<compile_context>
chip_gen: v5e
topology: v5e:2x2
jax: 0.10.0
libtpu: 0.0.40
codegen_flags: <defaults>
</compile_context>

<pallas_src>
import functools

import jax
import jax.numpy as jnp
from jax.experimental import pallas as pl
from jax.experimental.pallas import tpu as pltpu


# ----------------------------------------------------------------------------
# Pallas kernels
# ----------------------------------------------------------------------------
def _conv3x3_kernel(x_ref, w_ref, b_ref, o_ref, acc_ref, *, tm, W, Wp, relu):
    # x_ref  : (1, 1, (tm+2)*Wp, ck)  row tile with 2-row halo, rows flattened
    #                                  together with the zero-padded width (Wp=W+2)
    # w_ref  : (3, 3, ck, Co)          conv weight (HWIO), current Cin chunk
    # b_ref  : (1, Co)
    # o_ref  : (1, tm, W, Co)
    # acc_ref: (3, tm*Wp, Co) f32      one accumulator slab per width tap kw
    k = pl.program_id(2)

    @pl.when(k == 0)
    def _init():
        acc_ref[...] = jnp.zeros_like(acc_ref)

    # 9 accumulated MXU matmuls (3 height taps x 3 width taps) over the current
    # Cin chunk.  Height tap kh is a static slice of the flattened halo tile.
    for kh in range(3):
        xk = x_ref[0, 0, kh * Wp:kh * Wp + tm * Wp, :]          # (tm*Wp, ck)
        for kw in range(3):
            acc_ref[kw] += jnp.dot(xk, w_ref[kh, kw],
                                   preferred_element_type=jnp.float32)

    # Epilogue: combine the three width-tap slabs per output row, add bias,
    # apply ReLU (fused), write the lane-dense (W, Co) row.
    @pl.when(k == pl.num_programs(2) - 1)
    def _epilogue():
        bias = b_ref[...]                                        # (1, Co)
        for r in range(tm):
            base = r * Wp
            row = (acc_ref[0, base + 0:base + 0 + W, :]
                   + acc_ref[1, base + 1:base + 1 + W, :]
                   + acc_ref[2, base + 2:base + 2 + W, :]
                   + bias)
            if relu:
                row = jnp.maximum(row, 0.0)
            o_ref[0, r] = row.astype(o_ref.dtype)


def _dense_kernel(x_ref, w_ref, b_ref, o_ref):
    # Final conv4x4 (kernel == remaining spatial extent, padding 0) == dense.
    o_ref[...] = (jnp.dot(x_ref[...], w_ref[...],
                          preferred_element_type=jnp.float32)
                  + b_ref[...]).astype(o_ref.dtype)


# ----------------------------------------------------------------------------
# Pallas wrappers
# ----------------------------------------------------------------------------
def _pick_cin_tile(ci, ck_max=256):
    # Cin reduction-tile: full Cin when small, else a multiple of 128 dividing Cin.
    if ci <= ck_max or ci % 128 != 0:
        return ci
    ck = (ck_max // 128) * 128
    while ci % ck:
        ck -= 128
    return ck


def conv3x3_bias_act(x_nhwc, w_hwio, b, *, relu, tm_max=8,
                     mxu_dtype=jnp.float32):
    """Fused 3x3 conv (pad 1, stride 1) + bias + optional ReLU."""
    N, H, W, Ci = x_nhwc.shape
    Co = w_hwio.shape[-1]
    tm = min(tm_max, H)
    while H % tm:
        tm -= 1
    T = H // tm
    Wp = W + 2
    cflat = (tm + 2) * Wp

    # Zero-pad spatially, then materialize per-tile row chunks with a 2-row halo
    # (rows flattened together with padded width) so BlockSpec tiles never overlap.
    xp = jnp.pad(x_nhwc, ((0, 0), (1, 1), (1, 1), (0, 0)))
    xt = jnp.stack([xp[:, t * tm:t * tm + tm + 2] for t in range(T)], axis=1)
    xt = xt.reshape(N, T, cflat, Ci).astype(mxu_dtype)
    wk = w_hwio.astype(mxu_dtype)

    ck = _pick_cin_tile(Ci)
    nk = Ci // ck

    kernel = functools.partial(_conv3x3_kernel, tm=tm, W=W, Wp=Wp, relu=relu)
    return pl.pallas_call(
        kernel,
        out_shape=jax.ShapeDtypeStruct((N, H, W, Co), jnp.float32),
        grid=(N, T, nk),
        in_specs=[
            pl.BlockSpec((1, 1, cflat, ck), lambda n, t, k: (n, t, 0, k)),
            pl.BlockSpec((3, 3, ck, Co), lambda n, t, k: (0, 0, k, 0)),
            pl.BlockSpec((1, Co), lambda n, t, k: (0, 0)),
        ],
        out_specs=pl.BlockSpec((1, tm, W, Co), lambda n, t, k: (n, t, 0, 0)),
        scratch_shapes=[pltpu.VMEM((3, tm * Wp, Co), jnp.float32)],
        compiler_params=pltpu.CompilerParams(
            dimension_semantics=("parallel", "parallel", "arbitrary"),
            vmem_limit_bytes=32 * 1024 * 1024,   # headroom for v7x's 64 MiB VMEM
        ),
    )(xt, wk, b.reshape(1, Co).astype(jnp.float32))


def dense(x_nk, w_kd, b_d):
    N, _ = x_nk.shape
    D = w_kd.shape[-1]
    return pl.pallas_call(
        _dense_kernel,
        out_shape=jax.ShapeDtypeStruct((N, D), jnp.float32),
    )(x_nk, w_kd, b_d.reshape(1, D))


# ----------------------------------------------------------------------------
# JAX glue (pure data movement)
# ----------------------------------------------------------------------------
def maxpool2x2(x_nhwc):
    N, H, W, C = x_nhwc.shape
    return jnp.max(x_nhwc.reshape(N, H // 2, 2, W // 2, 2, C), axis=(2, 4))


# ----------------------------------------------------------------------------
# Classifier forward
# ----------------------------------------------------------------------------
def classifier_forward(x_nchw, params, *, mxu_dtype=jnp.float32):
    x = jnp.transpose(x_nchw, (0, 2, 3, 1)).astype(jnp.float32)   # NCHW -> NHWC

    # conv1 -> ReLU
    x = conv3x3_bias_act(x, params["conv1_w"], params["conv1_b"], relu=True,
                         mxu_dtype=mxu_dtype)
    # conv_i -> MaxPool2d(2) -> ReLU  (i = 2..7).  ReLU commutes with max-pool,
    # so it is fused into the conv epilogue; the pool runs on activated data.
    for i in range(2, 8):
        x = conv3x3_bias_act(x, params[f"conv{i}_w"], params[f"conv{i}_b"],
                             relu=True, mxu_dtype=mxu_dtype)
        x = maxpool2x2(x)
    # conv8 (no pool, no activation)
    x = conv3x3_bias_act(x, params["conv8_w"], params["conv8_b"], relu=False,
                         mxu_dtype=mxu_dtype)
    # conv4x4: kernel == remaining spatial extent, padding 0  ->  [N, D]
    N, Hf, Wf, C = x.shape
    D = params["convf_b"].shape[0]
    out = dense(x.reshape(N, Hf * Wf * C),
                params["convf_w"].reshape(Hf * Wf * C, D),
                params["convf_b"])
    return out                                       # == .squeeze(-1).squeeze(-1)


# ----------------------------------------------------------------------------
# Pure-JAX reference (for self-check)
# ----------------------------------------------------------------------------
def ref_forward(x_nchw, params):
    x = jnp.transpose(x_nchw, (0, 2, 3, 1)).astype(jnp.float32)

    def conv(v, w, b, padding):
        return jax.lax.conv_general_dilated(
            v, w, (1, 1), padding,
            dimension_numbers=("NHWC", "HWIO", "NHWC")) + b

    pool = lambda v: jax.lax.reduce_window(
        v, -jnp.inf, jax.lax.max, (1, 2, 2, 1), (1, 2, 2, 1), "VALID")
    relu = lambda v: jnp.maximum(v, 0.0)

    x = relu(conv(x, params["conv1_w"], params["conv1_b"], "SAME"))
    for i in range(2, 8):
        x = relu(pool(conv(x, params[f"conv{i}_w"], params[f"conv{i}_b"], "SAME")))
    x = conv(x, params["conv8_w"], params["conv8_b"], "SAME")
    x = conv(x, params["convf_w"], params["convf_b"], "VALID")
    return x.reshape(x.shape[0], -1)


# ----------------------------------------------------------------------------
# Deterministic parameter init + demo
# ----------------------------------------------------------------------------
def make_params(key, img_channels, dim_in, num_domains, final_k):
    chans = [img_channels, dim_in, 2 * dim_in, 4 * dim_in, 4 * dim_in,
             8 * dim_in, 8 * dim_in, 8 * dim_in, 8 * dim_in]
    ks = jax.random.split(key, 18)
    p = {}
    for i in range(8):
        ci, co = chans[i], chans[i + 1]
        std = (2.0 / (9 * ci)) ** 0.5
        p[f"conv{i + 1}_w"] = std * jax.random.normal(ks[2 * i], (3, 3, ci, co),
                                                      jnp.float32)
        p[f"conv{i + 1}_b"] = 0.01 * jax.random.normal(ks[2 * i + 1], (co,),
                                                       jnp.float32)
    cf = chans[-1]
    stdf = (1.0 / (final_k * final_k * cf)) ** 0.5
    p["convf_w"] = stdf * jax.random.normal(
        ks[16], (final_k, final_k, cf, num_domains), jnp.float32)
    p["convf_b"] = 0.01 * jax.random.normal(ks[17], (num_domains,), jnp.float32)
    return p


if __name__ == "__main__":
    # Small demo consistent with the module structure: img_size=64 so the six
    # 2x max-pools end at 1x1 and conv4x4 has kernel size img_size/2**6 = 1.
    # dim_in is kept small (8) instead of the default formula's 512.
    N, img_size, img_channels, dim_in, num_domains = 2, 64, 3, 8, 2
    final_k = img_size // 2 ** 6

    key = jax.random.PRNGKey(0)
    kx, kp = jax.random.split(key)
    x = jax.random.normal(kx, (N, img_channels, img_size, img_size), jnp.float32)
    params = make_params(kp, img_channels, dim_in, num_domains, final_k)

    out = jax.block_until_ready(classifier_forward(x, params))
    ref = jax.block_until_ready(ref_forward(x, params))

    assert out.shape == (N, num_domains), out.shape
    max_err = float(jnp.max(jnp.abs(out - ref)))
    assert jnp.allclose(out, ref, atol=2e-3, rtol=2e-3), max_err
    print("KERNEL_OK")
</pallas_src>

<mosaic_0001>
module attributes {stable_mosaic.version = 11 : i64} {
  func.func @_conv3x3_kernel(%arg0: i32, %arg1: i32, %arg2: i32, %arg3: memref<1x1x660x3xf32, #tpu.memory_space<vmem>>, %arg4: memref<3x3x3x8xf32, #tpu.memory_space<vmem>>, %arg5: memref<1x8xf32, #tpu.memory_space<vmem>>, %arg6: memref<1x8x64x8xf32, #tpu.memory_space<vmem>>, %arg7: memref<3x528x8xf32, #tpu.memory_space<vmem>>) attributes {dimension_semantics = [#tpu.dimension_semantics<parallel>, #tpu.dimension_semantics<parallel>, #tpu.dimension_semantics<arbitrary>], iteration_bounds = array<i64: 2, 8, 1>, scalar_prefetch = 0 : i64, scratch_operands = 1 : i64, tpu.core_type = #tpu.core_type<tc>, window_params = [{transform_indices = @transform_0, window_bounds = array<i64: 1, 1, 660, 3>}, {transform_indices = @transform_1, window_bounds = array<i64: 3, 3, 3, 8>}, {pipeline_mode = #tpu.pipeline_mode<synchronous>, transform_indices = @transform_2, window_bounds = array<i64: 1, 8>}, {transform_indices = @transform_3, window_bounds = array<i64: 1, 8, 64, 8>}]} {
    %c0_i32 = arith.constant 0 : i32
    %0 = arith.cmpi eq, %arg2, %c0_i32 : i32
    %1 = arith.extui %0 : i1 to i32
    %c0_i32_0 = arith.constant 0 : i32
    %2 = arith.cmpi ne, %1, %c0_i32_0 : i32
    scf.if %2 {
      %cst_108 = arith.constant 0.000000e+00 : f32
      %93 = vector.broadcast %cst_108 : f32 to vector<3x528x8xf32>
      %c0_109 = arith.constant 0 : index
      %c0_110 = arith.constant 0 : index
      %c0_111 = arith.constant 0 : index
      %94 = vector.load %arg7[%c0_109, %c0_110, %c0_111] : memref<3x528x8xf32, #tpu.memory_space<vmem>>, vector<3x528x8xf32>
      tpu.vector_store %arg7[%c0_109, %c0_110, %c0_111], %93 {strides = array<i32>} : memref<3x528x8xf32, #tpu.memory_space<vmem>>, vector<3x528x8xf32>,
    } else {
    }
    %c0 = arith.constant 0 : index
    %c0_1 = arith.constant 0 : index
    %c0_2 = arith.constant 0 : index
    %c0_3 = arith.constant 0 : index
    %3 = vector.load %arg3[%c0, %c0_1, %c0_2, %c0_3] : memref<1x1x660x3xf32, #tpu.memory_space<vmem>>, vector<1x1x528x3xf32>
    %4 = vector.shape_cast %3 : vector<1x1x528x3xf32> to vector<528x3xf32>
    %c0_4 = arith.constant 0 : index
    %c0_5 = arith.constant 0 : index
    %c0_6 = arith.constant 0 : index
    %5 = vector.load %arg7[%c0_4, %c0_5, %c0_6] : memref<3x528x8xf32, #tpu.memory_space<vmem>>, vector<1x528x8xf32>
    %6 = vector.shape_cast %5 : vector<1x528x8xf32> to vector<528x8xf32>
    %c0_7 = arith.constant 0 : index
    %c0_8 = arith.constant 0 : index
    %c0_9 = arith.constant 0 : index
    %c0_10 = arith.constant 0 : index
    %7 = vector.load %arg4[%c0_7, %c0_8, %c0_9, %c0_10] : memref<3x3x3x8xf32, #tpu.memory_space<vmem>>, vector<1x1x3x8xf32>
    %8 = vector.shape_cast %7 : vector<1x1x3x8xf32> to vector<3x8xf32>
    %cst = arith.constant dense<0.000000e+00> : vector<528x8xf32>
    %9 = tpu.matmul %4, %8, %cst {dimension_numbers = #tpu.dot_dimension_numbers<[1], [0], [0], [1], [0, 0, 1, 1], [], []>} : vector<528x3xf32>, vector<3x8xf32>, vector<528x8xf32> -> vector<528x8xf32>
    %10 = arith.addf %6, %9 : vector<528x8xf32>
    %c0_11 = arith.constant 0 : index
    %c0_12 = arith.constant 0 : index
    %c0_13 = arith.constant 0 : index
    %11 = vector.load %arg7[%c0_11, %c0_12, %c0_13] : memref<3x528x8xf32, #tpu.memory_space<vmem>>, vector<1x528x8xf32>
    %12 = vector.shape_cast %11 : vector<1x528x8xf32> to vector<528x8xf32>
    %13 = vector.shape_cast %10 : vector<528x8xf32> to vector<1x528x8xf32>
    tpu.vector_store %arg7[%c0_11, %c0_12, %c0_13], %13 {strides = array<i32>} : memref<3x528x8xf32, #tpu.memory_space<vmem>>, vector<1x528x8xf32>,
    %c1 = arith.constant 1 : index
    %c0_14 = arith.constant 0 : index
    %c0_15 = arith.constant 0 : index
    %14 = vector.load %arg7[%c1, %c0_14, %c0_15] : memref<3x528x8xf32, #tpu.memory_space<vmem>>, vector<1x528x8xf32>
    %15 = vector.shape_cast %14 : vector<1x528x8xf32> to vector<528x8xf32>
    %c0_16 = arith.constant 0 : index
    %c1_17 = arith.constant 1 : index
    %c0_18 = arith.constant 0 : index
    %c0_19 = arith.constant 0 : index
    %16 = vector.load %arg4[%c0_16, %c1_17, %c0_18, %c0_19] : memref<3x3x3x8xf32, #tpu.memory_space<vmem>>, vector<1x1x3x8xf32>
    %17 = vector.shape_cast %16 : vector<1x1x3x8xf32> to vector<3x8xf32>
    %cst_20 = arith.constant dense<0.000000e+00> : vector<528x8xf32>
    %18 = tpu.matmul %4, %17, %cst_20 {dimension_numbers = #tpu.dot_dimension_numbers<[1], [0], [0], [1], [0, 0, 1, 1], [], []>} : vector<528x3xf32>, vector<3x8xf32>, vector<528x8xf32> -> vector<528x8xf32>
    %19 = arith.addf %15, %18 : vector<528x8xf32>
    %c1_21 = arith.constant 1 : index
    %c0_22 = arith.constant 0 : index
    %c0_23 = arith.constant 0 : index
    %20 = vector.load %arg7[%c1_21, %c0_22, %c0_23] : memref<3x528x8xf32, #tpu.memory_space<vmem>>, vector<1x528x8xf32>
    %21 = vector.shape_cast %20 : vector<1x528x8xf32> to vector<528x8xf32>
    %22 = vector.shape_cast %19 : vector<528x8xf32> to vector<1x528x8xf32>
    tpu.vector_store %arg7[%c1_21, %c0_22, %c0_23], %22 {strides = array<i32>} : memref<3x528x8xf32, #tpu.memory_space<vmem>>, vector<1x528x8xf32>,
    %c2 = arith.constant 2 : index
    %c0_24 = arith.constant 0 : index
    %c0_25 = arith.constant 0 : index
    %23 = vector.load %arg7[%c2, %c0_24, %c0_25] : memref<3x528x8xf32, #tpu.memory_space<vmem>>, vector<1x528x8xf32>
    %24 = vector.shape_cast %23 : vector<1x528x8xf32> to vector<528x8xf32>
    %c0_26 = arith.constant 0 : index
    %c2_27 = arith.constant 2 : index
    %c0_28 = arith.constant 0 : index
    %c0_29 = arith.constant 0 : index
    %25 = vector.load %arg4[%c0_26, %c2_27, %c0_28, %c0_29] : memref<3x3x3x8xf32, #tpu.memory_space<vmem>>, vector<1x1x3x8xf32>
    %26 = vector.shape_cast %25 : vector<1x1x3x8xf32> to vector<3x8xf32>
    %cst_30 = arith.constant dense<0.000000e+00> : vector<528x8xf32>
    %27 = tpu.matmul %4, %26, %cst_30 {dimension_numbers = #tpu.dot_dimension_numbers<[1], [0], [0], [1], [0, 0, 1, 1], [], []>} : vector<528x3xf32>, vector<3x8xf32>, vector<528x8xf32> -> vector<528x8xf32>
    %28 = arith.addf %24, %27 : vector<528x8xf32>
    %c2_31 = arith.constant 2 : index
    %c0_32 = arith.constant 0 : index
    %c0_33 = arith.constant 0 : index
    %29 = vector.load %arg7[%c2_31, %c0_32, %c0_33] : memref<3x528x8xf32, #tpu.memory_space<vmem>>, vector<1x528x8xf32>
    %30 = vector.shape_cast %29 : vector<1x528x8xf32> to vector<528x8xf32>
    %31 = vector.shape_cast %28 : vector<528x8xf32> to vector<1x528x8xf32>
    tpu.vector_store %arg7[%c2_31, %c0_32, %c0_33], %31 {strides = array<i32>} : memref<3x528x8xf32, #tpu.memory_space<vmem>>, vector<1x528x8xf32>,
    %c0_34 = arith.constant 0 : index
    %c0_35 = arith.constant 0 : index
    %c66 = arith.constant 66 : index
    %c0_36 = arith.constant 0 : index
    %32 = vector.load %arg3[%c0_34, %c0_35, %c66, %c0_36] : memref<1x1x660x3xf32, #tpu.memory_space<vmem>>, vector<1x1x528x3xf32>
    %33 = vector.shape_cast %32 : vector<1x1x528x3xf32> to vector<528x3xf32>
    %c0_37 = arith.constant 0 : index
    %c0_38 = arith.constant 0 : index
    %c0_39 = arith.constant 0 : index
    %34 = vector.load %arg7[%c0_37, %c0_38, %c0_39] : memref<3x528x8xf32, #tpu.memory_space<vmem>>, vector<1x528x8xf32>
    %35 = vector.shape_cast %34 : vector<1x528x8xf32> to vector<528x8xf32>
    %c1_40 = arith.constant 1 : index
    %c0_41 = arith.constant 0 : index
    %c0_42 = arith.constant 0 : index
    %c0_43 = arith.constant 0 : index
    %36 = vector.load %arg4[%c1_40, %c0_41, %c0_42, %c0_43] : memref<3x3x3x8xf32, #tpu.memory_space<vmem>>, vector<1x1x3x8xf32>
    %37 = vector.shape_cast %36 : vector<1x1x3x8xf32> to vector<3x8xf32>
    %cst_44 = arith.constant dense<0.000000e+00> : vector<528x8xf32>
    %38 = tpu.matmul %33, %37, %cst_44 {dimension_numbers = #tpu.dot_dimension_numbers<[1], [0], [0], [1], [0, 0, 1, 1], [], []>} : vector<528x3xf32>, vector<3x8xf32>, vector<528x8xf32> -> vector<528x8xf32>
    %39 = arith.addf %35, %38 : vector<528x8xf32>
    %c0_45 = arith.constant 0 : index
    %c0_46 = arith.constant 0 : index
    %c0_47 = arith.constant 0 : index
    %40 = vector.load %arg7[%c0_45, %c0_46, %c0_47] : memref<3x528x8xf32, #tpu.memory_space<vmem>>, vector<1x528x8xf32>
    %41 = vector.shape_cast %40 : vector<1x528x8xf32> to vector<528x8xf32>
    %42 = vector.shape_cast %39 : vector<528x8xf32> to vector<1x528x8xf32>
    tpu.vector_store %arg7[%c0_45, %c0_46, %c0_47], %42 {strides = array<i32>} : memref<3x528x8xf32, #tpu.memory_space<vmem>>, vector<1x528x8xf32>,
    %c1_48 = arith.constant 1 : index
    %c0_49 = arith.constant 0 : index
    %c0_50 = arith.constant 0 : index
    %43 = vector.load %arg7[%c1_48, %c0_49, %c0_50] : memref<3x528x8xf32, #tpu.memory_space<vmem>>, vector<1x528x8xf32>
    %44 = vector.shape_cast %43 : vector<1x528x8xf32> to vector<528x8xf32>
    %c1_51 = arith.constant 1 : index
    %c1_52 = arith.constant 1 : index
    %c0_53 = arith.constant 0 : index
    %c0_54 = arith.constant 0 : index
    %45 = vector.load %arg4[%c1_51, %c1_52, %c0_53, %c0_54] : memref<3x3x3x8xf32, #tpu.memory_space<vmem>>, vector<1x1x3x8xf32>
    %46 = vector.shape_cast %45 : vector<1x1x3x8xf32> to vector<3x8xf32>
    %cst_55 = arith.constant dense<0.000000e+00> : vector<528x8xf32>
    %47 = tpu.matmul %33, %46, %cst_55 {dimension_numbers = #tpu.dot_dimension_numbers<[1], [0], [0], [1], [0, 0, 1, 1], [], []>} : vector<528x3xf32>, vector<3x8xf32>, vector<528x8xf32> -> vector<528x8xf32>
    %48 = arith.addf %44, %47 : vector<528x8xf32>
    %c1_56 = arith.constant 1 : index
    %c0_57 = arith.constant 0 : index
    %c0_58 = arith.constant 0 : index
    %49 = vector.load %arg7[%c1_56, %c0_57, %c0_58] : memref<3x528x8xf32, #tpu.memory_space<vmem>>, vector<1x528x8xf32>
    %50 = vector.shape_cast %49 : vector<1x528x8xf32> to vector<528x8xf32>
    %51 = vector.shape_cast %48 : vector<528x8xf32> to vector<1x528x8xf32>
    tpu.vector_store %arg7[%c1_56, %c0_57, %c0_58], %51 {strides = array<i32>} : memref<3x528x8xf32, #tpu.memory_space<vmem>>, vector<1x528x8xf32>,
    %c2_59 = arith.constant 2 : index
    %c0_60 = arith.constant 0 : index
    %c0_61 = arith.constant 0 : index
    %52 = vector.load %arg7[%c2_59, %c0_60, %c0_61] : memref<3x528x8xf32, #tpu.memory_space<vmem>>, vector<1x528x8xf32>
    %53 = vector.shape_cast %52 : vector<1x528x8xf32> to vector<528x8xf32>
    %c1_62 = arith.constant 1 : index
    %c2_63 = arith.constant 2 : index
    %c0_64 = arith.constant 0 : index
    %c0_65 = arith.constant 0 : index
    %54 = vector.load %arg4[%c1_62, %c2_63, %c0_64, %c0_65] : memref<3x3x3x8xf32, #tpu.memory_space<vmem>>, vector<1x1x3x8xf32>
    %55 = vector.shape_cast %54 : vector<1x1x3x8xf32> to vector<3x8xf32>
    %cst_66 = arith.constant dense<0.000000e+00> : vector<528x8xf32>
    %56 = tpu.matmul %33, %55, %cst_66 {dimension_numbers = #tpu.dot_dimension_numbers<[1], [0], [0], [1], [0, 0, 1, 1], [], []>} : vector<528x3xf32>, vector<3x8xf32>, vector<528x8xf32> -> vector<528x8xf32>
    %57 = arith.addf %53, %56 : vector<528x8xf32>
    %c2_67 = arith.constant 2 : index
    %c0_68 = arith.constant 0 : index
    %c0_69 = arith.constant 0 : index
    %58 = vector.load %arg7[%c2_67, %c0_68, %c0_69] : memref<3x528x8xf32, #tpu.memory_space<vmem>>, vector<1x528x8xf32>
    %59 = vector.shape_cast %58 : vector<1x528x8xf32> to vector<528x8xf32>
    %60 = vector.shape_cast %57 : vector<528x8xf32> to vector<1x528x8xf32>
    tpu.vector_store %arg7[%c2_67, %c0_68, %c0_69], %60 {strides = array<i32>} : memref<3x528x8xf32, #tpu.memory_space<vmem>>, vector<1x528x8xf32>,
    %c0_70 = arith.constant 0 : index
    %c0_71 = arith.constant 0 : index
    %c132 = arith.constant 132 : index
    %c0_72 = arith.constant 0 : index
    %61 = vector.load %arg3[%c0_70, %c0_71, %c132, %c0_72] : memref<1x1x660x3xf32, #tpu.memory_space<vmem>>, vector<1x1x528x3xf32>
    %62 = vector.shape_cast %61 : vector<1x1x528x3xf32> to vector<528x3xf32>
    %c0_73 = arith.constant 0 : index
    %c0_74 = arith.constant 0 : index
    %c0_75 = arith.constant 0 : index
    %63 = vector.load %arg7[%c0_73, %c0_74, %c0_75] : memref<3x528x8xf32, #tpu.memory_space<vmem>>, vector<1x528x8xf32>
    %64 = vector.shape_cast %63 : vector<1x528x8xf32> to vector<528x8xf32>
    %c2_76 = arith.constant 2 : index
    %c0_77 = arith.constant 0 : index
    %c0_78 = arith.constant 0 : index
    %c0_79 = arith.constant 0 : index
    %65 = vector.load %arg4[%c2_76, %c0_77, %c0_78, %c0_79] : memref<3x3x3x8xf32, #tpu.memory_space<vmem>>, vector<1x1x3x8xf32>
    %66 = vector.shape_cast %65 : vector<1x1x3x8xf32> to vector<3x8xf32>
    %cst_80 = arith.constant dense<0.000000e+00> : vector<528x8xf32>
    %67 = tpu.matmul %62, %66, %cst_80 {dimension_numbers = #tpu.dot_dimension_numbers<[1], [0], [0], [1], [0, 0, 1, 1], [], []>} : vector<528x3xf32>, vector<3x8xf32>, vector<528x8xf32> -> vector<528x8xf32>
    %68 = arith.addf %64, %67 : vector<528x8xf32>
    %c0_81 = arith.constant 0 : index
    %c0_82 = arith.constant 0 : index
    %c0_83 = arith.constant 0 : index
    %69 = vector.load %arg7[%c0_81, %c0_82, %c0_83] : memref<3x528x8xf32, #tpu.memory_space<vmem>>, vector<1x528x8xf32>
    %70 = vector.shape_cast %69 : vector<1x528x8xf32> to vector<528x8xf32>
    %71 = vector.shape_cast %68 : vector<528x8xf32> to vector<1x528x8xf32>
    tpu.vector_store %arg7[%c0_81, %c0_82, %c0_83], %71 {strides = array<i32>} : memref<3x528x8xf32, #tpu.memory_space<vmem>>, vector<1x528x8xf32>,
    %c1_84 = arith.constant 1 : index
    %c0_85 = arith.constant 0 : index
    %c0_86 = arith.constant 0 : index
    %72 = vector.load %arg7[%c1_84, %c0_85, %c0_86] : memref<3x528x8xf32, #tpu.memory_space<vmem>>, vector<1x528x8xf32>
    %73 = vector.shape_cast %72 : vector<1x528x8xf32> to vector<528x8xf32>
    %c2_87 = arith.constant 2 : index
    %c1_88 = arith.constant 1 : index
    %c0_89 = arith.constant 0 : index
    %c0_90 = arith.constant 0 : index
    %74 = vector.load %arg4[%c2_87, %c1_88, %c0_89, %c0_90] : memref<3x3x3x8xf32, #tpu.memory_space<vmem>>, vector<1x1x3x8xf32>
    %75 = vector.shape_cast %74 : vector<1x1x3x8xf32> to vector<3x8xf32>
    %cst_91 = arith.constant dense<0.000000e+00> : vector<528x8xf32>
    %76 = tpu.matmul %62, %75, %cst_91 {dimension_numbers = #tpu.dot_dimension_numbers<[1], [0], [0], [1], [0, 0, 1, 1], [], []>} : vector<528x3xf32>, vector<3x8xf32>, vector<528x8xf32> -> vector<528x8xf32>
    %77 = arith.addf %73, %76 : vector<528x8xf32>
    %c1_92 = arith.constant 1 : index
    %c0_93 = arith.constant 0 : index
    %c0_94 = arith.constant 0 : index
    %78 = vector.load %arg7[%c1_92, %c0_93, %c0_94] : memref<3x528x8xf32, #tpu.memory_space<vmem>>, vector<1x528x8xf32>
    %79 = vector.shape_cast %78 : vector<1x528x8xf32> to vector<528x8xf32>
    %80 = vector.shape_cast %77 : vector<528x8xf32> to vector<1x528x8xf32>
    tpu.vector_store %arg7[%c1_92, %c0_93, %c0_94], %80 {strides = array<i32>} : memref<3x528x8xf32, #tpu.memory_space<vmem>>, vector<1x528x8xf32>,
    %c2_95 = arith.constant 2 : index
    %c0_96 = arith.constant 0 : index
    %c0_97 = arith.constant 0 : index
    %81 = vector.load %arg7[%c2_95, %c0_96, %c0_97] : memref<3x528x8xf32, #tpu.memory_space<vmem>>, vector<1x528x8xf32>
    %82 = vector.shape_cast %81 : vector<1x528x8xf32> to vector<528x8xf32>
    %c2_98 = arith.constant 2 : index
    %c2_99 = arith.constant 2 : index
    %c0_100 = arith.constant 0 : index
    %c0_101 = arith.constant 0 : index
    %83 = vector.load %arg4[%c2_98, %c2_99, %c0_100, %c0_101] : memref<3x3x3x8xf32, #tpu.memory_space<vmem>>, vector<1x1x3x8xf32>
    %84 = vector.shape_cast %83 : vector<1x1x3x8xf32> to vector<3x8xf32>
    %cst_102 = arith.constant dense<0.000000e+00> : vector<528x8xf32>
    %85 = tpu.matmul %62, %84, %cst_102 {dimension_numbers = #tpu.dot_dimension_numbers<[1], [0], [0], [1], [0, 0, 1, 1], [], []>} : vector<528x3xf32>, vector<3x8xf32>, vector<528x8xf32> -> vector<528x8xf32>
    %86 = arith.addf %82, %85 : vector<528x8xf32>
    %c2_103 = arith.constant 2 : index
    %c0_104 = arith.constant 0 : index
    %c0_105 = arith.constant 0 : index
    %87 = vector.load %arg7[%c2_103, %c0_104, %c0_105] : memref<3x528x8xf32, #tpu.memory_space<vmem>>, vector<1x528x8xf32>
    %88 = vector.shape_cast %87 : vector<1x528x8xf32> to vector<528x8xf32>
    %89 = vector.shape_cast %86 : vector<528x8xf32> to vector<1x528x8xf32>
    tpu.vector_store %arg7[%c2_103, %c0_104, %c0_105], %89 {strides = array<i32>} : memref<3x528x8xf32, #tpu.memory_space<vmem>>, vector<1x528x8xf32>,
    %c0_i32_106 = arith.constant 0 : i32
    %90 = arith.cmpi eq, %arg2, %c0_i32_106 : i32
    %91 = arith.extui %90 : i1 to i32
    %c0_i32_107 = arith.constant 0 : i32
    %92 = arith.cmpi ne, %91, %c0_i32_107 : i32
    scf.if %92 {
      %c0_108 = arith.constant 0 : index
      %c0_109 = arith.constant 0 : index
      %93 = vector.load %arg5[%c0_108, %c0_109] : memref<1x8xf32, #tpu.memory_space<vmem>>, vector<1x8xf32>
      %c0_110 = arith.constant 0 : index
      %c0_111 = arith.constant 0 : index
      %c0_112 = arith.constant 0 : index
      %94 = vector.load %arg7[%c0_110, %c0_111, %c0_112] : memref<3x528x8xf32, #tpu.memory_space<vmem>>, vector<1x64x8xf32>
      %95 = vector.shape_cast %94 : vector<1x64x8xf32> to vector<64x8xf32>
      %c1_113 = arith.constant 1 : index
      %c1_114 = arith.constant 1 : index
      %c0_115 = arith.constant 0 : index
      %96 = vector.load %arg7[%c1_113, %c1_114, %c0_115] : memref<3x528x8xf32, #tpu.memory_space<vmem>>, vector<1x64x8xf32>
      %97 = vector.shape_cast %96 : vector<1x64x8xf32> to vector<64x8xf32>
      %98 = arith.addf %95, %97 : vector<64x8xf32>
      %c2_116 = arith.constant 2 : index
      %c2_117 = arith.constant 2 : index
      %c0_118 = arith.constant 0 : index
      %99 = vector.load %arg7[%c2_116, %c2_117, %c0_118] : memref<3x528x8xf32, #tpu.memory_space<vmem>>, vector<1x64x8xf32>
      %100 = vector.shape_cast %99 : vector<1x64x8xf32> to vector<64x8xf32>
      %101 = arith.addf %98, %100 : vector<64x8xf32>
      %102 = vector.broadcast %93 : vector<1x8xf32> to vector<64x8xf32>
      %103 = arith.addf %101, %102 : vector<64x8xf32>
      %cst_119 = arith.constant 0.000000e+00 : f32
      %104 = vector.broadcast %cst_119 : f32 to vector<64x8xf32>
      %105 = arith.maximumf %103, %104 : vector<64x8xf32>
      %c0_120 = arith.constant 0 : index
      %c0_121 = arith.constant 0 : index
      %c0_122 = arith.constant 0 : index
      %c0_123 = arith.constant 0 : index
      %106 = vector.load %arg6[%c0_120, %c0_121, %c0_122, %c0_123] : memref<1x8x64x8xf32, #tpu.memory_space<vmem>>, vector<1x1x64x8xf32>
      %107 = vector.shape_cast %106 : vector<1x1x64x8xf32> to vector<64x8xf32>
      %108 = vector.shape_cast %105 : vector<64x8xf32> to vector<1x1x64x8xf32>
      tpu.vector_store %arg6[%c0_120, %c0_121, %c0_122, %c0_123], %108 {strides = array<i32>} : memref<1x8x64x8xf32, #tpu.memory_space<vmem>>, vector<1x1x64x8xf32>,
      %c0_124 = arith.constant 0 : index
      %c66_125 = arith.constant 66 : index
      %c0_126 = arith.constant 0 : index
      %109 = vector.load %arg7[%c0_124, %c66_125, %c0_126] : memref<3x528x8xf32, #tpu.memory_space<vmem>>, vector<1x64x8xf32>
      %110 = vector.shape_cast %109 : vector<1x64x8xf32> to vector<64x8xf32>
      %c1_127 = arith.constant 1 : index
      %c67 = arith.constant 67 : index
      %c0_128 = arith.constant 0 : index
      %111 = vector.load %arg7[%c1_127, %c67, %c0_128] : memref<3x528x8xf32, #tpu.memory_space<vmem>>, vector<1x64x8xf32>
      %112 = vector.shape_cast %111 : vector<1x64x8xf32> to vector<64x8xf32>
      %113 = arith.addf %110, %112 : vector<64x8xf32>
      %c2_129 = arith.constant 2 : index
      %c68 = arith.constant 68 : index
      %c0_130 = arith.constant 0 : index
      %114 = vector.load %arg7[%c2_129, %c68, %c0_130] : memref<3x528x8xf32, #tpu.memory_space<vmem>>, vector<1x64x8xf32>
      %115 = vector.shape_cast %114 : vector<1x64x8xf32> to vector<64x8xf32>
      %116 = arith.addf %113, %115 : vector<64x8xf32>
      %117 = vector.broadcast %93 : vector<1x8xf32> to vector<64x8xf32>
      %118 = arith.addf %116, %117 : vector<64x8xf32>
      %cst_131 = arith.constant 0.000000e+00 : f32
      %119 = vector.broadcast %cst_131 : f32 to vector<64x8xf32>
      %120 = arith.maximumf %118, %119 : vector<64x8xf32>
      %c0_132 = arith.constant 0 : index
      %c1_133 = arith.constant 1 : index
      %c0_134 = arith.constant 0 : index
      %c0_135 = arith.constant 0 : index
      %121 = vector.load %arg6[%c0_132, %c1_133, %c0_134, %c0_135] : memref<1x8x64x8xf32, #tpu.memory_space<vmem>>, vector<1x1x64x8xf32>
      %122 = vector.shape_cast %121 : vector<1x1x64x8xf32> to vector<64x8xf32>
      %123 = vector.shape_cast %120 : vector<64x8xf32> to vector<1x1x64x8xf32>
      tpu.vector_store %arg6[%c0_132, %c1_133, %c0_134, %c0_135], %123 {strides = array<i32>} : memref<1x8x64x8xf32, #tpu.memory_space<vmem>>, vector<1x1x64x8xf32>,
      %c0_136 = arith.constant 0 : index
      %c132_137 = arith.constant 132 : index
      %c0_138 = arith.constant 0 : index
      %124 = vector.load %arg7[%c0_136, %c132_137, %c0_138] : memref<3x528x8xf32, #tpu.memory_space<vmem>>, vector<1x64x8xf32>
      %125 = vector.shape_cast %124 : vector<1x64x8xf32> to vector<64x8xf32>
      %c1_139 = arith.constant 1 : index
      %c133 = arith.constant 133 : index
      %c0_140 = arith.constant 0 : index
      %126 = vector.load %arg7[%c1_139, %c133, %c0_140] : memref<3x528x8xf32, #tpu.memory_space<vmem>>, vector<1x64x8xf32>
      %127 = vector.shape_cast %126 : vector<1x64x8xf32> to vector<64x8xf32>
      %128 = arith.addf %125, %127 : vector<64x8xf32>
      %c2_141 = arith.constant 2 : index
      %c134 = arith.constant 134 : index
      %c0_142 = arith.constant 0 : index
      %129 = vector.load %arg7[%c2_141, %c134, %c0_142] : memref<3x528x8xf32, #tpu.memory_space<vmem>>, vector<1x64x8xf32>
      %130 = vector.shape_cast %129 : vector<1x64x8xf32> to vector<64x8xf32>
      %131 = arith.addf %128, %130 : vector<64x8xf32>
      %132 = vector.broadcast %93 : vector<1x8xf32> to vector<64x8xf32>
      %133 = arith.addf %131, %132 : vector<64x8xf32>
      %cst_143 = arith.constant 0.000000e+00 : f32
      %134 = vector.broadcast %cst_143 : f32 to vector<64x8xf32>
      %135 = arith.maximumf %133, %134 : vector<64x8xf32>
      %c0_144 = arith.constant 0 : index
      %c2_145 = arith.constant 2 : index
      %c0_146 = arith.constant 0 : index
      %c0_147 = arith.constant 0 : index
      %136 = vector.load %arg6[%c0_144, %c2_145, %c0_146, %c0_147] : memref<1x8x64x8xf32, #tpu.memory_space<vmem>>, vector<1x1x64x8xf32>
      %137 = vector.shape_cast %136 : vector<1x1x64x8xf32> to vector<64x8xf32>
      %138 = vector.shape_cast %135 : vector<64x8xf32> to vector<1x1x64x8xf32>
      tpu.vector_store %arg6[%c0_144, %c2_145, %c0_146, %c0_147], %138 {strides = array<i32>} : memref<1x8x64x8xf32, #tpu.memory_space<vmem>>, vector<1x1x64x8xf32>,
      %c0_148 = arith.constant 0 : index
      %c198 = arith.constant 198 : index
      %c0_149 = arith.constant 0 : index
      %139 = vector.load %arg7[%c0_148, %c198, %c0_149] : memref<3x528x8xf32, #tpu.memory_space<vmem>>, vector<1x64x8xf32>
      %140 = vector.shape_cast %139 : vector<1x64x8xf32> to vector<64x8xf32>
      %c1_150 = arith.constant 1 : index
      %c199 = arith.constant 199 : index
      %c0_151 = arith.constant 0 : index
      %141 = vector.load %arg7[%c1_150, %c199, %c0_151] : memref<3x528x8xf32, #tpu.memory_space<vmem>>, vector<1x64x8xf32>
      %142 = vector.shape_cast %141 : vector<1x64x8xf32> to vector<64x8xf32>
      %143 = arith.addf %140, %142 : vector<64x8xf32>
      %c2_152 = arith.constant 2 : index
      %c200 = arith.constant 200 : index
      %c0_153 = arith.constant 0 : index
      %144 = vector.load %arg7[%c2_152, %c200, %c0_153] : memref<3x528x8xf32, #tpu.memory_space<vmem>>, vector<1x64x8xf32>
      %145 = vector.shape_cast %144 : vector<1x64x8xf32> to vector<64x8xf32>
      %146 = arith.addf %143, %145 : vector<64x8xf32>
      %147 = vector.broadcast %93 : vector<1x8xf32> to vector<64x8xf32>
      %148 = arith.addf %146, %147 : vector<64x8xf32>
      %cst_154 = arith.constant 0.000000e+00 : f32
      %149 = vector.broadcast %cst_154 : f32 to vector<64x8xf32>
      %150 = arith.maximumf %148, %149 : vector<64x8xf32>
      %c0_155 = arith.constant 0 : index
      %c3 = arith.constant 3 : index
      %c0_156 = arith.constant 0 : index
      %c0_157 = arith.constant 0 : index
      %151 = vector.load %arg6[%c0_155, %c3, %c0_156, %c0_157] : memref<1x8x64x8xf32, #tpu.memory_space<vmem>>, vector<1x1x64x8xf32>
      %152 = vector.shape_cast %151 : vector<1x1x64x8xf32> to vector<64x8xf32>
      %153 = vector.shape_cast %150 : vector<64x8xf32> to vector<1x1x64x8xf32>
      tpu.vector_store %arg6[%c0_155, %c3, %c0_156, %c0_157], %153 {strides = array<i32>} : memref<1x8x64x8xf32, #tpu.memory_space<vmem>>, vector<1x1x64x8xf32>,
      %c0_158 = arith.constant 0 : index
      %c264 = arith.constant 264 : index
      %c0_159 = arith.constant 0 : index
      %154 = vector.load %arg7[%c0_158, %c264, %c0_159] : memref<3x528x8xf32, #tpu.memory_space<vmem>>, vector<1x64x8xf32>
      %155 = vector.shape_cast %154 : vector<1x64x8xf32> to vector<64x8xf32>
      %c1_160 = arith.constant 1 : index
      %c265 = arith.constant 265 : index
      %c0_161 = arith.constant 0 : index
      %156 = vector.load %arg7[%c1_160, %c265, %c0_161] : memref<3x528x8xf32, #tpu.memory_space<vmem>>, vector<1x64x8xf32>
      %157 = vector.shape_cast %156 : vector<1x64x8xf32> to vector<64x8xf32>
      %158 = arith.addf %155, %157 : vector<64x8xf32>
      %c2_162 = arith.constant 2 : index
      %c266 = arith.constant 266 : index
      %c0_163 = arith.constant 0 : index
      %159 = vector.load %arg7[%c2_162, %c266, %c0_163] : memref<3x528x8xf32, #tpu.memory_space<vmem>>, vector<1x64x8xf32>
      %160 = vector.shape_cast %159 : vector<1x64x8xf32> to vector<64x8xf32>
      %161 = arith.addf %158, %160 : vector<64x8xf32>
      %162 = vector.broadcast %93 : vector<1x8xf32> to vector<64x8xf32>
      %163 = arith.addf %161, %162 : vector<64x8xf32>
      %cst_164 = arith.constant 0.000000e+00 : f32
      %164 = vector.broadcast %cst_164 : f32 to vector<64x8xf32>
      %165 = arith.maximumf %163, %164 : vector<64x8xf32>
      %c0_165 = arith.constant 0 : index
      %c4 = arith.constant 4 : index
      %c0_166 = arith.constant 0 : index
      %c0_167 = arith.constant 0 : index
      %166 = vector.load %arg6[%c0_165, %c4, %c0_166, %c0_167] : memref<1x8x64x8xf32, #tpu.memory_space<vmem>>, vector<1x1x64x8xf32>
      %167 = vector.shape_cast %166 : vector<1x1x64x8xf32> to vector<64x8xf32>
      %168 = vector.shape_cast %165 : vector<64x8xf32> to vector<1x1x64x8xf32>
      tpu.vector_store %arg6[%c0_165, %c4, %c0_166, %c0_167], %168 {strides = array<i32>} : memref<1x8x64x8xf32, #tpu.memory_space<vmem>>, vector<1x1x64x8xf32>,
      %c0_168 = arith.constant 0 : index
      %c330 = arith.constant 330 : index
      %c0_169 = arith.constant 0 : index
      %169 = vector.load %arg7[%c0_168, %c330, %c0_169] : memref<3x528x8xf32, #tpu.memory_space<vmem>>, vector<1x64x8xf32>
      %170 = vector.shape_cast %169 : vector<1x64x8xf32> to vector<64x8xf32>
      %c1_170 = arith.constant 1 : index
      %c331 = arith.constant 331 : index
      %c0_171 = arith.constant 0 : index
      %171 = vector.load %arg7[%c1_170, %c331, %c0_171] : memref<3x528x8xf32, #tpu.memory_space<vmem>>, vector<1x64x8xf32>
      %172 = vector.shape_cast %171 : vector<1x64x8xf32> to vector<64x8xf32>
      %173 = arith.addf %170, %172 : vector<64x8xf32>
      %c2_172 = arith.constant 2 : index
      %c332 = arith.constant 332 : index
      %c0_173 = arith.constant 0 : index
      %174 = vector.load %arg7[%c2_172, %c332, %c0_173] : memref<3x528x8xf32, #tpu.memory_space<vmem>>, vector<1x64x8xf32>
      %175 = vector.shape_cast %174 : vector<1x64x8xf32> to vector<64x8xf32>
      %176 = arith.addf %173, %175 : vector<64x8xf32>
      %177 = vector.broadcast %93 : vector<1x8xf32> to vector<64x8xf32>
      %178 = arith.addf %176, %177 : vector<64x8xf32>
      %cst_174 = arith.constant 0.000000e+00 : f32
      %179 = vector.broadcast %cst_174 : f32 to vector<64x8xf32>
      %180 = arith.maximumf %178, %179 : vector<64x8xf32>
      %c0_175 = arith.constant 0 : index
      %c5 = arith.constant 5 : index
      %c0_176 = arith.constant 0 : index
      %c0_177 = arith.constant 0 : index
      %181 = vector.load %arg6[%c0_175, %c5, %c0_176, %c0_177] : memref<1x8x64x8xf32, #tpu.memory_space<vmem>>, vector<1x1x64x8xf32>
      %182 = vector.shape_cast %181 : vector<1x1x64x8xf32> to vector<64x8xf32>
      %183 = vector.shape_cast %180 : vector<64x8xf32> to vector<1x1x64x8xf32>
      tpu.vector_store %arg6[%c0_175, %c5, %c0_176, %c0_177], %183 {strides = array<i32>} : memref<1x8x64x8xf32, #tpu.memory_space<vmem>>, vector<1x1x64x8xf32>,
      %c0_178 = arith.constant 0 : index
      %c396 = arith.constant 396 : index
      %c0_179 = arith.constant 0 : index
      %184 = vector.load %arg7[%c0_178, %c396, %c0_179] : memref<3x528x8xf32, #tpu.memory_space<vmem>>, vector<1x64x8xf32>
      %185 = vector.shape_cast %184 : vector<1x64x8xf32> to vector<64x8xf32>
      %c1_180 = arith.constant 1 : index
      %c397 = arith.constant 397 : index
      %c0_181 = arith.constant 0 : index
      %186 = vector.load %arg7[%c1_180, %c397, %c0_181] : memref<3x528x8xf32, #tpu.memory_space<vmem>>, vector<1x64x8xf32>
      %187 = vector.shape_cast %186 : vector<1x64x8xf32> to vector<64x8xf32>
      %188 = arith.addf %185, %187 : vector<64x8xf32>
      %c2_182 = arith.constant 2 : index
      %c398 = arith.constant 398 : index
      %c0_183 = arith.constant 0 : index
      %189 = vector.load %arg7[%c2_182, %c398, %c0_183] : memref<3x528x8xf32, #tpu.memory_space<vmem>>, vector<1x64x8xf32>
      %190 = vector.shape_cast %189 : vector<1x64x8xf32> to vector<64x8xf32>
      %191 = arith.addf %188, %190 : vector<64x8xf32>
      %192 = vector.broadcast %93 : vector<1x8xf32> to vector<64x8xf32>
      %193 = arith.addf %191, %192 : vector<64x8xf32>
      %cst_184 = arith.constant 0.000000e+00 : f32
      %194 = vector.broadcast %cst_184 : f32 to vector<64x8xf32>
      %195 = arith.maximumf %193, %194 : vector<64x8xf32>
      %c0_185 = arith.constant 0 : index
      %c6 = arith.constant 6 : index
      %c0_186 = arith.constant 0 : index
      %c0_187 = arith.constant 0 : index
      %196 = vector.load %arg6[%c0_185, %c6, %c0_186, %c0_187] : memref<1x8x64x8xf32, #tpu.memory_space<vmem>>, vector<1x1x64x8xf32>
      %197 = vector.shape_cast %196 : vector<1x1x64x8xf32> to vector<64x8xf32>
      %198 = vector.shape_cast %195 : vector<64x8xf32> to vector<1x1x64x8xf32>
      tpu.vector_store %arg6[%c0_185, %c6, %c0_186, %c0_187], %198 {strides = array<i32>} : memref<1x8x64x8xf32, #tpu.memory_space<vmem>>, vector<1x1x64x8xf32>,
      %c0_188 = arith.constant 0 : index
      %c462 = arith.constant 462 : index
      %c0_189 = arith.constant 0 : index
      %199 = vector.load %arg7[%c0_188, %c462, %c0_189] : memref<3x528x8xf32, #tpu.memory_space<vmem>>, vector<1x64x8xf32>
      %200 = vector.shape_cast %199 : vector<1x64x8xf32> to vector<64x8xf32>
      %c1_190 = arith.constant 1 : index
      %c463 = arith.constant 463 : index
      %c0_191 = arith.constant 0 : index
      %201 = vector.load %arg7[%c1_190, %c463, %c0_191] : memref<3x528x8xf32, #tpu.memory_space<vmem>>, vector<1x64x8xf32>
      %202 = vector.shape_cast %201 : vector<1x64x8xf32> to vector<64x8xf32>
      %203 = arith.addf %200, %202 : vector<64x8xf32>
      %c2_192 = arith.constant 2 : index
      %c464 = arith.constant 464 : index
      %c0_193 = arith.constant 0 : index
      %204 = vector.load %arg7[%c2_192, %c464, %c0_193] : memref<3x528x8xf32, #tpu.memory_space<vmem>>, vector<1x64x8xf32>
      %205 = vector.shape_cast %204 : vector<1x64x8xf32> to vector<64x8xf32>
      %206 = arith.addf %203, %205 : vector<64x8xf32>
      %207 = vector.broadcast %93 : vector<1x8xf32> to vector<64x8xf32>
      %208 = arith.addf %206, %207 : vector<64x8xf32>
      %cst_194 = arith.constant 0.000000e+00 : f32
      %209 = vector.broadcast %cst_194 : f32 to vector<64x8xf32>
      %210 = arith.maximumf %208, %209 : vector<64x8xf32>
      %c0_195 = arith.constant 0 : index
      %c7 = arith.constant 7 : index
      %c0_196 = arith.constant 0 : index
      %c0_197 = arith.constant 0 : index
      %211 = vector.load %arg6[%c0_195, %c7, %c0_196, %c0_197] : memref<1x8x64x8xf32, #tpu.memory_space<vmem>>, vector<1x1x64x8xf32>
      %212 = vector.shape_cast %211 : vector<1x1x64x8xf32> to vector<64x8xf32>
      %213 = vector.shape_cast %210 : vector<64x8xf32> to vector<1x1x64x8xf32>
      tpu.vector_store %arg6[%c0_195, %c7, %c0_196, %c0_197], %213 {strides = array<i32>} : memref<1x8x64x8xf32, #tpu.memory_space<vmem>>, vector<1x1x64x8xf32>,
    } else {
    }
    return
  }
  func.func @transform_0(%arg0: i32, %arg1: i32, %arg2: i32) -> (i32, i32, i32, i32) {
    %c0_i32 = arith.constant 0 : i32
    %c0_i32_0 = arith.constant 0 : i32
    return %arg0, %arg1, %c0_i32, %arg2 : i32, i32, i32, i32
  }
  func.func @transform_1(%arg0: i32, %arg1: i32, %arg2: i32) -> (i32, i32, i32, i32) {
    %c0_i32 = arith.constant 0 : i32
    %c0_i32_0 = arith.constant 0 : i32
    %c0_i32_1 = arith.constant 0 : i32
    %c0_i32_2 = arith.constant 0 : i32
    return %c0_i32, %c0_i32_0, %arg2, %c0_i32_1 : i32, i32, i32, i32
  }
  func.func @transform_2(%arg0: i32, %arg1: i32, %arg2: i32) -> (i32, i32) {
    %c0_i32 = arith.constant 0 : i32
    %c0_i32_0 = arith.constant 0 : i32
    %c0_i32_1 = arith.constant 0 : i32
    return %c0_i32, %c0_i32_0 : i32, i32
  }
  func.func @transform_3(%arg0: i32, %arg1: i32, %arg2: i32) -> (i32, i32, i32, i32) {
    %c0_i32 = arith.constant 0 : i32
    %c0_i32_0 = arith.constant 0 : i32
    %c0_i32_1 = arith.constant 0 : i32
    return %arg0, %arg1, %c0_i32, %c0_i32_0 : i32, i32, i32, i32
  }
}

</mosaic_0001>

<llo_original>
// kernel: tpu_custom_call.1
$region0: #{tpu_custom_call.1}
  #allocation0 [shape = 'u32[]', space=smem, size = 0x4, offset = 0x4, fixed_abs, tag = 'smem constant byte address 0x4 - core index']
  #allocation1 [shape = 'u32[72,128]{1,0:T(1,128)}', space=vmem, size = 0x9000, scoped, tag = 'internal scratch']
  #allocation2 [shape = 'f32[3,528,8]{2,1,0:T(8,128)}', space=vmem, size = 0xc6000, scoped, tag = 'scratch operand']
  %s0 = inlined_call_operand.vmem [shape: f32[2,8,660,3], index: 0, kind: input, shape index: {}]
  %s1 = inlined_call_operand.vmem [shape: f32[3,3,3,8], index: 1, kind: input, shape index: {}]
  %s2 = inlined_call_operand.vmem [shape: f32[1,8], index: 2, kind: input, shape index: {}]
  %s3 = inlined_call_operand.vmem [shape: f32[2,64,64,8], index: 3, kind: output, shape index: {}]
  %s4 = sld [smem:[#allocation0]]
  $region53: #{tpu_custom_call.1} parent=0
    _
  %s6 = ssub.s32 1, %s4
  %s7 = scalar_select 0, %s6, %s4
  loop: start=0, step=1, limit=18
  $region2: #{tpu_custom_call.1} parent=0 // loop_pre_header
    _
  $region3: #{tpu_custom_call.1} parent=0 // loop_header
    %s9 = sphi 0, %s13
    %p10 = scmp.ge.s32.totalorder %s9, 18
    %s16 = sphi 0, %s35
    %s17 = sphi 0, %s31
    %s18 = sphi 0, %s27
    %s19 = sphi 0, %s16
    %s20 = sphi 0, %s17
    %s21 = sphi 0, %s18
    %s22 = sphi 0, %s19
    %s23 = sphi 0, %s20
    %s24 = sphi 0, %s21
    %s42 = sphi 0, %s44
    %s45 = sphi 0, %s42
    %s46 = sphi 0, %s45
    %s62 = sphi 0, %s46
    %s68 = sphi 0, %s70
    %s71 = sphi 0, %s68
    %s72 = sphi 0, %s71
    %s88 = sphi 0, %s72
    %s92 = sphi 0, %s92
    %s94 = sphi 0, %s92
    %s95 = sphi 0, %s94
    %s109 = sphi 0, %s95
    %s117 = sphi 0, %s119
    %s120 = sphi 0, %s117
    %s121 = sphi 0, %s120
    %s137 = sphi 0, %s121
  $region4: #{tpu_custom_call.1} parent=0 // loop_header_branch
    %12 = sbr.rel (%p10) target = $region8
  $region5: #{tpu_custom_call.1} parent=0 // loop_body
    %s14 = ssub.s32 %s9, 1
    %s15 = ssub.s32 %s9, 2
    %s25 = sadd.s32 1, %s18
    %p26 = scmp.ge.s32.totalorder %s25, 1
    %s27 = scalar_select %p26, 0, %s25
    %s28 = sadd.s32 1, %s17
    %s29 = scalar_select %p26, %s28, %s17
    %p30 = scmp.ge.s32.totalorder %s29, 8
    %s31 = scalar_select %p30, 0, %s29
    %s32 = sadd.s32 1, %s16
    %s33 = scalar_select %p30, %s32, %s16
    %p34 = scmp.ge.s32.totalorder %s33, 2
    %s35 = scalar_select %p34, 0, %s33
    %s36 = ssub.s32 %s16, %s35
    %s37 = ssub.s32 %s17, %s31
    %s38 = sor.u32 %s36, %s37
    %s39 = ssub.s32 %s18, %s27
    %s40 = sor.u32 %s38, %s39
    %p41 = scmp.eq.s32.totalorder %s40, 0
    %s43 = sadd.s32 %s42, 1
    %s44 = scalar_select %p41, %s42, %s43
    %p47 = pneg %p41
    %p48 = scmp.eq.s32.totalorder %s9, 15
    %p49 = por %p47, %p48
    %p50 = scmp.ne.s32.totalorder %s42, %s45
    %p51 = scmp.eq.s32.totalorder %s9, 0
    %p52 = por %p50, %p51
    %p53 = scmp.ne.s32.totalorder %s42, %s45
    %p54 = scmp.eq.s32.totalorder %s14, 15
    %p55 = por %p53, %p54
    %p56 = scmp.ne.s32.totalorder %s45, %s46
    %p57 = scmp.eq.s32.totalorder %s14, 0
    %p58 = por %p56, %p57
    %p59 = scmp.ne.s32.totalorder %s45, %s46
    %p60 = scmp.eq.s32.totalorder %s15, 15
    %p61 = por %p59, %p60
    %p63 = scmp.ne.s32.totalorder %s46, %s62
    %p64 = scmp.eq.s32.totalorder %s15, 0
    %p65 = por %p63, %p64
    %s66 = ssub.s32 %s18, %s27
    %p67 = scmp.eq.s32.totalorder %s66, 0
    %s69 = sadd.s32 %s68, 1
    %s70 = scalar_select %p67, %s68, %s69
    %p73 = pneg %p67
    %p74 = scmp.eq.s32.totalorder %s9, 15
    %p75 = por %p73, %p74
    %p76 = scmp.ne.s32.totalorder %s68, %s71
    %p77 = scmp.eq.s32.totalorder %s9, 0
    %p78 = por %p76, %p77
    %p79 = scmp.ne.s32.totalorder %s68, %s71
    %p80 = scmp.eq.s32.totalorder %s14, 15
    %p81 = por %p79, %p80
    %p82 = scmp.ne.s32.totalorder %s71, %s72
    %p83 = scmp.eq.s32.totalorder %s14, 0
    %p84 = por %p82, %p83
    %p85 = scmp.ne.s32.totalorder %s71, %s72
    %p86 = scmp.eq.s32.totalorder %s15, 15
    %p87 = por %p85, %p86
    %p89 = scmp.ne.s32.totalorder %s72, %s88
    %p90 = scmp.eq.s32.totalorder %s15, 0
    %p91 = por %p89, %p90
    %s93 = sadd.s32 %s92, 1
    %p96 = scmp.eq.s32.totalorder %s9, 15
    %p97 = scmp.ne.s32.totalorder %s92, %s94
    %p98 = scmp.eq.s32.totalorder %s9, 0
    %p99 = por %p97, %p98
    %p100 = scmp.ne.s32.totalorder %s92, %s94
    %p101 = scmp.eq.s32.totalorder %s14, 15
    %p102 = por %p100, %p101
    %p103 = scmp.ne.s32.totalorder %s94, %s95
    %p104 = scmp.eq.s32.totalorder %s14, 0
    %p105 = por %p103, %p104
    %p106 = scmp.ne.s32.totalorder %s94, %s95
    %p107 = scmp.eq.s32.totalorder %s15, 15
    %p108 = por %p106, %p107
    %p110 = scmp.ne.s32.totalorder %s95, %s109
    %p111 = scmp.eq.s32.totalorder %s15, 0
    %p112 = por %p110, %p111
    %s113 = ssub.s32 %s16, %s35
    %s114 = ssub.s32 %s17, %s31
    %s115 = sor.u32 %s113, %s114
    %p116 = scmp.eq.s32.totalorder %s115, 0
    %s118 = sadd.s32 %s117, 1
    %s119 = scalar_select %p116, %s117, %s118
    %p122 = pneg %p116
    %p123 = scmp.eq.s32.totalorder %s9, 15
    %p124 = por %p122, %p123
    %p125 = scmp.ne.s32.totalorder %s117, %s120
    %p126 = scmp.eq.s32.totalorder %s9, 0
    %p127 = por %p125, %p126
    %p128 = scmp.ne.s32.totalorder %s117, %s120
    %p129 = scmp.eq.s32.totalorder %s14, 15
    %p130 = por %p128, %p129
    %p131 = scmp.ne.s32.totalorder %s120, %s121
    %p132 = scmp.eq.s32.totalorder %s14, 0
    %p133 = por %p131, %p132
    %p134 = scmp.ne.s32.totalorder %s120, %s121
    %p135 = scmp.eq.s32.totalorder %s15, 15
    %p136 = por %p134, %p135
    %p138 = scmp.ne.s32.totalorder %s121, %s137
    %p139 = scmp.eq.s32.totalorder %s15, 0
    %p140 = por %p138, %p139
    %p141 = scmp.le.s32.totalorder 1, %s9
    %p142 = scmp.lt.s32.totalorder %s9, 17
    %p143 = pnand %p141, %p142
    %p144 = pneg %p143
    // Predicated region
    $region9: #{tpu_custom_call.1} parent=5 // pred_check
      _
    $region10: #{tpu_custom_call.1} parent=5 // pred_check_branch
      %146 = sbr.rel (%p143) target = $region12
    $region11: #{tpu_custom_call.1} parent=5 // pred_region
      %s147 = ssub.s32 %s9, 1
      // Predicated region
      $region13: #{tpu_custom_call.1} parent=11 // pred_check
        %p148 = pneg %p84
      $region14: #{tpu_custom_call.1} parent=11 // pred_check_branch
        %150 = sbr.rel (%p148) target = $region16
      $region15: #{tpu_custom_call.1} parent=11 // pred_region
        %p151 = scmp.lt.s32.totalorder %s21, 0
        %s152 = scalar_select %p151, %s21, 0
        %s153 = smul.addr %s152, 4
        %s154 = scalar_lea.vmem %s1, %s153
      $region16: #{tpu_custom_call.1} parent=11 // pred_fallthru
        _
      // Predicated region
      $region17: #{tpu_custom_call.1} parent=11 // pred_check
        %p155 = pneg %p105
      $region18: #{tpu_custom_call.1} parent=11 // pred_check_branch
        %157 = sbr.rel (%p155) target = $region20
      $region19: #{tpu_custom_call.1} parent=11 // pred_region
        _
      $region20: #{tpu_custom_call.1} parent=11 // pred_fallthru
        _
    $region12: #{tpu_custom_call.1} parent=5 // pred_fallthru
      _
    %p158 = scmp.lt.s32.totalorder %s9, 16
    // Predicated region
    $region21: #{tpu_custom_call.1} parent=5 // pred_check
      %p159 = pneg %p158
    $region22: #{tpu_custom_call.1} parent=5 // pred_check_branch
      %161 = sbr.rel (%p159) target = $region24
    $region23: #{tpu_custom_call.1} parent=5 // pred_region
      // Predicated region
      $region25: #{tpu_custom_call.1} parent=23 // pred_check
        %p162 = pneg %p52
      $region26: #{tpu_custom_call.1} parent=23 // pred_check_branch
        %164 = sbr.rel (%p162) target = $region28
      $region27: #{tpu_custom_call.1} parent=23 // pred_region
        %p165 = scmp.lt.s32.totalorder %s16, 1
        %s166 = scalar_select %p165, %s16, 1
        %p167 = scmp.lt.s32.totalorder %s17, 7
        %s168 = scalar_select %p167, %s17, 7
        %p169 = scmp.lt.s32.totalorder %s18, 0
        %s170 = scalar_select %p169, %s18, 0
        %s171 = smul.addr %s168, 83
        %s172 = sadd.s32 %s170, %s171
        %s173 = smul.addr %s166, 664
        %s174 = sadd.s32 %s172, %s173
        %s175 = smul.addr %s174, 8
        %s176 = scalar_lea.vmem %s0, %s175
      $region28: #{tpu_custom_call.1} parent=23 // pred_fallthru
        _
    $region24: #{tpu_custom_call.1} parent=5 // pred_fallthru
      _
    %p177 = scmp.le.s32.totalorder 1, %s9
    %p178 = scmp.lt.s32.totalorder %s9, 17
    %p179 = pnand %p177, %p178
    %p180 = pneg %p179
    // Predicated region
    $region29: #{tpu_custom_call.1} parent=5 // pred_check
      _
    $region30: #{tpu_custom_call.1} parent=5 // pred_check_branch
      %182 = sbr.rel (%p179) target = $region32
    $region31: #{tpu_custom_call.1} parent=5 // pred_region
      %s183 = ssub.s32 %s9, 1
      %p184 = scmp.lt.s32.totalorder %s19, 1
      %s185 = scalar_select %p184, %s19, 1
      %p186 = scmp.lt.s32.totalorder %s20, 7
      %s187 = scalar_select %p186, %s20, 7
      %p188 = scmp.lt.s32.totalorder %s21, 0
      %s189 = scalar_select %p188, %s21, 0
      %s190 = smul.addr %s187, 83
      %s191 = sadd.s32 %s189, %s190
      %s192 = smul.addr %s185, 664
      %s193 = sadd.s32 %s191, %s192
      %s194 = smul.addr %s193, 8
      %s195 = scalar_lea.vmem %s0, %s194
      %p196 = pneg %p58
      %p197 = pneg %p55
      %p198 = scmp.lt.s32.totalorder %s21, 0
      %s199 = scalar_select %p198, %s21, 0
      %s200 = smul.addr %s199, 4
      %s201 = scalar_lea.vmem %s1, %s200
      %p202 = pneg %p84
      %p203 = pneg %p81
      %p204 = pneg %p105
      %p205 = pneg %p102
      %p206 = pneg %p133
      %p207 = pneg %p130
      %s208 = smul.u32 8, %s20
      %p209 = scmp.lt.s32.totalorder %s19, 1
      %s210 = scalar_select %p209, %s19, 1
      %p211 = scmp.lt.s32.totalorder %s208, 63
      %s212 = scalar_select %p211, %s208, 63
      %s213 = smul.addr %s212, 8
      %s214 = smul.addr %s210, 512
      %s215 = sadd.s32 %s213, %s214
      %s216 = smul.addr %s215, 8
      %s217 = scalar_lea.vmem %s3, %s216
      %p218 = scmp.lt.s32.totalorder %s19, 1
      %s219 = scalar_select %p218, %s19, 1
      %p220 = scmp.lt.s32.totalorder %s20, 7
      %s221 = scalar_select %p220, %s20, 7
      %p222 = scmp.lt.s32.totalorder %s21, 0
      %s223 = scalar_select %p222, %s21, 0
      %s224 = smul.addr %s221, 83
      %s225 = sadd.s32 %s223, %s224
      %s226 = smul.addr %s219, 664
      %s227 = sadd.s32 %s225, %s226
      %s228 = smul.addr %s227, 8
      %s229 = scalar_lea.vmem %s0, %s228
      %p230 = scmp.lt.s32.totalorder %s21, 0
      %s231 = scalar_select %p230, %s21, 0
      %s232 = smul.addr %s231, 4
      %s233 = scalar_lea.vmem %s1, %s232
      %s234 = smul.u32 8, %s20
      %p235 = scmp.lt.s32.totalorder %s19, 1
      %s236 = scalar_select %p235, %s19, 1
      %p237 = scmp.lt.s32.totalorder %s234, 63
      %s238 = scalar_select %p237, %s234, 63
      %s239 = smul.addr %s238, 8
      %s240 = smul.addr %s236, 512
      %s241 = sadd.s32 %s239, %s240
      %s242 = smul.addr %s241, 8
      %s243 = scalar_lea.vmem %s3, %s242
      %s244 = smul.u32 8, %s20
      %p245 = scmp.eq.s32.totalorder %s21, 0
      // Predicated region
      $region33: #{tpu_custom_call.1} parent=31 // pred_check
        %p246 = pneg %p245
      $region34: #{tpu_custom_call.1} parent=31 // pred_check_branch
        %248 = sbr.rel (%p246) target = $region36
      $region35: #{tpu_custom_call.1} parent=31 // pred_region
        %vm249 = vcmask 64512
        %250 = vst.msk [vmem:[#allocation2] sm:$0xff] %vm249, 0.0
        %251 = vst.msk [vmem:[#allocation2 + $0x8] sm:$0xff] %vm249, 0.0
        %252 = vst.msk [vmem:[#allocation2 + $0x10] sm:$0xff] %vm249, 0.0
        %253 = vst.msk [vmem:[#allocation2 + $0x18] sm:$0xff] %vm249, 0.0
        %254 = vst.msk [vmem:[#allocation2 + $0x20] sm:$0xff] %vm249, 0.0
        %255 = vst.msk [vmem:[#allocation2 + $0x28] sm:$0xff] %vm249, 0.0
        %256 = vst.msk [vmem:[#allocation2 + $0x30] sm:$0xff] %vm249, 0.0
        %257 = vst.msk [vmem:[#allocation2 + $0x38] sm:$0xff] %vm249, 0.0
        %258 = vst.msk [vmem:[#allocation2 + $0x40] sm:$0xff] %vm249, 0.0
        %259 = vst.msk [vmem:[#allocation2 + $0x48] sm:$0xff] %vm249, 0.0
        %260 = vst.msk [vmem:[#allocation2 + $0x50] sm:$0xff] %vm249, 0.0
        %261 = vst.msk [vmem:[#allocation2 + $0x58] sm:$0xff] %vm249, 0.0
        %262 = vst.msk [vmem:[#allocation2 + $0x60] sm:$0xff] %vm249, 0.0
        %263 = vst.msk [vmem:[#allocation2 + $0x68] sm:$0xff] %vm249, 0.0
        %264 = vst.msk [vmem:[#allocation2 + $0x70] sm:$0xff] %vm249, 0.0
        %265 = vst.msk [vmem:[#allocation2 + $0x78] sm:$0xff] %vm249, 0.0
        %266 = vst.msk [vmem:[#allocation2 + $0x80] sm:$0xff] %vm249, 0.0
        %267 = vst.msk [vmem:[#allocation2 + $0x88] sm:$0xff] %vm249, 0.0
        %268 = vst.msk [vmem:[#allocation2 + $0x90] sm:$0xff] %vm249, 0.0
        %269 = vst.msk [vmem:[#allocation2 + $0x98] sm:$0xff] %vm249, 0.0
        %270 = vst.msk [vmem:[#allocation2 + $0xa0] sm:$0xff] %vm249, 0.0
        %271 = vst.msk [vmem:[#allocation2 + $0xa8] sm:$0xff] %vm249, 0.0
        %272 = vst.msk [vmem:[#allocation2 + $0xb0] sm:$0xff] %vm249, 0.0
        %273 = vst.msk [vmem:[#allocation2 + $0xb8] sm:$0xff] %vm249, 0.0
        %274 = vst.msk [vmem:[#allocation2 + $0xc0] sm:$0xff] %vm249, 0.0
        %275 = vst.msk [vmem:[#allocation2 + $0xc8] sm:$0xff] %vm249, 0.0
        %276 = vst.msk [vmem:[#allocation2 + $0xd0] sm:$0xff] %vm249, 0.0
        %277 = vst.msk [vmem:[#allocation2 + $0xd8] sm:$0xff] %vm249, 0.0
        %278 = vst.msk [vmem:[#allocation2 + $0xe0] sm:$0xff] %vm249, 0.0
        %279 = vst.msk [vmem:[#allocation2 + $0xe8] sm:$0xff] %vm249, 0.0
        %280 = vst.msk [vmem:[#allocation2 + $0xf0] sm:$0xff] %vm249, 0.0
        %281 = vst.msk [vmem:[#allocation2 + $0xf8] sm:$0xff] %vm249, 0.0
        %282 = vst.msk [vmem:[#allocation2 + $0x100] sm:$0xff] %vm249, 0.0
        %283 = vst.msk [vmem:[#allocation2 + $0x108] sm:$0xff] %vm249, 0.0
        %284 = vst.msk [vmem:[#allocation2 + $0x110] sm:$0xff] %vm249, 0.0
        %285 = vst.msk [vmem:[#allocation2 + $0x118] sm:$0xff] %vm249, 0.0
        %286 = vst.msk [vmem:[#allocation2 + $0x120] sm:$0xff] %vm249, 0.0
        %287 = vst.msk [vmem:[#allocation2 + $0x128] sm:$0xff] %vm249, 0.0
        %288 = vst.msk [vmem:[#allocation2 + $0x130] sm:$0xff] %vm249, 0.0
        %289 = vst.msk [vmem:[#allocation2 + $0x138] sm:$0xff] %vm249, 0.0
        %290 = vst.msk [vmem:[#allocation2 + $0x140] sm:$0xff] %vm249, 0.0
        %291 = vst.msk [vmem:[#allocation2 + $0x148] sm:$0xff] %vm249, 0.0
        %292 = vst.msk [vmem:[#allocation2 + $0x150] sm:$0xff] %vm249, 0.0
        %293 = vst.msk [vmem:[#allocation2 + $0x158] sm:$0xff] %vm249, 0.0
        %294 = vst.msk [vmem:[#allocation2 + $0x160] sm:$0xff] %vm249, 0.0
        %295 = vst.msk [vmem:[#allocation2 + $0x168] sm:$0xff] %vm249, 0.0
        %296 = vst.msk [vmem:[#allocation2 + $0x170] sm:$0xff] %vm249, 0.0
        %297 = vst.msk [vmem:[#allocation2 + $0x178] sm:$0xff] %vm249, 0.0
        %298 = vst.msk [vmem:[#allocation2 + $0x180] sm:$0xff] %vm249, 0.0
        %299 = vst.msk [vmem:[#allocation2 + $0x188] sm:$0xff] %vm249, 0.0
        %300 = vst.msk [vmem:[#allocation2 + $0x190] sm:$0xff] %vm249, 0.0
        %301 = vst.msk [vmem:[#allocation2 + $0x198] sm:$0xff] %vm249, 0.0
        %302 = vst.msk [vmem:[#allocation2 + $0x1a0] sm:$0xff] %vm249, 0.0
        %303 = vst.msk [vmem:[#allocation2 + $0x1a8] sm:$0xff] %vm249, 0.0
        %304 = vst.msk [vmem:[#allocation2 + $0x1b0] sm:$0xff] %vm249, 0.0
        %305 = vst.msk [vmem:[#allocation2 + $0x1b8] sm:$0xff] %vm249, 0.0
        %306 = vst.msk [vmem:[#allocation2 + $0x1c0] sm:$0xff] %vm249, 0.0
        %307 = vst.msk [vmem:[#allocation2 + $0x1c8] sm:$0xff] %vm249, 0.0
        %308 = vst.msk [vmem:[#allocation2 + $0x1d0] sm:$0xff] %vm249, 0.0
        %309 = vst.msk [vmem:[#allocation2 + $0x1d8] sm:$0xff] %vm249, 0.0
        %310 = vst.msk [vmem:[#allocation2 + $0x1e0] sm:$0xff] %vm249, 0.0
        %311 = vst.msk [vmem:[#allocation2 + $0x1e8] sm:$0xff] %vm249, 0.0
        %312 = vst.msk [vmem:[#allocation2 + $0x1f0] sm:$0xff] %vm249, 0.0
        %313 = vst.msk [vmem:[#allocation2 + $0x1f8] sm:$0xff] %vm249, 0.0
        %314 = vst.msk [vmem:[#allocation2 + $0x200] sm:$0xff] %vm249, 0.0
        %315 = vst.msk [vmem:[#allocation2 + $0x208] sm:$0xff] %vm249, 0.0
        %316 = vst.msk [vmem:[#allocation2 + $0x210] sm:$0xff] %vm249, 0.0
        %317 = vst.msk [vmem:[#allocation2 + $0x218] sm:$0xff] %vm249, 0.0
        %318 = vst.msk [vmem:[#allocation2 + $0x220] sm:$0xff] %vm249, 0.0
        %319 = vst.msk [vmem:[#allocation2 + $0x228] sm:$0xff] %vm249, 0.0
        %320 = vst.msk [vmem:[#allocation2 + $0x230] sm:$0xff] %vm249, 0.0
        %321 = vst.msk [vmem:[#allocation2 + $0x238] sm:$0xff] %vm249, 0.0
        %322 = vst.msk [vmem:[#allocation2 + $0x240] sm:$0xff] %vm249, 0.0
        %323 = vst.msk [vmem:[#allocation2 + $0x248] sm:$0xff] %vm249, 0.0
        %324 = vst.msk [vmem:[#allocation2 + $0x250] sm:$0xff] %vm249, 0.0
        %325 = vst.msk [vmem:[#allocation2 + $0x258] sm:$0xff] %vm249, 0.0
        %326 = vst.msk [vmem:[#allocation2 + $0x260] sm:$0xff] %vm249, 0.0
        %327 = vst.msk [vmem:[#allocation2 + $0x268] sm:$0xff] %vm249, 0.0
        %328 = vst.msk [vmem:[#allocation2 + $0x270] sm:$0xff] %vm249, 0.0
        %329 = vst.msk [vmem:[#allocation2 + $0x278] sm:$0xff] %vm249, 0.0
        %330 = vst.msk [vmem:[#allocation2 + $0x280] sm:$0xff] %vm249, 0.0
        %331 = vst.msk [vmem:[#allocation2 + $0x288] sm:$0xff] %vm249, 0.0
        %332 = vst.msk [vmem:[#allocation2 + $0x290] sm:$0xff] %vm249, 0.0
        %333 = vst.msk [vmem:[#allocation2 + $0x298] sm:$0xff] %vm249, 0.0
        %334 = vst.msk [vmem:[#allocation2 + $0x2a0] sm:$0xff] %vm249, 0.0
        %335 = vst.msk [vmem:[#allocation2 + $0x2a8] sm:$0xff] %vm249, 0.0
        %336 = vst.msk [vmem:[#allocation2 + $0x2b0] sm:$0xff] %vm249, 0.0
        %337 = vst.msk [vmem:[#allocation2 + $0x2b8] sm:$0xff] %vm249, 0.0
        %338 = vst.msk [vmem:[#allocation2 + $0x2c0] sm:$0xff] %vm249, 0.0
        %339 = vst.msk [vmem:[#allocation2 + $0x2c8] sm:$0xff] %vm249, 0.0
        %340 = vst.msk [vmem:[#allocation2 + $0x2d0] sm:$0xff] %vm249, 0.0
        %341 = vst.msk [vmem:[#allocation2 + $0x2d8] sm:$0xff] %vm249, 0.0
        %342 = vst.msk [vmem:[#allocation2 + $0x2e0] sm:$0xff] %vm249, 0.0
        %343 = vst.msk [vmem:[#allocation2 + $0x2e8] sm:$0xff] %vm249, 0.0
        %344 = vst.msk [vmem:[#allocation2 + $0x2f0] sm:$0xff] %vm249, 0.0
        %345 = vst.msk [vmem:[#allocation2 + $0x2f8] sm:$0xff] %vm249, 0.0
        %346 = vst.msk [vmem:[#allocation2 + $0x300] sm:$0xff] %vm249, 0.0
        %347 = vst.msk [vmem:[#allocation2 + $0x308] sm:$0xff] %vm249, 0.0
        %348 = vst.msk [vmem:[#allocation2 + $0x310] sm:$0xff] %vm249, 0.0
        %349 = vst.msk [vmem:[#allocation2 + $0x318] sm:$0xff] %vm249, 0.0
        %350 = vst.msk [vmem:[#allocation2 + $0x320] sm:$0xff] %vm249, 0.0
        %351 = vst.msk [vmem:[#allocation2 + $0x328] sm:$0xff] %vm249, 0.0
        %352 = vst.msk [vmem:[#allocation2 + $0x330] sm:$0xff] %vm249, 0.0
        %353 = vst.msk [vmem:[#allocation2 + $0x338] sm:$0xff] %vm249, 0.0
        %354 = vst.msk [vmem:[#allocation2 + $0x340] sm:$0xff] %vm249, 0.0
        %355 = vst.msk [vmem:[#allocation2 + $0x348] sm:$0xff] %vm249, 0.0
        %356 = vst.msk [vmem:[#allocation2 + $0x350] sm:$0xff] %vm249, 0.0
        %357 = vst.msk [vmem:[#allocation2 + $0x358] sm:$0xff] %vm249, 0.0
        %358 = vst.msk [vmem:[#allocation2 + $0x360] sm:$0xff] %vm249, 0.0
        %359 = vst.msk [vmem:[#allocation2 + $0x368] sm:$0xff] %vm249, 0.0
        %360 = vst.msk [vmem:[#allocation2 + $0x370] sm:$0xff] %vm249, 0.0
        %361 = vst.msk [vmem:[#allocation2 + $0x378] sm:$0xff] %vm249, 0.0
        %362 = vst.msk [vmem:[#allocation2 + $0x380] sm:$0xff] %vm249, 0.0
        %363 = vst.msk [vmem:[#allocation2 + $0x388] sm:$0xff] %vm249, 0.0
        %364 = vst.msk [vmem:[#allocation2 + $0x390] sm:$0xff] %vm249, 0.0
        %365 = vst.msk [vmem:[#allocation2 + $0x398] sm:$0xff] %vm249, 0.0
        %366 = vst.msk [vmem:[#allocation2 + $0x3a0] sm:$0xff] %vm249, 0.0
        %367 = vst.msk [vmem:[#allocation2 + $0x3a8] sm:$0xff] %vm249, 0.0
        %368 = vst.msk [vmem:[#allocation2 + $0x3b0] sm:$0xff] %vm249, 0.0
        %369 = vst.msk [vmem:[#allocation2 + $0x3b8] sm:$0xff] %vm249, 0.0
        %370 = vst.msk [vmem:[#allocation2 + $0x3c0] sm:$0xff] %vm249, 0.0
        %371 = vst.msk [vmem:[#allocation2 + $0x3c8] sm:$0xff] %vm249, 0.0
        %372 = vst.msk [vmem:[#allocation2 + $0x3d0] sm:$0xff] %vm249, 0.0
        %373 = vst.msk [vmem:[#allocation2 + $0x3d8] sm:$0xff] %vm249, 0.0
        %374 = vst.msk [vmem:[#allocation2 + $0x3e0] sm:$0xff] %vm249, 0.0
        %375 = vst.msk [vmem:[#allocation2 + $0x3e8] sm:$0xff] %vm249, 0.0
        %376 = vst.msk [vmem:[#allocation2 + $0x3f0] sm:$0xff] %vm249, 0.0
        %377 = vst.msk [vmem:[#allocation2 + $0x3f8] sm:$0xff] %vm249, 0.0
        %378 = vst.msk [vmem:[#allocation2 + $0x400] sm:$0xff] %vm249, 0.0
        %379 = vst.msk [vmem:[#allocation2 + $0x408] sm:$0xff] %vm249, 0.0
        %380 = vst.msk [vmem:[#allocation2 + $0x410] sm:$0xff] %vm249, 0.0
        %381 = vst.msk [vmem:[#allocation2 + $0x418] sm:$0xff] %vm249, 0.0
        %382 = vst.msk [vmem:[#allocation2 + $0x420] sm:$0xff] %vm249, 0.0
        %383 = vst.msk [vmem:[#allocation2 + $0x428] sm:$0xff] %vm249, 0.0
        %384 = vst.msk [vmem:[#allocation2 + $0x430] sm:$0xff] %vm249, 0.0
        %385 = vst.msk [vmem:[#allocation2 + $0x438] sm:$0xff] %vm249, 0.0
        %386 = vst.msk [vmem:[#allocation2 + $0x440] sm:$0xff] %vm249, 0.0
        %387 = vst.msk [vmem:[#allocation2 + $0x448] sm:$0xff] %vm249, 0.0
        %388 = vst.msk [vmem:[#allocation2 + $0x450] sm:$0xff] %vm249, 0.0
        %389 = vst.msk [vmem:[#allocation2 + $0x458] sm:$0xff] %vm249, 0.0
        %390 = vst.msk [vmem:[#allocation2 + $0x460] sm:$0xff] %vm249, 0.0
        %391 = vst.msk [vmem:[#allocation2 + $0x468] sm:$0xff] %vm249, 0.0
        %392 = vst.msk [vmem:[#allocation2 + $0x470] sm:$0xff] %vm249, 0.0
        %393 = vst.msk [vmem:[#allocation2 + $0x478] sm:$0xff] %vm249, 0.0
        %394 = vst.msk [vmem:[#allocation2 + $0x480] sm:$0xff] %vm249, 0.0
        %395 = vst.msk [vmem:[#allocation2 + $0x488] sm:$0xff] %vm249, 0.0
        %396 = vst.msk [vmem:[#allocation2 + $0x490] sm:$0xff] %vm249, 0.0
        %397 = vst.msk [vmem:[#allocation2 + $0x498] sm:$0xff] %vm249, 0.0
        %398 = vst.msk [vmem:[#allocation2 + $0x4a0] sm:$0xff] %vm249, 0.0
        %399 = vst.msk [vmem:[#allocation2 + $0x4a8] sm:$0xff] %vm249, 0.0
        %400 = vst.msk [vmem:[#allocation2 + $0x4b0] sm:$0xff] %vm249, 0.0
        %401 = vst.msk [vmem:[#allocation2 + $0x4b8] sm:$0xff] %vm249, 0.0
        %402 = vst.msk [vmem:[#allocation2 + $0x4c0] sm:$0xff] %vm249, 0.0
        %403 = vst.msk [vmem:[#allocation2 + $0x4c8] sm:$0xff] %vm249, 0.0
        %404 = vst.msk [vmem:[#allocation2 + $0x4d0] sm:$0xff] %vm249, 0.0
        %405 = vst.msk [vmem:[#allocation2 + $0x4d8] sm:$0xff] %vm249, 0.0
        %406 = vst.msk [vmem:[#allocation2 + $0x4e0] sm:$0xff] %vm249, 0.0
        %407 = vst.msk [vmem:[#allocation2 + $0x4e8] sm:$0xff] %vm249, 0.0
        %408 = vst.msk [vmem:[#allocation2 + $0x4f0] sm:$0xff] %vm249, 0.0
        %409 = vst.msk [vmem:[#allocation2 + $0x4f8] sm:$0xff] %vm249, 0.0
        %410 = vst.msk [vmem:[#allocation2 + $0x500] sm:$0xff] %vm249, 0.0
        %411 = vst.msk [vmem:[#allocation2 + $0x508] sm:$0xff] %vm249, 0.0
        %412 = vst.msk [vmem:[#allocation2 + $0x510] sm:$0xff] %vm249, 0.0
        %413 = vst.msk [vmem:[#allocation2 + $0x518] sm:$0xff] %vm249, 0.0
        %414 = vst.msk [vmem:[#allocation2 + $0x520] sm:$0xff] %vm249, 0.0
        %415 = vst.msk [vmem:[#allocation2 + $0x528] sm:$0xff] %vm249, 0.0
        %416 = vst.msk [vmem:[#allocation2 + $0x530] sm:$0xff] %vm249, 0.0
        %417 = vst.msk [vmem:[#allocation2 + $0x538] sm:$0xff] %vm249, 0.0
        %418 = vst.msk [vmem:[#allocation2 + $0x540] sm:$0xff] %vm249, 0.0
        %419 = vst.msk [vmem:[#allocation2 + $0x548] sm:$0xff] %vm249, 0.0
        %420 = vst.msk [vmem:[#allocation2 + $0x550] sm:$0xff] %vm249, 0.0
        %421 = vst.msk [vmem:[#allocation2 + $0x558] sm:$0xff] %vm249, 0.0
        %422 = vst.msk [vmem:[#allocation2 + $0x560] sm:$0xff] %vm249, 0.0
        %423 = vst.msk [vmem:[#allocation2 + $0x568] sm:$0xff] %vm249, 0.0
        %424 = vst.msk [vmem:[#allocation2 + $0x570] sm:$0xff] %vm249, 0.0
        %425 = vst.msk [vmem:[#allocation2 + $0x578] sm:$0xff] %vm249, 0.0
        %426 = vst.msk [vmem:[#allocation2 + $0x580] sm:$0xff] %vm249, 0.0
        %427 = vst.msk [vmem:[#allocation2 + $0x588] sm:$0xff] %vm249, 0.0
        %428 = vst.msk [vmem:[#allocation2 + $0x590] sm:$0xff] %vm249, 0.0
        %429 = vst.msk [vmem:[#allocation2 + $0x598] sm:$0xff] %vm249, 0.0
        %430 = vst.msk [vmem:[#allocation2 + $0x5a0] sm:$0xff] %vm249, 0.0
        %431 = vst.msk [vmem:[#allocation2 + $0x5a8] sm:$0xff] %vm249, 0.0
        %432 = vst.msk [vmem:[#allocation2 + $0x5b0] sm:$0xff] %vm249, 0.0
        %433 = vst.msk [vmem:[#allocation2 + $0x5b8] sm:$0xff] %vm249, 0.0
        %434 = vst.msk [vmem:[#allocation2 + $0x5c0] sm:$0xff] %vm249, 0.0
        %435 = vst.msk [vmem:[#allocation2 + $0x5c8] sm:$0xff] %vm249, 0.0
        %436 = vst.msk [vmem:[#allocation2 + $0x5d0] sm:$0xff] %vm249, 0.0
        %437 = vst.msk [vmem:[#allocation2 + $0x5d8] sm:$0xff] %vm249, 0.0
        %438 = vst.msk [vmem:[#allocation2 + $0x5e0] sm:$0xff] %vm249, 0.0
        %439 = vst.msk [vmem:[#allocation2 + $0x5e8] sm:$0xff] %vm249, 0.0
        %440 = vst.msk [vmem:[#allocation2 + $0x5f0] sm:$0xff] %vm249, 0.0
        %441 = vst.msk [vmem:[#allocation2 + $0x5f8] sm:$0xff] %vm249, 0.0
        %442 = vst.msk [vmem:[#allocation2 + $0x600] sm:$0xff] %vm249, 0.0
        %443 = vst.msk [vmem:[#allocation2 + $0x608] sm:$0xff] %vm249, 0.0
        %444 = vst.msk [vmem:[#allocation2 + $0x610] sm:$0xff] %vm249, 0.0
        %445 = vst.msk [vmem:[#allocation2 + $0x618] sm:$0xff] %vm249, 0.0
        %446 = vst.msk [vmem:[#allocation2 + $0x620] sm:$0xff] %vm249, 0.0
        %447 = vst.msk [vmem:[#allocation2 + $0x628] sm:$0xff] %vm249, 0.0
      $region36: #{tpu_custom_call.1} parent=31 // pred_fallthru
        _
      %v448 = vld [vmem:[%s229] sm:$0xff]
      %v449 = vld [vmem:[%s229 + $0x8] sm:$0xff]
      %v450 = vld [vmem:[%s229 + $0x10] sm:$0xff]
      %v451 = vld [vmem:[%s229 + $0x18] sm:$0xff]
      %v452 = vld [vmem:[%s229 + $0x20] sm:$0xff]
      %v453 = vld [vmem:[%s229 + $0x28] sm:$0xff]
      %v454 = vld [vmem:[%s229 + $0x30] sm:$0xff]
      %v455 = vld [vmem:[%s229 + $0x38] sm:$0xff]
      %v456 = vld [vmem:[%s229 + $0x40] sm:$0xff]
      %v457 = vld [vmem:[%s229 + $0x48] sm:$0xff]
      %v458 = vld [vmem:[%s229 + $0x50] sm:$0xff]
      %v459 = vld [vmem:[%s229 + $0x58] sm:$0xff]
      %v460 = vld [vmem:[%s229 + $0x60] sm:$0xff]
      %v461 = vld [vmem:[%s229 + $0x68] sm:$0xff]
      %v462 = vld [vmem:[%s229 + $0x70] sm:$0xff]
      %v463 = vld [vmem:[%s229 + $0x78] sm:$0xff]
      %v464 = vld [vmem:[%s229 + $0x80] sm:$0xff]
      %v465 = vld [vmem:[%s229 + $0x88] sm:$0xff]
      %v466 = vld [vmem:[%s229 + $0x90] sm:$0xff]
      %v467 = vld [vmem:[%s229 + $0x98] sm:$0xff]
      %v468 = vld [vmem:[%s229 + $0xa0] sm:$0xff]
      %v469 = vld [vmem:[%s229 + $0xa8] sm:$0xff]
      %v470 = vld [vmem:[%s229 + $0xb0] sm:$0xff]
      %v471 = vld [vmem:[%s229 + $0xb8] sm:$0xff]
      %v472 = vld [vmem:[%s229 + $0xc0] sm:$0xff]
      %v473 = vld [vmem:[%s229 + $0xc8] sm:$0xff]
      %v474 = vld [vmem:[%s229 + $0xd0] sm:$0xff]
      %v475 = vld [vmem:[%s229 + $0xd8] sm:$0xff]
      %v476 = vld [vmem:[%s229 + $0xe0] sm:$0xff]
      %v477 = vld [vmem:[%s229 + $0xe8] sm:$0xff]
      %v478 = vld [vmem:[%s229 + $0xf0] sm:$0xff]
      %v479 = vld [vmem:[%s229 + $0xf8] sm:$0xff]
      %v480 = vld [vmem:[%s229 + $0x100] sm:$0xff]
      %v481 = vld [vmem:[%s229 + $0x108] sm:$0xff]
      %v482 = vld [vmem:[%s229 + $0x110] sm:$0xff]
      %v483 = vld [vmem:[%s229 + $0x118] sm:$0xff]
      %v484 = vld [vmem:[%s229 + $0x120] sm:$0xff]
      %v485 = vld [vmem:[%s229 + $0x128] sm:$0xff]
      %v486 = vld [vmem:[%s229 + $0x130] sm:$0xff]
      %v487 = vld [vmem:[%s229 + $0x138] sm:$0xff]
      %v488 = vld [vmem:[%s229 + $0x140] sm:$0xff]
      %v489 = vld [vmem:[%s229 + $0x148] sm:$0xff]
      %v490 = vld [vmem:[%s229 + $0x150] sm:$0xff]
      %v491 = vld [vmem:[%s229 + $0x158] sm:$0xff]
      %v492 = vld [vmem:[%s229 + $0x160] sm:$0xff]
      %v493 = vld [vmem:[%s229 + $0x168] sm:$0xff]
      %v494 = vld [vmem:[%s229 + $0x170] sm:$0xff]
      %v495 = vld [vmem:[%s229 + $0x178] sm:$0xff]
      %v496 = vld [vmem:[%s229 + $0x180] sm:$0xff]
      %v497 = vld [vmem:[%s229 + $0x188] sm:$0xff]
      %v498 = vld [vmem:[%s229 + $0x190] sm:$0xff]
      %v499 = vld [vmem:[%s229 + $0x198] sm:$0xff]
      %v500 = vld [vmem:[%s229 + $0x1a0] sm:$0xff]
      %v501 = vld [vmem:[%s229 + $0x1a8] sm:$0xff]
      %v502 = vld [vmem:[%s229 + $0x1b0] sm:$0xff]
      %v503 = vld [vmem:[%s229 + $0x1b8] sm:$0xff]
      %v504 = vld [vmem:[%s229 + $0x1c0] sm:$0xff]
      %v505 = vld [vmem:[%s229 + $0x1c8] sm:$0xff]
      %v506 = vld [vmem:[%s229 + $0x1d0] sm:$0xff]
      %v507 = vld [vmem:[%s229 + $0x1d8] sm:$0xff]
      %v508 = vld [vmem:[%s229 + $0x1e0] sm:$0xff]
      %v509 = vld [vmem:[%s229 + $0x1e8] sm:$0xff]
      %v510 = vld [vmem:[%s229 + $0x1f0] sm:$0xff]
      %v511 = vld [vmem:[%s229 + $0x1f8] sm:$0xff]
      %v512 = vld [vmem:[%s229 + $0x200] sm:$0xff]
      %v513 = vld [vmem:[%s229 + $0x208] sm:$0xff]
      %v514 = vld [vmem:[#allocation2] sm:$0xff]
      %v515 = vld [vmem:[#allocation2 + $0x8] sm:$0xff]
      %v516 = vld [vmem:[#allocation2 + $0x10] sm:$0xff]
      %v517 = vld [vmem:[#allocation2 + $0x18] sm:$0xff]
      %v518 = vld [vmem:[#allocation2 + $0x20] sm:$0xff]
      %v519 = vld [vmem:[#allocation2 + $0x28] sm:$0xff]
      %v520 = vld [vmem:[#allocation2 + $0x30] sm:$0xff]
      %v521 = vld [vmem:[#allocation2 + $0x38] sm:$0xff]
      %v522 = vld [vmem:[#allocation2 + $0x40] sm:$0xff]
      %v523 = vld [vmem:[#allocation2 + $0x48] sm:$0xff]
      %v524 = vld [vmem:[#allocation2 + $0x50] sm:$0xff]
      %v525 = vld [vmem:[#allocation2 + $0x58] sm:$0xff]
      %v526 = vld [vmem:[#allocation2 + $0x60] sm:$0xff]
      %v527 = vld [vmem:[#allocation2 + $0x68] sm:$0xff]
      %v528 = vld [vmem:[#allocation2 + $0x70] sm:$0xff]
      %v529 = vld [vmem:[#allocation2 + $0x78] sm:$0xff]
      %v530 = vld [vmem:[#allocation2 + $0x80] sm:$0xff]
      %v531 = vld [vmem:[#allocation2 + $0x88] sm:$0xff]
      %v532 = vld [vmem:[#allocation2 + $0x90] sm:$0xff]
      %v533 = vld [vmem:[#allocation2 + $0x98] sm:$0xff]
      %v534 = vld [vmem:[#allocation2 + $0xa0] sm:$0xff]
      %v535 = vld [vmem:[#allocation2 + $0xa8] sm:$0xff]
      %v536 = vld [vmem:[#allocation2 + $0xb0] sm:$0xff]
      %v537 = vld [vmem:[#allocation2 + $0xb8] sm:$0xff]
      %v538 = vld [vmem:[#allocation2 + $0xc0] sm:$0xff]
      %v539 = vld [vmem:[#allocation2 + $0xc8] sm:$0xff]
      %v540 = vld [vmem:[#allocation2 + $0xd0] sm:$0xff]
      %v541 = vld [vmem:[#allocation2 + $0xd8] sm:$0xff]
      %v542 = vld [vmem:[#allocation2 + $0xe0] sm:$0xff]
      %v543 = vld [vmem:[#allocation2 + $0xe8] sm:$0xff]
      %v544 = vld [vmem:[#allocation2 + $0xf0] sm:$0xff]
      %v545 = vld [vmem:[#allocation2 + $0xf8] sm:$0xff]
      %v546 = vld [vmem:[#allocation2 + $0x100] sm:$0xff]
      %v547 = vld [vmem:[#allocation2 + $0x108] sm:$0xff]
      %v548 = vld [vmem:[#allocation2 + $0x110] sm:$0xff]
      %v549 = vld [vmem:[#allocation2 + $0x118] sm:$0xff]
      %v550 = vld [vmem:[#allocation2 + $0x120] sm:$0xff]
      %v551 = vld [vmem:[#allocation2 + $0x128] sm:$0xff]
      %v552 = vld [vmem:[#allocation2 + $0x130] sm:$0xff]
      %v553 = vld [vmem:[#allocation2 + $0x138] sm:$0xff]
      %v554 = vld [vmem:[#allocation2 + $0x140] sm:$0xff]
      %v555 = vld [vmem:[#allocation2 + $0x148] sm:$0xff]
      %v556 = vld [vmem:[#allocation2 + $0x150] sm:$0xff]
      %v557 = vld [vmem:[#allocation2 + $0x158] sm:$0xff]
      %v558 = vld [vmem:[#allocation2 + $0x160] sm:$0xff]
      %v559 = vld [vmem:[#allocation2 + $0x168] sm:$0xff]
      %v560 = vld [vmem:[#allocation2 + $0x170] sm:$0xff]
      %v561 = vld [vmem:[#allocation2 + $0x178] sm:$0xff]
      %v562 = vld [vmem:[#allocation2 + $0x180] sm:$0xff]
      %v563 = vld [vmem:[#allocation2 + $0x188] sm:$0xff]
      %v564 = vld [vmem:[#allocation2 + $0x190] sm:$0xff]
      %v565 = vld [vmem:[#allocation2 + $0x198] sm:$0xff]
      %v566 = vld [vmem:[#allocation2 + $0x1a0] sm:$0xff]
      %v567 = vld [vmem:[#allocation2 + $0x1a8] sm:$0xff]
      %v568 = vld [vmem:[#allocation2 + $0x1b0] sm:$0xff]
      %v569 = vld [vmem:[#allocation2 + $0x1b8] sm:$0xff]
      %v570 = vld [vmem:[#allocation2 + $0x1c0] sm:$0xff]
      %v571 = vld [vmem:[#allocation2 + $0x1c8] sm:$0xff]
      %v572 = vld [vmem:[#allocation2 + $0x1d0] sm:$0xff]
      %v573 = vld [vmem:[#allocation2 + $0x1d8] sm:$0xff]
      %v574 = vld [vmem:[#allocation2 + $0x1e0] sm:$0xff]
      %v575 = vld [vmem:[#allocation2 + $0x1e8] sm:$0xff]
      %v576 = vld [vmem:[#allocation2 + $0x1f0] sm:$0xff]
      %v577 = vld [vmem:[#allocation2 + $0x1f8] sm:$0xff]
      %v578 = vld [vmem:[#allocation2 + $0x200] sm:$0xff]
      %v579 = vld [vmem:[#allocation2 + $0x208] sm:$0xff]
      %v580 = vld [vmem:[%s233] sm:$0x7]
      %vm581 = vcmask 23552
      %v583 = vsel %vm581, %v448, 0
      %v586 = vsel %vm581, %v449, 0
      %v589 = vsel %vm581, %v450, 0
      %v592 = vsel %vm581, %v451, 0
      %v595 = vsel %vm581, %v452, 0
      %v598 = vsel %vm581, %v453, 0
      %v601 = vsel %vm581, %v454, 0
      %v604 = vsel %vm581, %v455, 0
      %v607 = vsel %vm581, %v456, 0
      %v610 = vsel %vm581, %v457, 0
      %v613 = vsel %vm581, %v458, 0
      %v616 = vsel %vm581, %v459, 0
      %v619 = vsel %vm581, %v460, 0
      %v622 = vsel %vm581, %v461, 0
      %v625 = vsel %vm581, %v462, 0
      %v628 = vsel %vm581, %v463, 0
      %v631 = vsel %vm581, %v464, 0
      %v634 = vsel %vm581, %v465, 0
      %v637 = vsel %vm581, %v466, 0
      %v640 = vsel %vm581, %v467, 0
      %v643 = vsel %vm581, %v468, 0
      %v646 = vsel %vm581, %v469, 0
      %v649 = vsel %vm581, %v470, 0
      %v652 = vsel %vm581, %v471, 0
      %v655 = vsel %vm581, %v472, 0
      %v658 = vsel %vm581, %v473, 0
      %v661 = vsel %vm581, %v474, 0
      %v664 = vsel %vm581, %v475, 0
      %v667 = vsel %vm581, %v476, 0
      %v670 = vsel %vm581, %v477, 0
      %v673 = vsel %vm581, %v478, 0
      %v676 = vsel %vm581, %v479, 0
      %v679 = vsel %vm581, %v480, 0
      %v682 = vsel %vm581, %v481, 0
      %v685 = vsel %vm581, %v482, 0
      %v688 = vsel %vm581, %v483, 0
      %v691 = vsel %vm581, %v484, 0
      %v694 = vsel %vm581, %v485, 0
      %v697 = vsel %vm581, %v486, 0
      %v700 = vsel %vm581, %v487, 0
      %v703 = vsel %vm581, %v488, 0
      %v706 = vsel %vm581, %v489, 0
      %v709 = vsel %vm581, %v490, 0
      %v712 = vsel %vm581, %v491, 0
      %v715 = vsel %vm581, %v492, 0
      %v718 = vsel %vm581, %v493, 0
      %v721 = vsel %vm581, %v494, 0
      %v724 = vsel %vm581, %v495, 0
      %v727 = vsel %vm581, %v496, 0
      %v730 = vsel %vm581, %v497, 0
      %v733 = vsel %vm581, %v498, 0
      %v736 = vsel %vm581, %v499, 0
      %v739 = vsel %vm581, %v500, 0
      %v742 = vsel %vm581, %v501, 0
      %v745 = vsel %vm581, %v502, 0
      %v748 = vsel %vm581, %v503, 0
      %v751 = vsel %vm581, %v504, 0
      %v754 = vsel %vm581, %v505, 0
      %v757 = vsel %vm581, %v506, 0
      %v760 = vsel %vm581, %v507, 0
      %v763 = vsel %vm581, %v508, 0
      %v766 = vsel %vm581, %v509, 0
      %v769 = vsel %vm581, %v510, 0
      %v772 = vsel %vm581, %v511, 0
      %v775 = vsel %vm581, %v512, 0
      %v778 = vsel %vm581, %v513, 0
      %vm780 = vcmask 1042432
      %v782 = vsel %vm780, %v580, 0
      %784 = vmatpush.msra.mxu0 0.0
      %785 = vmatpush.msra.mxu0 0.0
      %786 = vmatpush.msra.mxu0 0.0
      %787 = vmatpush.msra.mxu0 0.0
      %788 = vmatpush.msra.mxu0 0.0
      %789 = vmatpush.msra.mxu0 0.0
      %790 = vmatpush.msra.mxu0 0.0
      %791 = vmatpush.msra.mxu0 0.0
      %792 = vmatpush.msra.mxu0 0.0
      %793 = vmatpush.msra.mxu0 0.0
      %794 = vmatpush.msra.mxu0 0.0
      %795 = vmatpush.msra.mxu0 0.0
      %796 = vmatpush.msra.mxu0 0.0
      %797 = vmatpush.msra.mxu0 0.0
      %798 = vmatpush.msra.mxu0 0.0
      %799 = vmatpush.msra.mxu0 %v782
      %800 = vmatmul.f32.gmra.mxu0 %v583
      %v801 = vpop.f32.mrf.mxu0
      %v802 = vadd.f32 0.0, %v801
      %803 = vmatmul.f32.gmra.mxu0 %v586
      %v804 = vpop.f32.mrf.mxu0
      %v805 = vadd.f32 0.0, %v804
      %806 = vmatmul.f32.gmra.mxu0 %v589
      %v807 = vpop.f32.mrf.mxu0
      %v808 = vadd.f32 0.0, %v807
      %809 = vmatmul.f32.gmra.mxu0 %v592
      %v810 = vpop.f32.mrf.mxu0
      %v811 = vadd.f32 0.0, %v810
      %812 = vmatmul.f32.gmra.mxu0 %v595
      %v813 = vpop.f32.mrf.mxu0
      %v814 = vadd.f32 0.0, %v813
      %815 = vmatmul.f32.gmra.mxu0 %v598
      %v816 = vpop.f32.mrf.mxu0
      %v817 = vadd.f32 0.0, %v816
      %818 = vmatmul.f32.gmra.mxu0 %v601
      %v819 = vpop.f32.mrf.mxu0
      %v820 = vadd.f32 0.0, %v819
      %821 = vmatmul.f32.gmra.mxu0 %v604
      %v822 = vpop.f32.mrf.mxu0
      %v823 = vadd.f32 0.0, %v822
      %824 = vmatmul.f32.gmra.mxu0 %v607
      %v825 = vpop.f32.mrf.mxu0
      %v826 = vadd.f32 0.0, %v825
      %827 = vmatmul.f32.gmra.mxu0 %v610
      %v828 = vpop.f32.mrf.mxu0
      %v829 = vadd.f32 0.0, %v828
      %830 = vmatmul.f32.gmra.mxu0 %v613
      %v831 = vpop.f32.mrf.mxu0
      %v832 = vadd.f32 0.0, %v831
      %833 = vmatmul.f32.gmra.mxu0 %v616
      %v834 = vpop.f32.mrf.mxu0
      %v835 = vadd.f32 0.0, %v834
      %836 = vmatmul.f32.gmra.mxu0 %v619
      %v837 = vpop.f32.mrf.mxu0
      %v838 = vadd.f32 0.0, %v837
      %839 = vmatmul.f32.gmra.mxu0 %v622
      %v840 = vpop.f32.mrf.mxu0
      %v841 = vadd.f32 0.0, %v840
      %842 = vmatmul.f32.gmra.mxu0 %v625
      %v843 = vpop.f32.mrf.mxu0
      %v844 = vadd.f32 0.0, %v843
      %845 = vmatmul.f32.gmra.mxu0 %v628
      %v846 = vpop.f32.mrf.mxu0
      %v847 = vadd.f32 0.0, %v846
      %848 = vmatmul.f32.gmra.mxu0 %v631
      %v849 = vpop.f32.mrf.mxu0
      %v850 = vadd.f32 0.0, %v849
      %851 = vmatmul.f32.gmra.mxu0 %v634
      %v852 = vpop.f32.mrf.mxu0
      %v853 = vadd.f32 0.0, %v852
      %854 = vmatmul.f32.gmra.mxu0 %v637
      %v855 = vpop.f32.mrf.mxu0
      %v856 = vadd.f32 0.0, %v855
      %857 = vmatmul.f32.gmra.mxu0 %v640
      %v858 = vpop.f32.mrf.mxu0
      %v859 = vadd.f32 0.0, %v858
      %860 = vmatmul.f32.gmra.mxu0 %v643
      %v861 = vpop.f32.mrf.mxu0
      %v862 = vadd.f32 0.0, %v861
      %863 = vmatmul.f32.gmra.mxu0 %v646
      %v864 = vpop.f32.mrf.mxu0
      %v865 = vadd.f32 0.0, %v864
      %866 = vmatmul.f32.gmra.mxu0 %v649
      %v867 = vpop.f32.mrf.mxu0
      %v868 = vadd.f32 0.0, %v867
      %869 = vmatmul.f32.gmra.mxu0 %v652
      %v870 = vpop.f32.mrf.mxu0
      %v871 = vadd.f32 0.0, %v870
      %872 = vmatmul.f32.gmra.mxu0 %v655
      %v873 = vpop.f32.mrf.mxu0
      %v874 = vadd.f32 0.0, %v873
      %875 = vmatmul.f32.gmra.mxu0 %v658
      %v876 = vpop.f32.mrf.mxu0
      %v877 = vadd.f32 0.0, %v876
      %878 = vmatmul.f32.gmra.mxu0 %v661
      %v879 = vpop.f32.mrf.mxu0
      %v880 = vadd.f32 0.0, %v879
      %881 = vmatmul.f32.gmra.mxu0 %v664
      %v882 = vpop.f32.mrf.mxu0
      %v883 = vadd.f32 0.0, %v882
      %884 = vmatmul.f32.gmra.mxu0 %v667
      %v885 = vpop.f32.mrf.mxu0
      %v886 = vadd.f32 0.0, %v885
      %887 = vmatmul.f32.gmra.mxu0 %v670
      %v888 = vpop.f32.mrf.mxu0
      %v889 = vadd.f32 0.0, %v888
      %890 = vmatmul.f32.gmra.mxu0 %v673
      %v891 = vpop.f32.mrf.mxu0
      %v892 = vadd.f32 0.0, %v891
      %893 = vmatmul.f32.gmra.mxu0 %v676
      %v894 = vpop.f32.mrf.mxu0
      %v895 = vadd.f32 0.0, %v894
      %896 = vmatmul.f32.gmra.mxu0 %v679
      %v897 = vpop.f32.mrf.mxu0
      %v898 = vadd.f32 0.0, %v897
      %899 = vmatmul.f32.gmra.mxu0 %v682
      %v900 = vpop.f32.mrf.mxu0
      %v901 = vadd.f32 0.0, %v900
      %902 = vmatmul.f32.gmra.mxu0 %v685
      %v903 = vpop.f32.mrf.mxu0
      %v904 = vadd.f32 0.0, %v903
      %905 = vmatmul.f32.gmra.mxu0 %v688
      %v906 = vpop.f32.mrf.mxu0
      %v907 = vadd.f32 0.0, %v906
      %908 = vmatmul.f32.gmra.mxu0 %v691
      %v909 = vpop.f32.mrf.mxu0
      %v910 = vadd.f32 0.0, %v909
      %911 = vmatmul.f32.gmra.mxu0 %v694
      %v912 = vpop.f32.mrf.mxu0
      %v913 = vadd.f32 0.0, %v912
      %914 = vmatmul.f32.gmra.mxu0 %v697
      %v915 = vpop.f32.mrf.mxu0
      %v916 = vadd.f32 0.0, %v915
      %917 = vmatmul.f32.gmra.mxu0 %v700
      %v918 = vpop.f32.mrf.mxu0
      %v919 = vadd.f32 0.0, %v918
      %920 = vmatmul.f32.gmra.mxu0 %v703
      %v921 = vpop.f32.mrf.mxu0
      %v922 = vadd.f32 0.0, %v921
      %923 = vmatmul.f32.gmra.mxu0 %v706
      %v924 = vpop.f32.mrf.mxu0
      %v925 = vadd.f32 0.0, %v924
      %926 = vmatmul.f32.gmra.mxu0 %v709
      %v927 = vpop.f32.mrf.mxu0
      %v928 = vadd.f32 0.0, %v927
      %929 = vmatmul.f32.gmra.mxu0 %v712
      %v930 = vpop.f32.mrf.mxu0
      %v931 = vadd.f32 0.0, %v930
      %932 = vmatmul.f32.gmra.mxu0 %v715
      %v933 = vpop.f32.mrf.mxu0
      %v934 = vadd.f32 0.0, %v933
      %935 = vmatmul.f32.gmra.mxu0 %v718
      %v936 = vpop.f32.mrf.mxu0
      %v937 = vadd.f32 0.0, %v936
      %938 = vmatmul.f32.gmra.mxu0 %v721
      %v939 = vpop.f32.mrf.mxu0
      %v940 = vadd.f32 0.0, %v939
      %941 = vmatmul.f32.gmra.mxu0 %v724
      %v942 = vpop.f32.mrf.mxu0
      %v943 = vadd.f32 0.0, %v942
      %944 = vmatmul.f32.gmra.mxu0 %v727
      %v945 = vpop.f32.mrf.mxu0
      %v946 = vadd.f32 0.0, %v945
      %947 = vmatmul.f32.gmra.mxu0 %v730
      %v948 = vpop.f32.mrf.mxu0
      %v949 = vadd.f32 0.0, %v948
      %950 = vmatmul.f32.gmra.mxu0 %v733
      %v951 = vpop.f32.mrf.mxu0
      %v952 = vadd.f32 0.0, %v951
      %953 = vmatmul.f32.gmra.mxu0 %v736
      %v954 = vpop.f32.mrf.mxu0
      %v955 = vadd.f32 0.0, %v954
      %956 = vmatmul.f32.gmra.mxu0 %v739
      %v957 = vpop.f32.mrf.mxu0
      %v958 = vadd.f32 0.0, %v957
      %959 = vmatmul.f32.gmra.mxu0 %v742
      %v960 = vpop.f32.mrf.mxu0
      %v961 = vadd.f32 0.0, %v960
      %962 = vmatmul.f32.gmra.mxu0 %v745
      %v963 = vpop.f32.mrf.mxu0
      %v964 = vadd.f32 0.0, %v963
      %965 = vmatmul.f32.gmra.mxu0 %v748
      %v966 = vpop.f32.mrf.mxu0
      %v967 = vadd.f32 0.0, %v966
      %968 = vmatmul.f32.gmra.mxu0 %v751
      %v969 = vpop.f32.mrf.mxu0
      %v970 = vadd.f32 0.0, %v969
      %971 = vmatmul.f32.gmra.mxu0 %v754
      %v972 = vpop.f32.mrf.mxu0
      %v973 = vadd.f32 0.0, %v972
      %974 = vmatmul.f32.gmra.mxu0 %v757
      %v975 = vpop.f32.mrf.mxu0
      %v976 = vadd.f32 0.0, %v975
      %977 = vmatmul.f32.gmra.mxu0 %v760
      %v978 = vpop.f32.mrf.mxu0
      %v979 = vadd.f32 0.0, %v978
      %980 = vmatmul.f32.gmra.mxu0 %v763
      %v981 = vpop.f32.mrf.mxu0
      %v982 = vadd.f32 0.0, %v981
      %983 = vmatmul.f32.gmra.mxu0 %v766
      %v984 = vpop.f32.mrf.mxu0
      %v985 = vadd.f32 0.0, %v984
      %986 = vmatmul.f32.gmra.mxu0 %v769
      %v987 = vpop.f32.mrf.mxu0
      %v988 = vadd.f32 0.0, %v987
      %989 = vmatmul.f32.gmra.mxu0 %v772
      %v990 = vpop.f32.mrf.mxu0
      %v991 = vadd.f32 0.0, %v990
      %992 = vmatmul.f32.gmra.mxu0 %v775
      %v993 = vpop.f32.mrf.mxu0
      %v994 = vadd.f32 0.0, %v993
      %995 = vmatmul.f32.gmra.mxu0 %v778
      %v996 = vpop.f32.mrf.mxu0
      %v997 = vadd.f32 0.0, %v996
      %998 = vdwg.mxu0
      %v999 = vadd.f32 %v514, %v802
      %v1000 = vadd.f32 %v515, %v805
      %v1001 = vadd.f32 %v516, %v808
      %v1002 = vadd.f32 %v517, %v811
      %v1003 = vadd.f32 %v518, %v814
      %v1004 = vadd.f32 %v519, %v817
      %v1005 = vadd.f32 %v520, %v820
      %v1006 = vadd.f32 %v521, %v823
      %v1007 = vadd.f32 %v522, %v826
      %v1008 = vadd.f32 %v523, %v829
      %v1009 = vadd.f32 %v524, %v832
      %v1010 = vadd.f32 %v525, %v835
      %v1011 = vadd.f32 %v526, %v838
      %v1012 = vadd.f32 %v527, %v841
      %v1013 = vadd.f32 %v528, %v844
      %v1014 = vadd.f32 %v529, %v847
      %v1015 = vadd.f32 %v530, %v850
      %v1016 = vadd.f32 %v531, %v853
      %v1017 = vadd.f32 %v532, %v856
      %v1018 = vadd.f32 %v533, %v859
      %v1019 = vadd.f32 %v534, %v862
      %v1020 = vadd.f32 %v535, %v865
      %v1021 = vadd.f32 %v536, %v868
      %v1022 = vadd.f32 %v537, %v871
      %v1023 = vadd.f32 %v538, %v874
      %v1024 = vadd.f32 %v539, %v877
      %v1025 = vadd.f32 %v540, %v880
      %v1026 = vadd.f32 %v541, %v883
      %v1027 = vadd.f32 %v542, %v886
      %v1028 = vadd.f32 %v543, %v889
      %v1029 = vadd.f32 %v544, %v892
      %v1030 = vadd.f32 %v545, %v895
      %v1031 = vadd.f32 %v546, %v898
      %v1032 = vadd.f32 %v547, %v901
      %v1033 = vadd.f32 %v548, %v904
      %v1034 = vadd.f32 %v549, %v907
      %v1035 = vadd.f32 %v550, %v910
      %v1036 = vadd.f32 %v551, %v913
      %v1037 = vadd.f32 %v552, %v916
      %v1038 = vadd.f32 %v553, %v919
      %v1039 = vadd.f32 %v554, %v922
      %v1040 = vadd.f32 %v555, %v925
      %v1041 = vadd.f32 %v556, %v928
      %v1042 = vadd.f32 %v557, %v931
      %v1043 = vadd.f32 %v558, %v934
      %v1044 = vadd.f32 %v559, %v937
      %v1045 = vadd.f32 %v560, %v940
      %v1046 = vadd.f32 %v561, %v943
      %v1047 = vadd.f32 %v562, %v946
      %v1048 = vadd.f32 %v563, %v949
      %v1049 = vadd.f32 %v564, %v952
      %v1050 = vadd.f32 %v565, %v955
      %v1051 = vadd.f32 %v566, %v958
      %v1052 = vadd.f32 %v567, %v961
      %v1053 = vadd.f32 %v568, %v964
      %v1054 = vadd.f32 %v569, %v967
      %v1055 = vadd.f32 %v570, %v970
      %v1056 = vadd.f32 %v571, %v973
      %v1057 = vadd.f32 %v572, %v976
      %v1058 = vadd.f32 %v573, %v979
      %v1059 = vadd.f32 %v574, %v982
      %v1060 = vadd.f32 %v575, %v985
      %v1061 = vadd.f32 %v576, %v988
      %v1062 = vadd.f32 %v577, %v991
      %v1063 = vadd.f32 %v578, %v994
      %v1064 = vadd.f32 %v579, %v997
      %vm1065 = vcmask 64512
      %1066 = vst.msk [vmem:[#allocation2] sm:$0xff] %vm1065, %v999
      %1067 = vst.msk [vmem:[#allocation2 + $0x8] sm:$0xff] %vm1065, %v1000
      %1068 = vst.msk [vmem:[#allocation2 + $0x10] sm:$0xff] %vm1065, %v1001
      %1069 = vst.msk [vmem:[#allocation2 + $0x18] sm:$0xff] %vm1065, %v1002
      %1070 = vst.msk [vmem:[#allocation2 + $0x20] sm:$0xff] %vm1065, %v1003
      %1071 = vst.msk [vmem:[#allocation2 + $0x28] sm:$0xff] %vm1065, %v1004
      %1072 = vst.msk [vmem:[#allocation2 + $0x30] sm:$0xff] %vm1065, %v1005
      %1073 = vst.msk [vmem:[#allocation2 + $0x38] sm:$0xff] %vm1065, %v1006
      %1074 = vst.msk [vmem:[#allocation2 + $0x40] sm:$0xff] %vm1065, %v1007
      %1075 = vst.msk [vmem:[#allocation2 + $0x48] sm:$0xff] %vm1065, %v1008
      %1076 = vst.msk [vmem:[#allocation2 + $0x50] sm:$0xff] %vm1065, %v1009
      %1077 = vst.msk [vmem:[#allocation2 + $0x58] sm:$0xff] %vm1065, %v1010
      %1078 = vst.msk [vmem:[#allocation2 + $0x60] sm:$0xff] %vm1065, %v1011
      %1079 = vst.msk [vmem:[#allocation2 + $0x68] sm:$0xff] %vm1065, %v1012
      %1080 = vst.msk [vmem:[#allocation2 + $0x70] sm:$0xff] %vm1065, %v1013
      %1081 = vst.msk [vmem:[#allocation2 + $0x78] sm:$0xff] %vm1065, %v1014
      %1082 = vst.msk [vmem:[#allocation2 + $0x80] sm:$0xff] %vm1065, %v1015
      %1083 = vst.msk [vmem:[#allocation2 + $0x88] sm:$0xff] %vm1065, %v1016
      %1084 = vst.msk [vmem:[#allocation2 + $0x90] sm:$0xff] %vm1065, %v1017
      %1085 = vst.msk [vmem:[#allocation2 + $0x98] sm:$0xff] %vm1065, %v1018
      %1086 = vst.msk [vmem:[#allocation2 + $0xa0] sm:$0xff] %vm1065, %v1019
      %1087 = vst.msk [vmem:[#allocation2 + $0xa8] sm:$0xff] %vm1065, %v1020
      %1088 = vst.msk [vmem:[#allocation2 + $0xb0] sm:$0xff] %vm1065, %v1021
      %1089 = vst.msk [vmem:[#allocation2 + $0xb8] sm:$0xff] %vm1065, %v1022
      %1090 = vst.msk [vmem:[#allocation2 + $0xc0] sm:$0xff] %vm1065, %v1023
      %1091 = vst.msk [vmem:[#allocation2 + $0xc8] sm:$0xff] %vm1065, %v1024
      %1092 = vst.msk [vmem:[#allocation2 + $0xd0] sm:$0xff] %vm1065, %v1025
      %1093 = vst.msk [vmem:[#allocation2 + $0xd8] sm:$0xff] %vm1065, %v1026
      %1094 = vst.msk [vmem:[#allocation2 + $0xe0] sm:$0xff] %vm1065, %v1027
      %1095 = vst.msk [vmem:[#allocation2 + $0xe8] sm:$0xff] %vm1065, %v1028
      %1096 = vst.msk [vmem:[#allocation2 + $0xf0] sm:$0xff] %vm1065, %v1029
      %1097 = vst.msk [vmem:[#allocation2 + $0xf8] sm:$0xff] %vm1065, %v1030
      %1098 = vst.msk [vmem:[#allocation2 + $0x100] sm:$0xff] %vm1065, %v1031
      %1099 = vst.msk [vmem:[#allocation2 + $0x108] sm:$0xff] %vm1065, %v1032
      %1100 = vst.msk [vmem:[#allocation2 + $0x110] sm:$0xff] %vm1065, %v1033
      %1101 = vst.msk [vmem:[#allocation2 + $0x118] sm:$0xff] %vm1065, %v1034
      %1102 = vst.msk [vmem:[#allocation2 + $0x120] sm:$0xff] %vm1065, %v1035
      %1103 = vst.msk [vmem:[#allocation2 + $0x128] sm:$0xff] %vm1065, %v1036
      %1104 = vst.msk [vmem:[#allocation2 + $0x130] sm:$0xff] %vm1065, %v1037
      %1105 = vst.msk [vmem:[#allocation2 + $0x138] sm:$0xff] %vm1065, %v1038
      %1106 = vst.msk [vmem:[#allocation2 + $0x140] sm:$0xff] %vm1065, %v1039
      %1107 = vst.msk [vmem:[#allocation2 + $0x148] sm:$0xff] %vm1065, %v1040
      %1108 = vst.msk [vmem:[#allocation2 + $0x150] sm:$0xff] %vm1065, %v1041
      %1109 = vst.msk [vmem:[#allocation2 + $0x158] sm:$0xff] %vm1065, %v1042
      %1110 = vst.msk [vmem:[#allocation2 + $0x160] sm:$0xff] %vm1065, %v1043
      %1111 = vst.msk [vmem:[#allocation2 + $0x168] sm:$0xff] %vm1065, %v1044
      %1112 = vst.msk [vmem:[#allocation2 + $0x170] sm:$0xff] %vm1065, %v1045
      %1113 = vst.msk [vmem:[#allocation2 + $0x178] sm:$0xff] %vm1065, %v1046
      %1114 = vst.msk [vmem:[#allocation2 + $0x180] sm:$0xff] %vm1065, %v1047
      %1115 = vst.msk [vmem:[#allocation2 + $0x188] sm:$0xff] %vm1065, %v1048
      %1116 = vst.msk [vmem:[#allocation2 + $0x190] sm:$0xff] %vm1065, %v1049
      %1117 = vst.msk [vmem:[#allocation2 + $0x198] sm:$0xff] %vm1065, %v1050
      %1118 = vst.msk [vmem:[#allocation2 + $0x1a0] sm:$0xff] %vm1065, %v1051
      %1119 = vst.msk [vmem:[#allocation2 + $0x1a8] sm:$0xff] %vm1065, %v1052
      %1120 = vst.msk [vmem:[#allocation2 + $0x1b0] sm:$0xff] %vm1065, %v1053
      %1121 = vst.msk [vmem:[#allocation2 + $0x1b8] sm:$0xff] %vm1065, %v1054
      %1122 = vst.msk [vmem:[#allocation2 + $0x1c0] sm:$0xff] %vm1065, %v1055
      %1123 = vst.msk [vmem:[#allocation2 + $0x1c8] sm:$0xff] %vm1065, %v1056
      %1124 = vst.msk [vmem:[#allocation2 + $0x1d0] sm:$0xff] %vm1065, %v1057
      %1125 = vst.msk [vmem:[#allocation2 + $0x1d8] sm:$0xff] %vm1065, %v1058
      %1126 = vst.msk [vmem:[#allocation2 + $0x1e0] sm:$0xff] %vm1065, %v1059
      %1127 = vst.msk [vmem:[#allocation2 + $0x1e8] sm:$0xff] %vm1065, %v1060
      %1128 = vst.msk [vmem:[#allocation2 + $0x1f0] sm:$0xff] %vm1065, %v1061
      %1129 = vst.msk [vmem:[#allocation2 + $0x1f8] sm:$0xff] %vm1065, %v1062
      %1130 = vst.msk [vmem:[#allocation2 + $0x200] sm:$0xff] %vm1065, %v1063
      %1131 = vst.msk [vmem:[#allocation2 + $0x208] sm:$0xff] %vm1065, %v1064
      %s1132 = scalar_lea.vmem [#allocation2], 528
      %v1133 = vld [vmem:[%s1132] sm:$0xff]
      %v1134 = vld [vmem:[%s1132 + $0x8] sm:$0xff]
      %v1135 = vld [vmem:[%s1132 + $0x10] sm:$0xff]
      %v1136 = vld [vmem:[%s1132 + $0x18] sm:$0xff]
      %v1137 = vld [vmem:[%s1132 + $0x20] sm:$0xff]
      %v1138 = vld [vmem:[%s1132 + $0x28] sm:$0xff]
      %v1139 = vld [vmem:[%s1132 + $0x30] sm:$0xff]
      %v1140 = vld [vmem:[%s1132 + $0x38] sm:$0xff]
      %v1141 = vld [vmem:[%s1132 + $0x40] sm:$0xff]
      %v1142 = vld [vmem:[%s1132 + $0x48] sm:$0xff]
      %v1143 = vld [vmem:[%s1132 + $0x50] sm:$0xff]
      %v1144 = vld [vmem:[%s1132 + $0x58] sm:$0xff]
      %v1145 = vld [vmem:[%s1132 + $0x60] sm:$0xff]
      %v1146 = vld [vmem:[%s1132 + $0x68] sm:$0xff]
      %v1147 = vld [vmem:[%s1132 + $0x70] sm:$0xff]
      %v1148 = vld [vmem:[%s1132 + $0x78] sm:$0xff]
      %v1149 = vld [vmem:[%s1132 + $0x80] sm:$0xff]
      %v1150 = vld [vmem:[%s1132 + $0x88] sm:$0xff]
      %v1151 = vld [vmem:[%s1132 + $0x90] sm:$0xff]
      %v1152 = vld [vmem:[%s1132 + $0x98] sm:$0xff]
      %v1153 = vld [vmem:[%s1132 + $0xa0] sm:$0xff]
      %v1154 = vld [vmem:[%s1132 + $0xa8] sm:$0xff]
      %v1155 = vld [vmem:[%s1132 + $0xb0] sm:$0xff]
      %v1156 = vld [vmem:[%s1132 + $0xb8] sm:$0xff]
      %v1157 = vld [vmem:[%s1132 + $0xc0] sm:$0xff]
      %v1158 = vld [vmem:[%s1132 + $0xc8] sm:$0xff]
      %v1159 = vld [vmem:[%s1132 + $0xd0] sm:$0xff]
      %v1160 = vld [vmem:[%s1132 + $0xd8] sm:$0xff]
      %v1161 = vld [vmem:[%s1132 + $0xe0] sm:$0xff]
      %v1162 = vld [vmem:[%s1132 + $0xe8] sm:$0xff]
      %v1163 = vld [vmem:[%s1132 + $0xf0] sm:$0xff]
      %v1164 = vld [vmem:[%s1132 + $0xf8] sm:$0xff]
      %v1165 = vld [vmem:[%s1132 + $0x100] sm:$0xff]
      %v1166 = vld [vmem:[%s1132 + $0x108] sm:$0xff]
      %v1167 = vld [vmem:[%s1132 + $0x110] sm:$0xff]
      %v1168 = vld [vmem:[%s1132 + $0x118] sm:$0xff]
      %v1169 = vld [vmem:[%s1132 + $0x120] sm:$0xff]
      %v1170 = vld [vmem:[%s1132 + $0x128] sm:$0xff]
      %v1171 = vld [vmem:[%s1132 + $0x130] sm:$0xff]
      %v1172 = vld [vmem:[%s1132 + $0x138] sm:$0xff]
      %v1173 = vld [vmem:[%s1132 + $0x140] sm:$0xff]
      %v1174 = vld [vmem:[%s1132 + $0x148] sm:$0xff]
      %v1175 = vld [vmem:[%s1132 + $0x150] sm:$0xff]
      %v1176 = vld [vmem:[%s1132 + $0x158] sm:$0xff]
      %v1177 = vld [vmem:[%s1132 + $0x160] sm:$0xff]
      %v1178 = vld [vmem:[%s1132 + $0x168] sm:$0xff]
      %v1179 = vld [vmem:[%s1132 + $0x170] sm:$0xff]
      %v1180 = vld [vmem:[%s1132 + $0x178] sm:$0xff]
      %v1181 = vld [vmem:[%s1132 + $0x180] sm:$0xff]
      %v1182 = vld [vmem:[%s1132 + $0x188] sm:$0xff]
      %v1183 = vld [vmem:[%s1132 + $0x190] sm:$0xff]
      %v1184 = vld [vmem:[%s1132 + $0x198] sm:$0xff]
      %v1185 = vld [vmem:[%s1132 + $0x1a0] sm:$0xff]
      %v1186 = vld [vmem:[%s1132 + $0x1a8] sm:$0xff]
      %v1187 = vld [vmem:[%s1132 + $0x1b0] sm:$0xff]
      %v1188 = vld [vmem:[%s1132 + $0x1b8] sm:$0xff]
      %v1189 = vld [vmem:[%s1132 + $0x1c0] sm:$0xff]
      %v1190 = vld [vmem:[%s1132 + $0x1c8] sm:$0xff]
      %v1191 = vld [vmem:[%s1132 + $0x1d0] sm:$0xff]
      %v1192 = vld [vmem:[%s1132 + $0x1d8] sm:$0xff]
      %v1193 = vld [vmem:[%s1132 + $0x1e0] sm:$0xff]
      %v1194 = vld [vmem:[%s1132 + $0x1e8] sm:$0xff]
      %v1195 = vld [vmem:[%s1132 + $0x1f0] sm:$0xff]
      %v1196 = vld [vmem:[%s1132 + $0x1f8] sm:$0xff]
      %v1197 = vld [vmem:[%s1132 + $0x200] sm:$0xff]
      %v1198 = vld [vmem:[%s1132 + $0x208] sm:$0xff]
      %s1199 = scalar_lea.vmem %s233, 4
      %v1200 = vld [vmem:[%s1199] sm:$0x7]
      %v1202 = vsel %vm780, %v1200, 0
      %1204 = vmatpush.msra.mxu0 0.0
      %1205 = vmatpush.msra.mxu0 0.0
      %1206 = vmatpush.msra.mxu0 0.0
      %1207 = vmatpush.msra.mxu0 0.0
      %1208 = vmatpush.msra.mxu0 0.0
      %1209 = vmatpush.msra.mxu0 0.0
      %1210 = vmatpush.msra.mxu0 0.0
      %1211 = vmatpush.msra.mxu0 0.0
      %1212 = vmatpush.msra.mxu0 0.0
      %1213 = vmatpush.msra.mxu0 0.0
      %1214 = vmatpush.msra.mxu0 0.0
      %1215 = vmatpush.msra.mxu0 0.0
      %1216 = vmatpush.msra.mxu0 0.0
      %1217 = vmatpush.msra.mxu0 0.0
      %1218 = vmatpush.msra.mxu0 0.0
      %1219 = vmatpush.msra.mxu0 %v1202
      %1220 = vmatmul.f32.gmra.mxu0 %v583
      %v1221 = vpop.f32.mrf.mxu0
      %v1222 = vadd.f32 0.0, %v1221
      %1223 = vmatmul.f32.gmra.mxu0 %v586
      %v1224 = vpop.f32.mrf.mxu0
      %v1225 = vadd.f32 0.0, %v1224
      %1226 = vmatmul.f32.gmra.mxu0 %v589
      %v1227 = vpop.f32.mrf.mxu0
      %v1228 = vadd.f32 0.0, %v1227
      %1229 = vmatmul.f32.gmra.mxu0 %v592
      %v1230 = vpop.f32.mrf.mxu0
      %v1231 = vadd.f32 0.0, %v1230
      %1232 = vmatmul.f32.gmra.mxu0 %v595
      %v1233 = vpop.f32.mrf.mxu0
      %v1234 = vadd.f32 0.0, %v1233
      %1235 = vmatmul.f32.gmra.mxu0 %v598
      %v1236 = vpop.f32.mrf.mxu0
      %v1237 = vadd.f32 0.0, %v1236
      %1238 = vmatmul.f32.gmra.mxu0 %v601
      %v1239 = vpop.f32.mrf.mxu0
      %v1240 = vadd.f32 0.0, %v1239
      %1241 = vmatmul.f32.gmra.mxu0 %v604
      %v1242 = vpop.f32.mrf.mxu0
      %v1243 = vadd.f32 0.0, %v1242
      %1244 = vmatmul.f32.gmra.mxu0 %v607
      %v1245 = vpop.f32.mrf.mxu0
      %v1246 = vadd.f32 0.0, %v1245
      %1247 = vmatmul.f32.gmra.mxu0 %v610
      %v1248 = vpop.f32.mrf.mxu0
      %v1249 = vadd.f32 0.0, %v1248
      %1250 = vmatmul.f32.gmra.mxu0 %v613
      %v1251 = vpop.f32.mrf.mxu0
      %v1252 = vadd.f32 0.0, %v1251
      %1253 = vmatmul.f32.gmra.mxu0 %v616
      %v1254 = vpop.f32.mrf.mxu0
      %v1255 = vadd.f32 0.0, %v1254
      %1256 = vmatmul.f32.gmra.mxu0 %v619
      %v1257 = vpop.f32.mrf.mxu0
      %v1258 = vadd.f32 0.0, %v1257
      %1259 = vmatmul.f32.gmra.mxu0 %v622
      %v1260 = vpop.f32.mrf.mxu0
      %v1261 = vadd.f32 0.0, %v1260
      %1262 = vmatmul.f32.gmra.mxu0 %v625
      %v1263 = vpop.f32.mrf.mxu0
      %v1264 = vadd.f32 0.0, %v1263
      %1265 = vmatmul.f32.gmra.mxu0 %v628
      %v1266 = vpop.f32.mrf.mxu0
      %v1267 = vadd.f32 0.0, %v1266
      %1268 = vmatmul.f32.gmra.mxu0 %v631
      %v1269 = vpop.f32.mrf.mxu0
      %v1270 = vadd.f32 0.0, %v1269
      %1271 = vmatmul.f32.gmra.mxu0 %v634
      %v1272 = vpop.f32.mrf.mxu0
      %v1273 = vadd.f32 0.0, %v1272
      %1274 = vmatmul.f32.gmra.mxu0 %v637
      %v1275 = vpop.f32.mrf.mxu0
      %v1276 = vadd.f32 0.0, %v1275
      %1277 = vmatmul.f32.gmra.mxu0 %v640
      %v1278 = vpop.f32.mrf.mxu0
      %v1279 = vadd.f32 0.0, %v1278
      %1280 = vmatmul.f32.gmra.mxu0 %v643
      %v1281 = vpop.f32.mrf.mxu0
      %v1282 = vadd.f32 0.0, %v1281
      %1283 = vmatmul.f32.gmra.mxu0 %v646
      %v1284 = vpop.f32.mrf.mxu0
      %v1285 = vadd.f32 0.0, %v1284
      %1286 = vmatmul.f32.gmra.mxu0 %v649
      %v1287 = vpop.f32.mrf.mxu0
      %v1288 = vadd.f32 0.0, %v1287
      %1289 = vmatmul.f32.gmra.mxu0 %v652
      %v1290 = vpop.f32.mrf.mxu0
      %v1291 = vadd.f32 0.0, %v1290
      %1292 = vmatmul.f32.gmra.mxu0 %v655
      %v1293 = vpop.f32.mrf.mxu0
      %v1294 = vadd.f32 0.0, %v1293
      %1295 = vmatmul.f32.gmra.mxu0 %v658
      %v1296 = vpop.f32.mrf.mxu0
      %v1297 = vadd.f32 0.0, %v1296
      %1298 = vmatmul.f32.gmra.mxu0 %v661
      %v1299 = vpop.f32.mrf.mxu0
      %v1300 = vadd.f32 0.0, %v1299
      %1301 = vmatmul.f32.gmra.mxu0 %v664
      %v1302 = vpop.f32.mrf.mxu0
      %v1303 = vadd.f32 0.0, %v1302
      %1304 = vmatmul.f32.gmra.mxu0 %v667
      %v1305 = vpop.f32.mrf.mxu0
      %v1306 = vadd.f32 0.0, %v1305
      %1307 = vmatmul.f32.gmra.mxu0 %v670
      %v1308 = vpop.f32.mrf.mxu0
      %v1309 = vadd.f32 0.0, %v1308
      %1310 = vmatmul.f32.gmra.mxu0 %v673
      %v1311 = vpop.f32.mrf.mxu0
      %v1312 = vadd.f32 0.0, %v1311
      %1313 = vmatmul.f32.gmra.mxu0 %v676
      %v1314 = vpop.f32.mrf.mxu0
      %v1315 = vadd.f32 0.0, %v1314
      %1316 = vmatmul.f32.gmra.mxu0 %v679
      %v1317 = vpop.f32.mrf.mxu0
      %v1318 = vadd.f32 0.0, %v1317
      %1319 = vmatmul.f32.gmra.mxu0 %v682
      %v1320 = vpop.f32.mrf.mxu0
      %v1321 = vadd.f32 0.0, %v1320
      %1322 = vmatmul.f32.gmra.mxu0 %v685
      %v1323 = vpop.f32.mrf.mxu0
      %v1324 = vadd.f32 0.0, %v1323
      %1325 = vmatmul.f32.gmra.mxu0 %v688
      %v1326 = vpop.f32.mrf.mxu0
      %v1327 = vadd.f32 0.0, %v1326
      %1328 = vmatmul.f32.gmra.mxu0 %v691
      %v1329 = vpop.f32.mrf.mxu0
      %v1330 = vadd.f32 0.0, %v1329
      %1331 = vmatmul.f32.gmra.mxu0 %v694
      %v1332 = vpop.f32.mrf.mxu0
      %v1333 = vadd.f32 0.0, %v1332
      %1334 = vmatmul.f32.gmra.mxu0 %v697
      %v1335 = vpop.f32.mrf.mxu0
      %v1336 = vadd.f32 0.0, %v1335
      %1337 = vmatmul.f32.gmra.mxu0 %v700
      %v1338 = vpop.f32.mrf.mxu0
      %v1339 = vadd.f32 0.0, %v1338
      %1340 = vmatmul.f32.gmra.mxu0 %v703
      %v1341 = vpop.f32.mrf.mxu0
      %v1342 = vadd.f32 0.0, %v1341
      %1343 = vmatmul.f32.gmra.mxu0 %v706
      %v1344 = vpop.f32.mrf.mxu0
      %v1345 = vadd.f32 0.0, %v1344
      %1346 = vmatmul.f32.gmra.mxu0 %v709
      %v1347 = vpop.f32.mrf.mxu0
      %v1348 = vadd.f32 0.0, %v1347
      %1349 = vmatmul.f32.gmra.mxu0 %v712
      %v1350 = vpop.f32.mrf.mxu0
      %v1351 = vadd.f32 0.0, %v1350
      %1352 = vmatmul.f32.gmra.mxu0 %v715
      %v1353 = vpop.f32.mrf.mxu0
      %v1354 = vadd.f32 0.0, %v1353
      %1355 = vmatmul.f32.gmra.mxu0 %v718
      %v1356 = vpop.f32.mrf.mxu0
      %v1357 = vadd.f32 0.0, %v1356
      %1358 = vmatmul.f32.gmra.mxu0 %v721
      %v1359 = vpop.f32.mrf.mxu0
      %v1360 = vadd.f32 0.0, %v1359
      %1361 = vmatmul.f32.gmra.mxu0 %v724
      %v1362 = vpop.f32.mrf.mxu0
      %v1363 = vadd.f32 0.0, %v1362
      %1364 = vmatmul.f32.gmra.mxu0 %v727
      %v1365 = vpop.f32.mrf.mxu0
      %v1366 = vadd.f32 0.0, %v1365
      %1367 = vmatmul.f32.gmra.mxu0 %v730
      %v1368 = vpop.f32.mrf.mxu0
      %v1369 = vadd.f32 0.0, %v1368
      %1370 = vmatmul.f32.gmra.mxu0 %v733
      %v1371 = vpop.f32.mrf.mxu0
      %v1372 = vadd.f32 0.0, %v1371
      %1373 = vmatmul.f32.gmra.mxu0 %v736
      %v1374 = vpop.f32.mrf.mxu0
      %v1375 = vadd.f32 0.0, %v1374
      %1376 = vmatmul.f32.gmra.mxu0 %v739
      %v1377 = vpop.f32.mrf.mxu0
      %v1378 = vadd.f32 0.0, %v1377
      %1379 = vmatmul.f32.gmra.mxu0 %v742
      %v1380 = vpop.f32.mrf.mxu0
      %v1381 = vadd.f32 0.0, %v1380
      %1382 = vmatmul.f32.gmra.mxu0 %v745
      %v1383 = vpop.f32.mrf.mxu0
      %v1384 = vadd.f32 0.0, %v1383
      %1385 = vmatmul.f32.gmra.mxu0 %v748
      %v1386 = vpop.f32.mrf.mxu0
      %v1387 = vadd.f32 0.0, %v1386
      %1388 = vmatmul.f32.gmra.mxu0 %v751
      %v1389 = vpop.f32.mrf.mxu0
      %v1390 = vadd.f32 0.0, %v1389
      %1391 = vmatmul.f32.gmra.mxu0 %v754
      %v1392 = vpop.f32.mrf.mxu0
      %v1393 = vadd.f32 0.0, %v1392
      %1394 = vmatmul.f32.gmra.mxu0 %v757
      %v1395 = vpop.f32.mrf.mxu0
      %v1396 = vadd.f32 0.0, %v1395
      %1397 = vmatmul.f32.gmra.mxu0 %v760
      %v1398 = vpop.f32.mrf.mxu0
      %v1399 = vadd.f32 0.0, %v1398
      %1400 = vmatmul.f32.gmra.mxu0 %v763
      %v1401 = vpop.f32.mrf.mxu0
      %v1402 = vadd.f32 0.0, %v1401
      %1403 = vmatmul.f32.gmra.mxu0 %v766
      %v1404 = vpop.f32.mrf.mxu0
      %v1405 = vadd.f32 0.0, %v1404
      %1406 = vmatmul.f32.gmra.mxu0 %v769
      %v1407 = vpop.f32.mrf.mxu0
      %v1408 = vadd.f32 0.0, %v1407
      %1409 = vmatmul.f32.gmra.mxu0 %v772
      %v1410 = vpop.f32.mrf.mxu0
      %v1411 = vadd.f32 0.0, %v1410
      %1412 = vmatmul.f32.gmra.mxu0 %v775
      %v1413 = vpop.f32.mrf.mxu0
      %v1414 = vadd.f32 0.0, %v1413
      %1415 = vmatmul.f32.gmra.mxu0 %v778
      %v1416 = vpop.f32.mrf.mxu0
      %v1417 = vadd.f32 0.0, %v1416
      %1418 = vdwg.mxu0
      %v1419 = vadd.f32 %v1133, %v1222
      %v1420 = vadd.f32 %v1134, %v1225
      %v1421 = vadd.f32 %v1135, %v1228
      %v1422 = vadd.f32 %v1136, %v1231
      %v1423 = vadd.f32 %v1137, %v1234
      %v1424 = vadd.f32 %v1138, %v1237
      %v1425 = vadd.f32 %v1139, %v1240
      %v1426 = vadd.f32 %v1140, %v1243
      %v1427 = vadd.f32 %v1141, %v1246
      %v1428 = vadd.f32 %v1142, %v1249
      %v1429 = vadd.f32 %v1143, %v1252
      %v1430 = vadd.f32 %v1144, %v1255
      %v1431 = vadd.f32 %v1145, %v1258
      %v1432 = vadd.f32 %v1146, %v1261
      %v1433 = vadd.f32 %v1147, %v1264
      %v1434 = vadd.f32 %v1148, %v1267
      %v1435 = vadd.f32 %v1149, %v1270
      %v1436 = vadd.f32 %v1150, %v1273
      %v1437 = vadd.f32 %v1151, %v1276
      %v1438 = vadd.f32 %v1152, %v1279
      %v1439 = vadd.f32 %v1153, %v1282
      %v1440 = vadd.f32 %v1154, %v1285
      %v1441 = vadd.f32 %v1155, %v1288
      %v1442 = vadd.f32 %v1156, %v1291
      %v1443 = vadd.f32 %v1157, %v1294
      %v1444 = vadd.f32 %v1158, %v1297
      %v1445 = vadd.f32 %v1159, %v1300
      %v1446 = vadd.f32 %v1160, %v1303
      %v1447 = vadd.f32 %v1161, %v1306
      %v1448 = vadd.f32 %v1162, %v1309
      %v1449 = vadd.f32 %v1163, %v1312
      %v1450 = vadd.f32 %v1164, %v1315
      %v1451 = vadd.f32 %v1165, %v1318
      %v1452 = vadd.f32 %v1166, %v1321
      %v1453 = vadd.f32 %v1167, %v1324
      %v1454 = vadd.f32 %v1168, %v1327
      %v1455 = vadd.f32 %v1169, %v1330
      %v1456 = vadd.f32 %v1170, %v1333
      %v1457 = vadd.f32 %v1171, %v1336
      %v1458 = vadd.f32 %v1172, %v1339
      %v1459 = vadd.f32 %v1173, %v1342
      %v1460 = vadd.f32 %v1174, %v1345
      %v1461 = vadd.f32 %v1175, %v1348
      %v1462 = vadd.f32 %v1176, %v1351
      %v1463 = vadd.f32 %v1177, %v1354
      %v1464 = vadd.f32 %v1178, %v1357
      %v1465 = vadd.f32 %v1179, %v1360
      %v1466 = vadd.f32 %v1180, %v1363
      %v1467 = vadd.f32 %v1181, %v1366
      %v1468 = vadd.f32 %v1182, %v1369
      %v1469 = vadd.f32 %v1183, %v1372
      %v1470 = vadd.f32 %v1184, %v1375
      %v1471 = vadd.f32 %v1185, %v1378
      %v1472 = vadd.f32 %v1186, %v1381
      %v1473 = vadd.f32 %v1187, %v1384
      %v1474 = vadd.f32 %v1188, %v1387
      %v1475 = vadd.f32 %v1189, %v1390
      %v1476 = vadd.f32 %v1190, %v1393
      %v1477 = vadd.f32 %v1191, %v1396
      %v1478 = vadd.f32 %v1192, %v1399
      %v1479 = vadd.f32 %v1193, %v1402
      %v1480 = vadd.f32 %v1194, %v1405
      %v1481 = vadd.f32 %v1195, %v1408
      %v1482 = vadd.f32 %v1196, %v1411
      %v1483 = vadd.f32 %v1197, %v1414
      %v1484 = vadd.f32 %v1198, %v1417
      %1485 = vst.msk [vmem:[%s1132] sm:$0xff] %vm1065, %v1419
      %1486 = vst.msk [vmem:[%s1132 + $0x8] sm:$0xff] %vm1065, %v1420
      %1487 = vst.msk [vmem:[%s1132 + $0x10] sm:$0xff] %vm1065, %v1421
      %1488 = vst.msk [vmem:[%s1132 + $0x18] sm:$0xff] %vm1065, %v1422
      %1489 = vst.msk [vmem:[%s1132 + $0x20] sm:$0xff] %vm1065, %v1423
      %1490 = vst.msk [vmem:[%s1132 + $0x28] sm:$0xff] %vm1065, %v1424
      %1491 = vst.msk [vmem:[%s1132 + $0x30] sm:$0xff] %vm1065, %v1425
      %1492 = vst.msk [vmem:[%s1132 + $0x38] sm:$0xff] %vm1065, %v1426
      %1493 = vst.msk [vmem:[%s1132 + $0x40] sm:$0xff] %vm1065, %v1427
      %1494 = vst.msk [vmem:[%s1132 + $0x48] sm:$0xff] %vm1065, %v1428
      %1495 = vst.msk [vmem:[%s1132 + $0x50] sm:$0xff] %vm1065, %v1429
      %1496 = vst.msk [vmem:[%s1132 + $0x58] sm:$0xff] %vm1065, %v1430
      %1497 = vst.msk [vmem:[%s1132 + $0x60] sm:$0xff] %vm1065, %v1431
      %1498 = vst.msk [vmem:[%s1132 + $0x68] sm:$0xff] %vm1065, %v1432
      %1499 = vst.msk [vmem:[%s1132 + $0x70] sm:$0xff] %vm1065, %v1433
      %1500 = vst.msk [vmem:[%s1132 + $0x78] sm:$0xff] %vm1065, %v1434
      %1501 = vst.msk [vmem:[%s1132 + $0x80] sm:$0xff] %vm1065, %v1435
      %1502 = vst.msk [vmem:[%s1132 + $0x88] sm:$0xff] %vm1065, %v1436
      %1503 = vst.msk [vmem:[%s1132 + $0x90] sm:$0xff] %vm1065, %v1437
      %1504 = vst.msk [vmem:[%s1132 + $0x98] sm:$0xff] %vm1065, %v1438
      %1505 = vst.msk [vmem:[%s1132 + $0xa0] sm:$0xff] %vm1065, %v1439
      %1506 = vst.msk [vmem:[%s1132 + $0xa8] sm:$0xff] %vm1065, %v1440
      %1507 = vst.msk [vmem:[%s1132 + $0xb0] sm:$0xff] %vm1065, %v1441
      %1508 = vst.msk [vmem:[%s1132 + $0xb8] sm:$0xff] %vm1065, %v1442
      %1509 = vst.msk [vmem:[%s1132 + $0xc0] sm:$0xff] %vm1065, %v1443
      %1510 = vst.msk [vmem:[%s1132 + $0xc8] sm:$0xff] %vm1065, %v1444
      %1511 = vst.msk [vmem:[%s1132 + $0xd0] sm:$0xff] %vm1065, %v1445
      %1512 = vst.msk [vmem:[%s1132 + $0xd8] sm:$0xff] %vm1065, %v1446
      %1513 = vst.msk [vmem:[%s1132 + $0xe0] sm:$0xff] %vm1065, %v1447
      %1514 = vst.msk [vmem:[%s1132 + $0xe8] sm:$0xff] %vm1065, %v1448
      %1515 = vst.msk [vmem:[%s1132 + $0xf0] sm:$0xff] %vm1065, %v1449
      %1516 = vst.msk [vmem:[%s1132 + $0xf8] sm:$0xff] %vm1065, %v1450
      %1517 = vst.msk [vmem:[%s1132 + $0x100] sm:$0xff] %vm1065, %v1451
      %1518 = vst.msk [vmem:[%s1132 + $0x108] sm:$0xff] %vm1065, %v1452
      %1519 = vst.msk [vmem:[%s1132 + $0x110] sm:$0xff] %vm1065, %v1453
      %1520 = vst.msk [vmem:[%s1132 + $0x118] sm:$0xff] %vm1065, %v1454
      %1521 = vst.msk [vmem:[%s1132 + $0x120] sm:$0xff] %vm1065, %v1455
      %1522 = vst.msk [vmem:[%s1132 + $0x128] sm:$0xff] %vm1065, %v1456
      %1523 = vst.msk [vmem:[%s1132 + $0x130] sm:$0xff] %vm1065, %v1457
      %1524 = vst.msk [vmem:[%s1132 + $0x138] sm:$0xff] %vm1065, %v1458
      %1525 = vst.msk [vmem:[%s1132 + $0x140] sm:$0xff] %vm1065, %v1459
      %1526 = vst.msk [vmem:[%s1132 + $0x148] sm:$0xff] %vm1065, %v1460
      %1527 = vst.msk [vmem:[%s1132 + $0x150] sm:$0xff] %vm1065, %v1461
      %1528 = vst.msk [vmem:[%s1132 + $0x158] sm:$0xff] %vm1065, %v1462
      %1529 = vst.msk [vmem:[%s1132 + $0x160] sm:$0xff] %vm1065, %v1463
      %1530 = vst.msk [vmem:[%s1132 + $0x168] sm:$0xff] %vm1065, %v1464
      %1531 = vst.msk [vmem:[%s1132 + $0x170] sm:$0xff] %vm1065, %v1465
      %1532 = vst.msk [vmem:[%s1132 + $0x178] sm:$0xff] %vm1065, %v1466
      %1533 = vst.msk [vmem:[%s1132 + $0x180] sm:$0xff] %vm1065, %v1467
      %1534 = vst.msk [vmem:[%s1132 + $0x188] sm:$0xff] %vm1065, %v1468
      %1535 = vst.msk [vmem:[%s1132 + $0x190] sm:$0xff] %vm1065, %v1469
      %1536 = vst.msk [vmem:[%s1132 + $0x198] sm:$0xff] %vm1065, %v1470
      %1537 = vst.msk [vmem:[%s1132 + $0x1a0] sm:$0xff] %vm1065, %v1471
      %1538 = vst.msk [vmem:[%s1132 + $0x1a8] sm:$0xff] %vm1065, %v1472
      %1539 = vst.msk [vmem:[%s1132 + $0x1b0] sm:$0xff] %vm1065, %v1473
      %1540 = vst.msk [vmem:[%s1132 + $0x1b8] sm:$0xff] %vm1065, %v1474
      %1541 = vst.msk [vmem:[%s1132 + $0x1c0] sm:$0xff] %vm1065, %v1475
      %1542 = vst.msk [vmem:[%s1132 + $0x1c8] sm:$0xff] %vm1065, %v1476
      %1543 = vst.msk [vmem:[%s1132 + $0x1d0] sm:$0xff] %vm1065, %v1477
      %1544 = vst.msk [vmem:[%s1132 + $0x1d8] sm:$0xff] %vm1065, %v1478
      %1545 = vst.msk [vmem:[%s1132 + $0x1e0] sm:$0xff] %vm1065, %v1479
      %1546 = vst.msk [vmem:[%s1132 + $0x1e8] sm:$0xff] %vm1065, %v1480
      %1547 = vst.msk [vmem:[%s1132 + $0x1f0] sm:$0xff] %vm1065, %v1481
      %1548 = vst.msk [vmem:[%s1132 + $0x1f8] sm:$0xff] %vm1065, %v1482
      %1549 = vst.msk [vmem:[%s1132 + $0x200] sm:$0xff] %vm1065, %v1483
      %1550 = vst.msk [vmem:[%s1132 + $0x208] sm:$0xff] %vm1065, %v1484
      %s1551 = scalar_lea.vmem [#allocation2], 1056
      %v1552 = vld [vmem:[%s1551] sm:$0xff]
      %v1553 = vld [vmem:[%s1551 + $0x8] sm:$0xff]
      %v1554 = vld [vmem:[%s1551 + $0x10] sm:$0xff]
      %v1555 = vld [vmem:[%s1551 + $0x18] sm:$0xff]
      %v1556 = vld [vmem:[%s1551 + $0x20] sm:$0xff]
      %v1557 = vld [vmem:[%s1551 + $0x28] sm:$0xff]
      %v1558 = vld [vmem:[%s1551 + $0x30] sm:$0xff]
      %v1559 = vld [vmem:[%s1551 + $0x38] sm:$0xff]
      %v1560 = vld [vmem:[%s1551 + $0x40] sm:$0xff]
      %v1561 = vld [vmem:[%s1551 + $0x48] sm:$0xff]
      %v1562 = vld [vmem:[%s1551 + $0x50] sm:$0xff]
      %v1563 = vld [vmem:[%s1551 + $0x58] sm:$0xff]
      %v1564 = vld [vmem:[%s1551 + $0x60] sm:$0xff]
      %v1565 = vld [vmem:[%s1551 + $0x68] sm:$0xff]
      %v1566 = vld [vmem:[%s1551 + $0x70] sm:$0xff]
      %v1567 = vld [vmem:[%s1551 + $0x78] sm:$0xff]
      %v1568 = vld [vmem:[%s1551 + $0x80] sm:$0xff]
      %v1569 = vld [vmem:[%s1551 + $0x88] sm:$0xff]
      %v1570 = vld [vmem:[%s1551 + $0x90] sm:$0xff]
      %v1571 = vld [vmem:[%s1551 + $0x98] sm:$0xff]
      %v1572 = vld [vmem:[%s1551 + $0xa0] sm:$0xff]
      %v1573 = vld [vmem:[%s1551 + $0xa8] sm:$0xff]
      %v1574 = vld [vmem:[%s1551 + $0xb0] sm:$0xff]
      %v1575 = vld [vmem:[%s1551 + $0xb8] sm:$0xff]
      %v1576 = vld [vmem:[%s1551 + $0xc0] sm:$0xff]
      %v1577 = vld [vmem:[%s1551 + $0xc8] sm:$0xff]
      %v1578 = vld [vmem:[%s1551 + $0xd0] sm:$0xff]
      %v1579 = vld [vmem:[%s1551 + $0xd8] sm:$0xff]
      %v1580 = vld [vmem:[%s1551 + $0xe0] sm:$0xff]
      %v1581 = vld [vmem:[%s1551 + $0xe8] sm:$0xff]
      %v1582 = vld [vmem:[%s1551 + $0xf0] sm:$0xff]
      %v1583 = vld [vmem:[%s1551 + $0xf8] sm:$0xff]
      %v1584 = vld [vmem:[%s1551 + $0x100] sm:$0xff]
      %v1585 = vld [vmem:[%s1551 + $0x108] sm:$0xff]
      %v1586 = vld [vmem:[%s1551 + $0x110] sm:$0xff]
      %v1587 = vld [vmem:[%s1551 + $0x118] sm:$0xff]
      %v1588 = vld [vmem:[%s1551 + $0x120] sm:$0xff]
      %v1589 = vld [vmem:[%s1551 + $0x128] sm:$0xff]
      %v1590 = vld [vmem:[%s1551 + $0x130] sm:$0xff]
      %v1591 = vld [vmem:[%s1551 + $0x138] sm:$0xff]
      %v1592 = vld [vmem:[%s1551 + $0x140] sm:$0xff]
      %v1593 = vld [vmem:[%s1551 + $0x148] sm:$0xff]
      %v1594 = vld [vmem:[%s1551 + $0x150] sm:$0xff]
      %v1595 = vld [vmem:[%s1551 + $0x158] sm:$0xff]
      %v1596 = vld [vmem:[%s1551 + $0x160] sm:$0xff]
      %v1597 = vld [vmem:[%s1551 + $0x168] sm:$0xff]
      %v1598 = vld [vmem:[%s1551 + $0x170] sm:$0xff]
      %v1599 = vld [vmem:[%s1551 + $0x178] sm:$0xff]
      %v1600 = vld [vmem:[%s1551 + $0x180] sm:$0xff]
      %v1601 = vld [vmem:[%s1551 + $0x188] sm:$0xff]
      %v1602 = vld [vmem:[%s1551 + $0x190] sm:$0xff]
      %v1603 = vld [vmem:[%s1551 + $0x198] sm:$0xff]
      %v1604 = vld [vmem:[%s1551 + $0x1a0] sm:$0xff]
      %v1605 = vld [vmem:[%s1551 + $0x1a8] sm:$0xff]
      %v1606 = vld [vmem:[%s1551 + $0x1b0] sm:$0xff]
      %v1607 = vld [vmem:[%s1551 + $0x1b8] sm:$0xff]
      %v1608 = vld [vmem:[%s1551 + $0x1c0] sm:$0xff]
      %v1609 = vld [vmem:[%s1551 + $0x1c8] sm:$0xff]
      %v1610 = vld [vmem:[%s1551 + $0x1d0] sm:$0xff]
      %v1611 = vld [vmem:[%s1551 + $0x1d8] sm:$0xff]
      %v1612 = vld [vmem:[%s1551 + $0x1e0] sm:$0xff]
      %v1613 = vld [vmem:[%s1551 + $0x1e8] sm:$0xff]
      %v1614 = vld [vmem:[%s1551 + $0x1f0] sm:$0xff]
      %v1615 = vld [vmem:[%s1551 + $0x1f8] sm:$0xff]
      %v1616 = vld [vmem:[%s1551 + $0x200] sm:$0xff]
      %v1617 = vld [vmem:[%s1551 + $0x208] sm:$0xff]
      %s1618 = scalar_lea.vmem %s233, 8
      %v1619 = vld [vmem:[%s1618] sm:$0x7]
      %v1621 = vsel %vm780, %v1619, 0
      %1623 = vmatpush.msra.mxu0 0.0
      %1624 = vmatpush.msra.mxu0 0.0
      %1625 = vmatpush.msra.mxu0 0.0
      %1626 = vmatpush.msra.mxu0 0.0
      %1627 = vmatpush.msra.mxu0 0.0
      %1628 = vmatpush.msra.mxu0 0.0
      %1629 = vmatpush.msra.mxu0 0.0
      %1630 = vmatpush.msra.mxu0 0.0
      %1631 = vmatpush.msra.mxu0 0.0
      %1632 = vmatpush.msra.mxu0 0.0
      %1633 = vmatpush.msra.mxu0 0.0
      %1634 = vmatpush.msra.mxu0 0.0
      %1635 = vmatpush.msra.mxu0 0.0
      %1636 = vmatpush.msra.mxu0 0.0
      %1637 = vmatpush.msra.mxu0 0.0
      %1638 = vmatpush.msra.mxu0 %v1621
      %1639 = vmatmul.f32.gmra.mxu0 %v583
      %v1640 = vpop.f32.mrf.mxu0
      %v1641 = vadd.f32 0.0, %v1640
      %1642 = vmatmul.f32.gmra.mxu0 %v586
      %v1643 = vpop.f32.mrf.mxu0
      %v1644 = vadd.f32 0.0, %v1643
      %1645 = vmatmul.f32.gmra.mxu0 %v589
      %v1646 = vpop.f32.mrf.mxu0
      %v1647 = vadd.f32 0.0, %v1646
      %1648 = vmatmul.f32.gmra.mxu0 %v592
      %v1649 = vpop.f32.mrf.mxu0
      %v1650 = vadd.f32 0.0, %v1649
      %1651 = vmatmul.f32.gmra.mxu0 %v595
      %v1652 = vpop.f32.mrf.mxu0
      %v1653 = vadd.f32 0.0, %v1652
      %1654 = vmatmul.f32.gmra.mxu0 %v598
      %v1655 = vpop.f32.mrf.mxu0
      %v1656 = vadd.f32 0.0, %v1655
      %1657 = vmatmul.f32.gmra.mxu0 %v601
      %v1658 = vpop.f32.mrf.mxu0
      %v1659 = vadd.f32 0.0, %v1658
      %1660 = vmatmul.f32.gmra.mxu0 %v604
      %v1661 = vpop.f32.mrf.mxu0
      %v1662 = vadd.f32 0.0, %v1661
      %1663 = vmatmul.f32.gmra.mxu0 %v607
      %v1664 = vpop.f32.mrf.mxu0
      %v1665 = vadd.f32 0.0, %v1664
      %1666 = vmatmul.f32.gmra.mxu0 %v610
      %v1667 = vpop.f32.mrf.mxu0
      %v1668 = vadd.f32 0.0, %v1667
      %1669 = vmatmul.f32.gmra.mxu0 %v613
      %v1670 = vpop.f32.mrf.mxu0
      %v1671 = vadd.f32 0.0, %v1670
      %1672 = vmatmul.f32.gmra.mxu0 %v616
      %v1673 = vpop.f32.mrf.mxu0
      %v1674 = vadd.f32 0.0, %v1673
      %1675 = vmatmul.f32.gmra.mxu0 %v619
      %v1676 = vpop.f32.mrf.mxu0
      %v1677 = vadd.f32 0.0, %v1676
      %1678 = vmatmul.f32.gmra.mxu0 %v622
      %v1679 = vpop.f32.mrf.mxu0
      %v1680 = vadd.f32 0.0, %v1679
      %1681 = vmatmul.f32.gmra.mxu0 %v625
      %v1682 = vpop.f32.mrf.mxu0
      %v1683 = vadd.f32 0.0, %v1682
      %1684 = vmatmul.f32.gmra.mxu0 %v628
      %v1685 = vpop.f32.mrf.mxu0
      %v1686 = vadd.f32 0.0, %v1685
      %1687 = vmatmul.f32.gmra.mxu0 %v631
      %v1688 = vpop.f32.mrf.mxu0
      %v1689 = vadd.f32 0.0, %v1688
      %1690 = vmatmul.f32.gmra.mxu0 %v634
      %v1691 = vpop.f32.mrf.mxu0
      %v1692 = vadd.f32 0.0, %v1691
      %1693 = vmatmul.f32.gmra.mxu0 %v637
      %v1694 = vpop.f32.mrf.mxu0
      %v1695 = vadd.f32 0.0, %v1694
      %1696 = vmatmul.f32.gmra.mxu0 %v640
      %v1697 = vpop.f32.mrf.mxu0
      %v1698 = vadd.f32 0.0, %v1697
      %1699 = vmatmul.f32.gmra.mxu0 %v643
      %v1700 = vpop.f32.mrf.mxu0
      %v1701 = vadd.f32 0.0, %v1700
      %1702 = vmatmul.f32.gmra.mxu0 %v646
      %v1703 = vpop.f32.mrf.mxu0
      %v1704 = vadd.f32 0.0, %v1703
      %1705 = vmatmul.f32.gmra.mxu0 %v649
      %v1706 = vpop.f32.mrf.mxu0
      %v1707 = vadd.f32 0.0, %v1706
      %1708 = vmatmul.f32.gmra.mxu0 %v652
      %v1709 = vpop.f32.mrf.mxu0
      %v1710 = vadd.f32 0.0, %v1709
      %1711 = vmatmul.f32.gmra.mxu0 %v655
      %v1712 = vpop.f32.mrf.mxu0
      %v1713 = vadd.f32 0.0, %v1712
      %1714 = vmatmul.f32.gmra.mxu0 %v658
      %v1715 = vpop.f32.mrf.mxu0
      %v1716 = vadd.f32 0.0, %v1715
      %1717 = vmatmul.f32.gmra.mxu0 %v661
      %v1718 = vpop.f32.mrf.mxu0
      %v1719 = vadd.f32 0.0, %v1718
      %1720 = vmatmul.f32.gmra.mxu0 %v664
      %v1721 = vpop.f32.mrf.mxu0
      %v1722 = vadd.f32 0.0, %v1721
      %1723 = vmatmul.f32.gmra.mxu0 %v667
      %v1724 = vpop.f32.mrf.mxu0
      %v1725 = vadd.f32 0.0, %v1724
      %1726 = vmatmul.f32.gmra.mxu0 %v670
      %v1727 = vpop.f32.mrf.mxu0
      %v1728 = vadd.f32 0.0, %v1727
      %1729 = vmatmul.f32.gmra.mxu0 %v673
      %v1730 = vpop.f32.mrf.mxu0
      %v1731 = vadd.f32 0.0, %v1730
      %1732 = vmatmul.f32.gmra.mxu0 %v676
      %v1733 = vpop.f32.mrf.mxu0
      %v1734 = vadd.f32 0.0, %v1733
      %1735 = vmatmul.f32.gmra.mxu0 %v679
      %v1736 = vpop.f32.mrf.mxu0
      %v1737 = vadd.f32 0.0, %v1736
      %1738 = vmatmul.f32.gmra.mxu0 %v682
      %v1739 = vpop.f32.mrf.mxu0
      %v1740 = vadd.f32 0.0, %v1739
      %1741 = vmatmul.f32.gmra.mxu0 %v685
      %v1742 = vpop.f32.mrf.mxu0
      %v1743 = vadd.f32 0.0, %v1742
      %1744 = vmatmul.f32.gmra.mxu0 %v688
      %v1745 = vpop.f32.mrf.mxu0
      %v1746 = vadd.f32 0.0, %v1745
      %1747 = vmatmul.f32.gmra.mxu0 %v691
      %v1748 = vpop.f32.mrf.mxu0
      %v1749 = vadd.f32 0.0, %v1748
      %1750 = vmatmul.f32.gmra.mxu0 %v694
      %v1751 = vpop.f32.mrf.mxu0
      %v1752 = vadd.f32 0.0, %v1751
      %1753 = vmatmul.f32.gmra.mxu0 %v697
      %v1754 = vpop.f32.mrf.mxu0
      %v1755 = vadd.f32 0.0, %v1754
      %1756 = vmatmul.f32.gmra.mxu0 %v700
      %v1757 = vpop.f32.mrf.mxu0
      %v1758 = vadd.f32 0.0, %v1757
      %1759 = vmatmul.f32.gmra.mxu0 %v703
      %v1760 = vpop.f32.mrf.mxu0
      %v1761 = vadd.f32 0.0, %v1760
      %1762 = vmatmul.f32.gmra.mxu0 %v706
      %v1763 = vpop.f32.mrf.mxu0
      %v1764 = vadd.f32 0.0, %v1763
      %1765 = vmatmul.f32.gmra.mxu0 %v709
      %v1766 = vpop.f32.mrf.mxu0
      %v1767 = vadd.f32 0.0, %v1766
      %1768 = vmatmul.f32.gmra.mxu0 %v712
      %v1769 = vpop.f32.mrf.mxu0
      %v1770 = vadd.f32 0.0, %v1769
      %1771 = vmatmul.f32.gmra.mxu0 %v715
      %v1772 = vpop.f32.mrf.mxu0
      %v1773 = vadd.f32 0.0, %v1772
      %1774 = vmatmul.f32.gmra.mxu0 %v718
      %v1775 = vpop.f32.mrf.mxu0
      %v1776 = vadd.f32 0.0, %v1775
      %1777 = vmatmul.f32.gmra.mxu0 %v721
      %v1778 = vpop.f32.mrf.mxu0
      %v1779 = vadd.f32 0.0, %v1778
      %1780 = vmatmul.f32.gmra.mxu0 %v724
      %v1781 = vpop.f32.mrf.mxu0
      %v1782 = vadd.f32 0.0, %v1781
      %1783 = vmatmul.f32.gmra.mxu0 %v727
      %v1784 = vpop.f32.mrf.mxu0
      %v1785 = vadd.f32 0.0, %v1784
      %1786 = vmatmul.f32.gmra.mxu0 %v730
      %v1787 = vpop.f32.mrf.mxu0
      %v1788 = vadd.f32 0.0, %v1787
      %1789 = vmatmul.f32.gmra.mxu0 %v733
      %v1790 = vpop.f32.mrf.mxu0
      %v1791 = vadd.f32 0.0, %v1790
      %1792 = vmatmul.f32.gmra.mxu0 %v736
      %v1793 = vpop.f32.mrf.mxu0
      %v1794 = vadd.f32 0.0, %v1793
      %1795 = vmatmul.f32.gmra.mxu0 %v739
      %v1796 = vpop.f32.mrf.mxu0
      %v1797 = vadd.f32 0.0, %v1796
      %1798 = vmatmul.f32.gmra.mxu0 %v742
      %v1799 = vpop.f32.mrf.mxu0
      %v1800 = vadd.f32 0.0, %v1799
      %1801 = vmatmul.f32.gmra.mxu0 %v745
      %v1802 = vpop.f32.mrf.mxu0
      %v1803 = vadd.f32 0.0, %v1802
      %1804 = vmatmul.f32.gmra.mxu0 %v748
      %v1805 = vpop.f32.mrf.mxu0
      %v1806 = vadd.f32 0.0, %v1805
      %1807 = vmatmul.f32.gmra.mxu0 %v751
      %v1808 = vpop.f32.mrf.mxu0
      %v1809 = vadd.f32 0.0, %v1808
      %1810 = vmatmul.f32.gmra.mxu0 %v754
      %v1811 = vpop.f32.mrf.mxu0
      %v1812 = vadd.f32 0.0, %v1811
      %1813 = vmatmul.f32.gmra.mxu0 %v757
      %v1814 = vpop.f32.mrf.mxu0
      %v1815 = vadd.f32 0.0, %v1814
      %1816 = vmatmul.f32.gmra.mxu0 %v760
      %v1817 = vpop.f32.mrf.mxu0
      %v1818 = vadd.f32 0.0, %v1817
      %1819 = vmatmul.f32.gmra.mxu0 %v763
      %v1820 = vpop.f32.mrf.mxu0
      %v1821 = vadd.f32 0.0, %v1820
      %1822 = vmatmul.f32.gmra.mxu0 %v766
      %v1823 = vpop.f32.mrf.mxu0
      %v1824 = vadd.f32 0.0, %v1823
      %1825 = vmatmul.f32.gmra.mxu0 %v769
      %v1826 = vpop.f32.mrf.mxu0
      %v1827 = vadd.f32 0.0, %v1826
      %1828 = vmatmul.f32.gmra.mxu0 %v772
      %v1829 = vpop.f32.mrf.mxu0
      %v1830 = vadd.f32 0.0, %v1829
      %1831 = vmatmul.f32.gmra.mxu0 %v775
      %v1832 = vpop.f32.mrf.mxu0
      %v1833 = vadd.f32 0.0, %v1832
      %1834 = vmatmul.f32.gmra.mxu0 %v778
      %v1835 = vpop.f32.mrf.mxu0
      %v1836 = vadd.f32 0.0, %v1835
      %1837 = vdwg.mxu0
      %v1838 = vadd.f32 %v1552, %v1641
      %v1839 = vadd.f32 %v1553, %v1644
      %v1840 = vadd.f32 %v1554, %v1647
      %v1841 = vadd.f32 %v1555, %v1650
      %v1842 = vadd.f32 %v1556, %v1653
      %v1843 = vadd.f32 %v1557, %v1656
      %v1844 = vadd.f32 %v1558, %v1659
      %v1845 = vadd.f32 %v1559, %v1662
      %v1846 = vadd.f32 %v1560, %v1665
      %v1847 = vadd.f32 %v1561, %v1668
      %v1848 = vadd.f32 %v1562, %v1671
      %v1849 = vadd.f32 %v1563, %v1674
      %v1850 = vadd.f32 %v1564, %v1677
      %v1851 = vadd.f32 %v1565, %v1680
      %v1852 = vadd.f32 %v1566, %v1683
      %v1853 = vadd.f32 %v1567, %v1686
      %v1854 = vadd.f32 %v1568, %v1689
      %v1855 = vadd.f32 %v1569, %v1692
      %v1856 = vadd.f32 %v1570, %v1695
      %v1857 = vadd.f32 %v1571, %v1698
      %v1858 = vadd.f32 %v1572, %v1701
      %v1859 = vadd.f32 %v1573, %v1704
      %v1860 = vadd.f32 %v1574, %v1707
      %v1861 = vadd.f32 %v1575, %v1710
      %v1862 = vadd.f32 %v1576, %v1713
      %v1863 = vadd.f32 %v1577, %v1716
      %v1864 = vadd.f32 %v1578, %v1719
      %v1865 = vadd.f32 %v1579, %v1722
      %v1866 = vadd.f32 %v1580, %v1725
      %v1867 = vadd.f32 %v1581, %v1728
      %v1868 = vadd.f32 %v1582, %v1731
      %v1869 = vadd.f32 %v1583, %v1734
      %v1870 = vadd.f32 %v1584, %v1737
      %v1871 = vadd.f32 %v1585, %v1740
      %v1872 = vadd.f32 %v1586, %v1743
      %v1873 = vadd.f32 %v1587, %v1746
      %v1874 = vadd.f32 %v1588, %v1749
      %v1875 = vadd.f32 %v1589, %v1752
      %v1876 = vadd.f32 %v1590, %v1755
      %v1877 = vadd.f32 %v1591, %v1758
      %v1878 = vadd.f32 %v1592, %v1761
      %v1879 = vadd.f32 %v1593, %v1764
      %v1880 = vadd.f32 %v1594, %v1767
      %v1881 = vadd.f32 %v1595, %v1770
      %v1882 = vadd.f32 %v1596, %v1773
      %v1883 = vadd.f32 %v1597, %v1776
      %v1884 = vadd.f32 %v1598, %v1779
      %v1885 = vadd.f32 %v1599, %v1782
      %v1886 = vadd.f32 %v1600, %v1785
      %v1887 = vadd.f32 %v1601, %v1788
      %v1888 = vadd.f32 %v1602, %v1791
      %v1889 = vadd.f32 %v1603, %v1794
      %v1890 = vadd.f32 %v1604, %v1797
      %v1891 = vadd.f32 %v1605, %v1800
      %v1892 = vadd.f32 %v1606, %v1803
      %v1893 = vadd.f32 %v1607, %v1806
      %v1894 = vadd.f32 %v1608, %v1809
      %v1895 = vadd.f32 %v1609, %v1812
      %v1896 = vadd.f32 %v1610, %v1815
      %v1897 = vadd.f32 %v1611, %v1818
      %v1898 = vadd.f32 %v1612, %v1821
      %v1899 = vadd.f32 %v1613, %v1824
      %v1900 = vadd.f32 %v1614, %v1827
      %v1901 = vadd.f32 %v1615, %v1830
      %v1902 = vadd.f32 %v1616, %v1833
      %v1903 = vadd.f32 %v1617, %v1836
      %1904 = vst.msk [vmem:[%s1551] sm:$0xff] %vm1065, %v1838
      %1905 = vst.msk [vmem:[%s1551 + $0x8] sm:$0xff] %vm1065, %v1839
      %1906 = vst.msk [vmem:[%s1551 + $0x10] sm:$0xff] %vm1065, %v1840
      %1907 = vst.msk [vmem:[%s1551 + $0x18] sm:$0xff] %vm1065, %v1841
      %1908 = vst.msk [vmem:[%s1551 + $0x20] sm:$0xff] %vm1065, %v1842
      %1909 = vst.msk [vmem:[%s1551 + $0x28] sm:$0xff] %vm1065, %v1843
      %1910 = vst.msk [vmem:[%s1551 + $0x30] sm:$0xff] %vm1065, %v1844
      %1911 = vst.msk [vmem:[%s1551 + $0x38] sm:$0xff] %vm1065, %v1845
      %1912 = vst.msk [vmem:[%s1551 + $0x40] sm:$0xff] %vm1065, %v1846
      %1913 = vst.msk [vmem:[%s1551 + $0x48] sm:$0xff] %vm1065, %v1847
      %1914 = vst.msk [vmem:[%s1551 + $0x50] sm:$0xff] %vm1065, %v1848
      %1915 = vst.msk [vmem:[%s1551 + $0x58] sm:$0xff] %vm1065, %v1849
      %1916 = vst.msk [vmem:[%s1551 + $0x60] sm:$0xff] %vm1065, %v1850
      %1917 = vst.msk [vmem:[%s1551 + $0x68] sm:$0xff] %vm1065, %v1851
      %1918 = vst.msk [vmem:[%s1551 + $0x70] sm:$0xff] %vm1065, %v1852
      %1919 = vst.msk [vmem:[%s1551 + $0x78] sm:$0xff] %vm1065, %v1853
      %1920 = vst.msk [vmem:[%s1551 + $0x80] sm:$0xff] %vm1065, %v1854
      %1921 = vst.msk [vmem:[%s1551 + $0x88] sm:$0xff] %vm1065, %v1855
      %1922 = vst.msk [vmem:[%s1551 + $0x90] sm:$0xff] %vm1065, %v1856
      %1923 = vst.msk [vmem:[%s1551 + $0x98] sm:$0xff] %vm1065, %v1857
      %1924 = vst.msk [vmem:[%s1551 + $0xa0] sm:$0xff] %vm1065, %v1858
      %1925 = vst.msk [vmem:[%s1551 + $0xa8] sm:$0xff] %vm1065, %v1859
      %1926 = vst.msk [vmem:[%s1551 + $0xb0] sm:$0xff] %vm1065, %v1860
      %1927 = vst.msk [vmem:[%s1551 + $0xb8] sm:$0xff] %vm1065, %v1861
      %1928 = vst.msk [vmem:[%s1551 + $0xc0] sm:$0xff] %vm1065, %v1862
      %1929 = vst.msk [vmem:[%s1551 + $0xc8] sm:$0xff] %vm1065, %v1863
      %1930 = vst.msk [vmem:[%s1551 + $0xd0] sm:$0xff] %vm1065, %v1864
      %1931 = vst.msk [vmem:[%s1551 + $0xd8] sm:$0xff] %vm1065, %v1865
      %1932 = vst.msk [vmem:[%s1551 + $0xe0] sm:$0xff] %vm1065, %v1866
      %1933 = vst.msk [vmem:[%s1551 + $0xe8] sm:$0xff] %vm1065, %v1867
      %1934 = vst.msk [vmem:[%s1551 + $0xf0] sm:$0xff] %vm1065, %v1868
      %1935 = vst.msk [vmem:[%s1551 + $0xf8] sm:$0xff] %vm1065, %v1869
      %1936 = vst.msk [vmem:[%s1551 + $0x100] sm:$0xff] %vm1065, %v1870
      %1937 = vst.msk [vmem:[%s1551 + $0x108] sm:$0xff] %vm1065, %v1871
      %1938 = vst.msk [vmem:[%s1551 + $0x110] sm:$0xff] %vm1065, %v1872
      %1939 = vst.msk [vmem:[%s1551 + $0x118] sm:$0xff] %vm1065, %v1873
      %1940 = vst.msk [vmem:[%s1551 + $0x120] sm:$0xff] %vm1065, %v1874
      %1941 = vst.msk [vmem:[%s1551 + $0x128] sm:$0xff] %vm1065, %v1875
      %1942 = vst.msk [vmem:[%s1551 + $0x130] sm:$0xff] %vm1065, %v1876
      %1943 = vst.msk [vmem:[%s1551 + $0x138] sm:$0xff] %vm1065, %v1877
      %1944 = vst.msk [vmem:[%s1551 + $0x140] sm:$0xff] %vm1065, %v1878
      %1945 = vst.msk [vmem:[%s1551 + $0x148] sm:$0xff] %vm1065, %v1879
      %1946 = vst.msk [vmem:[%s1551 + $0x150] sm:$0xff] %vm1065, %v1880
      %1947 = vst.msk [vmem:[%s1551 + $0x158] sm:$0xff] %vm1065, %v1881
      %1948 = vst.msk [vmem:[%s1551 + $0x160] sm:$0xff] %vm1065, %v1882
      %1949 = vst.msk [vmem:[%s1551 + $0x168] sm:$0xff] %vm1065, %v1883
      %1950 = vst.msk [vmem:[%s1551 + $0x170] sm:$0xff] %vm1065, %v1884
      %1951 = vst.msk [vmem:[%s1551 + $0x178] sm:$0xff] %vm1065, %v1885
      %1952 = vst.msk [vmem:[%s1551 + $0x180] sm:$0xff] %vm1065, %v1886
      %1953 = vst.msk [vmem:[%s1551 + $0x188] sm:$0xff] %vm1065, %v1887
      %1954 = vst.msk [vmem:[%s1551 + $0x190] sm:$0xff] %vm1065, %v1888
      %1955 = vst.msk [vmem:[%s1551 + $0x198] sm:$0xff] %vm1065, %v1889
      %1956 = vst.msk [vmem:[%s1551 + $0x1a0] sm:$0xff] %vm1065, %v1890
      %1957 = vst.msk [vmem:[%s1551 + $0x1a8] sm:$0xff] %vm1065, %v1891
      %1958 = vst.msk [vmem:[%s1551 + $0x1b0] sm:$0xff] %vm1065, %v1892
      %1959 = vst.msk [vmem:[%s1551 + $0x1b8] sm:$0xff] %vm1065, %v1893
      %1960 = vst.msk [vmem:[%s1551 + $0x1c0] sm:$0xff] %vm1065, %v1894
      %1961 = vst.msk [vmem:[%s1551 + $0x1c8] sm:$0xff] %vm1065, %v1895
      %1962 = vst.msk [vmem:[%s1551 + $0x1d0] sm:$0xff] %vm1065, %v1896
      %1963 = vst.msk [vmem:[%s1551 + $0x1d8] sm:$0xff] %vm1065, %v1897
      %1964 = vst.msk [vmem:[%s1551 + $0x1e0] sm:$0xff] %vm1065, %v1898
      %1965 = vst.msk [vmem:[%s1551 + $0x1e8] sm:$0xff] %vm1065, %v1899
      %1966 = vst.msk [vmem:[%s1551 + $0x1f0] sm:$0xff] %vm1065, %v1900
      %1967 = vst.msk [vmem:[%s1551 + $0x1f8] sm:$0xff] %vm1065, %v1901
      %1968 = vst.msk [vmem:[%s1551 + $0x200] sm:$0xff] %vm1065, %v1902
      %1969 = vst.msk [vmem:[%s1551 + $0x208] sm:$0xff] %vm1065, %v1903
      %v1970 = vld [vmem:[%s229 + $0x42] sm:$0xff]
      %v1971 = vld [vmem:[%s229 + $0x4a] sm:$0xff]
      %v1972 = vld [vmem:[%s229 + $0x52] sm:$0xff]
      %v1973 = vld [vmem:[%s229 + $0x5a] sm:$0xff]
      %v1974 = vld [vmem:[%s229 + $0x62] sm:$0xff]
      %v1975 = vld [vmem:[%s229 + $0x6a] sm:$0xff]
      %v1976 = vld [vmem:[%s229 + $0x72] sm:$0xff]
      %v1977 = vld [vmem:[%s229 + $0x7a] sm:$0xff]
      %v1978 = vld [vmem:[%s229 + $0x82] sm:$0xff]
      %v1979 = vld [vmem:[%s229 + $0x8a] sm:$0xff]
      %v1980 = vld [vmem:[%s229 + $0x92] sm:$0xff]
      %v1981 = vld [vmem:[%s229 + $0x9a] sm:$0xff]
      %v1982 = vld [vmem:[%s229 + $0xa2] sm:$0xff]
      %v1983 = vld [vmem:[%s229 + $0xaa] sm:$0xff]
      %v1984 = vld [vmem:[%s229 + $0xb2] sm:$0xff]
      %v1985 = vld [vmem:[%s229 + $0xba] sm:$0xff]
      %v1986 = vld [vmem:[%s229 + $0xc2] sm:$0xff]
      %v1987 = vld [vmem:[%s229 + $0xca] sm:$0xff]
      %v1988 = vld [vmem:[%s229 + $0xd2] sm:$0xff]
      %v1989 = vld [vmem:[%s229 + $0xda] sm:$0xff]
      %v1990 = vld [vmem:[%s229 + $0xe2] sm:$0xff]
      %v1991 = vld [vmem:[%s229 + $0xea] sm:$0xff]
      %v1992 = vld [vmem:[%s229 + $0xf2] sm:$0xff]
      %v1993 = vld [vmem:[%s229 + $0xfa] sm:$0xff]
      %v1994 = vld [vmem:[%s229 + $0x102] sm:$0xff]
      %v1995 = vld [vmem:[%s229 + $0x10a] sm:$0xff]
      %v1996 = vld [vmem:[%s229 + $0x112] sm:$0xff]
      %v1997 = vld [vmem:[%s229 + $0x11a] sm:$0xff]
      %v1998 = vld [vmem:[%s229 + $0x122] sm:$0xff]
      %v1999 = vld [vmem:[%s229 + $0x12a] sm:$0xff]
      %v2000 = vld [vmem:[%s229 + $0x132] sm:$0xff]
      %v2001 = vld [vmem:[%s229 + $0x13a] sm:$0xff]
      %v2002 = vld [vmem:[%s229 + $0x142] sm:$0xff]
      %v2003 = vld [vmem:[%s229 + $0x14a] sm:$0xff]
      %v2004 = vld [vmem:[%s229 + $0x152] sm:$0xff]
      %v2005 = vld [vmem:[%s229 + $0x15a] sm:$0xff]
      %v2006 = vld [vmem:[%s229 + $0x162] sm:$0xff]
      %v2007 = vld [vmem:[%s229 + $0x16a] sm:$0xff]
      %v2008 = vld [vmem:[%s229 + $0x172] sm:$0xff]
      %v2009 = vld [vmem:[%s229 + $0x17a] sm:$0xff]
      %v2010 = vld [vmem:[%s229 + $0x182] sm:$0xff]
      %v2011 = vld [vmem:[%s229 + $0x18a] sm:$0xff]
      %v2012 = vld [vmem:[%s229 + $0x192] sm:$0xff]
      %v2013 = vld [vmem:[%s229 + $0x19a] sm:$0xff]
      %v2014 = vld [vmem:[%s229 + $0x1a2] sm:$0xff]
      %v2015 = vld [vmem:[%s229 + $0x1aa] sm:$0xff]
      %v2016 = vld [vmem:[%s229 + $0x1b2] sm:$0xff]
      %v2017 = vld [vmem:[%s229 + $0x1ba] sm:$0xff]
      %v2018 = vld [vmem:[%s229 + $0x1c2] sm:$0xff]
      %v2019 = vld [vmem:[%s229 + $0x1ca] sm:$0xff]
      %v2020 = vld [vmem:[%s229 + $0x1d2] sm:$0xff]
      %v2021 = vld [vmem:[%s229 + $0x1da] sm:$0xff]
      %v2022 = vld [vmem:[%s229 + $0x1e2] sm:$0xff]
      %v2023 = vld [vmem:[%s229 + $0x1ea] sm:$0xff]
      %v2024 = vld [vmem:[%s229 + $0x1f2] sm:$0xff]
      %v2025 = vld [vmem:[%s229 + $0x1fa] sm:$0xff]
      %v2026 = vld [vmem:[%s229 + $0x202] sm:$0xff]
      %v2027 = vld [vmem:[%s229 + $0x20a] sm:$0xff]
      %v2028 = vld [vmem:[%s229 + $0x212] sm:$0xff]
      %v2029 = vld [vmem:[%s229 + $0x21a] sm:$0xff]
      %v2030 = vld [vmem:[%s229 + $0x222] sm:$0xff]
      %v2031 = vld [vmem:[%s229 + $0x22a] sm:$0xff]
      %v2032 = vld [vmem:[%s229 + $0x232] sm:$0xff]
      %v2033 = vld [vmem:[%s229 + $0x23a] sm:$0xff]
      %v2034 = vld [vmem:[%s229 + $0x242] sm:$0xff]
      %v2035 = vld [vmem:[%s229 + $0x24a] sm:$0xff]
      %v2036 = vld [vmem:[#allocation2] sm:$0xff]
      %v2037 = vld [vmem:[#allocation2 + $0x8] sm:$0xff]
      %v2038 = vld [vmem:[#allocation2 + $0x10] sm:$0xff]
      %v2039 = vld [vmem:[#allocation2 + $0x18] sm:$0xff]
      %v2040 = vld [vmem:[#allocation2 + $0x20] sm:$0xff]
      %v2041 = vld [vmem:[#allocation2 + $0x28] sm:$0xff]
      %v2042 = vld [vmem:[#allocation2 + $0x30] sm:$0xff]
      %v2043 = vld [vmem:[#allocation2 + $0x38] sm:$0xff]
      %v2044 = vld [vmem:[#allocation2 + $0x40] sm:$0xff]
      %v2045 = vld [vmem:[#allocation2 + $0x48] sm:$0xff]
      %v2046 = vld [vmem:[#allocation2 + $0x50] sm:$0xff]
      %v2047 = vld [vmem:[#allocation2 + $0x58] sm:$0xff]
      %v2048 = vld [vmem:[#allocation2 + $0x60] sm:$0xff]
      %v2049 = vld [vmem:[#allocation2 + $0x68] sm:$0xff]
      %v2050 = vld [vmem:[#allocation2 + $0x70] sm:$0xff]
      %v2051 = vld [vmem:[#allocation2 + $0x78] sm:$0xff]
      %v2052 = vld [vmem:[#allocation2 + $0x80] sm:$0xff]
      %v2053 = vld [vmem:[#allocation2 + $0x88] sm:$0xff]
      %v2054 = vld [vmem:[#allocation2 + $0x90] sm:$0xff]
      %v2055 = vld [vmem:[#allocation2 + $0x98] sm:$0xff]
      %v2056 = vld [vmem:[#allocation2 + $0xa0] sm:$0xff]
      %v2057 = vld [vmem:[#allocation2 + $0xa8] sm:$0xff]
      %v2058 = vld [vmem:[#allocation2 + $0xb0] sm:$0xff]
      %v2059 = vld [vmem:[#allocation2 + $0xb8] sm:$0xff]
      %v2060 = vld [vmem:[#allocation2 + $0xc0] sm:$0xff]
      %v2061 = vld [vmem:[#allocation2 + $0xc8] sm:$0xff]
      %v2062 = vld [vmem:[#allocation2 + $0xd0] sm:$0xff]
      %v2063 = vld [vmem:[#allocation2 + $0xd8] sm:$0xff]
      %v2064 = vld [vmem:[#allocation2 + $0xe0] sm:$0xff]
      %v2065 = vld [vmem:[#allocation2 + $0xe8] sm:$0xff]
      %v2066 = vld [vmem:[#allocation2 + $0xf0] sm:$0xff]
      %v2067 = vld [vmem:[#allocation2 + $0xf8] sm:$0xff]
      %v2068 = vld [vmem:[#allocation2 + $0x100] sm:$0xff]
      %v2069 = vld [vmem:[#allocation2 + $0x108] sm:$0xff]
      %v2070 = vld [vmem:[#allocation2 + $0x110] sm:$0xff]
      %v2071 = vld [vmem:[#allocation2 + $0x118] sm:$0xff]
      %v2072 = vld [vmem:[#allocation2 + $0x120] sm:$0xff]
      %v2073 = vld [vmem:[#allocation2 + $0x128] sm:$0xff]
      %v2074 = vld [vmem:[#allocation2 + $0x130] sm:$0xff]
      %v2075 = vld [vmem:[#allocation2 + $0x138] sm:$0xff]
      %v2076 = vld [vmem:[#allocation2 + $0x140] sm:$0xff]
      %v2077 = vld [vmem:[#allocation2 + $0x148] sm:$0xff]
      %v2078 = vld [vmem:[#allocation2 + $0x150] sm:$0xff]
      %v2079 = vld [vmem:[#allocation2 + $0x158] sm:$0xff]
      %v2080 = vld [vmem:[#allocation2 + $0x160] sm:$0xff]
      %v2081 = vld [vmem:[#allocation2 + $0x168] sm:$0xff]
      %v2082 = vld [vmem:[#allocation2 + $0x170] sm:$0xff]
      %v2083 = vld [vmem:[#allocation2 + $0x178] sm:$0xff]
      %v2084 = vld [vmem:[#allocation2 + $0x180] sm:$0xff]
      %v2085 = vld [vmem:[#allocation2 + $0x188] sm:$0xff]
      %v2086 = vld [vmem:[#allocation2 + $0x190] sm:$0xff]
      %v2087 = vld [vmem:[#allocation2 + $0x198] sm:$0xff]
      %v2088 = vld [vmem:[#allocation2 + $0x1a0] sm:$0xff]
      %v2089 = vld [vmem:[#allocation2 + $0x1a8] sm:$0xff]
      %v2090 = vld [vmem:[#allocation2 + $0x1b0] sm:$0xff]
      %v2091 = vld [vmem:[#allocation2 + $0x1b8] sm:$0xff]
      %v2092 = vld [vmem:[#allocation2 + $0x1c0] sm:$0xff]
      %v2093 = vld [vmem:[#allocation2 + $0x1c8] sm:$0xff]
      %v2094 = vld [vmem:[#allocation2 + $0x1d0] sm:$0xff]
      %v2095 = vld [vmem:[#allocation2 + $0x1d8] sm:$0xff]
      %v2096 = vld [vmem:[#allocation2 + $0x1e0] sm:$0xff]
      %v2097 = vld [vmem:[#allocation2 + $0x1e8] sm:$0xff]
      %v2098 = vld [vmem:[#allocation2 + $0x1f0] sm:$0xff]
      %v2099 = vld [vmem:[#allocation2 + $0x1f8] sm:$0xff]
      %v2100 = vld [vmem:[#allocation2 + $0x200] sm:$0xff]
      %v2101 = vld [vmem:[#allocation2 + $0x208] sm:$0xff]
      %s2102 = scalar_lea.vmem %s233, 12
      %v2103 = vld [vmem:[%s2102] sm:$0x7]
      %v2105 = vsel %vm581, %v1970, 0
      %v2108 = vsel %vm581, %v1971, 0
      %v2111 = vsel %vm581, %v1972, 0
      %v2114 = vsel %vm581, %v1973, 0
      %v2117 = vsel %vm581, %v1974, 0
      %v2120 = vsel %vm581, %v1975, 0
      %v2123 = vsel %vm581, %v1976, 0
      %v2126 = vsel %vm581, %v1977, 0
      %v2129 = vsel %vm581, %v1978, 0
      %v2132 = vsel %vm581, %v1979, 0
      %v2135 = vsel %vm581, %v1980, 0
      %v2138 = vsel %vm581, %v1981, 0
      %v2141 = vsel %vm581, %v1982, 0
      %v2144 = vsel %vm581, %v1983, 0
      %v2147 = vsel %vm581, %v1984, 0
      %v2150 = vsel %vm581, %v1985, 0
      %v2153 = vsel %vm581, %v1986, 0
      %v2156 = vsel %vm581, %v1987, 0
      %v2159 = vsel %vm581, %v1988, 0
      %v2162 = vsel %vm581, %v1989, 0
      %v2165 = vsel %vm581, %v1990, 0
      %v2168 = vsel %vm581, %v1991, 0
      %v2171 = vsel %vm581, %v1992, 0
      %v2174 = vsel %vm581, %v1993, 0
      %v2177 = vsel %vm581, %v1994, 0
      %v2180 = vsel %vm581, %v1995, 0
      %v2183 = vsel %vm581, %v1996, 0
      %v2186 = vsel %vm581, %v1997, 0
      %v2189 = vsel %vm581, %v1998, 0
      %v2192 = vsel %vm581, %v1999, 0
      %v2195 = vsel %vm581, %v2000, 0
      %v2198 = vsel %vm581, %v2001, 0
      %v2201 = vsel %vm581, %v2002, 0
      %v2204 = vsel %vm581, %v2003, 0
      %v2207 = vsel %vm581, %v2004, 0
      %v2210 = vsel %vm581, %v2005, 0
      %v2213 = vsel %vm581, %v2006, 0
      %v2216 = vsel %vm581, %v2007, 0
      %v2219 = vsel %vm581, %v2008, 0
      %v2222 = vsel %vm581, %v2009, 0
      %v2225 = vsel %vm581, %v2010, 0
      %v2228 = vsel %vm581, %v2011, 0
      %v2231 = vsel %vm581, %v2012, 0
      %v2234 = vsel %vm581, %v2013, 0
      %v2237 = vsel %vm581, %v2014, 0
      %v2240 = vsel %vm581, %v2015, 0
      %v2243 = vsel %vm581, %v2016, 0
      %v2246 = vsel %vm581, %v2017, 0
      %v2249 = vsel %vm581, %v2018, 0
      %v2252 = vsel %vm581, %v2019, 0
      %v2255 = vsel %vm581, %v2020, 0
      %v2258 = vsel %vm581, %v2021, 0
      %v2261 = vsel %vm581, %v2022, 0
      %v2264 = vsel %vm581, %v2023, 0
      %v2267 = vsel %vm581, %v2024, 0
      %v2270 = vsel %vm581, %v2025, 0
      %v2273 = vsel %vm581, %v2026, 0
      %v2276 = vsel %vm581, %v2027, 0
      %v2279 = vsel %vm581, %v2028, 0
      %v2282 = vsel %vm581, %v2029, 0
      %v2285 = vsel %vm581, %v2030, 0
      %v2288 = vsel %vm581, %v2031, 0
      %v2291 = vsel %vm581, %v2032, 0
      %v2294 = vsel %vm581, %v2033, 0
      %v2297 = vsel %vm581, %v2034, 0
      %v2300 = vsel %vm581, %v2035, 0
      %v2303 = vsel %vm780, %v2103, 0
      %2305 = vmatpush.msra.mxu0 0.0
      %2306 = vmatpush.msra.mxu0 0.0
      %2307 = vmatpush.msra.mxu0 0.0
      %2308 = vmatpush.msra.mxu0 0.0
      %2309 = vmatpush.msra.mxu0 0.0
      %2310 = vmatpush.msra.mxu0 0.0
      %2311 = vmatpush.msra.mxu0 0.0
      %2312 = vmatpush.msra.mxu0 0.0
      %2313 = vmatpush.msra.mxu0 0.0
      %2314 = vmatpush.msra.mxu0 0.0
      %2315 = vmatpush.msra.mxu0 0.0
      %2316 = vmatpush.msra.mxu0 0.0
      %2317 = vmatpush.msra.mxu0 0.0
      %2318 = vmatpush.msra.mxu0 0.0
      %2319 = vmatpush.msra.mxu0 0.0
      %2320 = vmatpush.msra.mxu0 %v2303
      %2321 = vmatmul.f32.gmra.mxu0 %v2105
      %v2322 = vpop.f32.mrf.mxu0
      %v2323 = vadd.f32 0.0, %v2322
      %2324 = vmatmul.f32.gmra.mxu0 %v2108
      %v2325 = vpop.f32.mrf.mxu0
      %v2326 = vadd.f32 0.0, %v2325
      %2327 = vmatmul.f32.gmra.mxu0 %v2111
      %v2328 = vpop.f32.mrf.mxu0
      %v2329 = vadd.f32 0.0, %v2328
      %2330 = vmatmul.f32.gmra.mxu0 %v2114
      %v2331 = vpop.f32.mrf.mxu0
      %v2332 = vadd.f32 0.0, %v2331
      %2333 = vmatmul.f32.gmra.mxu0 %v2117
      %v2334 = vpop.f32.mrf.mxu0
      %v2335 = vadd.f32 0.0, %v2334
      %2336 = vmatmul.f32.gmra.mxu0 %v2120
      %v2337 = vpop.f32.mrf.mxu0
      %v2338 = vadd.f32 0.0, %v2337
      %2339 = vmatmul.f32.gmra.mxu0 %v2123
      %v2340 = vpop.f32.mrf.mxu0
      %v2341 = vadd.f32 0.0, %v2340
      %2342 = vmatmul.f32.gmra.mxu0 %v2126
      %v2343 = vpop.f32.mrf.mxu0
      %v2344 = vadd.f32 0.0, %v2343
      %2345 = vmatmul.f32.gmra.mxu0 %v2129
      %v2346 = vpop.f32.mrf.mxu0
      %v2347 = vadd.f32 0.0, %v2346
      %2348 = vmatmul.f32.gmra.mxu0 %v2132
      %v2349 = vpop.f32.mrf.mxu0
      %v2350 = vadd.f32 0.0, %v2349
      %2351 = vmatmul.f32.gmra.mxu0 %v2135
      %v2352 = vpop.f32.mrf.mxu0
      %v2353 = vadd.f32 0.0, %v2352
      %2354 = vmatmul.f32.gmra.mxu0 %v2138
      %v2355 = vpop.f32.mrf.mxu0
      %v2356 = vadd.f32 0.0, %v2355
      %2357 = vmatmul.f32.gmra.mxu0 %v2141
      %v2358 = vpop.f32.mrf.mxu0
      %v2359 = vadd.f32 0.0, %v2358
      %2360 = vmatmul.f32.gmra.mxu0 %v2144
      %v2361 = vpop.f32.mrf.mxu0
      %v2362 = vadd.f32 0.0, %v2361
      %2363 = vmatmul.f32.gmra.mxu0 %v2147
      %v2364 = vpop.f32.mrf.mxu0
      %v2365 = vadd.f32 0.0, %v2364
      %2366 = vmatmul.f32.gmra.mxu0 %v2150
      %v2367 = vpop.f32.mrf.mxu0
      %v2368 = vadd.f32 0.0, %v2367
      %2369 = vmatmul.f32.gmra.mxu0 %v2153
      %v2370 = vpop.f32.mrf.mxu0
      %v2371 = vadd.f32 0.0, %v2370
      %2372 = vmatmul.f32.gmra.mxu0 %v2156
      %v2373 = vpop.f32.mrf.mxu0
      %v2374 = vadd.f32 0.0, %v2373
      %2375 = vmatmul.f32.gmra.mxu0 %v2159
      %v2376 = vpop.f32.mrf.mxu0
      %v2377 = vadd.f32 0.0, %v2376
      %2378 = vmatmul.f32.gmra.mxu0 %v2162
      %v2379 = vpop.f32.mrf.mxu0
      %v2380 = vadd.f32 0.0, %v2379
      %2381 = vmatmul.f32.gmra.mxu0 %v2165
      %v2382 = vpop.f32.mrf.mxu0
      %v2383 = vadd.f32 0.0, %v2382
      %2384 = vmatmul.f32.gmra.mxu0 %v2168
      %v2385 = vpop.f32.mrf.mxu0
      %v2386 = vadd.f32 0.0, %v2385
      %2387 = vmatmul.f32.gmra.mxu0 %v2171
      %v2388 = vpop.f32.mrf.mxu0
      %v2389 = vadd.f32 0.0, %v2388
      %2390 = vmatmul.f32.gmra.mxu0 %v2174
      %v2391 = vpop.f32.mrf.mxu0
      %v2392 = vadd.f32 0.0, %v2391
      %2393 = vmatmul.f32.gmra.mxu0 %v2177
      %v2394 = vpop.f32.mrf.mxu0
      %v2395 = vadd.f32 0.0, %v2394
      %2396 = vmatmul.f32.gmra.mxu0 %v2180
      %v2397 = vpop.f32.mrf.mxu0
      %v2398 = vadd.f32 0.0, %v2397
      %2399 = vmatmul.f32.gmra.mxu0 %v2183
      %v2400 = vpop.f32.mrf.mxu0
      %v2401 = vadd.f32 0.0, %v2400
      %2402 = vmatmul.f32.gmra.mxu0 %v2186
      %v2403 = vpop.f32.mrf.mxu0
      %v2404 = vadd.f32 0.0, %v2403
      %2405 = vmatmul.f32.gmra.mxu0 %v2189
      %v2406 = vpop.f32.mrf.mxu0
      %v2407 = vadd.f32 0.0, %v2406
      %2408 = vmatmul.f32.gmra.mxu0 %v2192
      %v2409 = vpop.f32.mrf.mxu0
      %v2410 = vadd.f32 0.0, %v2409
      %2411 = vmatmul.f32.gmra.mxu0 %v2195
      %v2412 = vpop.f32.mrf.mxu0
      %v2413 = vadd.f32 0.0, %v2412
      %2414 = vmatmul.f32.gmra.mxu0 %v2198
      %v2415 = vpop.f32.mrf.mxu0
      %v2416 = vadd.f32 0.0, %v2415
      %2417 = vmatmul.f32.gmra.mxu0 %v2201
      %v2418 = vpop.f32.mrf.mxu0
      %v2419 = vadd.f32 0.0, %v2418
      %2420 = vmatmul.f32.gmra.mxu0 %v2204
      %v2421 = vpop.f32.mrf.mxu0
      %v2422 = vadd.f32 0.0, %v2421
      %2423 = vmatmul.f32.gmra.mxu0 %v2207
      %v2424 = vpop.f32.mrf.mxu0
      %v2425 = vadd.f32 0.0, %v2424
      %2426 = vmatmul.f32.gmra.mxu0 %v2210
      %v2427 = vpop.f32.mrf.mxu0
      %v2428 = vadd.f32 0.0, %v2427
      %2429 = vmatmul.f32.gmra.mxu0 %v2213
      %v2430 = vpop.f32.mrf.mxu0
      %v2431 = vadd.f32 0.0, %v2430
      %2432 = vmatmul.f32.gmra.mxu0 %v2216
      %v2433 = vpop.f32.mrf.mxu0
      %v2434 = vadd.f32 0.0, %v2433
      %2435 = vmatmul.f32.gmra.mxu0 %v2219
      %v2436 = vpop.f32.mrf.mxu0
      %v2437 = vadd.f32 0.0, %v2436
      %2438 = vmatmul.f32.gmra.mxu0 %v2222
      %v2439 = vpop.f32.mrf.mxu0
      %v2440 = vadd.f32 0.0, %v2439
      %2441 = vmatmul.f32.gmra.mxu0 %v2225
      %v2442 = vpop.f32.mrf.mxu0
      %v2443 = vadd.f32 0.0, %v2442
      %2444 = vmatmul.f32.gmra.mxu0 %v2228
      %v2445 = vpop.f32.mrf.mxu0
      %v2446 = vadd.f32 0.0, %v2445
      %2447 = vmatmul.f32.gmra.mxu0 %v2231
      %v2448 = vpop.f32.mrf.mxu0
      %v2449 = vadd.f32 0.0, %v2448
      %2450 = vmatmul.f32.gmra.mxu0 %v2234
      %v2451 = vpop.f32.mrf.mxu0
      %v2452 = vadd.f32 0.0, %v2451
      %2453 = vmatmul.f32.gmra.mxu0 %v2237
      %v2454 = vpop.f32.mrf.mxu0
      %v2455 = vadd.f32 0.0, %v2454
      %2456 = vmatmul.f32.gmra.mxu0 %v2240
      %v2457 = vpop.f32.mrf.mxu0
      %v2458 = vadd.f32 0.0, %v2457
      %2459 = vmatmul.f32.gmra.mxu0 %v2243
      %v2460 = vpop.f32.mrf.mxu0
      %v2461 = vadd.f32 0.0, %v2460
      %2462 = vmatmul.f32.gmra.mxu0 %v2246
      %v2463 = vpop.f32.mrf.mxu0
      %v2464 = vadd.f32 0.0, %v2463
      %2465 = vmatmul.f32.gmra.mxu0 %v2249
      %v2466 = vpop.f32.mrf.mxu0
      %v2467 = vadd.f32 0.0, %v2466
      %2468 = vmatmul.f32.gmra.mxu0 %v2252
      %v2469 = vpop.f32.mrf.mxu0
      %v2470 = vadd.f32 0.0, %v2469
      %2471 = vmatmul.f32.gmra.mxu0 %v2255
      %v2472 = vpop.f32.mrf.mxu0
      %v2473 = vadd.f32 0.0, %v2472
      %2474 = vmatmul.f32.gmra.mxu0 %v2258
      %v2475 = vpop.f32.mrf.mxu0
      %v2476 = vadd.f32 0.0, %v2475
      %2477 = vmatmul.f32.gmra.mxu0 %v2261
      %v2478 = vpop.f32.mrf.mxu0
      %v2479 = vadd.f32 0.0, %v2478
      %2480 = vmatmul.f32.gmra.mxu0 %v2264
      %v2481 = vpop.f32.mrf.mxu0
      %v2482 = vadd.f32 0.0, %v2481
      %2483 = vmatmul.f32.gmra.mxu0 %v2267
      %v2484 = vpop.f32.mrf.mxu0
      %v2485 = vadd.f32 0.0, %v2484
      %2486 = vmatmul.f32.gmra.mxu0 %v2270
      %v2487 = vpop.f32.mrf.mxu0
      %v2488 = vadd.f32 0.0, %v2487
      %2489 = vmatmul.f32.gmra.mxu0 %v2273
      %v2490 = vpop.f32.mrf.mxu0
      %v2491 = vadd.f32 0.0, %v2490
      %2492 = vmatmul.f32.gmra.mxu0 %v2276
      %v2493 = vpop.f32.mrf.mxu0
      %v2494 = vadd.f32 0.0, %v2493
      %2495 = vmatmul.f32.gmra.mxu0 %v2279
      %v2496 = vpop.f32.mrf.mxu0
      %v2497 = vadd.f32 0.0, %v2496
      %2498 = vmatmul.f32.gmra.mxu0 %v2282
      %v2499 = vpop.f32.mrf.mxu0
      %v2500 = vadd.f32 0.0, %v2499
      %2501 = vmatmul.f32.gmra.mxu0 %v2285
      %v2502 = vpop.f32.mrf.mxu0
      %v2503 = vadd.f32 0.0, %v2502
      %2504 = vmatmul.f32.gmra.mxu0 %v2288
      %v2505 = vpop.f32.mrf.mxu0
      %v2506 = vadd.f32 0.0, %v2505
      %2507 = vmatmul.f32.gmra.mxu0 %v2291
      %v2508 = vpop.f32.mrf.mxu0
      %v2509 = vadd.f32 0.0, %v2508
      %2510 = vmatmul.f32.gmra.mxu0 %v2294
      %v2511 = vpop.f32.mrf.mxu0
      %v2512 = vadd.f32 0.0, %v2511
      %2513 = vmatmul.f32.gmra.mxu0 %v2297
      %v2514 = vpop.f32.mrf.mxu0
      %v2515 = vadd.f32 0.0, %v2514
      %2516 = vmatmul.f32.gmra.mxu0 %v2300
      %v2517 = vpop.f32.mrf.mxu0
      %v2518 = vadd.f32 0.0, %v2517
      %2519 = vdwg.mxu0
      %v2520 = vadd.f32 %v2036, %v2323
      %v2521 = vadd.f32 %v2037, %v2326
      %v2522 = vadd.f32 %v2038, %v2329
      %v2523 = vadd.f32 %v2039, %v2332
      %v2524 = vadd.f32 %v2040, %v2335
      %v2525 = vadd.f32 %v2041, %v2338
      %v2526 = vadd.f32 %v2042, %v2341
      %v2527 = vadd.f32 %v2043, %v2344
      %v2528 = vadd.f32 %v2044, %v2347
      %v2529 = vadd.f32 %v2045, %v2350
      %v2530 = vadd.f32 %v2046, %v2353
      %v2531 = vadd.f32 %v2047, %v2356
      %v2532 = vadd.f32 %v2048, %v2359
      %v2533 = vadd.f32 %v2049, %v2362
      %v2534 = vadd.f32 %v2050, %v2365
      %v2535 = vadd.f32 %v2051, %v2368
      %v2536 = vadd.f32 %v2052, %v2371
      %v2537 = vadd.f32 %v2053, %v2374
      %v2538 = vadd.f32 %v2054, %v2377
      %v2539 = vadd.f32 %v2055, %v2380
      %v2540 = vadd.f32 %v2056, %v2383
      %v2541 = vadd.f32 %v2057, %v2386
      %v2542 = vadd.f32 %v2058, %v2389
      %v2543 = vadd.f32 %v2059, %v2392
      %v2544 = vadd.f32 %v2060, %v2395
      %v2545 = vadd.f32 %v2061, %v2398
      %v2546 = vadd.f32 %v2062, %v2401
      %v2547 = vadd.f32 %v2063, %v2404
      %v2548 = vadd.f32 %v2064, %v2407
      %v2549 = vadd.f32 %v2065, %v2410
      %v2550 = vadd.f32 %v2066, %v2413
      %v2551 = vadd.f32 %v2067, %v2416
      %v2552 = vadd.f32 %v2068, %v2419
      %v2553 = vadd.f32 %v2069, %v2422
      %v2554 = vadd.f32 %v2070, %v2425
      %v2555 = vadd.f32 %v2071, %v2428
      %v2556 = vadd.f32 %v2072, %v2431
      %v2557 = vadd.f32 %v2073, %v2434
      %v2558 = vadd.f32 %v2074, %v2437
      %v2559 = vadd.f32 %v2075, %v2440
      %v2560 = vadd.f32 %v2076, %v2443
      %v2561 = vadd.f32 %v2077, %v2446
      %v2562 = vadd.f32 %v2078, %v2449
      %v2563 = vadd.f32 %v2079, %v2452
      %v2564 = vadd.f32 %v2080, %v2455
      %v2565 = vadd.f32 %v2081, %v2458
      %v2566 = vadd.f32 %v2082, %v2461
      %v2567 = vadd.f32 %v2083, %v2464
      %v2568 = vadd.f32 %v2084, %v2467
      %v2569 = vadd.f32 %v2085, %v2470
      %v2570 = vadd.f32 %v2086, %v2473
      %v2571 = vadd.f32 %v2087, %v2476
      %v2572 = vadd.f32 %v2088, %v2479
      %v2573 = vadd.f32 %v2089, %v2482
      %v2574 = vadd.f32 %v2090, %v2485
      %v2575 = vadd.f32 %v2091, %v2488
      %v2576 = vadd.f32 %v2092, %v2491
      %v2577 = vadd.f32 %v2093, %v2494
      %v2578 = vadd.f32 %v2094, %v2497
      %v2579 = vadd.f32 %v2095, %v2500
      %v2580 = vadd.f32 %v2096, %v2503
      %v2581 = vadd.f32 %v2097, %v2506
      %v2582 = vadd.f32 %v2098, %v2509
      %v2583 = vadd.f32 %v2099, %v2512
      %v2584 = vadd.f32 %v2100, %v2515
      %v2585 = vadd.f32 %v2101, %v2518
      %2586 = vst.msk [vmem:[#allocation2] sm:$0xff] %vm1065, %v2520
      %2587 = vst.msk [vmem:[#allocation2 + $0x8] sm:$0xff] %vm1065, %v2521
      %2588 = vst.msk [vmem:[#allocation2 + $0x10] sm:$0xff] %vm1065, %v2522
      %2589 = vst.msk [vmem:[#allocation2 + $0x18] sm:$0xff] %vm1065, %v2523
      %2590 = vst.msk [vmem:[#allocation2 + $0x20] sm:$0xff] %vm1065, %v2524
      %2591 = vst.msk [vmem:[#allocation2 + $0x28] sm:$0xff] %vm1065, %v2525
      %2592 = vst.msk [vmem:[#allocation2 + $0x30] sm:$0xff] %vm1065, %v2526
      %2593 = vst.msk [vmem:[#allocation2 + $0x38] sm:$0xff] %vm1065, %v2527
      %2594 = vst.msk [vmem:[#allocation2 + $0x40] sm:$0xff] %vm1065, %v2528
      %2595 = vst.msk [vmem:[#allocation2 + $0x48] sm:$0xff] %vm1065, %v2529
      %2596 = vst.msk [vmem:[#allocation2 + $0x50] sm:$0xff] %vm1065, %v2530
      %2597 = vst.msk [vmem:[#allocation2 + $0x58] sm:$0xff] %vm1065, %v2531
      %2598 = vst.msk [vmem:[#allocation2 + $0x60] sm:$0xff] %vm1065, %v2532
      %2599 = vst.msk [vmem:[#allocation2 + $0x68] sm:$0xff] %vm1065, %v2533
      %2600 = vst.msk [vmem:[#allocation2 + $0x70] sm:$0xff] %vm1065, %v2534
      %2601 = vst.msk [vmem:[#allocation2 + $0x78] sm:$0xff] %vm1065, %v2535
      %2602 = vst.msk [vmem:[#allocation2 + $0x80] sm:$0xff] %vm1065, %v2536
      %2603 = vst.msk [vmem:[#allocation2 + $0x88] sm:$0xff] %vm1065, %v2537
      %2604 = vst.msk [vmem:[#allocation2 + $0x90] sm:$0xff] %vm1065, %v2538
      %2605 = vst.msk [vmem:[#allocation2 + $0x98] sm:$0xff] %vm1065, %v2539
      %2606 = vst.msk [vmem:[#allocation2 + $0xa0] sm:$0xff] %vm1065, %v2540
      %2607 = vst.msk [vmem:[#allocation2 + $0xa8] sm:$0xff] %vm1065, %v2541
      %2608 = vst.msk [vmem:[#allocation2 + $0xb0] sm:$0xff] %vm1065, %v2542
      %2609 = vst.msk [vmem:[#allocation2 + $0xb8] sm:$0xff] %vm1065, %v2543
      %2610 = vst.msk [vmem:[#allocation2 + $0xc0] sm:$0xff] %vm1065, %v2544
      %2611 = vst.msk [vmem:[#allocation2 + $0xc8] sm:$0xff] %vm1065, %v2545
      %2612 = vst.msk [vmem:[#allocation2 + $0xd0] sm:$0xff] %vm1065, %v2546
      %2613 = vst.msk [vmem:[#allocation2 + $0xd8] sm:$0xff] %vm1065, %v2547
      %2614 = vst.msk [vmem:[#allocation2 + $0xe0] sm:$0xff] %vm1065, %v2548
      %2615 = vst.msk [vmem:[#allocation2 + $0xe8] sm:$0xff] %vm1065, %v2549
      %2616 = vst.msk [vmem:[#allocation2 + $0xf0] sm:$0xff] %vm1065, %v2550
      %2617 = vst.msk [vmem:[#allocation2 + $0xf8] sm:$0xff] %vm1065, %v2551
      %2618 = vst.msk [vmem:[#allocation2 + $0x100] sm:$0xff] %vm1065, %v2552
      %2619 = vst.msk [vmem:[#allocation2 + $0x108] sm:$0xff] %vm1065, %v2553
      %2620 = vst.msk [vmem:[#allocation2 + $0x110] sm:$0xff] %vm1065, %v2554
      %2621 = vst.msk [vmem:[#allocation2 + $0x118] sm:$0xff] %vm1065, %v2555
      %2622 = vst.msk [vmem:[#allocation2 + $0x120] sm:$0xff] %vm1065, %v2556
      %2623 = vst.msk [vmem:[#allocation2 + $0x128] sm:$0xff] %vm1065, %v2557
      %2624 = vst.msk [vmem:[#allocation2 + $0x130] sm:$0xff] %vm1065, %v2558
      %2625 = vst.msk [vmem:[#allocation2 + $0x138] sm:$0xff] %vm1065, %v2559
      %2626 = vst.msk [vmem:[#allocation2 + $0x140] sm:$0xff] %vm1065, %v2560
      %2627 = vst.msk [vmem:[#allocation2 + $0x148] sm:$0xff] %vm1065, %v2561
      %2628 = vst.msk [vmem:[#allocation2 + $0x150] sm:$0xff] %vm1065, %v2562
      %2629 = vst.msk [vmem:[#allocation2 + $0x158] sm:$0xff] %vm1065, %v2563
      %2630 = vst.msk [vmem:[#allocation2 + $0x160] sm:$0xff] %vm1065, %v2564
      %2631 = vst.msk [vmem:[#allocation2 + $0x168] sm:$0xff] %vm1065, %v2565
      %2632 = vst.msk [vmem:[#allocation2 + $0x170] sm:$0xff] %vm1065, %v2566
      %2633 = vst.msk [vmem:[#allocation2 + $0x178] sm:$0xff] %vm1065, %v2567
      %2634 = vst.msk [vmem:[#allocation2 + $0x180] sm:$0xff] %vm1065, %v2568
      %2635 = vst.msk [vmem:[#allocation2 + $0x188] sm:$0xff] %vm1065, %v2569
      %2636 = vst.msk [vmem:[#allocation2 + $0x190] sm:$0xff] %vm1065, %v2570
      %2637 = vst.msk [vmem:[#allocation2 + $0x198] sm:$0xff] %vm1065, %v2571
      %2638 = vst.msk [vmem:[#allocation2 + $0x1a0] sm:$0xff] %vm1065, %v2572
      %2639 = vst.msk [vmem:[#allocation2 + $0x1a8] sm:$0xff] %vm1065, %v2573
      %2640 = vst.msk [vmem:[#allocation2 + $0x1b0] sm:$0xff] %vm1065, %v2574
      %2641 = vst.msk [vmem:[#allocation2 + $0x1b8] sm:$0xff] %vm1065, %v2575
      %2642 = vst.msk [vmem:[#allocation2 + $0x1c0] sm:$0xff] %vm1065, %v2576
      %2643 = vst.msk [vmem:[#allocation2 + $0x1c8] sm:$0xff] %vm1065, %v2577
      %2644 = vst.msk [vmem:[#allocation2 + $0x1d0] sm:$0xff] %vm1065, %v2578
      %2645 = vst.msk [vmem:[#allocation2 + $0x1d8] sm:$0xff] %vm1065, %v2579
      %2646 = vst.msk [vmem:[#allocation2 + $0x1e0] sm:$0xff] %vm1065, %v2580
      %2647 = vst.msk [vmem:[#allocation2 + $0x1e8] sm:$0xff] %vm1065, %v2581
      %2648 = vst.msk [vmem:[#allocation2 + $0x1f0] sm:$0xff] %vm1065, %v2582
      %2649 = vst.msk [vmem:[#allocation2 + $0x1f8] sm:$0xff] %vm1065, %v2583
      %2650 = vst.msk [vmem:[#allocation2 + $0x200] sm:$0xff] %vm1065, %v2584
      %2651 = vst.msk [vmem:[#allocation2 + $0x208] sm:$0xff] %vm1065, %v2585
      %v2652 = vld [vmem:[%s1132] sm:$0xff]
      %v2653 = vld [vmem:[%s1132 + $0x8] sm:$0xff]
      %v2654 = vld [vmem:[%s1132 + $0x10] sm:$0xff]
      %v2655 = vld [vmem:[%s1132 + $0x18] sm:$0xff]
      %v2656 = vld [vmem:[%s1132 + $0x20] sm:$0xff]
      %v2657 = vld [vmem:[%s1132 + $0x28] sm:$0xff]
      %v2658 = vld [vmem:[%s1132 + $0x30] sm:$0xff]
      %v2659 = vld [vmem:[%s1132 + $0x38] sm:$0xff]
      %v2660 = vld [vmem:[%s1132 + $0x40] sm:$0xff]
      %v2661 = vld [vmem:[%s1132 + $0x48] sm:$0xff]
      %v2662 = vld [vmem:[%s1132 + $0x50] sm:$0xff]
      %v2663 = vld [vmem:[%s1132 + $0x58] sm:$0xff]
      %v2664 = vld [vmem:[%s1132 + $0x60] sm:$0xff]
      %v2665 = vld [vmem:[%s1132 + $0x68] sm:$0xff]
      %v2666 = vld [vmem:[%s1132 + $0x70] sm:$0xff]
      %v2667 = vld [vmem:[%s1132 + $0x78] sm:$0xff]
      %v2668 = vld [vmem:[%s1132 + $0x80] sm:$0xff]
      %v2669 = vld [vmem:[%s1132 + $0x88] sm:$0xff]
      %v2670 = vld [vmem:[%s1132 + $0x90] sm:$0xff]
      %v2671 = vld [vmem:[%s1132 + $0x98] sm:$0xff]
      %v2672 = vld [vmem:[%s1132 + $0xa0] sm:$0xff]
      %v2673 = vld [vmem:[%s1132 + $0xa8] sm:$0xff]
      %v2674 = vld [vmem:[%s1132 + $0xb0] sm:$0xff]
      %v2675 = vld [vmem:[%s1132 + $0xb8] sm:$0xff]
      %v2676 = vld [vmem:[%s1132 + $0xc0] sm:$0xff]
      %v2677 = vld [vmem:[%s1132 + $0xc8] sm:$0xff]
      %v2678 = vld [vmem:[%s1132 + $0xd0] sm:$0xff]
      %v2679 = vld [vmem:[%s1132 + $0xd8] sm:$0xff]
      %v2680 = vld [vmem:[%s1132 + $0xe0] sm:$0xff]
      %v2681 = vld [vmem:[%s1132 + $0xe8] sm:$0xff]
      %v2682 = vld [vmem:[%s1132 + $0xf0] sm:$0xff]
      %v2683 = vld [vmem:[%s1132 + $0xf8] sm:$0xff]
      %v2684 = vld [vmem:[%s1132 + $0x100] sm:$0xff]
      %v2685 = vld [vmem:[%s1132 + $0x108] sm:$0xff]
      %v2686 = vld [vmem:[%s1132 + $0x110] sm:$0xff]
      %v2687 = vld [vmem:[%s1132 + $0x118] sm:$0xff]
      %v2688 = vld [vmem:[%s1132 + $0x120] sm:$0xff]
      %v2689 = vld [vmem:[%s1132 + $0x128] sm:$0xff]
      %v2690 = vld [vmem:[%s1132 + $0x130] sm:$0xff]
      %v2691 = vld [vmem:[%s1132 + $0x138] sm:$0xff]
      %v2692 = vld [vmem:[%s1132 + $0x140] sm:$0xff]
      %v2693 = vld [vmem:[%s1132 + $0x148] sm:$0xff]
      %v2694 = vld [vmem:[%s1132 + $0x150] sm:$0xff]
      %v2695 = vld [vmem:[%s1132 + $0x158] sm:$0xff]
      %v2696 = vld [vmem:[%s1132 + $0x160] sm:$0xff]
      %v2697 = vld [vmem:[%s1132 + $0x168] sm:$0xff]
      %v2698 = vld [vmem:[%s1132 + $0x170] sm:$0xff]
      %v2699 = vld [vmem:[%s1132 + $0x178] sm:$0xff]
      %v2700 = vld [vmem:[%s1132 + $0x180] sm:$0xff]
      %v2701 = vld [vmem:[%s1132 + $0x188] sm:$0xff]
      %v2702 = vld [vmem:[%s1132 + $0x190] sm:$0xff]
      %v2703 = vld [vmem:[%s1132 + $0x198] sm:$0xff]
      %v2704 = vld [vmem:[%s1132 + $0x1a0] sm:$0xff]
      %v2705 = vld [vmem:[%s1132 + $0x1a8] sm:$0xff]
      %v2706 = vld [vmem:[%s1132 + $0x1b0] sm:$0xff]
      %v2707 = vld [vmem:[%s1132 + $0x1b8] sm:$0xff]
      %v2708 = vld [vmem:[%s1132 + $0x1c0] sm:$0xff]
      %v2709 = vld [vmem:[%s1132 + $0x1c8] sm:$0xff]
      %v2710 = vld [vmem:[%s1132 + $0x1d0] sm:$0xff]
      %v2711 = vld [vmem:[%s1132 + $0x1d8] sm:$0xff]
      %v2712 = vld [vmem:[%s1132 + $0x1e0] sm:$0xff]
      %v2713 = vld [vmem:[%s1132 + $0x1e8] sm:$0xff]
      %v2714 = vld [vmem:[%s1132 + $0x1f0] sm:$0xff]
      %v2715 = vld [vmem:[%s1132 + $0x1f8] sm:$0xff]
      %v2716 = vld [vmem:[%s1132 + $0x200] sm:$0xff]
      %v2717 = vld [vmem:[%s1132 + $0x208] sm:$0xff]
      %s2718 = scalar_lea.vmem %s233, 16
      %v2719 = vld [vmem:[%s2718] sm:$0x7]
      %v2721 = vsel %vm780, %v2719, 0
      %2723 = vmatpush.msra.mxu0 0.0
      %2724 = vmatpush.msra.mxu0 0.0
      %2725 = vmatpush.msra.mxu0 0.0
      %2726 = vmatpush.msra.mxu0 0.0
      %2727 = vmatpush.msra.mxu0 0.0
      %2728 = vmatpush.msra.mxu0 0.0
      %2729 = vmatpush.msra.mxu0 0.0
      %2730 = vmatpush.msra.mxu0 0.0
      %2731 = vmatpush.msra.mxu0 0.0
      %2732 = vmatpush.msra.mxu0 0.0
      %2733 = vmatpush.msra.mxu0 0.0
      %2734 = vmatpush.msra.mxu0 0.0
      %2735 = vmatpush.msra.mxu0 0.0
      %2736 = vmatpush.msra.mxu0 0.0
      %2737 = vmatpush.msra.mxu0 0.0
      %2738 = vmatpush.msra.mxu0 %v2721
      %2739 = vmatmul.f32.gmra.mxu0 %v2105
      %v2740 = vpop.f32.mrf.mxu0
      %v2741 = vadd.f32 0.0, %v2740
      %2742 = vmatmul.f32.gmra.mxu0 %v2108
      %v2743 = vpop.f32.mrf.mxu0
      %v2744 = vadd.f32 0.0, %v2743
      %2745 = vmatmul.f32.gmra.mxu0 %v2111
      %v2746 = vpop.f32.mrf.mxu0
      %v2747 = vadd.f32 0.0, %v2746
      %2748 = vmatmul.f32.gmra.mxu0 %v2114
      %v2749 = vpop.f32.mrf.mxu0
      %v2750 = vadd.f32 0.0, %v2749
      %2751 = vmatmul.f32.gmra.mxu0 %v2117
      %v2752 = vpop.f32.mrf.mxu0
      %v2753 = vadd.f32 0.0, %v2752
      %2754 = vmatmul.f32.gmra.mxu0 %v2120
      %v2755 = vpop.f32.mrf.mxu0
      %v2756 = vadd.f32 0.0, %v2755
      %2757 = vmatmul.f32.gmra.mxu0 %v2123
      %v2758 = vpop.f32.mrf.mxu0
      %v2759 = vadd.f32 0.0, %v2758
      %2760 = vmatmul.f32.gmra.mxu0 %v2126
      %v2761 = vpop.f32.mrf.mxu0
      %v2762 = vadd.f32 0.0, %v2761
      %2763 = vmatmul.f32.gmra.mxu0 %v2129
      %v2764 = vpop.f32.mrf.mxu0
      %v2765 = vadd.f32 0.0, %v2764
      %2766 = vmatmul.f32.gmra.mxu0 %v2132
      %v2767 = vpop.f32.mrf.mxu0
      %v2768 = vadd.f32 0.0, %v2767
      %2769 = vmatmul.f32.gmra.mxu0 %v2135
      %v2770 = vpop.f32.mrf.mxu0
      %v2771 = vadd.f32 0.0, %v2770
      %2772 = vmatmul.f32.gmra.mxu0 %v2138
      %v2773 = vpop.f32.mrf.mxu0
      %v2774 = vadd.f32 0.0, %v2773
      %2775 = vmatmul.f32.gmra.mxu0 %v2141
      %v2776 = vpop.f32.mrf.mxu0
      %v2777 = vadd.f32 0.0, %v2776
      %2778 = vmatmul.f32.gmra.mxu0 %v2144
      %v2779 = vpop.f32.mrf.mxu0
      %v2780 = vadd.f32 0.0, %v2779
      %2781 = vmatmul.f32.gmra.mxu0 %v2147
      %v2782 = vpop.f32.mrf.mxu0
      %v2783 = vadd.f32 0.0, %v2782
      %2784 = vmatmul.f32.gmra.mxu0 %v2150
      %v2785 = vpop.f32.mrf.mxu0
      %v2786 = vadd.f32 0.0, %v2785
      %2787 = vmatmul.f32.gmra.mxu0 %v2153
      %v2788 = vpop.f32.mrf.mxu0
      %v2789 = vadd.f32 0.0, %v2788
      %2790 = vmatmul.f32.gmra.mxu0 %v2156
      %v2791 = vpop.f32.mrf.mxu0
      %v2792 = vadd.f32 0.0, %v2791
      %2793 = vmatmul.f32.gmra.mxu0 %v2159
      %v2794 = vpop.f32.mrf.mxu0
      %v2795 = vadd.f32 0.0, %v2794
      %2796 = vmatmul.f32.gmra.mxu0 %v2162
      %v2797 = vpop.f32.mrf.mxu0
      %v2798 = vadd.f32 0.0, %v2797
      %2799 = vmatmul.f32.gmra.mxu0 %v2165
      %v2800 = vpop.f32.mrf.mxu0
      %v2801 = vadd.f32 0.0, %v2800
      %2802 = vmatmul.f32.gmra.mxu0 %v2168
      %v2803 = vpop.f32.mrf.mxu0
      %v2804 = vadd.f32 0.0, %v2803
      %2805 = vmatmul.f32.gmra.mxu0 %v2171
      %v2806 = vpop.f32.mrf.mxu0
      %v2807 = vadd.f32 0.0, %v2806
      %2808 = vmatmul.f32.gmra.mxu0 %v2174
      %v2809 = vpop.f32.mrf.mxu0
      %v2810 = vadd.f32 0.0, %v2809
      %2811 = vmatmul.f32.gmra.mxu0 %v2177
      %v2812 = vpop.f32.mrf.mxu0
      %v2813 = vadd.f32 0.0, %v2812
      %2814 = vmatmul.f32.gmra.mxu0 %v2180
      %v2815 = vpop.f32.mrf.mxu0
      %v2816 = vadd.f32 0.0, %v2815
      %2817 = vmatmul.f32.gmra.mxu0 %v2183
      %v2818 = vpop.f32.mrf.mxu0
      %v2819 = vadd.f32 0.0, %v2818
      %2820 = vmatmul.f32.gmra.mxu0 %v2186
      %v2821 = vpop.f32.mrf.mxu0
      %v2822 = vadd.f32 0.0, %v2821
      %2823 = vmatmul.f32.gmra.mxu0 %v2189
      %v2824 = vpop.f32.mrf.mxu0
      %v2825 = vadd.f32 0.0, %v2824
      %2826 = vmatmul.f32.gmra.mxu0 %v2192
      %v2827 = vpop.f32.mrf.mxu0
      %v2828 = vadd.f32 0.0, %v2827
      %2829 = vmatmul.f32.gmra.mxu0 %v2195
      %v2830 = vpop.f32.mrf.mxu0
      %v2831 = vadd.f32 0.0, %v2830
      %2832 = vmatmul.f32.gmra.mxu0 %v2198
      %v2833 = vpop.f32.mrf.mxu0
      %v2834 = vadd.f32 0.0, %v2833
      %2835 = vmatmul.f32.gmra.mxu0 %v2201
      %v2836 = vpop.f32.mrf.mxu0
      %v2837 = vadd.f32 0.0, %v2836
      %2838 = vmatmul.f32.gmra.mxu0 %v2204
      %v2839 = vpop.f32.mrf.mxu0
      %v2840 = vadd.f32 0.0, %v2839
      %2841 = vmatmul.f32.gmra.mxu0 %v2207
      %v2842 = vpop.f32.mrf.mxu0
      %v2843 = vadd.f32 0.0, %v2842
      %2844 = vmatmul.f32.gmra.mxu0 %v2210
      %v2845 = vpop.f32.mrf.mxu0
      %v2846 = vadd.f32 0.0, %v2845
      %2847 = vmatmul.f32.gmra.mxu0 %v2213
      %v2848 = vpop.f32.mrf.mxu0
      %v2849 = vadd.f32 0.0, %v2848
      %2850 = vmatmul.f32.gmra.mxu0 %v2216
      %v2851 = vpop.f32.mrf.mxu0
      %v2852 = vadd.f32 0.0, %v2851
      %2853 = vmatmul.f32.gmra.mxu0 %v2219
      %v2854 = vpop.f32.mrf.mxu0
      %v2855 = vadd.f32 0.0, %v2854
      %2856 = vmatmul.f32.gmra.mxu0 %v2222
      %v2857 = vpop.f32.mrf.mxu0
      %v2858 = vadd.f32 0.0, %v2857
      %2859 = vmatmul.f32.gmra.mxu0 %v2225
      %v2860 = vpop.f32.mrf.mxu0
      %v2861 = vadd.f32 0.0, %v2860
      %2862 = vmatmul.f32.gmra.mxu0 %v2228
      %v2863 = vpop.f32.mrf.mxu0
      %v2864 = vadd.f32 0.0, %v2863
      %2865 = vmatmul.f32.gmra.mxu0 %v2231
      %v2866 = vpop.f32.mrf.mxu0
      %v2867 = vadd.f32 0.0, %v2866
      %2868 = vmatmul.f32.gmra.mxu0 %v2234
      %v2869 = vpop.f32.mrf.mxu0
      %v2870 = vadd.f32 0.0, %v2869
      %2871 = vmatmul.f32.gmra.mxu0 %v2237
      %v2872 = vpop.f32.mrf.mxu0
      %v2873 = vadd.f32 0.0, %v2872
      %2874 = vmatmul.f32.gmra.mxu0 %v2240
      %v2875 = vpop.f32.mrf.mxu0
      %v2876 = vadd.f32 0.0, %v2875
      %2877 = vmatmul.f32.gmra.mxu0 %v2243
      %v2878 = vpop.f32.mrf.mxu0
      %v2879 = vadd.f32 0.0, %v2878
      %2880 = vmatmul.f32.gmra.mxu0 %v2246
      %v2881 = vpop.f32.mrf.mxu0
      %v2882 = vadd.f32 0.0, %v2881
      %2883 = vmatmul.f32.gmra.mxu0 %v2249
      %v2884 = vpop.f32.mrf.mxu0
      %v2885 = vadd.f32 0.0, %v2884
      %2886 = vmatmul.f32.gmra.mxu0 %v2252
      %v2887 = vpop.f32.mrf.mxu0
      %v2888 = vadd.f32 0.0, %v2887
      %2889 = vmatmul.f32.gmra.mxu0 %v2255
      %v2890 = vpop.f32.mrf.mxu0
      %v2891 = vadd.f32 0.0, %v2890
      %2892 = vmatmul.f32.gmra.mxu0 %v2258
      %v2893 = vpop.f32.mrf.mxu0
      %v2894 = vadd.f32 0.0, %v2893
      %2895 = vmatmul.f32.gmra.mxu0 %v2261
      %v2896 = vpop.f32.mrf.mxu0
      %v2897 = vadd.f32 0.0, %v2896
      %2898 = vmatmul.f32.gmra.mxu0 %v2264
      %v2899 = vpop.f32.mrf.mxu0
      %v2900 = vadd.f32 0.0, %v2899
      %2901 = vmatmul.f32.gmra.mxu0 %v2267
      %v2902 = vpop.f32.mrf.mxu0
      %v2903 = vadd.f32 0.0, %v2902
      %2904 = vmatmul.f32.gmra.mxu0 %v2270
      %v2905 = vpop.f32.mrf.mxu0
      %v2906 = vadd.f32 0.0, %v2905
      %2907 = vmatmul.f32.gmra.mxu0 %v2273
      %v2908 = vpop.f32.mrf.mxu0
      %v2909 = vadd.f32 0.0, %v2908
      %2910 = vmatmul.f32.gmra.mxu0 %v2276
      %v2911 = vpop.f32.mrf.mxu0
      %v2912 = vadd.f32 0.0, %v2911
      %2913 = vmatmul.f32.gmra.mxu0 %v2279
      %v2914 = vpop.f32.mrf.mxu0
      %v2915 = vadd.f32 0.0, %v2914
      %2916 = vmatmul.f32.gmra.mxu0 %v2282
      %v2917 = vpop.f32.mrf.mxu0
      %v2918 = vadd.f32 0.0, %v2917
      %2919 = vmatmul.f32.gmra.mxu0 %v2285
      %v2920 = vpop.f32.mrf.mxu0
      %v2921 = vadd.f32 0.0, %v2920
      %2922 = vmatmul.f32.gmra.mxu0 %v2288
      %v2923 = vpop.f32.mrf.mxu0
      %v2924 = vadd.f32 0.0, %v2923
      %2925 = vmatmul.f32.gmra.mxu0 %v2291
      %v2926 = vpop.f32.mrf.mxu0
      %v2927 = vadd.f32 0.0, %v2926
      %2928 = vmatmul.f32.gmra.mxu0 %v2294
      %v2929 = vpop.f32.mrf.mxu0
      %v2930 = vadd.f32 0.0, %v2929
      %2931 = vmatmul.f32.gmra.mxu0 %v2297
      %v2932 = vpop.f32.mrf.mxu0
      %v2933 = vadd.f32 0.0, %v2932
      %2934 = vmatmul.f32.gmra.mxu0 %v2300
      %v2935 = vpop.f32.mrf.mxu0
      %v2936 = vadd.f32 0.0, %v2935
      %2937 = vdwg.mxu0
      %v2938 = vadd.f32 %v2652, %v2741
      %v2939 = vadd.f32 %v2653, %v2744
      %v2940 = vadd.f32 %v2654, %v2747
      %v2941 = vadd.f32 %v2655, %v2750
      %v2942 = vadd.f32 %v2656, %v2753
      %v2943 = vadd.f32 %v2657, %v2756
      %v2944 = vadd.f32 %v2658, %v2759
      %v2945 = vadd.f32 %v2659, %v2762
      %v2946 = vadd.f32 %v2660, %v2765
      %v2947 = vadd.f32 %v2661, %v2768
      %v2948 = vadd.f32 %v2662, %v2771
      %v2949 = vadd.f32 %v2663, %v2774
      %v2950 = vadd.f32 %v2664, %v2777
      %v2951 = vadd.f32 %v2665, %v2780
      %v2952 = vadd.f32 %v2666, %v2783
      %v2953 = vadd.f32 %v2667, %v2786
      %v2954 = vadd.f32 %v2668, %v2789
      %v2955 = vadd.f32 %v2669, %v2792
      %v2956 = vadd.f32 %v2670, %v2795
      %v2957 = vadd.f32 %v2671, %v2798
      %v2958 = vadd.f32 %v2672, %v2801
      %v2959 = vadd.f32 %v2673, %v2804
      %v2960 = vadd.f32 %v2674, %v2807
      %v2961 = vadd.f32 %v2675, %v2810
      %v2962 = vadd.f32 %v2676, %v2813
      %v2963 = vadd.f32 %v2677, %v2816
      %v2964 = vadd.f32 %v2678, %v2819
      %v2965 = vadd.f32 %v2679, %v2822
      %v2966 = vadd.f32 %v2680, %v2825
      %v2967 = vadd.f32 %v2681, %v2828
      %v2968 = vadd.f32 %v2682, %v2831
      %v2969 = vadd.f32 %v2683, %v2834
      %v2970 = vadd.f32 %v2684, %v2837
      %v2971 = vadd.f32 %v2685, %v2840
      %v2972 = vadd.f32 %v2686, %v2843
      %v2973 = vadd.f32 %v2687, %v2846
      %v2974 = vadd.f32 %v2688, %v2849
      %v2975 = vadd.f32 %v2689, %v2852
      %v2976 = vadd.f32 %v2690, %v2855
      %v2977 = vadd.f32 %v2691, %v2858
      %v2978 = vadd.f32 %v2692, %v2861
      %v2979 = vadd.f32 %v2693, %v2864
      %v2980 = vadd.f32 %v2694, %v2867
      %v2981 = vadd.f32 %v2695, %v2870
      %v2982 = vadd.f32 %v2696, %v2873
      %v2983 = vadd.f32 %v2697, %v2876
      %v2984 = vadd.f32 %v2698, %v2879
      %v2985 = vadd.f32 %v2699, %v2882
      %v2986 = vadd.f32 %v2700, %v2885
      %v2987 = vadd.f32 %v2701, %v2888
      %v2988 = vadd.f32 %v2702, %v2891
      %v2989 = vadd.f32 %v2703, %v2894
      %v2990 = vadd.f32 %v2704, %v2897
      %v2991 = vadd.f32 %v2705, %v2900
      %v2992 = vadd.f32 %v2706, %v2903
      %v2993 = vadd.f32 %v2707, %v2906
      %v2994 = vadd.f32 %v2708, %v2909
      %v2995 = vadd.f32 %v2709, %v2912
      %v2996 = vadd.f32 %v2710, %v2915
      %v2997 = vadd.f32 %v2711, %v2918
      %v2998 = vadd.f32 %v2712, %v2921
      %v2999 = vadd.f32 %v2713, %v2924
      %v3000 = vadd.f32 %v2714, %v2927
      %v3001 = vadd.f32 %v2715, %v2930
      %v3002 = vadd.f32 %v2716, %v2933
      %v3003 = vadd.f32 %v2717, %v2936
      %3004 = vst.msk [vmem:[%s1132] sm:$0xff] %vm1065, %v2938
      %3005 = vst.msk [vmem:[%s1132 + $0x8] sm:$0xff] %vm1065, %v2939
      %3006 = vst.msk [vmem:[%s1132 + $0x10] sm:$0xff] %vm1065, %v2940
      %3007 = vst.msk [vmem:[%s1132 + $0x18] sm:$0xff] %vm1065, %v2941
      %3008 = vst.msk [vmem:[%s1132 + $0x20] sm:$0xff] %vm1065, %v2942
      %3009 = vst.msk [vmem:[%s1132 + $0x28] sm:$0xff] %vm1065, %v2943
      %3010 = vst.msk [vmem:[%s1132 + $0x30] sm:$0xff] %vm1065, %v2944
      %3011 = vst.msk [vmem:[%s1132 + $0x38] sm:$0xff] %vm1065, %v2945
      %3012 = vst.msk [vmem:[%s1132 + $0x40] sm:$0xff] %vm1065, %v2946
      %3013 = vst.msk [vmem:[%s1132 + $0x48] sm:$0xff] %vm1065, %v2947
      %3014 = vst.msk [vmem:[%s1132 + $0x50] sm:$0xff] %vm1065, %v2948
      %3015 = vst.msk [vmem:[%s1132 + $0x58] sm:$0xff] %vm1065, %v2949
      %3016 = vst.msk [vmem:[%s1132 + $0x60] sm:$0xff] %vm1065, %v2950
      %3017 = vst.msk [vmem:[%s1132 + $0x68] sm:$0xff] %vm1065, %v2951
      %3018 = vst.msk [vmem:[%s1132 + $0x70] sm:$0xff] %vm1065, %v2952
      %3019 = vst.msk [vmem:[%s1132 + $0x78] sm:$0xff] %vm1065, %v2953
      %3020 = vst.msk [vmem:[%s1132 + $0x80] sm:$0xff] %vm1065, %v2954
      %3021 = vst.msk [vmem:[%s1132 + $0x88] sm:$0xff] %vm1065, %v2955
      %3022 = vst.msk [vmem:[%s1132 + $0x90] sm:$0xff] %vm1065, %v2956
      %3023 = vst.msk [vmem:[%s1132 + $0x98] sm:$0xff] %vm1065, %v2957
      %3024 = vst.msk [vmem:[%s1132 + $0xa0] sm:$0xff] %vm1065, %v2958
      %3025 = vst.msk [vmem:[%s1132 + $0xa8] sm:$0xff] %vm1065, %v2959
      %3026 = vst.msk [vmem:[%s1132 + $0xb0] sm:$0xff] %vm1065, %v2960
      %3027 = vst.msk [vmem:[%s1132 + $0xb8] sm:$0xff] %vm1065, %v2961
      %3028 = vst.msk [vmem:[%s1132 + $0xc0] sm:$0xff] %vm1065, %v2962
      %3029 = vst.msk [vmem:[%s1132 + $0xc8] sm:$0xff] %vm1065, %v2963
      %3030 = vst.msk [vmem:[%s1132 + $0xd0] sm:$0xff] %vm1065, %v2964
      %3031 = vst.msk [vmem:[%s1132 + $0xd8] sm:$0xff] %vm1065, %v2965
      %3032 = vst.msk [vmem:[%s1132 + $0xe0] sm:$0xff] %vm1065, %v2966
      %3033 = vst.msk [vmem:[%s1132 + $0xe8] sm:$0xff] %vm1065, %v2967
      %3034 = vst.msk [vmem:[%s1132 + $0xf0] sm:$0xff] %vm1065, %v2968
      %3035 = vst.msk [vmem:[%s1132 + $0xf8] sm:$0xff] %vm1065, %v2969
      %3036 = vst.msk [vmem:[%s1132 + $0x100] sm:$0xff] %vm1065, %v2970
      %3037 = vst.msk [vmem:[%s1132 + $0x108] sm:$0xff] %vm1065, %v2971
      %3038 = vst.msk [vmem:[%s1132 + $0x110] sm:$0xff] %vm1065, %v2972
      %3039 = vst.msk [vmem:[%s1132 + $0x118] sm:$0xff] %vm1065, %v2973
      %3040 = vst.msk [vmem:[%s1132 + $0x120] sm:$0xff] %vm1065, %v2974
      %3041 = vst.msk [vmem:[%s1132 + $0x128] sm:$0xff] %vm1065, %v2975
      %3042 = vst.msk [vmem:[%s1132 + $0x130] sm:$0xff] %vm1065, %v2976
      %3043 = vst.msk [vmem:[%s1132 + $0x138] sm:$0xff] %vm1065, %v2977
      %3044 = vst.msk [vmem:[%s1132 + $0x140] sm:$0xff] %vm1065, %v2978
      %3045 = vst.msk [vmem:[%s1132 + $0x148] sm:$0xff] %vm1065, %v2979
      %3046 = vst.msk [vmem:[%s1132 + $0x150] sm:$0xff] %vm1065, %v2980
      %3047 = vst.msk [vmem:[%s1132 + $0x158] sm:$0xff] %vm1065, %v2981
      %3048 = vst.msk [vmem:[%s1132 + $0x160] sm:$0xff] %vm1065, %v2982
      %3049 = vst.msk [vmem:[%s1132 + $0x168] sm:$0xff] %vm1065, %v2983
      %3050 = vst.msk [vmem:[%s1132 + $0x170] sm:$0xff] %vm1065, %v2984
      %3051 = vst.msk [vmem:[%s1132 + $0x178] sm:$0xff] %vm1065, %v2985
      %3052 = vst.msk [vmem:[%s1132 + $0x180] sm:$0xff] %vm1065, %v2986
      %3053 = vst.msk [vmem:[%s1132 + $0x188] sm:$0xff] %vm1065, %v2987
      %3054 = vst.msk [vmem:[%s1132 + $0x190] sm:$0xff] %vm1065, %v2988
      %3055 = vst.msk [vmem:[%s1132 + $0x198] sm:$0xff] %vm1065, %v2989
      %3056 = vst.msk [vmem:[%s1132 + $0x1a0] sm:$0xff] %vm1065, %v2990
      %3057 = vst.msk [vmem:[%s1132 + $0x1a8] sm:$0xff] %vm1065, %v2991
      %3058 = vst.msk [vmem:[%s1132 + $0x1b0] sm:$0xff] %vm1065, %v2992
      %3059 = vst.msk [vmem:[%s1132 + $0x1b8] sm:$0xff] %vm1065, %v2993
      %3060 = vst.msk [vmem:[%s1132 + $0x1c0] sm:$0xff] %vm1065, %v2994
      %3061 = vst.msk [vmem:[%s1132 + $0x1c8] sm:$0xff] %vm1065, %v2995
      %3062 = vst.msk [vmem:[%s1132 + $0x1d0] sm:$0xff] %vm1065, %v2996
      %3063 = vst.msk [vmem:[%s1132 + $0x1d8] sm:$0xff] %vm1065, %v2997
      %3064 = vst.msk [vmem:[%s1132 + $0x1e0] sm:$0xff] %vm1065, %v2998
      %3065 = vst.msk [vmem:[%s1132 + $0x1e8] sm:$0xff] %vm1065, %v2999
      %3066 = vst.msk [vmem:[%s1132 + $0x1f0] sm:$0xff] %vm1065, %v3000
      %3067 = vst.msk [vmem:[%s1132 + $0x1f8] sm:$0xff] %vm1065, %v3001
      %3068 = vst.msk [vmem:[%s1132 + $0x200] sm:$0xff] %vm1065, %v3002
      %3069 = vst.msk [vmem:[%s1132 + $0x208] sm:$0xff] %vm1065, %v3003
      %v3070 = vld [vmem:[%s1551] sm:$0xff]
      %v3071 = vld [vmem:[%s1551 + $0x8] sm:$0xff]
      %v3072 = vld [vmem:[%s1551 + $0x10] sm:$0xff]
      %v3073 = vld [vmem:[%s1551 + $0x18] sm:$0xff]
      %v3074 = vld [vmem:[%s1551 + $0x20] sm:$0xff]
      %v3075 = vld [vmem:[%s1551 + $0x28] sm:$0xff]
      %v3076 = vld [vmem:[%s1551 + $0x30] sm:$0xff]
      %v3077 = vld [vmem:[%s1551 + $0x38] sm:$0xff]
      %v3078 = vld [vmem:[%s1551 + $0x40] sm:$0xff]
      %v3079 = vld [vmem:[%s1551 + $0x48] sm:$0xff]
      %v3080 = vld [vmem:[%s1551 + $0x50] sm:$0xff]
      %v3081 = vld [vmem:[%s1551 + $0x58] sm:$0xff]
      %v3082 = vld [vmem:[%s1551 + $0x60] sm:$0xff]
      %v3083 = vld [vmem:[%s1551 + $0x68] sm:$0xff]
      %v3084 = vld [vmem:[%s1551 + $0x70] sm:$0xff]
      %v3085 = vld [vmem:[%s1551 + $0x78] sm:$0xff]
      %v3086 = vld [vmem:[%s1551 + $0x80] sm:$0xff]
      %v3087 = vld [vmem:[%s1551 + $0x88] sm:$0xff]
      %v3088 = vld [vmem:[%s1551 + $0x90] sm:$0xff]
      %v3089 = vld [vmem:[%s1551 + $0x98] sm:$0xff]
      %v3090 = vld [vmem:[%s1551 + $0xa0] sm:$0xff]
      %v3091 = vld [vmem:[%s1551 + $0xa8] sm:$0xff]
      %v3092 = vld [vmem:[%s1551 + $0xb0] sm:$0xff]
      %v3093 = vld [vmem:[%s1551 + $0xb8] sm:$0xff]
      %v3094 = vld [vmem:[%s1551 + $0xc0] sm:$0xff]
      %v3095 = vld [vmem:[%s1551 + $0xc8] sm:$0xff]
      %v3096 = vld [vmem:[%s1551 + $0xd0] sm:$0xff]
      %v3097 = vld [vmem:[%s1551 + $0xd8] sm:$0xff]
      %v3098 = vld [vmem:[%s1551 + $0xe0] sm:$0xff]
      %v3099 = vld [vmem:[%s1551 + $0xe8] sm:$0xff]
      %v3100 = vld [vmem:[%s1551 + $0xf0] sm:$0xff]
      %v3101 = vld [vmem:[%s1551 + $0xf8] sm:$0xff]
      %v3102 = vld [vmem:[%s1551 + $0x100] sm:$0xff]
      %v3103 = vld [vmem:[%s1551 + $0x108] sm:$0xff]
      %v3104 = vld [vmem:[%s1551 + $0x110] sm:$0xff]
      %v3105 = vld [vmem:[%s1551 + $0x118] sm:$0xff]
      %v3106 = vld [vmem:[%s1551 + $0x120] sm:$0xff]
      %v3107 = vld [vmem:[%s1551 + $0x128] sm:$0xff]
      %v3108 = vld [vmem:[%s1551 + $0x130] sm:$0xff]
      %v3109 = vld [vmem:[%s1551 + $0x138] sm:$0xff]
      %v3110 = vld [vmem:[%s1551 + $0x140] sm:$0xff]
      %v3111 = vld [vmem:[%s1551 + $0x148] sm:$0xff]
      %v3112 = vld [vmem:[%s1551 + $0x150] sm:$0xff]
      %v3113 = vld [vmem:[%s1551 + $0x158] sm:$0xff]
      %v3114 = vld [vmem:[%s1551 + $0x160] sm:$0xff]
      %v3115 = vld [vmem:[%s1551 + $0x168] sm:$0xff]
      %v3116 = vld [vmem:[%s1551 + $0x170] sm:$0xff]
      %v3117 = vld [vmem:[%s1551 + $0x178] sm:$0xff]
      %v3118 = vld [vmem:[%s1551 + $0x180] sm:$0xff]
      %v3119 = vld [vmem:[%s1551 + $0x188] sm:$0xff]
      %v3120 = vld [vmem:[%s1551 + $0x190] sm:$0xff]
      %v3121 = vld [vmem:[%s1551 + $0x198] sm:$0xff]
      %v3122 = vld [vmem:[%s1551 + $0x1a0] sm:$0xff]
      %v3123 = vld [vmem:[%s1551 + $0x1a8] sm:$0xff]
      %v3124 = vld [vmem:[%s1551 + $0x1b0] sm:$0xff]
      %v3125 = vld [vmem:[%s1551 + $0x1b8] sm:$0xff]
      %v3126 = vld [vmem:[%s1551 + $0x1c0] sm:$0xff]
      %v3127 = vld [vmem:[%s1551 + $0x1c8] sm:$0xff]
      %v3128 = vld [vmem:[%s1551 + $0x1d0] sm:$0xff]
      %v3129 = vld [vmem:[%s1551 + $0x1d8] sm:$0xff]
      %v3130 = vld [vmem:[%s1551 + $0x1e0] sm:$0xff]
      %v3131 = vld [vmem:[%s1551 + $0x1e8] sm:$0xff]
      %v3132 = vld [vmem:[%s1551 + $0x1f0] sm:$0xff]
      %v3133 = vld [vmem:[%s1551 + $0x1f8] sm:$0xff]
      %v3134 = vld [vmem:[%s1551 + $0x200] sm:$0xff]
      %v3135 = vld [vmem:[%s1551 + $0x208] sm:$0xff]
      %s3136 = scalar_lea.vmem %s233, 20
      %v3137 = vld [vmem:[%s3136] sm:$0x7]
      %v3139 = vsel %vm780, %v3137, 0
      %3141 = vmatpush.msra.mxu0 0.0
      %3142 = vmatpush.msra.mxu0 0.0
      %3143 = vmatpush.msra.mxu0 0.0
      %3144 = vmatpush.msra.mxu0 0.0
      %3145 = vmatpush.msra.mxu0 0.0
      %3146 = vmatpush.msra.mxu0 0.0
      %3147 = vmatpush.msra.mxu0 0.0
      %3148 = vmatpush.msra.mxu0 0.0
      %3149 = vmatpush.msra.mxu0 0.0
      %3150 = vmatpush.msra.mxu0 0.0
      %3151 = vmatpush.msra.mxu0 0.0
      %3152 = vmatpush.msra.mxu0 0.0
      %3153 = vmatpush.msra.mxu0 0.0
      %3154 = vmatpush.msra.mxu0 0.0
      %3155 = vmatpush.msra.mxu0 0.0
      %3156 = vmatpush.msra.mxu0 %v3139
      %3157 = vmatmul.f32.gmra.mxu0 %v2105
      %v3158 = vpop.f32.mrf.mxu0
      %v3159 = vadd.f32 0.0, %v3158
      %3160 = vmatmul.f32.gmra.mxu0 %v2108
      %v3161 = vpop.f32.mrf.mxu0
      %v3162 = vadd.f32 0.0, %v3161
      %3163 = vmatmul.f32.gmra.mxu0 %v2111
      %v3164 = vpop.f32.mrf.mxu0
      %v3165 = vadd.f32 0.0, %v3164
      %3166 = vmatmul.f32.gmra.mxu0 %v2114
      %v3167 = vpop.f32.mrf.mxu0
      %v3168 = vadd.f32 0.0, %v3167
      %3169 = vmatmul.f32.gmra.mxu0 %v2117
      %v3170 = vpop.f32.mrf.mxu0
      %v3171 = vadd.f32 0.0, %v3170
      %3172 = vmatmul.f32.gmra.mxu0 %v2120
      %v3173 = vpop.f32.mrf.mxu0
      %v3174 = vadd.f32 0.0, %v3173
      %3175 = vmatmul.f32.gmra.mxu0 %v2123
      %v3176 = vpop.f32.mrf.mxu0
      %v3177 = vadd.f32 0.0, %v3176
      %3178 = vmatmul.f32.gmra.mxu0 %v2126
      %v3179 = vpop.f32.mrf.mxu0
      %v3180 = vadd.f32 0.0, %v3179
      %3181 = vmatmul.f32.gmra.mxu0 %v2129
      %v3182 = vpop.f32.mrf.mxu0
      %v3183 = vadd.f32 0.0, %v3182
      %3184 = vmatmul.f32.gmra.mxu0 %v2132
      %v3185 = vpop.f32.mrf.mxu0
      %v3186 = vadd.f32 0.0, %v3185
      %3187 = vmatmul.f32.gmra.mxu0 %v2135
      %v3188 = vpop.f32.mrf.mxu0
      %v3189 = vadd.f32 0.0, %v3188
      %3190 = vmatmul.f32.gmra.mxu0 %v2138
      %v3191 = vpop.f32.mrf.mxu0
      %v3192 = vadd.f32 0.0, %v3191
      %3193 = vmatmul.f32.gmra.mxu0 %v2141
      %v3194 = vpop.f32.mrf.mxu0
      %v3195 = vadd.f32 0.0, %v3194
      %3196 = vmatmul.f32.gmra.mxu0 %v2144
      %v3197 = vpop.f32.mrf.mxu0
      %v3198 = vadd.f32 0.0, %v3197
      %3199 = vmatmul.f32.gmra.mxu0 %v2147
      %v3200 = vpop.f32.mrf.mxu0
      %v3201 = vadd.f32 0.0, %v3200
      %3202 = vmatmul.f32.gmra.mxu0 %v2150
      %v3203 = vpop.f32.mrf.mxu0
      %v3204 = vadd.f32 0.0, %v3203
      %3205 = vmatmul.f32.gmra.mxu0 %v2153
      %v3206 = vpop.f32.mrf.mxu0
      %v3207 = vadd.f32 0.0, %v3206
      %3208 = vmatmul.f32.gmra.mxu0 %v2156
      %v3209 = vpop.f32.mrf.mxu0
      %v3210 = vadd.f32 0.0, %v3209
      %3211 = vmatmul.f32.gmra.mxu0 %v2159
      %v3212 = vpop.f32.mrf.mxu0
      %v3213 = vadd.f32 0.0, %v3212
      %3214 = vmatmul.f32.gmra.mxu0 %v2162
      %v3215 = vpop.f32.mrf.mxu0
      %v3216 = vadd.f32 0.0, %v3215
      %3217 = vmatmul.f32.gmra.mxu0 %v2165
      %v3218 = vpop.f32.mrf.mxu0
      %v3219 = vadd.f32 0.0, %v3218
      %3220 = vmatmul.f32.gmra.mxu0 %v2168
      %v3221 = vpop.f32.mrf.mxu0
      %v3222 = vadd.f32 0.0, %v3221
      %3223 = vmatmul.f32.gmra.mxu0 %v2171
      %v3224 = vpop.f32.mrf.mxu0
      %v3225 = vadd.f32 0.0, %v3224
      %3226 = vmatmul.f32.gmra.mxu0 %v2174
      %v3227 = vpop.f32.mrf.mxu0
      %v3228 = vadd.f32 0.0, %v3227
      %3229 = vmatmul.f32.gmra.mxu0 %v2177
      %v3230 = vpop.f32.mrf.mxu0
      %v3231 = vadd.f32 0.0, %v3230
      %3232 = vmatmul.f32.gmra.mxu0 %v2180
      %v3233 = vpop.f32.mrf.mxu0
      %v3234 = vadd.f32 0.0, %v3233
      %3235 = vmatmul.f32.gmra.mxu0 %v2183
      %v3236 = vpop.f32.mrf.mxu0
      %v3237 = vadd.f32 0.0, %v3236
      %3238 = vmatmul.f32.gmra.mxu0 %v2186
      %v3239 = vpop.f32.mrf.mxu0
      %v3240 = vadd.f32 0.0, %v3239
      %3241 = vmatmul.f32.gmra.mxu0 %v2189
      %v3242 = vpop.f32.mrf.mxu0
      %v3243 = vadd.f32 0.0, %v3242
      %3244 = vmatmul.f32.gmra.mxu0 %v2192
      %v3245 = vpop.f32.mrf.mxu0
      %v3246 = vadd.f32 0.0, %v3245
      %3247 = vmatmul.f32.gmra.mxu0 %v2195
      %v3248 = vpop.f32.mrf.mxu0
      %v3249 = vadd.f32 0.0, %v3248
      %3250 = vmatmul.f32.gmra.mxu0 %v2198
      %v3251 = vpop.f32.mrf.mxu0
      %v3252 = vadd.f32 0.0, %v3251
      %3253 = vmatmul.f32.gmra.mxu0 %v2201
      %v3254 = vpop.f32.mrf.mxu0
      %v3255 = vadd.f32 0.0, %v3254
      %3256 = vmatmul.f32.gmra.mxu0 %v2204
      %v3257 = vpop.f32.mrf.mxu0
      %v3258 = vadd.f32 0.0, %v3257
      %3259 = vmatmul.f32.gmra.mxu0 %v2207
      %v3260 = vpop.f32.mrf.mxu0
      %v3261 = vadd.f32 0.0, %v3260
      %3262 = vmatmul.f32.gmra.mxu0 %v2210
      %v3263 = vpop.f32.mrf.mxu0
      %v3264 = vadd.f32 0.0, %v3263
      %3265 = vmatmul.f32.gmra.mxu0 %v2213
      %v3266 = vpop.f32.mrf.mxu0
      %v3267 = vadd.f32 0.0, %v3266
      %3268 = vmatmul.f32.gmra.mxu0 %v2216
      %v3269 = vpop.f32.mrf.mxu0
      %v3270 = vadd.f32 0.0, %v3269
      %3271 = vmatmul.f32.gmra.mxu0 %v2219
      %v3272 = vpop.f32.mrf.mxu0
      %v3273 = vadd.f32 0.0, %v3272
      %3274 = vmatmul.f32.gmra.mxu0 %v2222
      %v3275 = vpop.f32.mrf.mxu0
      %v3276 = vadd.f32 0.0, %v3275
      %3277 = vmatmul.f32.gmra.mxu0 %v2225
      %v3278 = vpop.f32.mrf.mxu0
      %v3279 = vadd.f32 0.0, %v3278
      %3280 = vmatmul.f32.gmra.mxu0 %v2228
      %v3281 = vpop.f32.mrf.mxu0
      %v3282 = vadd.f32 0.0, %v3281
      %3283 = vmatmul.f32.gmra.mxu0 %v2231
      %v3284 = vpop.f32.mrf.mxu0
      %v3285 = vadd.f32 0.0, %v3284
      %3286 = vmatmul.f32.gmra.mxu0 %v2234
      %v3287 = vpop.f32.mrf.mxu0
      %v3288 = vadd.f32 0.0, %v3287
      %3289 = vmatmul.f32.gmra.mxu0 %v2237
      %v3290 = vpop.f32.mrf.mxu0
      %v3291 = vadd.f32 0.0, %v3290
      %3292 = vmatmul.f32.gmra.mxu0 %v2240
      %v3293 = vpop.f32.mrf.mxu0
      %v3294 = vadd.f32 0.0, %v3293
      %3295 = vmatmul.f32.gmra.mxu0 %v2243
      %v3296 = vpop.f32.mrf.mxu0
      %v3297 = vadd.f32 0.0, %v3296
      %3298 = vmatmul.f32.gmra.mxu0 %v2246
      %v3299 = vpop.f32.mrf.mxu0
      %v3300 = vadd.f32 0.0, %v3299
      %3301 = vmatmul.f32.gmra.mxu0 %v2249
      %v3302 = vpop.f32.mrf.mxu0
      %v3303 = vadd.f32 0.0, %v3302
      %3304 = vmatmul.f32.gmra.mxu0 %v2252
      %v3305 = vpop.f32.mrf.mxu0
      %v3306 = vadd.f32 0.0, %v3305
      %3307 = vmatmul.f32.gmra.mxu0 %v2255
      %v3308 = vpop.f32.mrf.mxu0
      %v3309 = vadd.f32 0.0, %v3308
      %3310 = vmatmul.f32.gmra.mxu0 %v2258
      %v3311 = vpop.f32.mrf.mxu0
      %v3312 = vadd.f32 0.0, %v3311
      %3313 = vmatmul.f32.gmra.mxu0 %v2261
      %v3314 = vpop.f32.mrf.mxu0
      %v3315 = vadd.f32 0.0, %v3314
      %3316 = vmatmul.f32.gmra.mxu0 %v2264
      %v3317 = vpop.f32.mrf.mxu0
      %v3318 = vadd.f32 0.0, %v3317
      %3319 = vmatmul.f32.gmra.mxu0 %v2267
      %v3320 = vpop.f32.mrf.mxu0
      %v3321 = vadd.f32 0.0, %v3320
      %3322 = vmatmul.f32.gmra.mxu0 %v2270
      %v3323 = vpop.f32.mrf.mxu0
      %v3324 = vadd.f32 0.0, %v3323
      %3325 = vmatmul.f32.gmra.mxu0 %v2273
      %v3326 = vpop.f32.mrf.mxu0
      %v3327 = vadd.f32 0.0, %v3326
      %3328 = vmatmul.f32.gmra.mxu0 %v2276
      %v3329 = vpop.f32.mrf.mxu0
      %v3330 = vadd.f32 0.0, %v3329
      %3331 = vmatmul.f32.gmra.mxu0 %v2279
      %v3332 = vpop.f32.mrf.mxu0
      %v3333 = vadd.f32 0.0, %v3332
      %3334 = vmatmul.f32.gmra.mxu0 %v2282
      %v3335 = vpop.f32.mrf.mxu0
      %v3336 = vadd.f32 0.0, %v3335
      %3337 = vmatmul.f32.gmra.mxu0 %v2285
      %v3338 = vpop.f32.mrf.mxu0
      %v3339 = vadd.f32 0.0, %v3338
      %3340 = vmatmul.f32.gmra.mxu0 %v2288
      %v3341 = vpop.f32.mrf.mxu0
      %v3342 = vadd.f32 0.0, %v3341
      %3343 = vmatmul.f32.gmra.mxu0 %v2291
      %v3344 = vpop.f32.mrf.mxu0
      %v3345 = vadd.f32 0.0, %v3344
      %3346 = vmatmul.f32.gmra.mxu0 %v2294
      %v3347 = vpop.f32.mrf.mxu0
      %v3348 = vadd.f32 0.0, %v3347
      %3349 = vmatmul.f32.gmra.mxu0 %v2297
      %v3350 = vpop.f32.mrf.mxu0
      %v3351 = vadd.f32 0.0, %v3350
      %3352 = vmatmul.f32.gmra.mxu0 %v2300
      %v3353 = vpop.f32.mrf.mxu0
      %v3354 = vadd.f32 0.0, %v3353
      %3355 = vdwg.mxu0
      %v3356 = vadd.f32 %v3070, %v3159
      %v3357 = vadd.f32 %v3071, %v3162
      %v3358 = vadd.f32 %v3072, %v3165
      %v3359 = vadd.f32 %v3073, %v3168
      %v3360 = vadd.f32 %v3074, %v3171
      %v3361 = vadd.f32 %v3075, %v3174
      %v3362 = vadd.f32 %v3076, %v3177
      %v3363 = vadd.f32 %v3077, %v3180
      %v3364 = vadd.f32 %v3078, %v3183
      %v3365 = vadd.f32 %v3079, %v3186
      %v3366 = vadd.f32 %v3080, %v3189
      %v3367 = vadd.f32 %v3081, %v3192
      %v3368 = vadd.f32 %v3082, %v3195
      %v3369 = vadd.f32 %v3083, %v3198
      %v3370 = vadd.f32 %v3084, %v3201
      %v3371 = vadd.f32 %v3085, %v3204
      %v3372 = vadd.f32 %v3086, %v3207
      %v3373 = vadd.f32 %v3087, %v3210
      %v3374 = vadd.f32 %v3088, %v3213
      %v3375 = vadd.f32 %v3089, %v3216
      %v3376 = vadd.f32 %v3090, %v3219
      %v3377 = vadd.f32 %v3091, %v3222
      %v3378 = vadd.f32 %v3092, %v3225
      %v3379 = vadd.f32 %v3093, %v3228
      %v3380 = vadd.f32 %v3094, %v3231
      %v3381 = vadd.f32 %v3095, %v3234
      %v3382 = vadd.f32 %v3096, %v3237
      %v3383 = vadd.f32 %v3097, %v3240
      %v3384 = vadd.f32 %v3098, %v3243
      %v3385 = vadd.f32 %v3099, %v3246
      %v3386 = vadd.f32 %v3100, %v3249
      %v3387 = vadd.f32 %v3101, %v3252
      %v3388 = vadd.f32 %v3102, %v3255
      %v3389 = vadd.f32 %v3103, %v3258
      %v3390 = vadd.f32 %v3104, %v3261
      %v3391 = vadd.f32 %v3105, %v3264
      %v3392 = vadd.f32 %v3106, %v3267
      %v3393 = vadd.f32 %v3107, %v3270
      %v3394 = vadd.f32 %v3108, %v3273
      %v3395 = vadd.f32 %v3109, %v3276
      %v3396 = vadd.f32 %v3110, %v3279
      %v3397 = vadd.f32 %v3111, %v3282
      %v3398 = vadd.f32 %v3112, %v3285
      %v3399 = vadd.f32 %v3113, %v3288
      %v3400 = vadd.f32 %v3114, %v3291
      %v3401 = vadd.f32 %v3115, %v3294
      %v3402 = vadd.f32 %v3116, %v3297
      %v3403 = vadd.f32 %v3117, %v3300
      %v3404 = vadd.f32 %v3118, %v3303
      %v3405 = vadd.f32 %v3119, %v3306
      %v3406 = vadd.f32 %v3120, %v3309
      %v3407 = vadd.f32 %v3121, %v3312
      %v3408 = vadd.f32 %v3122, %v3315
      %v3409 = vadd.f32 %v3123, %v3318
      %v3410 = vadd.f32 %v3124, %v3321
      %v3411 = vadd.f32 %v3125, %v3324
      %v3412 = vadd.f32 %v3126, %v3327
      %v3413 = vadd.f32 %v3127, %v3330
      %v3414 = vadd.f32 %v3128, %v3333
      %v3415 = vadd.f32 %v3129, %v3336
      %v3416 = vadd.f32 %v3130, %v3339
      %v3417 = vadd.f32 %v3131, %v3342
      %v3418 = vadd.f32 %v3132, %v3345
      %v3419 = vadd.f32 %v3133, %v3348
      %v3420 = vadd.f32 %v3134, %v3351
      %v3421 = vadd.f32 %v3135, %v3354
      %3422 = vst.msk [vmem:[%s1551] sm:$0xff] %vm1065, %v3356
      %3423 = vst.msk [vmem:[%s1551 + $0x8] sm:$0xff] %vm1065, %v3357
      %3424 = vst.msk [vmem:[%s1551 + $0x10] sm:$0xff] %vm1065, %v3358
      %3425 = vst.msk [vmem:[%s1551 + $0x18] sm:$0xff] %vm1065, %v3359
      %3426 = vst.msk [vmem:[%s1551 + $0x20] sm:$0xff] %vm1065, %v3360
      %3427 = vst.msk [vmem:[%s1551 + $0x28] sm:$0xff] %vm1065, %v3361
      %3428 = vst.msk [vmem:[%s1551 + $0x30] sm:$0xff] %vm1065, %v3362
      %3429 = vst.msk [vmem:[%s1551 + $0x38] sm:$0xff] %vm1065, %v3363
      %3430 = vst.msk [vmem:[%s1551 + $0x40] sm:$0xff] %vm1065, %v3364
      %3431 = vst.msk [vmem:[%s1551 + $0x48] sm:$0xff] %vm1065, %v3365
      %3432 = vst.msk [vmem:[%s1551 + $0x50] sm:$0xff] %vm1065, %v3366
      %3433 = vst.msk [vmem:[%s1551 + $0x58] sm:$0xff] %vm1065, %v3367
      %3434 = vst.msk [vmem:[%s1551 + $0x60] sm:$0xff] %vm1065, %v3368
      %3435 = vst.msk [vmem:[%s1551 + $0x68] sm:$0xff] %vm1065, %v3369
      %3436 = vst.msk [vmem:[%s1551 + $0x70] sm:$0xff] %vm1065, %v3370
      %3437 = vst.msk [vmem:[%s1551 + $0x78] sm:$0xff] %vm1065, %v3371
      %3438 = vst.msk [vmem:[%s1551 + $0x80] sm:$0xff] %vm1065, %v3372
      %3439 = vst.msk [vmem:[%s1551 + $0x88] sm:$0xff] %vm1065, %v3373
      %3440 = vst.msk [vmem:[%s1551 + $0x90] sm:$0xff] %vm1065, %v3374
      %3441 = vst.msk [vmem:[%s1551 + $0x98] sm:$0xff] %vm1065, %v3375
      %3442 = vst.msk [vmem:[%s1551 + $0xa0] sm:$0xff] %vm1065, %v3376
      %3443 = vst.msk [vmem:[%s1551 + $0xa8] sm:$0xff] %vm1065, %v3377
      %3444 = vst.msk [vmem:[%s1551 + $0xb0] sm:$0xff] %vm1065, %v3378
      %3445 = vst.msk [vmem:[%s1551 + $0xb8] sm:$0xff] %vm1065, %v3379
      %3446 = vst.msk [vmem:[%s1551 + $0xc0] sm:$0xff] %vm1065, %v3380
      %3447 = vst.msk [vmem:[%s1551 + $0xc8] sm:$0xff] %vm1065, %v3381
      %3448 = vst.msk [vmem:[%s1551 + $0xd0] sm:$0xff] %vm1065, %v3382
      %3449 = vst.msk [vmem:[%s1551 + $0xd8] sm:$0xff] %vm1065, %v3383
      %3450 = vst.msk [vmem:[%s1551 + $0xe0] sm:$0xff] %vm1065, %v3384
      %3451 = vst.msk [vmem:[%s1551 + $0xe8] sm:$0xff] %vm1065, %v3385
      %3452 = vst.msk [vmem:[%s1551 + $0xf0] sm:$0xff] %vm1065, %v3386
      %3453 = vst.msk [vmem:[%s1551 + $0xf8] sm:$0xff] %vm1065, %v3387
      %3454 = vst.msk [vmem:[%s1551 + $0x100] sm:$0xff] %vm1065, %v3388
      %3455 = vst.msk [vmem:[%s1551 + $0x108] sm:$0xff] %vm1065, %v3389
      %3456 = vst.msk [vmem:[%s1551 + $0x110] sm:$0xff] %vm1065, %v3390
      %3457 = vst.msk [vmem:[%s1551 + $0x118] sm:$0xff] %vm1065, %v3391
      %3458 = vst.msk [vmem:[%s1551 + $0x120] sm:$0xff] %vm1065, %v3392
      %3459 = vst.msk [vmem:[%s1551 + $0x128] sm:$0xff] %vm1065, %v3393
      %3460 = vst.msk [vmem:[%s1551 + $0x130] sm:$0xff] %vm1065, %v3394
      %3461 = vst.msk [vmem:[%s1551 + $0x138] sm:$0xff] %vm1065, %v3395
      %3462 = vst.msk [vmem:[%s1551 + $0x140] sm:$0xff] %vm1065, %v3396
      %3463 = vst.msk [vmem:[%s1551 + $0x148] sm:$0xff] %vm1065, %v3397
      %3464 = vst.msk [vmem:[%s1551 + $0x150] sm:$0xff] %vm1065, %v3398
      %3465 = vst.msk [vmem:[%s1551 + $0x158] sm:$0xff] %vm1065, %v3399
      %3466 = vst.msk [vmem:[%s1551 + $0x160] sm:$0xff] %vm1065, %v3400
      %3467 = vst.msk [vmem:[%s1551 + $0x168] sm:$0xff] %vm1065, %v3401
      %3468 = vst.msk [vmem:[%s1551 + $0x170] sm:$0xff] %vm1065, %v3402
      %3469 = vst.msk [vmem:[%s1551 + $0x178] sm:$0xff] %vm1065, %v3403
      %3470 = vst.msk [vmem:[%s1551 + $0x180] sm:$0xff] %vm1065, %v3404
      %3471 = vst.msk [vmem:[%s1551 + $0x188] sm:$0xff] %vm1065, %v3405
      %3472 = vst.msk [vmem:[%s1551 + $0x190] sm:$0xff] %vm1065, %v3406
      %3473 = vst.msk [vmem:[%s1551 + $0x198] sm:$0xff] %vm1065, %v3407
      %3474 = vst.msk [vmem:[%s1551 + $0x1a0] sm:$0xff] %vm1065, %v3408
      %3475 = vst.msk [vmem:[%s1551 + $0x1a8] sm:$0xff] %vm1065, %v3409
      %3476 = vst.msk [vmem:[%s1551 + $0x1b0] sm:$0xff] %vm1065, %v3410
      %3477 = vst.msk [vmem:[%s1551 + $0x1b8] sm:$0xff] %vm1065, %v3411
      %3478 = vst.msk [vmem:[%s1551 + $0x1c0] sm:$0xff] %vm1065, %v3412
      %3479 = vst.msk [vmem:[%s1551 + $0x1c8] sm:$0xff] %vm1065, %v3413
      %3480 = vst.msk [vmem:[%s1551 + $0x1d0] sm:$0xff] %vm1065, %v3414
      %3481 = vst.msk [vmem:[%s1551 + $0x1d8] sm:$0xff] %vm1065, %v3415
      %3482 = vst.msk [vmem:[%s1551 + $0x1e0] sm:$0xff] %vm1065, %v3416
      %3483 = vst.msk [vmem:[%s1551 + $0x1e8] sm:$0xff] %vm1065, %v3417
      %3484 = vst.msk [vmem:[%s1551 + $0x1f0] sm:$0xff] %vm1065, %v3418
      %3485 = vst.msk [vmem:[%s1551 + $0x1f8] sm:$0xff] %vm1065, %v3419
      %3486 = vst.msk [vmem:[%s1551 + $0x200] sm:$0xff] %vm1065, %v3420
      %3487 = vst.msk [vmem:[%s1551 + $0x208] sm:$0xff] %vm1065, %v3421
      %v3488 = vld [vmem:[%s229 + $0x84] sm:$0xff]
      %v3489 = vld [vmem:[%s229 + $0x8c] sm:$0xff]
      %v3490 = vld [vmem:[%s229 + $0x94] sm:$0xff]
      %v3491 = vld [vmem:[%s229 + $0x9c] sm:$0xff]
      %v3492 = vld [vmem:[%s229 + $0xa4] sm:$0xff]
      %v3493 = vld [vmem:[%s229 + $0xac] sm:$0xff]
      %v3494 = vld [vmem:[%s229 + $0xb4] sm:$0xff]
      %v3495 = vld [vmem:[%s229 + $0xbc] sm:$0xff]
      %v3496 = vld [vmem:[%s229 + $0xc4] sm:$0xff]
      %v3497 = vld [vmem:[%s229 + $0xcc] sm:$0xff]
      %v3498 = vld [vmem:[%s229 + $0xd4] sm:$0xff]
      %v3499 = vld [vmem:[%s229 + $0xdc] sm:$0xff]
      %v3500 = vld [vmem:[%s229 + $0xe4] sm:$0xff]
      %v3501 = vld [vmem:[%s229 + $0xec] sm:$0xff]
      %v3502 = vld [vmem:[%s229 + $0xf4] sm:$0xff]
      %v3503 = vld [vmem:[%s229 + $0xfc] sm:$0xff]
      %v3504 = vld [vmem:[%s229 + $0x104] sm:$0xff]
      %v3505 = vld [vmem:[%s229 + $0x10c] sm:$0xff]
      %v3506 = vld [vmem:[%s229 + $0x114] sm:$0xff]
      %v3507 = vld [vmem:[%s229 + $0x11c] sm:$0xff]
      %v3508 = vld [vmem:[%s229 + $0x124] sm:$0xff]
      %v3509 = vld [vmem:[%s229 + $0x12c] sm:$0xff]
      %v3510 = vld [vmem:[%s229 + $0x134] sm:$0xff]
      %v3511 = vld [vmem:[%s229 + $0x13c] sm:$0xff]
      %v3512 = vld [vmem:[%s229 + $0x144] sm:$0xff]
      %v3513 = vld [vmem:[%s229 + $0x14c] sm:$0xff]
      %v3514 = vld [vmem:[%s229 + $0x154] sm:$0xff]
      %v3515 = vld [vmem:[%s229 + $0x15c] sm:$0xff]
      %v3516 = vld [vmem:[%s229 + $0x164] sm:$0xff]
      %v3517 = vld [vmem:[%s229 + $0x16c] sm:$0xff]
      %v3518 = vld [vmem:[%s229 + $0x174] sm:$0xff]
      %v3519 = vld [vmem:[%s229 + $0x17c] sm:$0xff]
      %v3520 = vld [vmem:[%s229 + $0x184] sm:$0xff]
      %v3521 = vld [vmem:[%s229 + $0x18c] sm:$0xff]
      %v3522 = vld [vmem:[%s229 + $0x194] sm:$0xff]
      %v3523 = vld [vmem:[%s229 + $0x19c] sm:$0xff]
      %v3524 = vld [vmem:[%s229 + $0x1a4] sm:$0xff]
      %v3525 = vld [vmem:[%s229 + $0x1ac] sm:$0xff]
      %v3526 = vld [vmem:[%s229 + $0x1b4] sm:$0xff]
      %v3527 = vld [vmem:[%s229 + $0x1bc] sm:$0xff]
      %v3528 = vld [vmem:[%s229 + $0x1c4] sm:$0xff]
      %v3529 = vld [vmem:[%s229 + $0x1cc] sm:$0xff]
      %v3530 = vld [vmem:[%s229 + $0x1d4] sm:$0xff]
      %v3531 = vld [vmem:[%s229 + $0x1dc] sm:$0xff]
      %v3532 = vld [vmem:[%s229 + $0x1e4] sm:$0xff]
      %v3533 = vld [vmem:[%s229 + $0x1ec] sm:$0xff]
      %v3534 = vld [vmem:[%s229 + $0x1f4] sm:$0xff]
      %v3535 = vld [vmem:[%s229 + $0x1fc] sm:$0xff]
      %v3536 = vld [vmem:[%s229 + $0x204] sm:$0xff]
      %v3537 = vld [vmem:[%s229 + $0x20c] sm:$0xff]
      %v3538 = vld [vmem:[%s229 + $0x214] sm:$0xff]
      %v3539 = vld [vmem:[%s229 + $0x21c] sm:$0xff]
      %v3540 = vld [vmem:[%s229 + $0x224] sm:$0xff]
      %v3541 = vld [vmem:[%s229 + $0x22c] sm:$0xff]
      %v3542 = vld [vmem:[%s229 + $0x234] sm:$0xff]
      %v3543 = vld [vmem:[%s229 + $0x23c] sm:$0xff]
      %v3544 = vld [vmem:[%s229 + $0x244] sm:$0xff]
      %v3545 = vld [vmem:[%s229 + $0x24c] sm:$0xff]
      %v3546 = vld [vmem:[%s229 + $0x254] sm:$0xff]
      %v3547 = vld [vmem:[%s229 + $0x25c] sm:$0xff]
      %v3548 = vld [vmem:[%s229 + $0x264] sm:$0xff]
      %v3549 = vld [vmem:[%s229 + $0x26c] sm:$0xff]
      %v3550 = vld [vmem:[%s229 + $0x274] sm:$0xff]
      %v3551 = vld [vmem:[%s229 + $0x27c] sm:$0xff]
      %v3552 = vld [vmem:[%s229 + $0x284] sm:$0xff]
      %v3553 = vld [vmem:[%s229 + $0x28c] sm:$0xff]
      %v3554 = vld [vmem:[#allocation2] sm:$0xff]
      %v3555 = vld [vmem:[#allocation2 + $0x8] sm:$0xff]
      %v3556 = vld [vmem:[#allocation2 + $0x10] sm:$0xff]
      %v3557 = vld [vmem:[#allocation2 + $0x18] sm:$0xff]
      %v3558 = vld [vmem:[#allocation2 + $0x20] sm:$0xff]
      %v3559 = vld [vmem:[#allocation2 + $0x28] sm:$0xff]
      %v3560 = vld [vmem:[#allocation2 + $0x30] sm:$0xff]
      %v3561 = vld [vmem:[#allocation2 + $0x38] sm:$0xff]
      %v3562 = vld [vmem:[#allocation2 + $0x40] sm:$0xff]
      %v3563 = vld [vmem:[#allocation2 + $0x48] sm:$0xff]
      %v3564 = vld [vmem:[#allocation2 + $0x50] sm:$0xff]
      %v3565 = vld [vmem:[#allocation2 + $0x58] sm:$0xff]
      %v3566 = vld [vmem:[#allocation2 + $0x60] sm:$0xff]
      %v3567 = vld [vmem:[#allocation2 + $0x68] sm:$0xff]
      %v3568 = vld [vmem:[#allocation2 + $0x70] sm:$0xff]
      %v3569 = vld [vmem:[#allocation2 + $0x78] sm:$0xff]
      %v3570 = vld [vmem:[#allocation2 + $0x80] sm:$0xff]
      %v3571 = vld [vmem:[#allocation2 + $0x88] sm:$0xff]
      %v3572 = vld [vmem:[#allocation2 + $0x90] sm:$0xff]
      %v3573 = vld [vmem:[#allocation2 + $0x98] sm:$0xff]
      %v3574 = vld [vmem:[#allocation2 + $0xa0] sm:$0xff]
      %v3575 = vld [vmem:[#allocation2 + $0xa8] sm:$0xff]
      %v3576 = vld [vmem:[#allocation2 + $0xb0] sm:$0xff]
      %v3577 = vld [vmem:[#allocation2 + $0xb8] sm:$0xff]
      %v3578 = vld [vmem:[#allocation2 + $0xc0] sm:$0xff]
      %v3579 = vld [vmem:[#allocation2 + $0xc8] sm:$0xff]
      %v3580 = vld [vmem:[#allocation2 + $0xd0] sm:$0xff]
      %v3581 = vld [vmem:[#allocation2 + $0xd8] sm:$0xff]
      %v3582 = vld [vmem:[#allocation2 + $0xe0] sm:$0xff]
      %v3583 = vld [vmem:[#allocation2 + $0xe8] sm:$0xff]
      %v3584 = vld [vmem:[#allocation2 + $0xf0] sm:$0xff]
      %v3585 = vld [vmem:[#allocation2 + $0xf8] sm:$0xff]
      %v3586 = vld [vmem:[#allocation2 + $0x100] sm:$0xff]
      %v3587 = vld [vmem:[#allocation2 + $0x108] sm:$0xff]
      %v3588 = vld [vmem:[#allocation2 + $0x110] sm:$0xff]
      %v3589 = vld [vmem:[#allocation2 + $0x118] sm:$0xff]
      %v3590 = vld [vmem:[#allocation2 + $0x120] sm:$0xff]
      %v3591 = vld [vmem:[#allocation2 + $0x128] sm:$0xff]
      %v3592 = vld [vmem:[#allocation2 + $0x130] sm:$0xff]
      %v3593 = vld [vmem:[#allocation2 + $0x138] sm:$0xff]
      %v3594 = vld [vmem:[#allocation2 + $0x140] sm:$0xff]
      %v3595 = vld [vmem:[#allocation2 + $0x148] sm:$0xff]
      %v3596 = vld [vmem:[#allocation2 + $0x150] sm:$0xff]
      %v3597 = vld [vmem:[#allocation2 + $0x158] sm:$0xff]
      %v3598 = vld [vmem:[#allocation2 + $0x160] sm:$0xff]
      %v3599 = vld [vmem:[#allocation2 + $0x168] sm:$0xff]
      %v3600 = vld [vmem:[#allocation2 + $0x170] sm:$0xff]
      %v3601 = vld [vmem:[#allocation2 + $0x178] sm:$0xff]
      %v3602 = vld [vmem:[#allocation2 + $0x180] sm:$0xff]
      %v3603 = vld [vmem:[#allocation2 + $0x188] sm:$0xff]
      %v3604 = vld [vmem:[#allocation2 + $0x190] sm:$0xff]
      %v3605 = vld [vmem:[#allocation2 + $0x198] sm:$0xff]
      %v3606 = vld [vmem:[#allocation2 + $0x1a0] sm:$0xff]
      %v3607 = vld [vmem:[#allocation2 + $0x1a8] sm:$0xff]
      %v3608 = vld [vmem:[#allocation2 + $0x1b0] sm:$0xff]
      %v3609 = vld [vmem:[#allocation2 + $0x1b8] sm:$0xff]
      %v3610 = vld [vmem:[#allocation2 + $0x1c0] sm:$0xff]
      %v3611 = vld [vmem:[#allocation2 + $0x1c8] sm:$0xff]
      %v3612 = vld [vmem:[#allocation2 + $0x1d0] sm:$0xff]
      %v3613 = vld [vmem:[#allocation2 + $0x1d8] sm:$0xff]
      %v3614 = vld [vmem:[#allocation2 + $0x1e0] sm:$0xff]
      %v3615 = vld [vmem:[#allocation2 + $0x1e8] sm:$0xff]
      %v3616 = vld [vmem:[#allocation2 + $0x1f0] sm:$0xff]
      %v3617 = vld [vmem:[#allocation2 + $0x1f8] sm:$0xff]
      %v3618 = vld [vmem:[#allocation2 + $0x200] sm:$0xff]
      %v3619 = vld [vmem:[#allocation2 + $0x208] sm:$0xff]
      %s3620 = scalar_lea.vmem %s233, 24
      %v3621 = vld [vmem:[%s3620] sm:$0x7]
      %v3623 = vsel %vm581, %v3488, 0
      %v3626 = vsel %vm581, %v3489, 0
      %v3629 = vsel %vm581, %v3490, 0
      %v3632 = vsel %vm581, %v3491, 0
      %v3635 = vsel %vm581, %v3492, 0
      %v3638 = vsel %vm581, %v3493, 0
      %v3641 = vsel %vm581, %v3494, 0
      %v3644 = vsel %vm581, %v3495, 0
      %v3647 = vsel %vm581, %v3496, 0
      %v3650 = vsel %vm581, %v3497, 0
      %v3653 = vsel %vm581, %v3498, 0
      %v3656 = vsel %vm581, %v3499, 0
      %v3659 = vsel %vm581, %v3500, 0
      %v3662 = vsel %vm581, %v3501, 0
      %v3665 = vsel %vm581, %v3502, 0
      %v3668 = vsel %vm581, %v3503, 0
      %v3671 = vsel %vm581, %v3504, 0
      %v3674 = vsel %vm581, %v3505, 0
      %v3677 = vsel %vm581, %v3506, 0
      %v3680 = vsel %vm581, %v3507, 0
      %v3683 = vsel %vm581, %v3508, 0
      %v3686 = vsel %vm581, %v3509, 0
      %v3689 = vsel %vm581, %v3510, 0
      %v3692 = vsel %vm581, %v3511, 0
      %v3695 = vsel %vm581, %v3512, 0
      %v3698 = vsel %vm581, %v3513, 0
      %v3701 = vsel %vm581, %v3514, 0
      %v3704 = vsel %vm581, %v3515, 0
      %v3707 = vsel %vm581, %v3516, 0
      %v3710 = vsel %vm581, %v3517, 0
      %v3713 = vsel %vm581, %v3518, 0
      %v3716 = vsel %vm581, %v3519, 0
      %v3719 = vsel %vm581, %v3520, 0
      %v3722 = vsel %vm581, %v3521, 0
      %v3725 = vsel %vm581, %v3522, 0
      %v3728 = vsel %vm581, %v3523, 0
      %v3731 = vsel %vm581, %v3524, 0
      %v3734 = vsel %vm581, %v3525, 0
      %v3737 = vsel %vm581, %v3526, 0
      %v3740 = vsel %vm581, %v3527, 0
      %v3743 = vsel %vm581, %v3528, 0
      %v3746 = vsel %vm581, %v3529, 0
      %v3749 = vsel %vm581, %v3530, 0
      %v3752 = vsel %vm581, %v3531, 0
      %v3755 = vsel %vm581, %v3532, 0
      %v3758 = vsel %vm581, %v3533, 0
      %v3761 = vsel %vm581, %v3534, 0
      %v3764 = vsel %vm581, %v3535, 0
      %v3767 = vsel %vm581, %v3536, 0
      %v3770 = vsel %vm581, %v3537, 0
      %v3773 = vsel %vm581, %v3538, 0
      %v3776 = vsel %vm581, %v3539, 0
      %v3779 = vsel %vm581, %v3540, 0
      %v3782 = vsel %vm581, %v3541, 0
      %v3785 = vsel %vm581, %v3542, 0
      %v3788 = vsel %vm581, %v3543, 0
      %v3791 = vsel %vm581, %v3544, 0
      %v3794 = vsel %vm581, %v3545, 0
      %v3797 = vsel %vm581, %v3546, 0
      %v3800 = vsel %vm581, %v3547, 0
      %v3803 = vsel %vm581, %v3548, 0
      %v3806 = vsel %vm581, %v3549, 0
      %v3809 = vsel %vm581, %v3550, 0
      %v3812 = vsel %vm581, %v3551, 0
      %v3815 = vsel %vm581, %v3552, 0
      %v3818 = vsel %vm581, %v3553, 0
      %v3821 = vsel %vm780, %v3621, 0
      %3823 = vmatpush.msra.mxu0 0.0
      %3824 = vmatpush.msra.mxu0 0.0
      %3825 = vmatpush.msra.mxu0 0.0
      %3826 = vmatpush.msra.mxu0 0.0
      %3827 = vmatpush.msra.mxu0 0.0
      %3828 = vmatpush.msra.mxu0 0.0
      %3829 = vmatpush.msra.mxu0 0.0
      %3830 = vmatpush.msra.mxu0 0.0
      %3831 = vmatpush.msra.mxu0 0.0
      %3832 = vmatpush.msra.mxu0 0.0
      %3833 = vmatpush.msra.mxu0 0.0
      %3834 = vmatpush.msra.mxu0 0.0
      %3835 = vmatpush.msra.mxu0 0.0
      %3836 = vmatpush.msra.mxu0 0.0
      %3837 = vmatpush.msra.mxu0 0.0
      %3838 = vmatpush.msra.mxu0 %v3821
      %3839 = vmatmul.f32.gmra.mxu0 %v3623
      %v3840 = vpop.f32.mrf.mxu0
      %v3841 = vadd.f32 0.0, %v3840
      %3842 = vmatmul.f32.gmra.mxu0 %v3626
      %v3843 = vpop.f32.mrf.mxu0
      %v3844 = vadd.f32 0.0, %v3843
      %3845 = vmatmul.f32.gmra.mxu0 %v3629
      %v3846 = vpop.f32.mrf.mxu0
      %v3847 = vadd.f32 0.0, %v3846
      %3848 = vmatmul.f32.gmra.mxu0 %v3632
      %v3849 = vpop.f32.mrf.mxu0
      %v3850 = vadd.f32 0.0, %v3849
      %3851 = vmatmul.f32.gmra.mxu0 %v3635
      %v3852 = vpop.f32.mrf.mxu0
      %v3853 = vadd.f32 0.0, %v3852
      %3854 = vmatmul.f32.gmra.mxu0 %v3638
      %v3855 = vpop.f32.mrf.mxu0
      %v3856 = vadd.f32 0.0, %v3855
      %3857 = vmatmul.f32.gmra.mxu0 %v3641
      %v3858 = vpop.f32.mrf.mxu0
      %v3859 = vadd.f32 0.0, %v3858
      %3860 = vmatmul.f32.gmra.mxu0 %v3644
      %v3861 = vpop.f32.mrf.mxu0
      %v3862 = vadd.f32 0.0, %v3861
      %3863 = vmatmul.f32.gmra.mxu0 %v3647
      %v3864 = vpop.f32.mrf.mxu0
      %v3865 = vadd.f32 0.0, %v3864
      %3866 = vmatmul.f32.gmra.mxu0 %v3650
      %v3867 = vpop.f32.mrf.mxu0
      %v3868 = vadd.f32 0.0, %v3867
      %3869 = vmatmul.f32.gmra.mxu0 %v3653
      %v3870 = vpop.f32.mrf.mxu0
      %v3871 = vadd.f32 0.0, %v3870
      %3872 = vmatmul.f32.gmra.mxu0 %v3656
      %v3873 = vpop.f32.mrf.mxu0
      %v3874 = vadd.f32 0.0, %v3873
      %3875 = vmatmul.f32.gmra.mxu0 %v3659
      %v3876 = vpop.f32.mrf.mxu0
      %v3877 = vadd.f32 0.0, %v3876
      %3878 = vmatmul.f32.gmra.mxu0 %v3662
      %v3879 = vpop.f32.mrf.mxu0
      %v3880 = vadd.f32 0.0, %v3879
      %3881 = vmatmul.f32.gmra.mxu0 %v3665
      %v3882 = vpop.f32.mrf.mxu0
      %v3883 = vadd.f32 0.0, %v3882
      %3884 = vmatmul.f32.gmra.mxu0 %v3668
      %v3885 = vpop.f32.mrf.mxu0
      %v3886 = vadd.f32 0.0, %v3885
      %3887 = vmatmul.f32.gmra.mxu0 %v3671
      %v3888 = vpop.f32.mrf.mxu0
      %v3889 = vadd.f32 0.0, %v3888
      %3890 = vmatmul.f32.gmra.mxu0 %v3674
      %v3891 = vpop.f32.mrf.mxu0
      %v3892 = vadd.f32 0.0, %v3891
      %3893 = vmatmul.f32.gmra.mxu0 %v3677
      %v3894 = vpop.f32.mrf.mxu0
      %v3895 = vadd.f32 0.0, %v3894
      %3896 = vmatmul.f32.gmra.mxu0 %v3680
      %v3897 = vpop.f32.mrf.mxu0
      %v3898 = vadd.f32 0.0, %v3897
      %3899 = vmatmul.f32.gmra.mxu0 %v3683
      %v3900 = vpop.f32.mrf.mxu0
      %v3901 = vadd.f32 0.0, %v3900
      %3902 = vmatmul.f32.gmra.mxu0 %v3686
      %v3903 = vpop.f32.mrf.mxu0
      %v3904 = vadd.f32 0.0, %v3903
      %3905 = vmatmul.f32.gmra.mxu0 %v3689
      %v3906 = vpop.f32.mrf.mxu0
      %v3907 = vadd.f32 0.0, %v3906
      %3908 = vmatmul.f32.gmra.mxu0 %v3692
      %v3909 = vpop.f32.mrf.mxu0
      %v3910 = vadd.f32 0.0, %v3909
      %3911 = vmatmul.f32.gmra.mxu0 %v3695
      %v3912 = vpop.f32.mrf.mxu0
      %v3913 = vadd.f32 0.0, %v3912
      %3914 = vmatmul.f32.gmra.mxu0 %v3698
      %v3915 = vpop.f32.mrf.mxu0
      %v3916 = vadd.f32 0.0, %v3915
      %3917 = vmatmul.f32.gmra.mxu0 %v3701
      %v3918 = vpop.f32.mrf.mxu0
      %v3919 = vadd.f32 0.0, %v3918
      %3920 = vmatmul.f32.gmra.mxu0 %v3704
      %v3921 = vpop.f32.mrf.mxu0
      %v3922 = vadd.f32 0.0, %v3921
      %3923 = vmatmul.f32.gmra.mxu0 %v3707
      %v3924 = vpop.f32.mrf.mxu0
      %v3925 = vadd.f32 0.0, %v3924
      %3926 = vmatmul.f32.gmra.mxu0 %v3710
      %v3927 = vpop.f32.mrf.mxu0
      %v3928 = vadd.f32 0.0, %v3927
      %3929 = vmatmul.f32.gmra.mxu0 %v3713
      %v3930 = vpop.f32.mrf.mxu0
      %v3931 = vadd.f32 0.0, %v3930
      %3932 = vmatmul.f32.gmra.mxu0 %v3716
      %v3933 = vpop.f32.mrf.mxu0
      %v3934 = vadd.f32 0.0, %v3933
      %3935 = vmatmul.f32.gmra.mxu0 %v3719
      %v3936 = vpop.f32.mrf.mxu0
      %v3937 = vadd.f32 0.0, %v3936
      %3938 = vmatmul.f32.gmra.mxu0 %v3722
      %v3939 = vpop.f32.mrf.mxu0
      %v3940 = vadd.f32 0.0, %v3939
      %3941 = vmatmul.f32.gmra.mxu0 %v3725
      %v3942 = vpop.f32.mrf.mxu0
      %v3943 = vadd.f32 0.0, %v3942
      %3944 = vmatmul.f32.gmra.mxu0 %v3728
      %v3945 = vpop.f32.mrf.mxu0
      %v3946 = vadd.f32 0.0, %v3945
      %3947 = vmatmul.f32.gmra.mxu0 %v3731
      %v3948 = vpop.f32.mrf.mxu0
      %v3949 = vadd.f32 0.0, %v3948
      %3950 = vmatmul.f32.gmra.mxu0 %v3734
      %v3951 = vpop.f32.mrf.mxu0
      %v3952 = vadd.f32 0.0, %v3951
      %3953 = vmatmul.f32.gmra.mxu0 %v3737
      %v3954 = vpop.f32.mrf.mxu0
      %v3955 = vadd.f32 0.0, %v3954
      %3956 = vmatmul.f32.gmra.mxu0 %v3740
      %v3957 = vpop.f32.mrf.mxu0
      %v3958 = vadd.f32 0.0, %v3957
      %3959 = vmatmul.f32.gmra.mxu0 %v3743
      %v3960 = vpop.f32.mrf.mxu0
      %v3961 = vadd.f32 0.0, %v3960
      %3962 = vmatmul.f32.gmra.mxu0 %v3746
      %v3963 = vpop.f32.mrf.mxu0
      %v3964 = vadd.f32 0.0, %v3963
      %3965 = vmatmul.f32.gmra.mxu0 %v3749
      %v3966 = vpop.f32.mrf.mxu0
      %v3967 = vadd.f32 0.0, %v3966
      %3968 = vmatmul.f32.gmra.mxu0 %v3752
      %v3969 = vpop.f32.mrf.mxu0
      %v3970 = vadd.f32 0.0, %v3969
      %3971 = vmatmul.f32.gmra.mxu0 %v3755
      %v3972 = vpop.f32.mrf.mxu0
      %v3973 = vadd.f32 0.0, %v3972
      %3974 = vmatmul.f32.gmra.mxu0 %v3758
      %v3975 = vpop.f32.mrf.mxu0
      %v3976 = vadd.f32 0.0, %v3975
      %3977 = vmatmul.f32.gmra.mxu0 %v3761
      %v3978 = vpop.f32.mrf.mxu0
      %v3979 = vadd.f32 0.0, %v3978
      %3980 = vmatmul.f32.gmra.mxu0 %v3764
      %v3981 = vpop.f32.mrf.mxu0
      %v3982 = vadd.f32 0.0, %v3981
      %3983 = vmatmul.f32.gmra.mxu0 %v3767
      %v3984 = vpop.f32.mrf.mxu0
      %v3985 = vadd.f32 0.0, %v3984
      %3986 = vmatmul.f32.gmra.mxu0 %v3770
      %v3987 = vpop.f32.mrf.mxu0
      %v3988 = vadd.f32 0.0, %v3987
      %3989 = vmatmul.f32.gmra.mxu0 %v3773
      %v3990 = vpop.f32.mrf.mxu0
      %v3991 = vadd.f32 0.0, %v3990
      %3992 = vmatmul.f32.gmra.mxu0 %v3776
      %v3993 = vpop.f32.mrf.mxu0
      %v3994 = vadd.f32 0.0, %v3993
      %3995 = vmatmul.f32.gmra.mxu0 %v3779
      %v3996 = vpop.f32.mrf.mxu0
      %v3997 = vadd.f32 0.0, %v3996
      %3998 = vmatmul.f32.gmra.mxu0 %v3782
      %v3999 = vpop.f32.mrf.mxu0
      %v4000 = vadd.f32 0.0, %v3999
      %4001 = vmatmul.f32.gmra.mxu0 %v3785
      %v4002 = vpop.f32.mrf.mxu0
      %v4003 = vadd.f32 0.0, %v4002
      %4004 = vmatmul.f32.gmra.mxu0 %v3788
      %v4005 = vpop.f32.mrf.mxu0
      %v4006 = vadd.f32 0.0, %v4005
      %4007 = vmatmul.f32.gmra.mxu0 %v3791
      %v4008 = vpop.f32.mrf.mxu0
      %v4009 = vadd.f32 0.0, %v4008
      %4010 = vmatmul.f32.gmra.mxu0 %v3794
      %v4011 = vpop.f32.mrf.mxu0
      %v4012 = vadd.f32 0.0, %v4011
      %4013 = vmatmul.f32.gmra.mxu0 %v3797
      %v4014 = vpop.f32.mrf.mxu0
      %v4015 = vadd.f32 0.0, %v4014
      %4016 = vmatmul.f32.gmra.mxu0 %v3800
      %v4017 = vpop.f32.mrf.mxu0
      %v4018 = vadd.f32 0.0, %v4017
      %4019 = vmatmul.f32.gmra.mxu0 %v3803
      %v4020 = vpop.f32.mrf.mxu0
      %v4021 = vadd.f32 0.0, %v4020
      %4022 = vmatmul.f32.gmra.mxu0 %v3806
      %v4023 = vpop.f32.mrf.mxu0
      %v4024 = vadd.f32 0.0, %v4023
      %4025 = vmatmul.f32.gmra.mxu0 %v3809
      %v4026 = vpop.f32.mrf.mxu0
      %v4027 = vadd.f32 0.0, %v4026
      %4028 = vmatmul.f32.gmra.mxu0 %v3812
      %v4029 = vpop.f32.mrf.mxu0
      %v4030 = vadd.f32 0.0, %v4029
      %4031 = vmatmul.f32.gmra.mxu0 %v3815
      %v4032 = vpop.f32.mrf.mxu0
      %v4033 = vadd.f32 0.0, %v4032
      %4034 = vmatmul.f32.gmra.mxu0 %v3818
      %v4035 = vpop.f32.mrf.mxu0
      %v4036 = vadd.f32 0.0, %v4035
      %4037 = vdwg.mxu0
      %v4038 = vadd.f32 %v3554, %v3841
      %v4039 = vadd.f32 %v3555, %v3844
      %v4040 = vadd.f32 %v3556, %v3847
      %v4041 = vadd.f32 %v3557, %v3850
      %v4042 = vadd.f32 %v3558, %v3853
      %v4043 = vadd.f32 %v3559, %v3856
      %v4044 = vadd.f32 %v3560, %v3859
      %v4045 = vadd.f32 %v3561, %v3862
      %v4046 = vadd.f32 %v3562, %v3865
      %v4047 = vadd.f32 %v3563, %v3868
      %v4048 = vadd.f32 %v3564, %v3871
      %v4049 = vadd.f32 %v3565, %v3874
      %v4050 = vadd.f32 %v3566, %v3877
      %v4051 = vadd.f32 %v3567, %v3880
      %v4052 = vadd.f32 %v3568, %v3883
      %v4053 = vadd.f32 %v3569, %v3886
      %v4054 = vadd.f32 %v3570, %v3889
      %v4055 = vadd.f32 %v3571, %v3892
      %v4056 = vadd.f32 %v3572, %v3895
      %v4057 = vadd.f32 %v3573, %v3898
      %v4058 = vadd.f32 %v3574, %v3901
      %v4059 = vadd.f32 %v3575, %v3904
      %v4060 = vadd.f32 %v3576, %v3907
      %v4061 = vadd.f32 %v3577, %v3910
      %v4062 = vadd.f32 %v3578, %v3913
      %v4063 = vadd.f32 %v3579, %v3916
      %v4064 = vadd.f32 %v3580, %v3919
      %v4065 = vadd.f32 %v3581, %v3922
      %v4066 = vadd.f32 %v3582, %v3925
      %v4067 = vadd.f32 %v3583, %v3928
      %v4068 = vadd.f32 %v3584, %v3931
      %v4069 = vadd.f32 %v3585, %v3934
      %v4070 = vadd.f32 %v3586, %v3937
      %v4071 = vadd.f32 %v3587, %v3940
      %v4072 = vadd.f32 %v3588, %v3943
      %v4073 = vadd.f32 %v3589, %v3946
      %v4074 = vadd.f32 %v3590, %v3949
      %v4075 = vadd.f32 %v3591, %v3952
      %v4076 = vadd.f32 %v3592, %v3955
      %v4077 = vadd.f32 %v3593, %v3958
      %v4078 = vadd.f32 %v3594, %v3961
      %v4079 = vadd.f32 %v3595, %v3964
      %v4080 = vadd.f32 %v3596, %v3967
      %v4081 = vadd.f32 %v3597, %v3970
      %v4082 = vadd.f32 %v3598, %v3973
      %v4083 = vadd.f32 %v3599, %v3976
      %v4084 = vadd.f32 %v3600, %v3979
      %v4085 = vadd.f32 %v3601, %v3982
      %v4086 = vadd.f32 %v3602, %v3985
      %v4087 = vadd.f32 %v3603, %v3988
      %v4088 = vadd.f32 %v3604, %v3991
      %v4089 = vadd.f32 %v3605, %v3994
      %v4090 = vadd.f32 %v3606, %v3997
      %v4091 = vadd.f32 %v3607, %v4000
      %v4092 = vadd.f32 %v3608, %v4003
      %v4093 = vadd.f32 %v3609, %v4006
      %v4094 = vadd.f32 %v3610, %v4009
      %v4095 = vadd.f32 %v3611, %v4012
      %v4096 = vadd.f32 %v3612, %v4015
      %v4097 = vadd.f32 %v3613, %v4018
      %v4098 = vadd.f32 %v3614, %v4021
      %v4099 = vadd.f32 %v3615, %v4024
      %v4100 = vadd.f32 %v3616, %v4027
      %v4101 = vadd.f32 %v3617, %v4030
      %v4102 = vadd.f32 %v3618, %v4033
      %v4103 = vadd.f32 %v3619, %v4036
      %4104 = vst.msk [vmem:[#allocation2] sm:$0xff] %vm1065, %v4038
      %4105 = vst.msk [vmem:[#allocation2 + $0x8] sm:$0xff] %vm1065, %v4039
      %4106 = vst.msk [vmem:[#allocation2 + $0x10] sm:$0xff] %vm1065, %v4040
      %4107 = vst.msk [vmem:[#allocation2 + $0x18] sm:$0xff] %vm1065, %v4041
      %4108 = vst.msk [vmem:[#allocation2 + $0x20] sm:$0xff] %vm1065, %v4042
      %4109 = vst.msk [vmem:[#allocation2 + $0x28] sm:$0xff] %vm1065, %v4043
      %4110 = vst.msk [vmem:[#allocation2 + $0x30] sm:$0xff] %vm1065, %v4044
      %4111 = vst.msk [vmem:[#allocation2 + $0x38] sm:$0xff] %vm1065, %v4045
      %4112 = vst.msk [vmem:[#allocation2 + $0x40] sm:$0xff] %vm1065, %v4046
      %4113 = vst.msk [vmem:[#allocation2 + $0x48] sm:$0xff] %vm1065, %v4047
      %4114 = vst.msk [vmem:[#allocation2 + $0x50] sm:$0xff] %vm1065, %v4048
      %4115 = vst.msk [vmem:[#allocation2 + $0x58] sm:$0xff] %vm1065, %v4049
      %4116 = vst.msk [vmem:[#allocation2 + $0x60] sm:$0xff] %vm1065, %v4050
      %4117 = vst.msk [vmem:[#allocation2 + $0x68] sm:$0xff] %vm1065, %v4051
      %4118 = vst.msk [vmem:[#allocation2 + $0x70] sm:$0xff] %vm1065, %v4052
      %4119 = vst.msk [vmem:[#allocation2 + $0x78] sm:$0xff] %vm1065, %v4053
      %4120 = vst.msk [vmem:[#allocation2 + $0x80] sm:$0xff] %vm1065, %v4054
      %4121 = vst.msk [vmem:[#allocation2 + $0x88] sm:$0xff] %vm1065, %v4055
      %4122 = vst.msk [vmem:[#allocation2 + $0x90] sm:$0xff] %vm1065, %v4056
      %4123 = vst.msk [vmem:[#allocation2 + $0x98] sm:$0xff] %vm1065, %v4057
      %4124 = vst.msk [vmem:[#allocation2 + $0xa0] sm:$0xff] %vm1065, %v4058
      %4125 = vst.msk [vmem:[#allocation2 + $0xa8] sm:$0xff] %vm1065, %v4059
      %4126 = vst.msk [vmem:[#allocation2 + $0xb0] sm:$0xff] %vm1065, %v4060
      %4127 = vst.msk [vmem:[#allocation2 + $0xb8] sm:$0xff] %vm1065, %v4061
      %4128 = vst.msk [vmem:[#allocation2 + $0xc0] sm:$0xff] %vm1065, %v4062
      %4129 = vst.msk [vmem:[#allocation2 + $0xc8] sm:$0xff] %vm1065, %v4063
      %4130 = vst.msk [vmem:[#allocation2 + $0xd0] sm:$0xff] %vm1065, %v4064
      %4131 = vst.msk [vmem:[#allocation2 + $0xd8] sm:$0xff] %vm1065, %v4065
      %4132 = vst.msk [vmem:[#allocation2 + $0xe0] sm:$0xff] %vm1065, %v4066
      %4133 = vst.msk [vmem:[#allocation2 + $0xe8] sm:$0xff] %vm1065, %v4067
      %4134 = vst.msk [vmem:[#allocation2 + $0xf0] sm:$0xff] %vm1065, %v4068
      %4135 = vst.msk [vmem:[#allocation2 + $0xf8] sm:$0xff] %vm1065, %v4069
      %4136 = vst.msk [vmem:[#allocation2 + $0x100] sm:$0xff] %vm1065, %v4070
      %4137 = vst.msk [vmem:[#allocation2 + $0x108] sm:$0xff] %vm1065, %v4071
      %4138 = vst.msk [vmem:[#allocation2 + $0x110] sm:$0xff] %vm1065, %v4072
      %4139 = vst.msk [vmem:[#allocation2 + $0x118] sm:$0xff] %vm1065, %v4073
      %4140 = vst.msk [vmem:[#allocation2 + $0x120] sm:$0xff] %vm1065, %v4074
      %4141 = vst.msk [vmem:[#allocation2 + $0x128] sm:$0xff] %vm1065, %v4075
      %4142 = vst.msk [vmem:[#allocation2 + $0x130] sm:$0xff] %vm1065, %v4076
      %4143 = vst.msk [vmem:[#allocation2 + $0x138] sm:$0xff] %vm1065, %v4077
      %4144 = vst.msk [vmem:[#allocation2 + $0x140] sm:$0xff] %vm1065, %v4078
      %4145 = vst.msk [vmem:[#allocation2 + $0x148] sm:$0xff] %vm1065, %v4079
      %4146 = vst.msk [vmem:[#allocation2 + $0x150] sm:$0xff] %vm1065, %v4080
      %4147 = vst.msk [vmem:[#allocation2 + $0x158] sm:$0xff] %vm1065, %v4081
      %4148 = vst.msk [vmem:[#allocation2 + $0x160] sm:$0xff] %vm1065, %v4082
      %4149 = vst.msk [vmem:[#allocation2 + $0x168] sm:$0xff] %vm1065, %v4083
      %4150 = vst.msk [vmem:[#allocation2 + $0x170] sm:$0xff] %vm1065, %v4084
      %4151 = vst.msk [vmem:[#allocation2 + $0x178] sm:$0xff] %vm1065, %v4085
      %4152 = vst.msk [vmem:[#allocation2 + $0x180] sm:$0xff] %vm1065, %v4086
      %4153 = vst.msk [vmem:[#allocation2 + $0x188] sm:$0xff] %vm1065, %v4087
      %4154 = vst.msk [vmem:[#allocation2 + $0x190] sm:$0xff] %vm1065, %v4088
      %4155 = vst.msk [vmem:[#allocation2 + $0x198] sm:$0xff] %vm1065, %v4089
      %4156 = vst.msk [vmem:[#allocation2 + $0x1a0] sm:$0xff] %vm1065, %v4090
      %4157 = vst.msk [vmem:[#allocation2 + $0x1a8] sm:$0xff] %vm1065, %v4091
      %4158 = vst.msk [vmem:[#allocation2 + $0x1b0] sm:$0xff] %vm1065, %v4092
      %4159 = vst.msk [vmem:[#allocation2 + $0x1b8] sm:$0xff] %vm1065, %v4093
      %4160 = vst.msk [vmem:[#allocation2 + $0x1c0] sm:$0xff] %vm1065, %v4094
      %4161 = vst.msk [vmem:[#allocation2 + $0x1c8] sm:$0xff] %vm1065, %v4095
      %4162 = vst.msk [vmem:[#allocation2 + $0x1d0] sm:$0xff] %vm1065, %v4096
      %4163 = vst.msk [vmem:[#allocation2 + $0x1d8] sm:$0xff] %vm1065, %v4097
      %4164 = vst.msk [vmem:[#allocation2 + $0x1e0] sm:$0xff] %vm1065, %v4098
      %4165 = vst.msk [vmem:[#allocation2 + $0x1e8] sm:$0xff] %vm1065, %v4099
      %4166 = vst.msk [vmem:[#allocation2 + $0x1f0] sm:$0xff] %vm1065, %v4100
      %4167 = vst.msk [vmem:[#allocation2 + $0x1f8] sm:$0xff] %vm1065, %v4101
      %4168 = vst.msk [vmem:[#allocation2 + $0x200] sm:$0xff] %vm1065, %v4102
      %4169 = vst.msk [vmem:[#allocation2 + $0x208] sm:$0xff] %vm1065, %v4103
      %v4170 = vld [vmem:[%s1132] sm:$0xff]
      %v4171 = vld [vmem:[%s1132 + $0x8] sm:$0xff]
      %v4172 = vld [vmem:[%s1132 + $0x10] sm:$0xff]
      %v4173 = vld [vmem:[%s1132 + $0x18] sm:$0xff]
      %v4174 = vld [vmem:[%s1132 + $0x20] sm:$0xff]
      %v4175 = vld [vmem:[%s1132 + $0x28] sm:$0xff]
      %v4176 = vld [vmem:[%s1132 + $0x30] sm:$0xff]
      %v4177 = vld [vmem:[%s1132 + $0x38] sm:$0xff]
      %v4178 = vld [vmem:[%s1132 + $0x40] sm:$0xff]
      %v4179 = vld [vmem:[%s1132 + $0x48] sm:$0xff]
      %v4180 = vld [vmem:[%s1132 + $0x50] sm:$0xff]
      %v4181 = vld [vmem:[%s1132 + $0x58] sm:$0xff]
      %v4182 = vld [vmem:[%s1132 + $0x60] sm:$0xff]
      %v4183 = vld [vmem:[%s1132 + $0x68] sm:$0xff]
      %v4184 = vld [vmem:[%s1132 + $0x70] sm:$0xff]
      %v4185 = vld [vmem:[%s1132 + $0x78] sm:$0xff]
      %v4186 = vld [vmem:[%s1132 + $0x80] sm:$0xff]
      %v4187 = vld [vmem:[%s1132 + $0x88] sm:$0xff]
      %v4188 = vld [vmem:[%s1132 + $0x90] sm:$0xff]
      %v4189 = vld [vmem:[%s1132 + $0x98] sm:$0xff]
      %v4190 = vld [vmem:[%s1132 + $0xa0] sm:$0xff]
      %v4191 = vld [vmem:[%s1132 + $0xa8] sm:$0xff]
      %v4192 = vld [vmem:[%s1132 + $0xb0] sm:$0xff]
      %v4193 = vld [vmem:[%s1132 + $0xb8] sm:$0xff]
      %v4194 = vld [vmem:[%s1132 + $0xc0] sm:$0xff]
      %v4195 = vld [vmem:[%s1132 + $0xc8] sm:$0xff]
      %v4196 = vld [vmem:[%s1132 + $0xd0] sm:$0xff]
      %v4197 = vld [vmem:[%s1132 + $0xd8] sm:$0xff]
      %v4198 = vld [vmem:[%s1132 + $0xe0] sm:$0xff]
      %v4199 = vld [vmem:[%s1132 + $0xe8] sm:$0xff]
      %v4200 = vld [vmem:[%s1132 + $0xf0] sm:$0xff]
      %v4201 = vld [vmem:[%s1132 + $0xf8] sm:$0xff]
      %v4202 = vld [vmem:[%s1132 + $0x100] sm:$0xff]
      %v4203 = vld [vmem:[%s1132 + $0x108] sm:$0xff]
      %v4204 = vld [vmem:[%s1132 + $0x110] sm:$0xff]
      %v4205 = vld [vmem:[%s1132 + $0x118] sm:$0xff]
      %v4206 = vld [vmem:[%s1132 + $0x120] sm:$0xff]
      %v4207 = vld [vmem:[%s1132 + $0x128] sm:$0xff]
      %v4208 = vld [vmem:[%s1132 + $0x130] sm:$0xff]
      %v4209 = vld [vmem:[%s1132 + $0x138] sm:$0xff]
      %v4210 = vld [vmem:[%s1132 + $0x140] sm:$0xff]
      %v4211 = vld [vmem:[%s1132 + $0x148] sm:$0xff]
      %v4212 = vld [vmem:[%s1132 + $0x150] sm:$0xff]
      %v4213 = vld [vmem:[%s1132 + $0x158] sm:$0xff]
      %v4214 = vld [vmem:[%s1132 + $0x160] sm:$0xff]
      %v4215 = vld [vmem:[%s1132 + $0x168] sm:$0xff]
      %v4216 = vld [vmem:[%s1132 + $0x170] sm:$0xff]
      %v4217 = vld [vmem:[%s1132 + $0x178] sm:$0xff]
      %v4218 = vld [vmem:[%s1132 + $0x180] sm:$0xff]
      %v4219 = vld [vmem:[%s1132 + $0x188] sm:$0xff]
      %v4220 = vld [vmem:[%s1132 + $0x190] sm:$0xff]
      %v4221 = vld [vmem:[%s1132 + $0x198] sm:$0xff]
      %v4222 = vld [vmem:[%s1132 + $0x1a0] sm:$0xff]
      %v4223 = vld [vmem:[%s1132 + $0x1a8] sm:$0xff]
      %v4224 = vld [vmem:[%s1132 + $0x1b0] sm:$0xff]
      %v4225 = vld [vmem:[%s1132 + $0x1b8] sm:$0xff]
      %v4226 = vld [vmem:[%s1132 + $0x1c0] sm:$0xff]
      %v4227 = vld [vmem:[%s1132 + $0x1c8] sm:$0xff]
      %v4228 = vld [vmem:[%s1132 + $0x1d0] sm:$0xff]
      %v4229 = vld [vmem:[%s1132 + $0x1d8] sm:$0xff]
      %v4230 = vld [vmem:[%s1132 + $0x1e0] sm:$0xff]
      %v4231 = vld [vmem:[%s1132 + $0x1e8] sm:$0xff]
      %v4232 = vld [vmem:[%s1132 + $0x1f0] sm:$0xff]
      %v4233 = vld [vmem:[%s1132 + $0x1f8] sm:$0xff]
      %v4234 = vld [vmem:[%s1132 + $0x200] sm:$0xff]
      %v4235 = vld [vmem:[%s1132 + $0x208] sm:$0xff]
      %s4236 = scalar_lea.vmem %s233, 28
      %v4237 = vld [vmem:[%s4236] sm:$0x7]
      %v4239 = vsel %vm780, %v4237, 0
      %4241 = vmatpush.msra.mxu0 0.0
      %4242 = vmatpush.msra.mxu0 0.0
      %4243 = vmatpush.msra.mxu0 0.0
      %4244 = vmatpush.msra.mxu0 0.0
      %4245 = vmatpush.msra.mxu0 0.0
      %4246 = vmatpush.msra.mxu0 0.0
      %4247 = vmatpush.msra.mxu0 0.0
      %4248 = vmatpush.msra.mxu0 0.0
      %4249 = vmatpush.msra.mxu0 0.0
      %4250 = vmatpush.msra.mxu0 0.0
      %4251 = vmatpush.msra.mxu0 0.0
      %4252 = vmatpush.msra.mxu0 0.0
      %4253 = vmatpush.msra.mxu0 0.0
      %4254 = vmatpush.msra.mxu0 0.0
      %4255 = vmatpush.msra.mxu0 0.0
      %4256 = vmatpush.msra.mxu0 %v4239
      %4257 = vmatmul.f32.gmra.mxu0 %v3623
      %v4258 = vpop.f32.mrf.mxu0
      %v4259 = vadd.f32 0.0, %v4258
      %4260 = vmatmul.f32.gmra.mxu0 %v3626
      %v4261 = vpop.f32.mrf.mxu0
      %v4262 = vadd.f32 0.0, %v4261
      %4263 = vmatmul.f32.gmra.mxu0 %v3629
      %v4264 = vpop.f32.mrf.mxu0
      %v4265 = vadd.f32 0.0, %v4264
      %4266 = vmatmul.f32.gmra.mxu0 %v3632
      %v4267 = vpop.f32.mrf.mxu0
      %v4268 = vadd.f32 0.0, %v4267
      %4269 = vmatmul.f32.gmra.mxu0 %v3635
      %v4270 = vpop.f32.mrf.mxu0
      %v4271 = vadd.f32 0.0, %v4270
      %4272 = vmatmul.f32.gmra.mxu0 %v3638
      %v4273 = vpop.f32.mrf.mxu0
      %v4274 = vadd.f32 0.0, %v4273
      %4275 = vmatmul.f32.gmra.mxu0 %v3641
      %v4276 = vpop.f32.mrf.mxu0
      %v4277 = vadd.f32 0.0, %v4276
      %4278 = vmatmul.f32.gmra.mxu0 %v3644
      %v4279 = vpop.f32.mrf.mxu0
      %v4280 = vadd.f32 0.0, %v4279
      %4281 = vmatmul.f32.gmra.mxu0 %v3647
      %v4282 = vpop.f32.mrf.mxu0
      %v4283 = vadd.f32 0.0, %v4282
      %4284 = vmatmul.f32.gmra.mxu0 %v3650
      %v4285 = vpop.f32.mrf.mxu0
      %v4286 = vadd.f32 0.0, %v4285
      %4287 = vmatmul.f32.gmra.mxu0 %v3653
      %v4288 = vpop.f32.mrf.mxu0
      %v4289 = vadd.f32 0.0, %v4288
      %4290 = vmatmul.f32.gmra.mxu0 %v3656
      %v4291 = vpop.f32.mrf.mxu0
      %v4292 = vadd.f32 0.0, %v4291
      %4293 = vmatmul.f32.gmra.mxu0 %v3659
      %v4294 = vpop.f32.mrf.mxu0
      %v4295 = vadd.f32 0.0, %v4294
      %4296 = vmatmul.f32.gmra.mxu0 %v3662
      %v4297 = vpop.f32.mrf.mxu0
      %v4298 = vadd.f32 0.0, %v4297
      %4299 = vmatmul.f32.gmra.mxu0 %v3665
      %v4300 = vpop.f32.mrf.mxu0
      %v4301 = vadd.f32 0.0, %v4300
      %4302 = vmatmul.f32.gmra.mxu0 %v3668
      %v4303 = vpop.f32.mrf.mxu0
      %v4304 = vadd.f32 0.0, %v4303
      %4305 = vmatmul.f32.gmra.mxu0 %v3671
      %v4306 = vpop.f32.mrf.mxu0
      %v4307 = vadd.f32 0.0, %v4306
      %4308 = vmatmul.f32.gmra.mxu0 %v3674
      %v4309 = vpop.f32.mrf.mxu0
      %v4310 = vadd.f32 0.0, %v4309
      %4311 = vmatmul.f32.gmra.mxu0 %v3677
      %v4312 = vpop.f32.mrf.mxu0
      %v4313 = vadd.f32 0.0, %v4312
      %4314 = vmatmul.f32.gmra.mxu0 %v3680
      %v4315 = vpop.f32.mrf.mxu0
      %v4316 = vadd.f32 0.0, %v4315
      %4317 = vmatmul.f32.gmra.mxu0 %v3683
      %v4318 = vpop.f32.mrf.mxu0
      %v4319 = vadd.f32 0.0, %v4318
      %4320 = vmatmul.f32.gmra.mxu0 %v3686
      %v4321 = vpop.f32.mrf.mxu0
      %v4322 = vadd.f32 0.0, %v4321
      %4323 = vmatmul.f32.gmra.mxu0 %v3689
      %v4324 = vpop.f32.mrf.mxu0
      %v4325 = vadd.f32 0.0, %v4324
      %4326 = vmatmul.f32.gmra.mxu0 %v3692
      %v4327 = vpop.f32.mrf.mxu0
      %v4328 = vadd.f32 0.0, %v4327
      %4329 = vmatmul.f32.gmra.mxu0 %v3695
      %v4330 = vpop.f32.mrf.mxu0
      %v4331 = vadd.f32 0.0, %v4330
      %4332 = vmatmul.f32.gmra.mxu0 %v3698
      %v4333 = vpop.f32.mrf.mxu0
      %v4334 = vadd.f32 0.0, %v4333
      %4335 = vmatmul.f32.gmra.mxu0 %v3701
      %v4336 = vpop.f32.mrf.mxu0
      %v4337 = vadd.f32 0.0, %v4336
      %4338 = vmatmul.f32.gmra.mxu0 %v3704
      %v4339 = vpop.f32.mrf.mxu0
      %v4340 = vadd.f32 0.0, %v4339
      %4341 = vmatmul.f32.gmra.mxu0 %v3707
      %v4342 = vpop.f32.mrf.mxu0
      %v4343 = vadd.f32 0.0, %v4342
      %4344 = vmatmul.f32.gmra.mxu0 %v3710
      %v4345 = vpop.f32.mrf.mxu0
      %v4346 = vadd.f32 0.0, %v4345
      %4347 = vmatmul.f32.gmra.mxu0 %v3713
      %v4348 = vpop.f32.mrf.mxu0
      %v4349 = vadd.f32 0.0, %v4348
      %4350 = vmatmul.f32.gmra.mxu0 %v3716
      %v4351 = vpop.f32.mrf.mxu0
      %v4352 = vadd.f32 0.0, %v4351
      %4353 = vmatmul.f32.gmra.mxu0 %v3719
      %v4354 = vpop.f32.mrf.mxu0
      %v4355 = vadd.f32 0.0, %v4354
      %4356 = vmatmul.f32.gmra.mxu0 %v3722
      %v4357 = vpop.f32.mrf.mxu0
      %v4358 = vadd.f32 0.0, %v4357
      %4359 = vmatmul.f32.gmra.mxu0 %v3725
      %v4360 = vpop.f32.mrf.mxu0
      %v4361 = vadd.f32 0.0, %v4360
      %4362 = vmatmul.f32.gmra.mxu0 %v3728
      %v4363 = vpop.f32.mrf.mxu0
      %v4364 = vadd.f32 0.0, %v4363
      %4365 = vmatmul.f32.gmra.mxu0 %v3731
      %v4366 = vpop.f32.mrf.mxu0
      %v4367 = vadd.f32 0.0, %v4366
      %4368 = vmatmul.f32.gmra.mxu0 %v3734
      %v4369 = vpop.f32.mrf.mxu0
      %v4370 = vadd.f32 0.0, %v4369
      %4371 = vmatmul.f32.gmra.mxu0 %v3737
      %v4372 = vpop.f32.mrf.mxu0
      %v4373 = vadd.f32 0.0, %v4372
      %4374 = vmatmul.f32.gmra.mxu0 %v3740
      %v4375 = vpop.f32.mrf.mxu0
      %v4376 = vadd.f32 0.0, %v4375
      %4377 = vmatmul.f32.gmra.mxu0 %v3743
      %v4378 = vpop.f32.mrf.mxu0
      %v4379 = vadd.f32 0.0, %v4378
      %4380 = vmatmul.f32.gmra.mxu0 %v3746
      %v4381 = vpop.f32.mrf.mxu0
      %v4382 = vadd.f32 0.0, %v4381
      %4383 = vmatmul.f32.gmra.mxu0 %v3749
      %v4384 = vpop.f32.mrf.mxu0
      %v4385 = vadd.f32 0.0, %v4384
      %4386 = vmatmul.f32.gmra.mxu0 %v3752
      %v4387 = vpop.f32.mrf.mxu0
      %v4388 = vadd.f32 0.0, %v4387
      %4389 = vmatmul.f32.gmra.mxu0 %v3755
      %v4390 = vpop.f32.mrf.mxu0
      %v4391 = vadd.f32 0.0, %v4390
      %4392 = vmatmul.f32.gmra.mxu0 %v3758
      %v4393 = vpop.f32.mrf.mxu0
      %v4394 = vadd.f32 0.0, %v4393
      %4395 = vmatmul.f32.gmra.mxu0 %v3761
      %v4396 = vpop.f32.mrf.mxu0
      %v4397 = vadd.f32 0.0, %v4396
      %4398 = vmatmul.f32.gmra.mxu0 %v3764
      %v4399 = vpop.f32.mrf.mxu0
      %v4400 = vadd.f32 0.0, %v4399
      %4401 = vmatmul.f32.gmra.mxu0 %v3767
      %v4402 = vpop.f32.mrf.mxu0
      %v4403 = vadd.f32 0.0, %v4402
      %4404 = vmatmul.f32.gmra.mxu0 %v3770
      %v4405 = vpop.f32.mrf.mxu0
      %v4406 = vadd.f32 0.0, %v4405
      %4407 = vmatmul.f32.gmra.mxu0 %v3773
      %v4408 = vpop.f32.mrf.mxu0
      %v4409 = vadd.f32 0.0, %v4408
      %4410 = vmatmul.f32.gmra.mxu0 %v3776
      %v4411 = vpop.f32.mrf.mxu0
      %v4412 = vadd.f32 0.0, %v4411
      %4413 = vmatmul.f32.gmra.mxu0 %v3779
      %v4414 = vpop.f32.mrf.mxu0
      %v4415 = vadd.f32 0.0, %v4414
      %4416 = vmatmul.f32.gmra.mxu0 %v3782
      %v4417 = vpop.f32.mrf.mxu0
      %v4418 = vadd.f32 0.0, %v4417
      %4419 = vmatmul.f32.gmra.mxu0 %v3785
      %v4420 = vpop.f32.mrf.mxu0
      %v4421 = vadd.f32 0.0, %v4420
      %4422 = vmatmul.f32.gmra.mxu0 %v3788
      %v4423 = vpop.f32.mrf.mxu0
      %v4424 = vadd.f32 0.0, %v4423
      %4425 = vmatmul.f32.gmra.mxu0 %v3791
      %v4426 = vpop.f32.mrf.mxu0
      %v4427 = vadd.f32 0.0, %v4426
      %4428 = vmatmul.f32.gmra.mxu0 %v3794
      %v4429 = vpop.f32.mrf.mxu0
      %v4430 = vadd.f32 0.0, %v4429
      %4431 = vmatmul.f32.gmra.mxu0 %v3797
      %v4432 = vpop.f32.mrf.mxu0
      %v4433 = vadd.f32 0.0, %v4432
      %4434 = vmatmul.f32.gmra.mxu0 %v3800
      %v4435 = vpop.f32.mrf.mxu0
      %v4436 = vadd.f32 0.0, %v4435
      %4437 = vmatmul.f32.gmra.mxu0 %v3803
      %v4438 = vpop.f32.mrf.mxu0
      %v4439 = vadd.f32 0.0, %v4438
      %4440 = vmatmul.f32.gmra.mxu0 %v3806
      %v4441 = vpop.f32.mrf.mxu0
      %v4442 = vadd.f32 0.0, %v4441
      %4443 = vmatmul.f32.gmra.mxu0 %v3809
      %v4444 = vpop.f32.mrf.mxu0
      %v4445 = vadd.f32 0.0, %v4444
      %4446 = vmatmul.f32.gmra.mxu0 %v3812
      %v4447 = vpop.f32.mrf.mxu0
      %v4448 = vadd.f32 0.0, %v4447
      %4449 = vmatmul.f32.gmra.mxu0 %v3815
      %v4450 = vpop.f32.mrf.mxu0
      %v4451 = vadd.f32 0.0, %v4450
      %4452 = vmatmul.f32.gmra.mxu0 %v3818
      %v4453 = vpop.f32.mrf.mxu0
      %v4454 = vadd.f32 0.0, %v4453
      %4455 = vdwg.mxu0
      %v4456 = vadd.f32 %v4170, %v4259
      %v4457 = vadd.f32 %v4171, %v4262
      %v4458 = vadd.f32 %v4172, %v4265
      %v4459 = vadd.f32 %v4173, %v4268
      %v4460 = vadd.f32 %v4174, %v4271
      %v4461 = vadd.f32 %v4175, %v4274
      %v4462 = vadd.f32 %v4176, %v4277
      %v4463 = vadd.f32 %v4177, %v4280
      %v4464 = vadd.f32 %v4178, %v4283
      %v4465 = vadd.f32 %v4179, %v4286
      %v4466 = vadd.f32 %v4180, %v4289
      %v4467 = vadd.f32 %v4181, %v4292
      %v4468 = vadd.f32 %v4182, %v4295
      %v4469 = vadd.f32 %v4183, %v4298
      %v4470 = vadd.f32 %v4184, %v4301
      %v4471 = vadd.f32 %v4185, %v4304
      %v4472 = vadd.f32 %v4186, %v4307
      %v4473 = vadd.f32 %v4187, %v4310
      %v4474 = vadd.f32 %v4188, %v4313
      %v4475 = vadd.f32 %v4189, %v4316
      %v4476 = vadd.f32 %v4190, %v4319
      %v4477 = vadd.f32 %v4191, %v4322
      %v4478 = vadd.f32 %v4192, %v4325
      %v4479 = vadd.f32 %v4193, %v4328
      %v4480 = vadd.f32 %v4194, %v4331
      %v4481 = vadd.f32 %v4195, %v4334
      %v4482 = vadd.f32 %v4196, %v4337
      %v4483 = vadd.f32 %v4197, %v4340
      %v4484 = vadd.f32 %v4198, %v4343
      %v4485 = vadd.f32 %v4199, %v4346
      %v4486 = vadd.f32 %v4200, %v4349
      %v4487 = vadd.f32 %v4201, %v4352
      %v4488 = vadd.f32 %v4202, %v4355
      %v4489 = vadd.f32 %v4203, %v4358
      %v4490 = vadd.f32 %v4204, %v4361
      %v4491 = vadd.f32 %v4205, %v4364
      %v4492 = vadd.f32 %v4206, %v4367
      %v4493 = vadd.f32 %v4207, %v4370
      %v4494 = vadd.f32 %v4208, %v4373
      %v4495 = vadd.f32 %v4209, %v4376
      %v4496 = vadd.f32 %v4210, %v4379
      %v4497 = vadd.f32 %v4211, %v4382
      %v4498 = vadd.f32 %v4212, %v4385
      %v4499 = vadd.f32 %v4213, %v4388
      %v4500 = vadd.f32 %v4214, %v4391
      %v4501 = vadd.f32 %v4215, %v4394
      %v4502 = vadd.f32 %v4216, %v4397
      %v4503 = vadd.f32 %v4217, %v4400
      %v4504 = vadd.f32 %v4218, %v4403
      %v4505 = vadd.f32 %v4219, %v4406
      %v4506 = vadd.f32 %v4220, %v4409
      %v4507 = vadd.f32 %v4221, %v4412
      %v4508 = vadd.f32 %v4222, %v4415
      %v4509 = vadd.f32 %v4223, %v4418
      %v4510 = vadd.f32 %v4224, %v4421
      %v4511 = vadd.f32 %v4225, %v4424
      %v4512 = vadd.f32 %v4226, %v4427
      %v4513 = vadd.f32 %v4227, %v4430
      %v4514 = vadd.f32 %v4228, %v4433
      %v4515 = vadd.f32 %v4229, %v4436
      %v4516 = vadd.f32 %v4230, %v4439
      %v4517 = vadd.f32 %v4231, %v4442
      %v4518 = vadd.f32 %v4232, %v4445
      %v4519 = vadd.f32 %v4233, %v4448
      %v4520 = vadd.f32 %v4234, %v4451
      %v4521 = vadd.f32 %v4235, %v4454
      %4522 = vst.msk [vmem:[%s1132] sm:$0xff] %vm1065, %v4456
      %4523 = vst.msk [vmem:[%s1132 + $0x8] sm:$0xff] %vm1065, %v4457
      %4524 = vst.msk [vmem:[%s1132 + $0x10] sm:$0xff] %vm1065, %v4458
      %4525 = vst.msk [vmem:[%s1132 + $0x18] sm:$0xff] %vm1065, %v4459
      %4526 = vst.msk [vmem:[%s1132 + $0x20] sm:$0xff] %vm1065, %v4460
      %4527 = vst.msk [vmem:[%s1132 + $0x28] sm:$0xff] %vm1065, %v4461
      %4528 = vst.msk [vmem:[%s1132 + $0x30] sm:$0xff] %vm1065, %v4462
      %4529 = vst.msk [vmem:[%s1132 + $0x38] sm:$0xff] %vm1065, %v4463
      %4530 = vst.msk [vmem:[%s1132 + $0x40] sm:$0xff] %vm1065, %v4464
      %4531 = vst.msk [vmem:[%s1132 + $0x48] sm:$0xff] %vm1065, %v4465
      %4532 = vst.msk [vmem:[%s1132 + $0x50] sm:$0xff] %vm1065, %v4466
      %4533 = vst.msk [vmem:[%s1132 + $0x58] sm:$0xff] %vm1065, %v4467
      %4534 = vst.msk [vmem:[%s1132 + $0x60] sm:$0xff] %vm1065, %v4468
      %4535 = vst.msk [vmem:[%s1132 + $0x68] sm:$0xff] %vm1065, %v4469
      %4536 = vst.msk [vmem:[%s1132 + $0x70] sm:$0xff] %vm1065, %v4470
      %4537 = vst.msk [vmem:[%s1132 + $0x78] sm:$0xff] %vm1065, %v4471
      %4538 = vst.msk [vmem:[%s1132 + $0x80] sm:$0xff] %vm1065, %v4472
      %4539 = vst.msk [vmem:[%s1132 + $0x88] sm:$0xff] %vm1065, %v4473
      %4540 = vst.msk [vmem:[%s1132 + $0x90] sm:$0xff] %vm1065, %v4474
      %4541 = vst.msk [vmem:[%s1132 + $0x98] sm:$0xff] %vm1065, %v4475
      %4542 = vst.msk [vmem:[%s1132 + $0xa0] sm:$0xff] %vm1065, %v4476
      %4543 = vst.msk [vmem:[%s1132 + $0xa8] sm:$0xff] %vm1065, %v4477
      %4544 = vst.msk [vmem:[%s1132 + $0xb0] sm:$0xff] %vm1065, %v4478
      %4545 = vst.msk [vmem:[%s1132 + $0xb8] sm:$0xff] %vm1065, %v4479
      %4546 = vst.msk [vmem:[%s1132 + $0xc0] sm:$0xff] %vm1065, %v4480
      %4547 = vst.msk [vmem:[%s1132 + $0xc8] sm:$0xff] %vm1065, %v4481
      %4548 = vst.msk [vmem:[%s1132 + $0xd0] sm:$0xff] %vm1065, %v4482
      %4549 = vst.msk [vmem:[%s1132 + $0xd8] sm:$0xff] %vm1065, %v4483
      %4550 = vst.msk [vmem:[%s1132 + $0xe0] sm:$0xff] %vm1065, %v4484
      %4551 = vst.msk [vmem:[%s1132 + $0xe8] sm:$0xff] %vm1065, %v4485
      %4552 = vst.msk [vmem:[%s1132 + $0xf0] sm:$0xff] %vm1065, %v4486
      %4553 = vst.msk [vmem:[%s1132 + $0xf8] sm:$0xff] %vm1065, %v4487
      %4554 = vst.msk [vmem:[%s1132 + $0x100] sm:$0xff] %vm1065, %v4488
      %4555 = vst.msk [vmem:[%s1132 + $0x108] sm:$0xff] %vm1065, %v4489
      %4556 = vst.msk [vmem:[%s1132 + $0x110] sm:$0xff] %vm1065, %v4490
      %4557 = vst.msk [vmem:[%s1132 + $0x118] sm:$0xff] %vm1065, %v4491
      %4558 = vst.msk [vmem:[%s1132 + $0x120] sm:$0xff] %vm1065, %v4492
      %4559 = vst.msk [vmem:[%s1132 + $0x128] sm:$0xff] %vm1065, %v4493
      %4560 = vst.msk [vmem:[%s1132 + $0x130] sm:$0xff] %vm1065, %v4494
      %4561 = vst.msk [vmem:[%s1132 + $0x138] sm:$0xff] %vm1065, %v4495
      %4562 = vst.msk [vmem:[%s1132 + $0x140] sm:$0xff] %vm1065, %v4496
      %4563 = vst.msk [vmem:[%s1132 + $0x148] sm:$0xff] %vm1065, %v4497
      %4564 = vst.msk [vmem:[%s1132 + $0x150] sm:$0xff] %vm1065, %v4498
      %4565 = vst.msk [vmem:[%s1132 + $0x158] sm:$0xff] %vm1065, %v4499
      %4566 = vst.msk [vmem:[%s1132 + $0x160] sm:$0xff] %vm1065, %v4500
      %4567 = vst.msk [vmem:[%s1132 + $0x168] sm:$0xff] %vm1065, %v4501
      %4568 = vst.msk [vmem:[%s1132 + $0x170] sm:$0xff] %vm1065, %v4502
      %4569 = vst.msk [vmem:[%s1132 + $0x178] sm:$0xff] %vm1065, %v4503
      %4570 = vst.msk [vmem:[%s1132 + $0x180] sm:$0xff] %vm1065, %v4504
      %4571 = vst.msk [vmem:[%s1132 + $0x188] sm:$0xff] %vm1065, %v4505
      %4572 = vst.msk [vmem:[%s1132 + $0x190] sm:$0xff] %vm1065, %v4506
      %4573 = vst.msk [vmem:[%s1132 + $0x198] sm:$0xff] %vm1065, %v4507
      %4574 = vst.msk [vmem:[%s1132 + $0x1a0] sm:$0xff] %vm1065, %v4508
      %4575 = vst.msk [vmem:[%s1132 + $0x1a8] sm:$0xff] %vm1065, %v4509
      %4576 = vst.msk [vmem:[%s1132 + $0x1b0] sm:$0xff] %vm1065, %v4510
      %4577 = vst.msk [vmem:[%s1132 + $0x1b8] sm:$0xff] %vm1065, %v4511
      %4578 = vst.msk [vmem:[%s1132 + $0x1c0] sm:$0xff] %vm1065, %v4512
      %4579 = vst.msk [vmem:[%s1132 + $0x1c8] sm:$0xff] %vm1065, %v4513
      %4580 = vst.msk [vmem:[%s1132 + $0x1d0] sm:$0xff] %vm1065, %v4514
      %4581 = vst.msk [vmem:[%s1132 + $0x1d8] sm:$0xff] %vm1065, %v4515
      %4582 = vst.msk [vmem:[%s1132 + $0x1e0] sm:$0xff] %vm1065, %v4516
      %4583 = vst.msk [vmem:[%s1132 + $0x1e8] sm:$0xff] %vm1065, %v4517
      %4584 = vst.msk [vmem:[%s1132 + $0x1f0] sm:$0xff] %vm1065, %v4518
      %4585 = vst.msk [vmem:[%s1132 + $0x1f8] sm:$0xff] %vm1065, %v4519
      %4586 = vst.msk [vmem:[%s1132 + $0x200] sm:$0xff] %vm1065, %v4520
      %4587 = vst.msk [vmem:[%s1132 + $0x208] sm:$0xff] %vm1065, %v4521
      %v4588 = vld [vmem:[%s1551] sm:$0xff]
      %v4589 = vld [vmem:[%s1551 + $0x8] sm:$0xff]
      %v4590 = vld [vmem:[%s1551 + $0x10] sm:$0xff]
      %v4591 = vld [vmem:[%s1551 + $0x18] sm:$0xff]
      %v4592 = vld [vmem:[%s1551 + $0x20] sm:$0xff]
      %v4593 = vld [vmem:[%s1551 + $0x28] sm:$0xff]
      %v4594 = vld [vmem:[%s1551 + $0x30] sm:$0xff]
      %v4595 = vld [vmem:[%s1551 + $0x38] sm:$0xff]
      %v4596 = vld [vmem:[%s1551 + $0x40] sm:$0xff]
      %v4597 = vld [vmem:[%s1551 + $0x48] sm:$0xff]
      %v4598 = vld [vmem:[%s1551 + $0x50] sm:$0xff]
      %v4599 = vld [vmem:[%s1551 + $0x58] sm:$0xff]
      %v4600 = vld [vmem:[%s1551 + $0x60] sm:$0xff]
      %v4601 = vld [vmem:[%s1551 + $0x68] sm:$0xff]
      %v4602 = vld [vmem:[%s1551 + $0x70] sm:$0xff]
      %v4603 = vld [vmem:[%s1551 + $0x78] sm:$0xff]
      %v4604 = vld [vmem:[%s1551 + $0x80] sm:$0xff]
      %v4605 = vld [vmem:[%s1551 + $0x88] sm:$0xff]
      %v4606 = vld [vmem:[%s1551 + $0x90] sm:$0xff]
      %v4607 = vld [vmem:[%s1551 + $0x98] sm:$0xff]
      %v4608 = vld [vmem:[%s1551 + $0xa0] sm:$0xff]
      %v4609 = vld [vmem:[%s1551 + $0xa8] sm:$0xff]
      %v4610 = vld [vmem:[%s1551 + $0xb0] sm:$0xff]
      %v4611 = vld [vmem:[%s1551 + $0xb8] sm:$0xff]
      %v4612 = vld [vmem:[%s1551 + $0xc0] sm:$0xff]
      %v4613 = vld [vmem:[%s1551 + $0xc8] sm:$0xff]
      %v4614 = vld [vmem:[%s1551 + $0xd0] sm:$0xff]
      %v4615 = vld [vmem:[%s1551 + $0xd8] sm:$0xff]
      %v4616 = vld [vmem:[%s1551 + $0xe0] sm:$0xff]
      %v4617 = vld [vmem:[%s1551 + $0xe8] sm:$0xff]
      %v4618 = vld [vmem:[%s1551 + $0xf0] sm:$0xff]
      %v4619 = vld [vmem:[%s1551 + $0xf8] sm:$0xff]
      %v4620 = vld [vmem:[%s1551 + $0x100] sm:$0xff]
      %v4621 = vld [vmem:[%s1551 + $0x108] sm:$0xff]
      %v4622 = vld [vmem:[%s1551 + $0x110] sm:$0xff]
      %v4623 = vld [vmem:[%s1551 + $0x118] sm:$0xff]
      %v4624 = vld [vmem:[%s1551 + $0x120] sm:$0xff]
      %v4625 = vld [vmem:[%s1551 + $0x128] sm:$0xff]
      %v4626 = vld [vmem:[%s1551 + $0x130] sm:$0xff]
      %v4627 = vld [vmem:[%s1551 + $0x138] sm:$0xff]
      %v4628 = vld [vmem:[%s1551 + $0x140] sm:$0xff]
      %v4629 = vld [vmem:[%s1551 + $0x148] sm:$0xff]
      %v4630 = vld [vmem:[%s1551 + $0x150] sm:$0xff]
      %v4631 = vld [vmem:[%s1551 + $0x158] sm:$0xff]
      %v4632 = vld [vmem:[%s1551 + $0x160] sm:$0xff]
      %v4633 = vld [vmem:[%s1551 + $0x168] sm:$0xff]
      %v4634 = vld [vmem:[%s1551 + $0x170] sm:$0xff]
      %v4635 = vld [vmem:[%s1551 + $0x178] sm:$0xff]
      %v4636 = vld [vmem:[%s1551 + $0x180] sm:$0xff]
      %v4637 = vld [vmem:[%s1551 + $0x188] sm:$0xff]
      %v4638 = vld [vmem:[%s1551 + $0x190] sm:$0xff]
      %v4639 = vld [vmem:[%s1551 + $0x198] sm:$0xff]
      %v4640 = vld [vmem:[%s1551 + $0x1a0] sm:$0xff]
      %v4641 = vld [vmem:[%s1551 + $0x1a8] sm:$0xff]
      %v4642 = vld [vmem:[%s1551 + $0x1b0] sm:$0xff]
      %v4643 = vld [vmem:[%s1551 + $0x1b8] sm:$0xff]
      %v4644 = vld [vmem:[%s1551 + $0x1c0] sm:$0xff]
      %v4645 = vld [vmem:[%s1551 + $0x1c8] sm:$0xff]
      %v4646 = vld [vmem:[%s1551 + $0x1d0] sm:$0xff]
      %v4647 = vld [vmem:[%s1551 + $0x1d8] sm:$0xff]
      %v4648 = vld [vmem:[%s1551 + $0x1e0] sm:$0xff]
      %v4649 = vld [vmem:[%s1551 + $0x1e8] sm:$0xff]
      %v4650 = vld [vmem:[%s1551 + $0x1f0] sm:$0xff]
      %v4651 = vld [vmem:[%s1551 + $0x1f8] sm:$0xff]
      %v4652 = vld [vmem:[%s1551 + $0x200] sm:$0xff]
      %v4653 = vld [vmem:[%s1551 + $0x208] sm:$0xff]
      %s4654 = scalar_lea.vmem %s233, 32
      %v4655 = vld [vmem:[%s4654] sm:$0x7]
      %v4657 = vsel %vm780, %v4655, 0
      %4659 = vmatpush.msra.mxu0 0.0
      %4660 = vmatpush.msra.mxu0 0.0
      %4661 = vmatpush.msra.mxu0 0.0
      %4662 = vmatpush.msra.mxu0 0.0
      %4663 = vmatpush.msra.mxu0 0.0
      %4664 = vmatpush.msra.mxu0 0.0
      %4665 = vmatpush.msra.mxu0 0.0
      %4666 = vmatpush.msra.mxu0 0.0
      %4667 = vmatpush.msra.mxu0 0.0
      %4668 = vmatpush.msra.mxu0 0.0
      %4669 = vmatpush.msra.mxu0 0.0
      %4670 = vmatpush.msra.mxu0 0.0
      %4671 = vmatpush.msra.mxu0 0.0
      %4672 = vmatpush.msra.mxu0 0.0
      %4673 = vmatpush.msra.mxu0 0.0
      %4674 = vmatpush.msra.mxu0 %v4657
      %4675 = vmatmul.f32.gmra.mxu0 %v3623
      %v4676 = vpop.f32.mrf.mxu0
      %v4677 = vadd.f32 0.0, %v4676
      %4678 = vmatmul.f32.gmra.mxu0 %v3626
      %v4679 = vpop.f32.mrf.mxu0
      %v4680 = vadd.f32 0.0, %v4679
      %4681 = vmatmul.f32.gmra.mxu0 %v3629
      %v4682 = vpop.f32.mrf.mxu0
      %v4683 = vadd.f32 0.0, %v4682
      %4684 = vmatmul.f32.gmra.mxu0 %v3632
      %v4685 = vpop.f32.mrf.mxu0
      %v4686 = vadd.f32 0.0, %v4685
      %4687 = vmatmul.f32.gmra.mxu0 %v3635
      %v4688 = vpop.f32.mrf.mxu0
      %v4689 = vadd.f32 0.0, %v4688
      %4690 = vmatmul.f32.gmra.mxu0 %v3638
      %v4691 = vpop.f32.mrf.mxu0
      %v4692 = vadd.f32 0.0, %v4691
      %4693 = vmatmul.f32.gmra.mxu0 %v3641
      %v4694 = vpop.f32.mrf.mxu0
      %v4695 = vadd.f32 0.0, %v4694
      %4696 = vmatmul.f32.gmra.mxu0 %v3644
      %v4697 = vpop.f32.mrf.mxu0
      %v4698 = vadd.f32 0.0, %v4697
      %4699 = vmatmul.f32.gmra.mxu0 %v3647
      %v4700 = vpop.f32.mrf.mxu0
      %v4701 = vadd.f32 0.0, %v4700
      %4702 = vmatmul.f32.gmra.mxu0 %v3650
      %v4703 = vpop.f32.mrf.mxu0
      %v4704 = vadd.f32 0.0, %v4703
      %4705 = vmatmul.f32.gmra.mxu0 %v3653
      %v4706 = vpop.f32.mrf.mxu0
      %v4707 = vadd.f32 0.0, %v4706
      %4708 = vmatmul.f32.gmra.mxu0 %v3656
      %v4709 = vpop.f32.mrf.mxu0
      %v4710 = vadd.f32 0.0, %v4709
      %4711 = vmatmul.f32.gmra.mxu0 %v3659
      %v4712 = vpop.f32.mrf.mxu0
      %v4713 = vadd.f32 0.0, %v4712
      %4714 = vmatmul.f32.gmra.mxu0 %v3662
      %v4715 = vpop.f32.mrf.mxu0
      %v4716 = vadd.f32 0.0, %v4715
      %4717 = vmatmul.f32.gmra.mxu0 %v3665
      %v4718 = vpop.f32.mrf.mxu0
      %v4719 = vadd.f32 0.0, %v4718
      %4720 = vmatmul.f32.gmra.mxu0 %v3668
      %v4721 = vpop.f32.mrf.mxu0
      %v4722 = vadd.f32 0.0, %v4721
      %4723 = vmatmul.f32.gmra.mxu0 %v3671
      %v4724 = vpop.f32.mrf.mxu0
      %v4725 = vadd.f32 0.0, %v4724
      %4726 = vmatmul.f32.gmra.mxu0 %v3674
      %v4727 = vpop.f32.mrf.mxu0
      %v4728 = vadd.f32 0.0, %v4727
      %4729 = vmatmul.f32.gmra.mxu0 %v3677
      %v4730 = vpop.f32.mrf.mxu0
      %v4731 = vadd.f32 0.0, %v4730
      %4732 = vmatmul.f32.gmra.mxu0 %v3680
      %v4733 = vpop.f32.mrf.mxu0
      %v4734 = vadd.f32 0.0, %v4733
      %4735 = vmatmul.f32.gmra.mxu0 %v3683
      %v4736 = vpop.f32.mrf.mxu0
      %v4737 = vadd.f32 0.0, %v4736
      %4738 = vmatmul.f32.gmra.mxu0 %v3686
      %v4739 = vpop.f32.mrf.mxu0
      %v4740 = vadd.f32 0.0, %v4739
      %4741 = vmatmul.f32.gmra.mxu0 %v3689
      %v4742 = vpop.f32.mrf.mxu0
      %v4743 = vadd.f32 0.0, %v4742
      %4744 = vmatmul.f32.gmra.mxu0 %v3692
      %v4745 = vpop.f32.mrf.mxu0
      %v4746 = vadd.f32 0.0, %v4745
      %4747 = vmatmul.f32.gmra.mxu0 %v3695
      %v4748 = vpop.f32.mrf.mxu0
      %v4749 = vadd.f32 0.0, %v4748
      %4750 = vmatmul.f32.gmra.mxu0 %v3698
      %v4751 = vpop.f32.mrf.mxu0
      %v4752 = vadd.f32 0.0, %v4751
      %4753 = vmatmul.f32.gmra.mxu0 %v3701
      %v4754 = vpop.f32.mrf.mxu0
      %v4755 = vadd.f32 0.0, %v4754
      %4756 = vmatmul.f32.gmra.mxu0 %v3704
      %v4757 = vpop.f32.mrf.mxu0
      %v4758 = vadd.f32 0.0, %v4757
      %4759 = vmatmul.f32.gmra.mxu0 %v3707
      %v4760 = vpop.f32.mrf.mxu0
      %v4761 = vadd.f32 0.0, %v4760
      %4762 = vmatmul.f32.gmra.mxu0 %v3710
      %v4763 = vpop.f32.mrf.mxu0
      %v4764 = vadd.f32 0.0, %v4763
      %4765 = vmatmul.f32.gmra.mxu0 %v3713
      %v4766 = vpop.f32.mrf.mxu0
      %v4767 = vadd.f32 0.0, %v4766
      %4768 = vmatmul.f32.gmra.mxu0 %v3716
      %v4769 = vpop.f32.mrf.mxu0
      %v4770 = vadd.f32 0.0, %v4769
      %4771 = vmatmul.f32.gmra.mxu0 %v3719
      %v4772 = vpop.f32.mrf.mxu0
      %v4773 = vadd.f32 0.0, %v4772
      %4774 = vmatmul.f32.gmra.mxu0 %v3722
      %v4775 = vpop.f32.mrf.mxu0
      %v4776 = vadd.f32 0.0, %v4775
      %4777 = vmatmul.f32.gmra.mxu0 %v3725
      %v4778 = vpop.f32.mrf.mxu0
      %v4779 = vadd.f32 0.0, %v4778
      %4780 = vmatmul.f32.gmra.mxu0 %v3728
      %v4781 = vpop.f32.mrf.mxu0
      %v4782 = vadd.f32 0.0, %v4781
      %4783 = vmatmul.f32.gmra.mxu0 %v3731
      %v4784 = vpop.f32.mrf.mxu0
      %v4785 = vadd.f32 0.0, %v4784
      %4786 = vmatmul.f32.gmra.mxu0 %v3734
      %v4787 = vpop.f32.mrf.mxu0
      %v4788 = vadd.f32 0.0, %v4787
      %4789 = vmatmul.f32.gmra.mxu0 %v3737
      %v4790 = vpop.f32.mrf.mxu0
      %v4791 = vadd.f32 0.0, %v4790
      %4792 = vmatmul.f32.gmra.mxu0 %v3740
      %v4793 = vpop.f32.mrf.mxu0
      %v4794 = vadd.f32 0.0, %v4793
      %4795 = vmatmul.f32.gmra.mxu0 %v3743
      %v4796 = vpop.f32.mrf.mxu0
      %v4797 = vadd.f32 0.0, %v4796
      %4798 = vmatmul.f32.gmra.mxu0 %v3746
      %v4799 = vpop.f32.mrf.mxu0
      %v4800 = vadd.f32 0.0, %v4799
      %4801 = vmatmul.f32.gmra.mxu0 %v3749
      %v4802 = vpop.f32.mrf.mxu0
      %v4803 = vadd.f32 0.0, %v4802
      %4804 = vmatmul.f32.gmra.mxu0 %v3752
      %v4805 = vpop.f32.mrf.mxu0
      %v4806 = vadd.f32 0.0, %v4805
      %4807 = vmatmul.f32.gmra.mxu0 %v3755
      %v4808 = vpop.f32.mrf.mxu0
      %v4809 = vadd.f32 0.0, %v4808
      %4810 = vmatmul.f32.gmra.mxu0 %v3758
      %v4811 = vpop.f32.mrf.mxu0
      %v4812 = vadd.f32 0.0, %v4811
      %4813 = vmatmul.f32.gmra.mxu0 %v3761
      %v4814 = vpop.f32.mrf.mxu0
      %v4815 = vadd.f32 0.0, %v4814
      %4816 = vmatmul.f32.gmra.mxu0 %v3764
      %v4817 = vpop.f32.mrf.mxu0
      %v4818 = vadd.f32 0.0, %v4817
      %4819 = vmatmul.f32.gmra.mxu0 %v3767
      %v4820 = vpop.f32.mrf.mxu0
      %v4821 = vadd.f32 0.0, %v4820
      %4822 = vmatmul.f32.gmra.mxu0 %v3770
      %v4823 = vpop.f32.mrf.mxu0
      %v4824 = vadd.f32 0.0, %v4823
      %4825 = vmatmul.f32.gmra.mxu0 %v3773
      %v4826 = vpop.f32.mrf.mxu0
      %v4827 = vadd.f32 0.0, %v4826
      %4828 = vmatmul.f32.gmra.mxu0 %v3776
      %v4829 = vpop.f32.mrf.mxu0
      %v4830 = vadd.f32 0.0, %v4829
      %4831 = vmatmul.f32.gmra.mxu0 %v3779
      %v4832 = vpop.f32.mrf.mxu0
      %v4833 = vadd.f32 0.0, %v4832
      %4834 = vmatmul.f32.gmra.mxu0 %v3782
      %v4835 = vpop.f32.mrf.mxu0
      %v4836 = vadd.f32 0.0, %v4835
      %4837 = vmatmul.f32.gmra.mxu0 %v3785
      %v4838 = vpop.f32.mrf.mxu0
      %v4839 = vadd.f32 0.0, %v4838
      %4840 = vmatmul.f32.gmra.mxu0 %v3788
      %v4841 = vpop.f32.mrf.mxu0
      %v4842 = vadd.f32 0.0, %v4841
      %4843 = vmatmul.f32.gmra.mxu0 %v3791
      %v4844 = vpop.f32.mrf.mxu0
      %v4845 = vadd.f32 0.0, %v4844
      %4846 = vmatmul.f32.gmra.mxu0 %v3794
      %v4847 = vpop.f32.mrf.mxu0
      %v4848 = vadd.f32 0.0, %v4847
      %4849 = vmatmul.f32.gmra.mxu0 %v3797
      %v4850 = vpop.f32.mrf.mxu0
      %v4851 = vadd.f32 0.0, %v4850
      %4852 = vmatmul.f32.gmra.mxu0 %v3800
      %v4853 = vpop.f32.mrf.mxu0
      %v4854 = vadd.f32 0.0, %v4853
      %4855 = vmatmul.f32.gmra.mxu0 %v3803
      %v4856 = vpop.f32.mrf.mxu0
      %v4857 = vadd.f32 0.0, %v4856
      %4858 = vmatmul.f32.gmra.mxu0 %v3806
      %v4859 = vpop.f32.mrf.mxu0
      %v4860 = vadd.f32 0.0, %v4859
      %4861 = vmatmul.f32.gmra.mxu0 %v3809
      %v4862 = vpop.f32.mrf.mxu0
      %v4863 = vadd.f32 0.0, %v4862
      %4864 = vmatmul.f32.gmra.mxu0 %v3812
      %v4865 = vpop.f32.mrf.mxu0
      %v4866 = vadd.f32 0.0, %v4865
      %4867 = vmatmul.f32.gmra.mxu0 %v3815
      %v4868 = vpop.f32.mrf.mxu0
      %v4869 = vadd.f32 0.0, %v4868
      %4870 = vmatmul.f32.gmra.mxu0 %v3818
      %v4871 = vpop.f32.mrf.mxu0
      %v4872 = vadd.f32 0.0, %v4871
      %4873 = vdwg.mxu0
      %v4874 = vadd.f32 %v4588, %v4677
      %v4875 = vadd.f32 %v4589, %v4680
      %v4876 = vadd.f32 %v4590, %v4683
      %v4877 = vadd.f32 %v4591, %v4686
      %v4878 = vadd.f32 %v4592, %v4689
      %v4879 = vadd.f32 %v4593, %v4692
      %v4880 = vadd.f32 %v4594, %v4695
      %v4881 = vadd.f32 %v4595, %v4698
      %v4882 = vadd.f32 %v4596, %v4701
      %v4883 = vadd.f32 %v4597, %v4704
      %v4884 = vadd.f32 %v4598, %v4707
      %v4885 = vadd.f32 %v4599, %v4710
      %v4886 = vadd.f32 %v4600, %v4713
      %v4887 = vadd.f32 %v4601, %v4716
      %v4888 = vadd.f32 %v4602, %v4719
      %v4889 = vadd.f32 %v4603, %v4722
      %v4890 = vadd.f32 %v4604, %v4725
      %v4891 = vadd.f32 %v4605, %v4728
      %v4892 = vadd.f32 %v4606, %v4731
      %v4893 = vadd.f32 %v4607, %v4734
      %v4894 = vadd.f32 %v4608, %v4737
      %v4895 = vadd.f32 %v4609, %v4740
      %v4896 = vadd.f32 %v4610, %v4743
      %v4897 = vadd.f32 %v4611, %v4746
      %v4898 = vadd.f32 %v4612, %v4749
      %v4899 = vadd.f32 %v4613, %v4752
      %v4900 = vadd.f32 %v4614, %v4755
      %v4901 = vadd.f32 %v4615, %v4758
      %v4902 = vadd.f32 %v4616, %v4761
      %v4903 = vadd.f32 %v4617, %v4764
      %v4904 = vadd.f32 %v4618, %v4767
      %v4905 = vadd.f32 %v4619, %v4770
      %v4906 = vadd.f32 %v4620, %v4773
      %v4907 = vadd.f32 %v4621, %v4776
      %v4908 = vadd.f32 %v4622, %v4779
      %v4909 = vadd.f32 %v4623, %v4782
      %v4910 = vadd.f32 %v4624, %v4785
      %v4911 = vadd.f32 %v4625, %v4788
      %v4912 = vadd.f32 %v4626, %v4791
      %v4913 = vadd.f32 %v4627, %v4794
      %v4914 = vadd.f32 %v4628, %v4797
      %v4915 = vadd.f32 %v4629, %v4800
      %v4916 = vadd.f32 %v4630, %v4803
      %v4917 = vadd.f32 %v4631, %v4806
      %v4918 = vadd.f32 %v4632, %v4809
      %v4919 = vadd.f32 %v4633, %v4812
      %v4920 = vadd.f32 %v4634, %v4815
      %v4921 = vadd.f32 %v4635, %v4818
      %v4922 = vadd.f32 %v4636, %v4821
      %v4923 = vadd.f32 %v4637, %v4824
      %v4924 = vadd.f32 %v4638, %v4827
      %v4925 = vadd.f32 %v4639, %v4830
      %v4926 = vadd.f32 %v4640, %v4833
      %v4927 = vadd.f32 %v4641, %v4836
      %v4928 = vadd.f32 %v4642, %v4839
      %v4929 = vadd.f32 %v4643, %v4842
      %v4930 = vadd.f32 %v4644, %v4845
      %v4931 = vadd.f32 %v4645, %v4848
      %v4932 = vadd.f32 %v4646, %v4851
      %v4933 = vadd.f32 %v4647, %v4854
      %v4934 = vadd.f32 %v4648, %v4857
      %v4935 = vadd.f32 %v4649, %v4860
      %v4936 = vadd.f32 %v4650, %v4863
      %v4937 = vadd.f32 %v4651, %v4866
      %v4938 = vadd.f32 %v4652, %v4869
      %v4939 = vadd.f32 %v4653, %v4872
      %4940 = vst.msk [vmem:[%s1551] sm:$0xff] %vm1065, %v4874
      %4941 = vst.msk [vmem:[%s1551 + $0x8] sm:$0xff] %vm1065, %v4875
      %4942 = vst.msk [vmem:[%s1551 + $0x10] sm:$0xff] %vm1065, %v4876
      %4943 = vst.msk [vmem:[%s1551 + $0x18] sm:$0xff] %vm1065, %v4877
      %4944 = vst.msk [vmem:[%s1551 + $0x20] sm:$0xff] %vm1065, %v4878
      %4945 = vst.msk [vmem:[%s1551 + $0x28] sm:$0xff] %vm1065, %v4879
      %4946 = vst.msk [vmem:[%s1551 + $0x30] sm:$0xff] %vm1065, %v4880
      %4947 = vst.msk [vmem:[%s1551 + $0x38] sm:$0xff] %vm1065, %v4881
      %4948 = vst.msk [vmem:[%s1551 + $0x40] sm:$0xff] %vm1065, %v4882
      %4949 = vst.msk [vmem:[%s1551 + $0x48] sm:$0xff] %vm1065, %v4883
      %4950 = vst.msk [vmem:[%s1551 + $0x50] sm:$0xff] %vm1065, %v4884
      %4951 = vst.msk [vmem:[%s1551 + $0x58] sm:$0xff] %vm1065, %v4885
      %4952 = vst.msk [vmem:[%s1551 + $0x60] sm:$0xff] %vm1065, %v4886
      %4953 = vst.msk [vmem:[%s1551 + $0x68] sm:$0xff] %vm1065, %v4887
      %4954 = vst.msk [vmem:[%s1551 + $0x70] sm:$0xff] %vm1065, %v4888
      %4955 = vst.msk [vmem:[%s1551 + $0x78] sm:$0xff] %vm1065, %v4889
      %4956 = vst.msk [vmem:[%s1551 + $0x80] sm:$0xff] %vm1065, %v4890
      %4957 = vst.msk [vmem:[%s1551 + $0x88] sm:$0xff] %vm1065, %v4891
      %4958 = vst.msk [vmem:[%s1551 + $0x90] sm:$0xff] %vm1065, %v4892
      %4959 = vst.msk [vmem:[%s1551 + $0x98] sm:$0xff] %vm1065, %v4893
      %4960 = vst.msk [vmem:[%s1551 + $0xa0] sm:$0xff] %vm1065, %v4894
      %4961 = vst.msk [vmem:[%s1551 + $0xa8] sm:$0xff] %vm1065, %v4895
      %4962 = vst.msk [vmem:[%s1551 + $0xb0] sm:$0xff] %vm1065, %v4896
      %4963 = vst.msk [vmem:[%s1551 + $0xb8] sm:$0xff] %vm1065, %v4897
      %4964 = vst.msk [vmem:[%s1551 + $0xc0] sm:$0xff] %vm1065, %v4898
      %4965 = vst.msk [vmem:[%s1551 + $0xc8] sm:$0xff] %vm1065, %v4899
      %4966 = vst.msk [vmem:[%s1551 + $0xd0] sm:$0xff] %vm1065, %v4900
      %4967 = vst.msk [vmem:[%s1551 + $0xd8] sm:$0xff] %vm1065, %v4901
      %4968 = vst.msk [vmem:[%s1551 + $0xe0] sm:$0xff] %vm1065, %v4902
      %4969 = vst.msk [vmem:[%s1551 + $0xe8] sm:$0xff] %vm1065, %v4903
      %4970 = vst.msk [vmem:[%s1551 + $0xf0] sm:$0xff] %vm1065, %v4904
      %4971 = vst.msk [vmem:[%s1551 + $0xf8] sm:$0xff] %vm1065, %v4905
      %4972 = vst.msk [vmem:[%s1551 + $0x100] sm:$0xff] %vm1065, %v4906
      %4973 = vst.msk [vmem:[%s1551 + $0x108] sm:$0xff] %vm1065, %v4907
      %4974 = vst.msk [vmem:[%s1551 + $0x110] sm:$0xff] %vm1065, %v4908
      %4975 = vst.msk [vmem:[%s1551 + $0x118] sm:$0xff] %vm1065, %v4909
      %4976 = vst.msk [vmem:[%s1551 + $0x120] sm:$0xff] %vm1065, %v4910
      %4977 = vst.msk [vmem:[%s1551 + $0x128] sm:$0xff] %vm1065, %v4911
      %4978 = vst.msk [vmem:[%s1551 + $0x130] sm:$0xff] %vm1065, %v4912
      %4979 = vst.msk [vmem:[%s1551 + $0x138] sm:$0xff] %vm1065, %v4913
      %4980 = vst.msk [vmem:[%s1551 + $0x140] sm:$0xff] %vm1065, %v4914
      %4981 = vst.msk [vmem:[%s1551 + $0x148] sm:$0xff] %vm1065, %v4915
      %4982 = vst.msk [vmem:[%s1551 + $0x150] sm:$0xff] %vm1065, %v4916
      %4983 = vst.msk [vmem:[%s1551 + $0x158] sm:$0xff] %vm1065, %v4917
      %4984 = vst.msk [vmem:[%s1551 + $0x160] sm:$0xff] %vm1065, %v4918
      %4985 = vst.msk [vmem:[%s1551 + $0x168] sm:$0xff] %vm1065, %v4919
      %4986 = vst.msk [vmem:[%s1551 + $0x170] sm:$0xff] %vm1065, %v4920
      %4987 = vst.msk [vmem:[%s1551 + $0x178] sm:$0xff] %vm1065, %v4921
      %4988 = vst.msk [vmem:[%s1551 + $0x180] sm:$0xff] %vm1065, %v4922
      %4989 = vst.msk [vmem:[%s1551 + $0x188] sm:$0xff] %vm1065, %v4923
      %4990 = vst.msk [vmem:[%s1551 + $0x190] sm:$0xff] %vm1065, %v4924
      %4991 = vst.msk [vmem:[%s1551 + $0x198] sm:$0xff] %vm1065, %v4925
      %4992 = vst.msk [vmem:[%s1551 + $0x1a0] sm:$0xff] %vm1065, %v4926
      %4993 = vst.msk [vmem:[%s1551 + $0x1a8] sm:$0xff] %vm1065, %v4927
      %4994 = vst.msk [vmem:[%s1551 + $0x1b0] sm:$0xff] %vm1065, %v4928
      %4995 = vst.msk [vmem:[%s1551 + $0x1b8] sm:$0xff] %vm1065, %v4929
      %4996 = vst.msk [vmem:[%s1551 + $0x1c0] sm:$0xff] %vm1065, %v4930
      %4997 = vst.msk [vmem:[%s1551 + $0x1c8] sm:$0xff] %vm1065, %v4931
      %4998 = vst.msk [vmem:[%s1551 + $0x1d0] sm:$0xff] %vm1065, %v4932
      %4999 = vst.msk [vmem:[%s1551 + $0x1d8] sm:$0xff] %vm1065, %v4933
      %5000 = vst.msk [vmem:[%s1551 + $0x1e0] sm:$0xff] %vm1065, %v4934
      %5001 = vst.msk [vmem:[%s1551 + $0x1e8] sm:$0xff] %vm1065, %v4935
      %5002 = vst.msk [vmem:[%s1551 + $0x1f0] sm:$0xff] %vm1065, %v4936
      %5003 = vst.msk [vmem:[%s1551 + $0x1f8] sm:$0xff] %vm1065, %v4937
      %5004 = vst.msk [vmem:[%s1551 + $0x200] sm:$0xff] %vm1065, %v4938
      %5005 = vst.msk [vmem:[%s1551 + $0x208] sm:$0xff] %vm1065, %v4939
      // Predicated region
      $region37: #{tpu_custom_call.1} parent=31 // pred_check
        %p5006 = pneg %p245
      $region38: #{tpu_custom_call.1} parent=31 // pred_check_branch
        %5008 = sbr.rel (%p5006) target = $region40
      $region39: #{tpu_custom_call.1} parent=31 // pred_region
        %v5009 = vld [vmem:[%s2] sm:$0x1]
        %v5010 = vld [vmem:[#allocation2] sm:$0xff]
        %v5011 = vld [vmem:[#allocation2 + $0x8] sm:$0xff]
        %v5012 = vld [vmem:[#allocation2 + $0x10] sm:$0xff]
        %v5013 = vld [vmem:[#allocation2 + $0x18] sm:$0xff]
        %v5014 = vld [vmem:[#allocation2 + $0x20] sm:$0xff]
        %v5015 = vld [vmem:[#allocation2 + $0x28] sm:$0xff]
        %v5016 = vld [vmem:[#allocation2 + $0x30] sm:$0xff]
        %v5017 = vld [vmem:[#allocation2 + $0x38] sm:$0xff]
        %v5018 = vld [vmem:[%s1132 + $0x1] sm:$0xff]
        %v5019 = vld [vmem:[%s1132 + $0x9] sm:$0xff]
        %v5020 = vld [vmem:[%s1132 + $0x11] sm:$0xff]
        %v5021 = vld [vmem:[%s1132 + $0x19] sm:$0xff]
        %v5022 = vld [vmem:[%s1132 + $0x21] sm:$0xff]
        %v5023 = vld [vmem:[%s1132 + $0x29] sm:$0xff]
        %v5024 = vld [vmem:[%s1132 + $0x31] sm:$0xff]
        %v5025 = vld [vmem:[%s1132 + $0x39] sm:$0xff]
        %v5026 = vadd.f32 %v5010, %v5018
        %v5027 = vadd.f32 %v5011, %v5019
        %v5028 = vadd.f32 %v5012, %v5020
        %v5029 = vadd.f32 %v5013, %v5021
        %v5030 = vadd.f32 %v5014, %v5022
        %v5031 = vadd.f32 %v5015, %v5023
        %v5032 = vadd.f32 %v5016, %v5024
        %v5033 = vadd.f32 %v5017, %v5025
        %v5034 = vld [vmem:[%s1551 + $0x2] sm:$0xff]
        %v5035 = vld [vmem:[%s1551 + $0xa] sm:$0xff]
        %v5036 = vld [vmem:[%s1551 + $0x12] sm:$0xff]
        %v5037 = vld [vmem:[%s1551 + $0x1a] sm:$0xff]
        %v5038 = vld [vmem:[%s1551 + $0x22] sm:$0xff]
        %v5039 = vld [vmem:[%s1551 + $0x2a] sm:$0xff]
        %v5040 = vld [vmem:[%s1551 + $0x32] sm:$0xff]
        %v5041 = vld [vmem:[%s1551 + $0x3a] sm:$0xff]
        %v5042 = vadd.f32 %v5026, %v5034
        %v5043 = vadd.f32 %v5027, %v5035
        %v5044 = vadd.f32 %v5028, %v5036
        %v5045 = vadd.f32 %v5029, %v5037
        %v5046 = vadd.f32 %v5030, %v5038
        %v5047 = vadd.f32 %v5031, %v5039
        %v5048 = vadd.f32 %v5032, %v5040
        %v5049 = vadd.f32 %v5033, %v5041
        %v5051 = vperm.slane %v5009, 0
        %v5053 = vadd.f32 %v5042, %v5051
        %v5054 = vadd.f32 %v5043, %v5051
        %v5055 = vadd.f32 %v5044, %v5051
        %v5056 = vadd.f32 %v5045, %v5051
        %v5057 = vadd.f32 %v5046, %v5051
        %v5058 = vadd.f32 %v5047, %v5051
        %v5059 = vadd.f32 %v5048, %v5051
        %v5060 = vadd.f32 %v5049, %v5051
        %v5061 = vmax.f32 %v5053, 0.0
        %v5062 = vmax.f32 %v5054, 0.0
        %v5063 = vmax.f32 %v5055, 0.0
        %v5064 = vmax.f32 %v5056, 0.0
        %v5065 = vmax.f32 %v5057, 0.0
        %v5066 = vmax.f32 %v5058, 0.0
        %v5067 = vmax.f32 %v5059, 0.0
        %v5068 = vmax.f32 %v5060, 0.0
        %5069 = vst.msk [vmem:[%s243] sm:$0xff] %vm1065, %v5061
        %5070 = vst.msk [vmem:[%s243 + $0x8] sm:$0xff] %vm1065, %v5062
        %5071 = vst.msk [vmem:[%s243 + $0x10] sm:$0xff] %vm1065, %v5063
        %5072 = vst.msk [vmem:[%s243 + $0x18] sm:$0xff] %vm1065, %v5064
        %5073 = vst.msk [vmem:[%s243 + $0x20] sm:$0xff] %vm1065, %v5065
        %5074 = vst.msk [vmem:[%s243 + $0x28] sm:$0xff] %vm1065, %v5066
        %5075 = vst.msk [vmem:[%s243 + $0x30] sm:$0xff] %vm1065, %v5067
        %5076 = vst.msk [vmem:[%s243 + $0x38] sm:$0xff] %vm1065, %v5068
        %v5077 = vld [vmem:[#allocation2 + $0x42] sm:$0xff]
        %v5078 = vld [vmem:[#allocation2 + $0x4a] sm:$0xff]
        %v5079 = vld [vmem:[#allocation2 + $0x52] sm:$0xff]
        %v5080 = vld [vmem:[#allocation2 + $0x5a] sm:$0xff]
        %v5081 = vld [vmem:[#allocation2 + $0x62] sm:$0xff]
        %v5082 = vld [vmem:[#allocation2 + $0x6a] sm:$0xff]
        %v5083 = vld [vmem:[#allocation2 + $0x72] sm:$0xff]
        %v5084 = vld [vmem:[#allocation2 + $0x7a] sm:$0xff]
        %v5085 = vld [vmem:[%s1132 + $0x43] sm:$0xff]
        %v5086 = vld [vmem:[%s1132 + $0x4b] sm:$0xff]
        %v5087 = vld [vmem:[%s1132 + $0x53] sm:$0xff]
        %v5088 = vld [vmem:[%s1132 + $0x5b] sm:$0xff]
        %v5089 = vld [vmem:[%s1132 + $0x63] sm:$0xff]
        %v5090 = vld [vmem:[%s1132 + $0x6b] sm:$0xff]
        %v5091 = vld [vmem:[%s1132 + $0x73] sm:$0xff]
        %v5092 = vld [vmem:[%s1132 + $0x7b] sm:$0xff]
        %v5093 = vadd.f32 %v5077, %v5085
        %v5094 = vadd.f32 %v5078, %v5086
        %v5095 = vadd.f32 %v5079, %v5087
        %v5096 = vadd.f32 %v5080, %v5088
        %v5097 = vadd.f32 %v5081, %v5089
        %v5098 = vadd.f32 %v5082, %v5090
        %v5099 = vadd.f32 %v5083, %v5091
        %v5100 = vadd.f32 %v5084, %v5092
        %v5101 = vld [vmem:[%s1551 + $0x44] sm:$0xff]
        %v5102 = vld [vmem:[%s1551 + $0x4c] sm:$0xff]
        %v5103 = vld [vmem:[%s1551 + $0x54] sm:$0xff]
        %v5104 = vld [vmem:[%s1551 + $0x5c] sm:$0xff]
        %v5105 = vld [vmem:[%s1551 + $0x64] sm:$0xff]
        %v5106 = vld [vmem:[%s1551 + $0x6c] sm:$0xff]
        %v5107 = vld [vmem:[%s1551 + $0x74] sm:$0xff]
        %v5108 = vld [vmem:[%s1551 + $0x7c] sm:$0xff]
        %v5109 = vadd.f32 %v5093, %v5101
        %v5110 = vadd.f32 %v5094, %v5102
        %v5111 = vadd.f32 %v5095, %v5103
        %v5112 = vadd.f32 %v5096, %v5104
        %v5113 = vadd.f32 %v5097, %v5105
        %v5114 = vadd.f32 %v5098, %v5106
        %v5115 = vadd.f32 %v5099, %v5107
        %v5116 = vadd.f32 %v5100, %v5108
        %v5117 = vadd.f32 %v5109, %v5051
        %v5118 = vadd.f32 %v5110, %v5051
        %v5119 = vadd.f32 %v5111, %v5051
        %v5120 = vadd.f32 %v5112, %v5051
        %v5121 = vadd.f32 %v5113, %v5051
        %v5122 = vadd.f32 %v5114, %v5051
        %v5123 = vadd.f32 %v5115, %v5051
        %v5124 = vadd.f32 %v5116, %v5051
        %v5125 = vmax.f32 %v5117, 0.0
        %v5126 = vmax.f32 %v5118, 0.0
        %v5127 = vmax.f32 %v5119, 0.0
        %v5128 = vmax.f32 %v5120, 0.0
        %v5129 = vmax.f32 %v5121, 0.0
        %v5130 = vmax.f32 %v5122, 0.0
        %v5131 = vmax.f32 %v5123, 0.0
        %v5132 = vmax.f32 %v5124, 0.0
        %s5133 = scalar_lea.vmem %s243, 64
        %5134 = vst.msk [vmem:[%s5133] sm:$0xff] %vm1065, %v5125
        %5135 = vst.msk [vmem:[%s5133 + $0x8] sm:$0xff] %vm1065, %v5126
        %5136 = vst.msk [vmem:[%s5133 + $0x10] sm:$0xff] %vm1065, %v5127
        %5137 = vst.msk [vmem:[%s5133 + $0x18] sm:$0xff] %vm1065, %v5128
        %5138 = vst.msk [vmem:[%s5133 + $0x20] sm:$0xff] %vm1065, %v5129
        %5139 = vst.msk [vmem:[%s5133 + $0x28] sm:$0xff] %vm1065, %v5130
        %5140 = vst.msk [vmem:[%s5133 + $0x30] sm:$0xff] %vm1065, %v5131
        %5141 = vst.msk [vmem:[%s5133 + $0x38] sm:$0xff] %vm1065, %v5132
        %v5142 = vld [vmem:[#allocation2 + $0x84] sm:$0xff]
        %v5143 = vld [vmem:[#allocation2 + $0x8c] sm:$0xff]
        %v5144 = vld [vmem:[#allocation2 + $0x94] sm:$0xff]
        %v5145 = vld [vmem:[#allocation2 + $0x9c] sm:$0xff]
        %v5146 = vld [vmem:[#allocation2 + $0xa4] sm:$0xff]
        %v5147 = vld [vmem:[#allocation2 + $0xac] sm:$0xff]
        %v5148 = vld [vmem:[#allocation2 + $0xb4] sm:$0xff]
        %v5149 = vld [vmem:[#allocation2 + $0xbc] sm:$0xff]
        %v5150 = vld [vmem:[%s1132 + $0x85] sm:$0xff]
        %v5151 = vld [vmem:[%s1132 + $0x8d] sm:$0xff]
        %v5152 = vld [vmem:[%s1132 + $0x95] sm:$0xff]
        %v5153 = vld [vmem:[%s1132 + $0x9d] sm:$0xff]
        %v5154 = vld [vmem:[%s1132 + $0xa5] sm:$0xff]
        %v5155 = vld [vmem:[%s1132 + $0xad] sm:$0xff]
        %v5156 = vld [vmem:[%s1132 + $0xb5] sm:$0xff]
        %v5157 = vld [vmem:[%s1132 + $0xbd] sm:$0xff]
        %v5158 = vadd.f32 %v5142, %v5150
        %v5159 = vadd.f32 %v5143, %v5151
        %v5160 = vadd.f32 %v5144, %v5152
        %v5161 = vadd.f32 %v5145, %v5153
        %v5162 = vadd.f32 %v5146, %v5154
        %v5163 = vadd.f32 %v5147, %v5155
        %v5164 = vadd.f32 %v5148, %v5156
        %v5165 = vadd.f32 %v5149, %v5157
        %v5166 = vld [vmem:[%s1551 + $0x86] sm:$0xff]
        %v5167 = vld [vmem:[%s1551 + $0x8e] sm:$0xff]
        %v5168 = vld [vmem:[%s1551 + $0x96] sm:$0xff]
        %v5169 = vld [vmem:[%s1551 + $0x9e] sm:$0xff]
        %v5170 = vld [vmem:[%s1551 + $0xa6] sm:$0xff]
        %v5171 = vld [vmem:[%s1551 + $0xae] sm:$0xff]
        %v5172 = vld [vmem:[%s1551 + $0xb6] sm:$0xff]
        %v5173 = vld [vmem:[%s1551 + $0xbe] sm:$0xff]
        %v5174 = vadd.f32 %v5158, %v5166
        %v5175 = vadd.f32 %v5159, %v5167
        %v5176 = vadd.f32 %v5160, %v5168
        %v5177 = vadd.f32 %v5161, %v5169
        %v5178 = vadd.f32 %v5162, %v5170
        %v5179 = vadd.f32 %v5163, %v5171
        %v5180 = vadd.f32 %v5164, %v5172
        %v5181 = vadd.f32 %v5165, %v5173
        %v5182 = vadd.f32 %v5174, %v5051
        %v5183 = vadd.f32 %v5175, %v5051
        %v5184 = vadd.f32 %v5176, %v5051
        %v5185 = vadd.f32 %v5177, %v5051
        %v5186 = vadd.f32 %v5178, %v5051
        %v5187 = vadd.f32 %v5179, %v5051
        %v5188 = vadd.f32 %v5180, %v5051
        %v5189 = vadd.f32 %v5181, %v5051
        %v5190 = vmax.f32 %v5182, 0.0
        %v5191 = vmax.f32 %v5183, 0.0
        %v5192 = vmax.f32 %v5184, 0.0
        %v5193 = vmax.f32 %v5185, 0.0
        %v5194 = vmax.f32 %v5186, 0.0
        %v5195 = vmax.f32 %v5187, 0.0
        %v5196 = vmax.f32 %v5188, 0.0
        %v5197 = vmax.f32 %v5189, 0.0
        %s5198 = scalar_lea.vmem %s243, 128
        %5199 = vst.msk [vmem:[%s5198] sm:$0xff] %vm1065, %v5190
        %5200 = vst.msk [vmem:[%s5198 + $0x8] sm:$0xff] %vm1065, %v5191
        %5201 = vst.msk [vmem:[%s5198 + $0x10] sm:$0xff] %vm1065, %v5192
        %5202 = vst.msk [vmem:[%s5198 + $0x18] sm:$0xff] %vm1065, %v5193
        %5203 = vst.msk [vmem:[%s5198 + $0x20] sm:$0xff] %vm1065, %v5194
        %5204 = vst.msk [vmem:[%s5198 + $0x28] sm:$0xff] %vm1065, %v5195
        %5205 = vst.msk [vmem:[%s5198 + $0x30] sm:$0xff] %vm1065, %v5196
        %5206 = vst.msk [vmem:[%s5198 + $0x38] sm:$0xff] %vm1065, %v5197
        %v5207 = vld [vmem:[#allocation2 + $0xc6] sm:$0xff]
        %v5208 = vld [vmem:[#allocation2 + $0xce] sm:$0xff]
        %v5209 = vld [vmem:[#allocation2 + $0xd6] sm:$0xff]
        %v5210 = vld [vmem:[#allocation2 + $0xde] sm:$0xff]
        %v5211 = vld [vmem:[#allocation2 + $0xe6] sm:$0xff]
        %v5212 = vld [vmem:[#allocation2 + $0xee] sm:$0xff]
        %v5213 = vld [vmem:[#allocation2 + $0xf6] sm:$0xff]
        %v5214 = vld [vmem:[#allocation2 + $0xfe] sm:$0xff]
        %v5215 = vld [vmem:[%s1132 + $0xc7] sm:$0xff]
        %v5216 = vld [vmem:[%s1132 + $0xcf] sm:$0xff]
        %v5217 = vld [vmem:[%s1132 + $0xd7] sm:$0xff]
        %v5218 = vld [vmem:[%s1132 + $0xdf] sm:$0xff]
        %v5219 = vld [vmem:[%s1132 + $0xe7] sm:$0xff]
        %v5220 = vld [vmem:[%s1132 + $0xef] sm:$0xff]
        %v5221 = vld [vmem:[%s1132 + $0xf7] sm:$0xff]
        %v5222 = vld [vmem:[%s1132 + $0xff] sm:$0xff]
        %v5223 = vadd.f32 %v5207, %v5215
        %v5224 = vadd.f32 %v5208, %v5216
        %v5225 = vadd.f32 %v5209, %v5217
        %v5226 = vadd.f32 %v5210, %v5218
        %v5227 = vadd.f32 %v5211, %v5219
        %v5228 = vadd.f32 %v5212, %v5220
        %v5229 = vadd.f32 %v5213, %v5221
        %v5230 = vadd.f32 %v5214, %v5222
        %v5231 = vld [vmem:[%s1551 + $0xc8] sm:$0xff]
        %v5232 = vld [vmem:[%s1551 + $0xd0] sm:$0xff]
        %v5233 = vld [vmem:[%s1551 + $0xd8] sm:$0xff]
        %v5234 = vld [vmem:[%s1551 + $0xe0] sm:$0xff]
        %v5235 = vld [vmem:[%s1551 + $0xe8] sm:$0xff]
        %v5236 = vld [vmem:[%s1551 + $0xf0] sm:$0xff]
        %v5237 = vld [vmem:[%s1551 + $0xf8] sm:$0xff]
        %v5238 = vld [vmem:[%s1551 + $0x100] sm:$0xff]
        %v5239 = vadd.f32 %v5223, %v5231
        %v5240 = vadd.f32 %v5224, %v5232
        %v5241 = vadd.f32 %v5225, %v5233
        %v5242 = vadd.f32 %v5226, %v5234
        %v5243 = vadd.f32 %v5227, %v5235
        %v5244 = vadd.f32 %v5228, %v5236
        %v5245 = vadd.f32 %v5229, %v5237
        %v5246 = vadd.f32 %v5230, %v5238
        %v5247 = vadd.f32 %v5239, %v5051
        %v5248 = vadd.f32 %v5240, %v5051
        %v5249 = vadd.f32 %v5241, %v5051
        %v5250 = vadd.f32 %v5242, %v5051
        %v5251 = vadd.f32 %v5243, %v5051
        %v5252 = vadd.f32 %v5244, %v5051
        %v5253 = vadd.f32 %v5245, %v5051
        %v5254 = vadd.f32 %v5246, %v5051
        %v5255 = vmax.f32 %v5247, 0.0
        %v5256 = vmax.f32 %v5248, 0.0
        %v5257 = vmax.f32 %v5249, 0.0
        %v5258 = vmax.f32 %v5250, 0.0
        %v5259 = vmax.f32 %v5251, 0.0
        %v5260 = vmax.f32 %v5252, 0.0
        %v5261 = vmax.f32 %v5253, 0.0
        %v5262 = vmax.f32 %v5254, 0.0
        %s5263 = scalar_lea.vmem %s243, 192
        %5264 = vst.msk [vmem:[%s5263] sm:$0xff] %vm1065, %v5255
        %5265 = vst.msk [vmem:[%s5263 + $0x8] sm:$0xff] %vm1065, %v5256
        %5266 = vst.msk [vmem:[%s5263 + $0x10] sm:$0xff] %vm1065, %v5257
        %5267 = vst.msk [vmem:[%s5263 + $0x18] sm:$0xff] %vm1065, %v5258
        %5268 = vst.msk [vmem:[%s5263 + $0x20] sm:$0xff] %vm1065, %v5259
        %5269 = vst.msk [vmem:[%s5263 + $0x28] sm:$0xff] %vm1065, %v5260
        %5270 = vst.msk [vmem:[%s5263 + $0x30] sm:$0xff] %vm1065, %v5261
        %5271 = vst.msk [vmem:[%s5263 + $0x38] sm:$0xff] %vm1065, %v5262
        %v5272 = vld [vmem:[#allocation2 + $0x108] sm:$0xff]
        %v5273 = vld [vmem:[#allocation2 + $0x110] sm:$0xff]
        %v5274 = vld [vmem:[#allocation2 + $0x118] sm:$0xff]
        %v5275 = vld [vmem:[#allocation2 + $0x120] sm:$0xff]
        %v5276 = vld [vmem:[#allocation2 + $0x128] sm:$0xff]
        %v5277 = vld [vmem:[#allocation2 + $0x130] sm:$0xff]
        %v5278 = vld [vmem:[#allocation2 + $0x138] sm:$0xff]
        %v5279 = vld [vmem:[#allocation2 + $0x140] sm:$0xff]
        %v5280 = vld [vmem:[%s1132 + $0x109] sm:$0xff]
        %v5281 = vld [vmem:[%s1132 + $0x111] sm:$0xff]
        %v5282 = vld [vmem:[%s1132 + $0x119] sm:$0xff]
        %v5283 = vld [vmem:[%s1132 + $0x121] sm:$0xff]
        %v5284 = vld [vmem:[%s1132 + $0x129] sm:$0xff]
        %v5285 = vld [vmem:[%s1132 + $0x131] sm:$0xff]
        %v5286 = vld [vmem:[%s1132 + $0x139] sm:$0xff]
        %v5287 = vld [vmem:[%s1132 + $0x141] sm:$0xff]
        %v5288 = vadd.f32 %v5272, %v5280
        %v5289 = vadd.f32 %v5273, %v5281
        %v5290 = vadd.f32 %v5274, %v5282
        %v5291 = vadd.f32 %v5275, %v5283
        %v5292 = vadd.f32 %v5276, %v5284
        %v5293 = vadd.f32 %v5277, %v5285
        %v5294 = vadd.f32 %v5278, %v5286
        %v5295 = vadd.f32 %v5279, %v5287
        %v5296 = vld [vmem:[%s1551 + $0x10a] sm:$0xff]
        %v5297 = vld [vmem:[%s1551 + $0x112] sm:$0xff]
        %v5298 = vld [vmem:[%s1551 + $0x11a] sm:$0xff]
        %v5299 = vld [vmem:[%s1551 + $0x122] sm:$0xff]
        %v5300 = vld [vmem:[%s1551 + $0x12a] sm:$0xff]
        %v5301 = vld [vmem:[%s1551 + $0x132] sm:$0xff]
        %v5302 = vld [vmem:[%s1551 + $0x13a] sm:$0xff]
        %v5303 = vld [vmem:[%s1551 + $0x142] sm:$0xff]
        %v5304 = vadd.f32 %v5288, %v5296
        %v5305 = vadd.f32 %v5289, %v5297
        %v5306 = vadd.f32 %v5290, %v5298
        %v5307 = vadd.f32 %v5291, %v5299
        %v5308 = vadd.f32 %v5292, %v5300
        %v5309 = vadd.f32 %v5293, %v5301
        %v5310 = vadd.f32 %v5294, %v5302
        %v5311 = vadd.f32 %v5295, %v5303
        %v5312 = vadd.f32 %v5304, %v5051
        %v5313 = vadd.f32 %v5305, %v5051
        %v5314 = vadd.f32 %v5306, %v5051
        %v5315 = vadd.f32 %v5307, %v5051
        %v5316 = vadd.f32 %v5308, %v5051
        %v5317 = vadd.f32 %v5309, %v5051
        %v5318 = vadd.f32 %v5310, %v5051
        %v5319 = vadd.f32 %v5311, %v5051
        %v5320 = vmax.f32 %v5312, 0.0
        %v5321 = vmax.f32 %v5313, 0.0
        %v5322 = vmax.f32 %v5314, 0.0
        %v5323 = vmax.f32 %v5315, 0.0
        %v5324 = vmax.f32 %v5316, 0.0
        %v5325 = vmax.f32 %v5317, 0.0
        %v5326 = vmax.f32 %v5318, 0.0
        %v5327 = vmax.f32 %v5319, 0.0
        %s5328 = scalar_lea.vmem %s243, 256
        %5329 = vst.msk [vmem:[%s5328] sm:$0xff] %vm1065, %v5320
        %5330 = vst.msk [vmem:[%s5328 + $0x8] sm:$0xff] %vm1065, %v5321
        %5331 = vst.msk [vmem:[%s5328 + $0x10] sm:$0xff] %vm1065, %v5322
        %5332 = vst.msk [vmem:[%s5328 + $0x18] sm:$0xff] %vm1065, %v5323
        %5333 = vst.msk [vmem:[%s5328 + $0x20] sm:$0xff] %vm1065, %v5324
        %5334 = vst.msk [vmem:[%s5328 + $0x28] sm:$0xff] %vm1065, %v5325
        %5335 = vst.msk [vmem:[%s5328 + $0x30] sm:$0xff] %vm1065, %v5326
        %5336 = vst.msk [vmem:[%s5328 + $0x38] sm:$0xff] %vm1065, %v5327
        %v5337 = vld [vmem:[#allocation2 + $0x14a] sm:$0xff]
        %v5338 = vld [vmem:[#allocation2 + $0x152] sm:$0xff]
        %v5339 = vld [vmem:[#allocation2 + $0x15a] sm:$0xff]
        %v5340 = vld [vmem:[#allocation2 + $0x162] sm:$0xff]
        %v5341 = vld [vmem:[#allocation2 + $0x16a] sm:$0xff]
        %v5342 = vld [vmem:[#allocation2 + $0x172] sm:$0xff]
        %v5343 = vld [vmem:[#allocation2 + $0x17a] sm:$0xff]
        %v5344 = vld [vmem:[#allocation2 + $0x182] sm:$0xff]
        %v5345 = vld [vmem:[%s1132 + $0x14b] sm:$0xff]
        %v5346 = vld [vmem:[%s1132 + $0x153] sm:$0xff]
        %v5347 = vld [vmem:[%s1132 + $0x15b] sm:$0xff]
        %v5348 = vld [vmem:[%s1132 + $0x163] sm:$0xff]
        %v5349 = vld [vmem:[%s1132 + $0x16b] sm:$0xff]
        %v5350 = vld [vmem:[%s1132 + $0x173] sm:$0xff]
        %v5351 = vld [vmem:[%s1132 + $0x17b] sm:$0xff]
        %v5352 = vld [vmem:[%s1132 + $0x183] sm:$0xff]
        %v5353 = vadd.f32 %v5337, %v5345
        %v5354 = vadd.f32 %v5338, %v5346
        %v5355 = vadd.f32 %v5339, %v5347
        %v5356 = vadd.f32 %v5340, %v5348
        %v5357 = vadd.f32 %v5341, %v5349
        %v5358 = vadd.f32 %v5342, %v5350
        %v5359 = vadd.f32 %v5343, %v5351
        %v5360 = vadd.f32 %v5344, %v5352
        %v5361 = vld [vmem:[%s1551 + $0x14c] sm:$0xff]
        %v5362 = vld [vmem:[%s1551 + $0x154] sm:$0xff]
        %v5363 = vld [vmem:[%s1551 + $0x15c] sm:$0xff]
        %v5364 = vld [vmem:[%s1551 + $0x164] sm:$0xff]
        %v5365 = vld [vmem:[%s1551 + $0x16c] sm:$0xff]
        %v5366 = vld [vmem:[%s1551 + $0x174] sm:$0xff]
        %v5367 = vld [vmem:[%s1551 + $0x17c] sm:$0xff]
        %v5368 = vld [vmem:[%s1551 + $0x184] sm:$0xff]
        %v5369 = vadd.f32 %v5353, %v5361
        %v5370 = vadd.f32 %v5354, %v5362
        %v5371 = vadd.f32 %v5355, %v5363
        %v5372 = vadd.f32 %v5356, %v5364
        %v5373 = vadd.f32 %v5357, %v5365
        %v5374 = vadd.f32 %v5358, %v5366
        %v5375 = vadd.f32 %v5359, %v5367
        %v5376 = vadd.f32 %v5360, %v5368
        %v5377 = vadd.f32 %v5369, %v5051
        %v5378 = vadd.f32 %v5370, %v5051
        %v5379 = vadd.f32 %v5371, %v5051
        %v5380 = vadd.f32 %v5372, %v5051
        %v5381 = vadd.f32 %v5373, %v5051
        %v5382 = vadd.f32 %v5374, %v5051
        %v5383 = vadd.f32 %v5375, %v5051
        %v5384 = vadd.f32 %v5376, %v5051
        %v5385 = vmax.f32 %v5377, 0.0
        %v5386 = vmax.f32 %v5378, 0.0
        %v5387 = vmax.f32 %v5379, 0.0
        %v5388 = vmax.f32 %v5380, 0.0
        %v5389 = vmax.f32 %v5381, 0.0
        %v5390 = vmax.f32 %v5382, 0.0
        %v5391 = vmax.f32 %v5383, 0.0
        %v5392 = vmax.f32 %v5384, 0.0
        %s5393 = scalar_lea.vmem %s243, 320
        %5394 = vst.msk [vmem:[%s5393] sm:$0xff] %vm1065, %v5385
        %5395 = vst.msk [vmem:[%s5393 + $0x8] sm:$0xff] %vm1065, %v5386
        %5396 = vst.msk [vmem:[%s5393 + $0x10] sm:$0xff] %vm1065, %v5387
        %5397 = vst.msk [vmem:[%s5393 + $0x18] sm:$0xff] %vm1065, %v5388
        %5398 = vst.msk [vmem:[%s5393 + $0x20] sm:$0xff] %vm1065, %v5389
        %5399 = vst.msk [vmem:[%s5393 + $0x28] sm:$0xff] %vm1065, %v5390
        %5400 = vst.msk [vmem:[%s5393 + $0x30] sm:$0xff] %vm1065, %v5391
        %5401 = vst.msk [vmem:[%s5393 + $0x38] sm:$0xff] %vm1065, %v5392
        %v5402 = vld [vmem:[#allocation2 + $0x18c] sm:$0xff]
        %v5403 = vld [vmem:[#allocation2 + $0x194] sm:$0xff]
        %v5404 = vld [vmem:[#allocation2 + $0x19c] sm:$0xff]
        %v5405 = vld [vmem:[#allocation2 + $0x1a4] sm:$0xff]
        %v5406 = vld [vmem:[#allocation2 + $0x1ac] sm:$0xff]
        %v5407 = vld [vmem:[#allocation2 + $0x1b4] sm:$0xff]
        %v5408 = vld [vmem:[#allocation2 + $0x1bc] sm:$0xff]
        %v5409 = vld [vmem:[#allocation2 + $0x1c4] sm:$0xff]
        %v5410 = vld [vmem:[%s1132 + $0x18d] sm:$0xff]
        %v5411 = vld [vmem:[%s1132 + $0x195] sm:$0xff]
        %v5412 = vld [vmem:[%s1132 + $0x19d] sm:$0xff]
        %v5413 = vld [vmem:[%s1132 + $0x1a5] sm:$0xff]
        %v5414 = vld [vmem:[%s1132 + $0x1ad] sm:$0xff]
        %v5415 = vld [vmem:[%s1132 + $0x1b5] sm:$0xff]
        %v5416 = vld [vmem:[%s1132 + $0x1bd] sm:$0xff]
        %v5417 = vld [vmem:[%s1132 + $0x1c5] sm:$0xff]
        %v5418 = vadd.f32 %v5402, %v5410
        %v5419 = vadd.f32 %v5403, %v5411
        %v5420 = vadd.f32 %v5404, %v5412
        %v5421 = vadd.f32 %v5405, %v5413
        %v5422 = vadd.f32 %v5406, %v5414
        %v5423 = vadd.f32 %v5407, %v5415
        %v5424 = vadd.f32 %v5408, %v5416
        %v5425 = vadd.f32 %v5409, %v5417
        %v5426 = vld [vmem:[%s1551 + $0x18e] sm:$0xff]
        %v5427 = vld [vmem:[%s1551 + $0x196] sm:$0xff]
        %v5428 = vld [vmem:[%s1551 + $0x19e] sm:$0xff]
        %v5429 = vld [vmem:[%s1551 + $0x1a6] sm:$0xff]
        %v5430 = vld [vmem:[%s1551 + $0x1ae] sm:$0xff]
        %v5431 = vld [vmem:[%s1551 + $0x1b6] sm:$0xff]
        %v5432 = vld [vmem:[%s1551 + $0x1be] sm:$0xff]
        %v5433 = vld [vmem:[%s1551 + $0x1c6] sm:$0xff]
        %v5434 = vadd.f32 %v5418, %v5426
        %v5435 = vadd.f32 %v5419, %v5427
        %v5436 = vadd.f32 %v5420, %v5428
        %v5437 = vadd.f32 %v5421, %v5429
        %v5438 = vadd.f32 %v5422, %v5430
        %v5439 = vadd.f32 %v5423, %v5431
        %v5440 = vadd.f32 %v5424, %v5432
        %v5441 = vadd.f32 %v5425, %v5433
        %v5442 = vadd.f32 %v5434, %v5051
        %v5443 = vadd.f32 %v5435, %v5051
        %v5444 = vadd.f32 %v5436, %v5051
        %v5445 = vadd.f32 %v5437, %v5051
        %v5446 = vadd.f32 %v5438, %v5051
        %v5447 = vadd.f32 %v5439, %v5051
        %v5448 = vadd.f32 %v5440, %v5051
        %v5449 = vadd.f32 %v5441, %v5051
        %v5450 = vmax.f32 %v5442, 0.0
        %v5451 = vmax.f32 %v5443, 0.0
        %v5452 = vmax.f32 %v5444, 0.0
        %v5453 = vmax.f32 %v5445, 0.0
        %v5454 = vmax.f32 %v5446, 0.0
        %v5455 = vmax.f32 %v5447, 0.0
        %v5456 = vmax.f32 %v5448, 0.0
        %v5457 = vmax.f32 %v5449, 0.0
        %s5458 = scalar_lea.vmem %s243, 384
        %5459 = vst.msk [vmem:[%s5458] sm:$0xff] %vm1065, %v5450
        %5460 = vst.msk [vmem:[%s5458 + $0x8] sm:$0xff] %vm1065, %v5451
        %5461 = vst.msk [vmem:[%s5458 + $0x10] sm:$0xff] %vm1065, %v5452
        %5462 = vst.msk [vmem:[%s5458 + $0x18] sm:$0xff] %vm1065, %v5453
        %5463 = vst.msk [vmem:[%s5458 + $0x20] sm:$0xff] %vm1065, %v5454
        %5464 = vst.msk [vmem:[%s5458 + $0x28] sm:$0xff] %vm1065, %v5455
        %5465 = vst.msk [vmem:[%s5458 + $0x30] sm:$0xff] %vm1065, %v5456
        %5466 = vst.msk [vmem:[%s5458 + $0x38] sm:$0xff] %vm1065, %v5457
        %v5467 = vld [vmem:[#allocation2 + $0x1ce] sm:$0xff]
        %v5468 = vld [vmem:[#allocation2 + $0x1d6] sm:$0xff]
        %v5469 = vld [vmem:[#allocation2 + $0x1de] sm:$0xff]
        %v5470 = vld [vmem:[#allocation2 + $0x1e6] sm:$0xff]
        %v5471 = vld [vmem:[#allocation2 + $0x1ee] sm:$0xff]
        %v5472 = vld [vmem:[#allocation2 + $0x1f6] sm:$0xff]
        %v5473 = vld [vmem:[#allocation2 + $0x1fe] sm:$0xff]
        %v5474 = vld [vmem:[#allocation2 + $0x206] sm:$0xff]
        %v5475 = vld [vmem:[%s1132 + $0x1cf] sm:$0xff]
        %v5476 = vld [vmem:[%s1132 + $0x1d7] sm:$0xff]
        %v5477 = vld [vmem:[%s1132 + $0x1df] sm:$0xff]
        %v5478 = vld [vmem:[%s1132 + $0x1e7] sm:$0xff]
        %v5479 = vld [vmem:[%s1132 + $0x1ef] sm:$0xff]
        %v5480 = vld [vmem:[%s1132 + $0x1f7] sm:$0xff]
        %v5481 = vld [vmem:[%s1132 + $0x1ff] sm:$0xff]
        %v5482 = vld [vmem:[%s1132 + $0x207] sm:$0xff]
        %v5483 = vadd.f32 %v5467, %v5475
        %v5484 = vadd.f32 %v5468, %v5476
        %v5485 = vadd.f32 %v5469, %v5477
        %v5486 = vadd.f32 %v5470, %v5478
        %v5487 = vadd.f32 %v5471, %v5479
        %v5488 = vadd.f32 %v5472, %v5480
        %v5489 = vadd.f32 %v5473, %v5481
        %v5490 = vadd.f32 %v5474, %v5482
        %v5491 = vld [vmem:[%s1551 + $0x1d0] sm:$0xff]
        %v5492 = vld [vmem:[%s1551 + $0x1d8] sm:$0xff]
        %v5493 = vld [vmem:[%s1551 + $0x1e0] sm:$0xff]
        %v5494 = vld [vmem:[%s1551 + $0x1e8] sm:$0xff]
        %v5495 = vld [vmem:[%s1551 + $0x1f0] sm:$0xff]
        %v5496 = vld [vmem:[%s1551 + $0x1f8] sm:$0xff]
        %v5497 = vld [vmem:[%s1551 + $0x200] sm:$0xff]
        %v5498 = vld [vmem:[%s1551 + $0x208] sm:$0xff]
        %v5499 = vadd.f32 %v5483, %v5491
        %v5500 = vadd.f32 %v5484, %v5492
        %v5501 = vadd.f32 %v5485, %v5493
        %v5502 = vadd.f32 %v5486, %v5494
        %v5503 = vadd.f32 %v5487, %v5495
        %v5504 = vadd.f32 %v5488, %v5496
        %v5505 = vadd.f32 %v5489, %v5497
        %v5506 = vadd.f32 %v5490, %v5498
        %v5507 = vadd.f32 %v5499, %v5051
        %v5508 = vadd.f32 %v5500, %v5051
        %v5509 = vadd.f32 %v5501, %v5051
        %v5510 = vadd.f32 %v5502, %v5051
        %v5511 = vadd.f32 %v5503, %v5051
        %v5512 = vadd.f32 %v5504, %v5051
        %v5513 = vadd.f32 %v5505, %v5051
        %v5514 = vadd.f32 %v5506, %v5051
        %v5515 = vmax.f32 %v5507, 0.0
        %v5516 = vmax.f32 %v5508, 0.0
        %v5517 = vmax.f32 %v5509, 0.0
        %v5518 = vmax.f32 %v5510, 0.0
        %v5519 = vmax.f32 %v5511, 0.0
        %v5520 = vmax.f32 %v5512, 0.0
        %v5521 = vmax.f32 %v5513, 0.0
        %v5522 = vmax.f32 %v5514, 0.0
        %s5523 = scalar_lea.vmem %s243, 448
        %5524 = vst.msk [vmem:[%s5523] sm:$0xff] %vm1065, %v5515
        %5525 = vst.msk [vmem:[%s5523 + $0x8] sm:$0xff] %vm1065, %v5516
        %5526 = vst.msk [vmem:[%s5523 + $0x10] sm:$0xff] %vm1065, %v5517
        %5527 = vst.msk [vmem:[%s5523 + $0x18] sm:$0xff] %vm1065, %v5518
        %5528 = vst.msk [vmem:[%s5523 + $0x20] sm:$0xff] %vm1065, %v5519
        %5529 = vst.msk [vmem:[%s5523 + $0x28] sm:$0xff] %vm1065, %v5520
        %5530 = vst.msk [vmem:[%s5523 + $0x30] sm:$0xff] %vm1065, %v5521
        %5531 = vst.msk [vmem:[%s5523 + $0x38] sm:$0xff] %vm1065, %v5522
      $region40: #{tpu_custom_call.1} parent=31 // pred_fallthru
        _
      %s5532 = smul.u32 8, %s20
      %p5533 = scmp.lt.s32.totalorder %s19, 1
      %s5534 = scalar_select %p5533, %s19, 1
      %p5535 = scmp.lt.s32.totalorder %s5532, 63
      %s5536 = scalar_select %p5535, %s5532, 63
      %s5537 = smul.addr %s5536, 8
      %s5538 = smul.addr %s5534, 512
      %s5539 = sadd.s32 %s5537, %s5538
      %s5540 = smul.addr %s5539, 8
      %s5541 = scalar_lea.vmem %s3, %s5540
      // Predicated region
      $region41: #{tpu_custom_call.1} parent=31 // pred_check
        %p5542 = pneg %p130
      $region42: #{tpu_custom_call.1} parent=31 // pred_check_branch
        %5544 = sbr.rel (%p5542) target = $region44
      $region43: #{tpu_custom_call.1} parent=31 // pred_region
        %s5545 = smul.u32 8, %s20
      $region44: #{tpu_custom_call.1} parent=31 // pred_fallthru
        _
    $region32: #{tpu_custom_call.1} parent=5 // pred_fallthru
      _
    %p5546 = scmp.le.s32.totalorder 2, %s9
    // Predicated region
    $region45: #{tpu_custom_call.1} parent=5 // pred_check
      %p5547 = pneg %p5546
    $region46: #{tpu_custom_call.1} parent=5 // pred_check_branch
      %5549 = sbr.rel (%p5547) target = $region48
    $region47: #{tpu_custom_call.1} parent=5 // pred_region
      %s5550 = ssub.s32 %s9, 2
      // Predicated region
      $region49: #{tpu_custom_call.1} parent=47 // pred_check
        %p5551 = pneg %p136
      $region50: #{tpu_custom_call.1} parent=47 // pred_check_branch
        %5553 = sbr.rel (%p5551) target = $region52
      $region51: #{tpu_custom_call.1} parent=47 // pred_region
        %s5554 = smul.u32 8, %s23
        %p5555 = scmp.lt.s32.totalorder %s22, 1
        %s5556 = scalar_select %p5555, %s22, 1
        %p5557 = scmp.lt.s32.totalorder %s5554, 63
        %s5558 = scalar_select %p5557, %s5554, 63
        %s5559 = smul.addr %s5558, 8
        %s5560 = smul.addr %s5556, 512
        %s5561 = sadd.s32 %s5559, %s5560
        %s5562 = smul.addr %s5561, 8
        %s5563 = scalar_lea.vmem %s3, %s5562
      $region52: #{tpu_custom_call.1} parent=47 // pred_fallthru
        _
    $region48: #{tpu_custom_call.1} parent=5 // pred_fallthru
      _
  $region6: #{tpu_custom_call.1} parent=0 // loop_footer
    %s13 = sadd.s32 1, %s9
  $region7: #{tpu_custom_call.1} parent=0 // loop_footer_branch
    %8 = sbr.rel target = $region3
  $region8: #{tpu_custom_call.1} parent=0 // loop_exit
    _

</llo_original>
